<compile_context>
chip_gen: v7x
topology: tpu7x:2x2x1
jax: 0.10.0
libtpu: 0.0.40
codegen_flags: <defaults>
</compile_context>

<pallas_src>
import functools

import jax
import jax.numpy as jnp
from jax.experimental import pallas as pl
from jax.experimental.pallas import tpu as pltpu

_LANES = 128        # TPU lane width: channel dims are padded up to a multiple of this.
_NEG_SLOPE = 0.01   # PyTorch nn.LeakyReLU() default.


def _conv3x3_accumulate(read_slab, w_ref, acc_ref, *, H, W):
    """Accumulate a 3x3, stride-1 convolution into acc_ref ((H*W, Cout_p) f32 scratch).

    read_slab(kw) -> kw-shifted window of the zero-padded input, shape (H+2, W, Cin).
    w_ref: (9, Cin, Cout_p) with taps ordered kh*3+kw.
    """
    tap = 0
    for kw in range(3):
        slab = read_slab(kw)                              # (H+2, W, Cin)
        cin = slab.shape[-1]
        slab = slab.reshape(slab.shape[0] * W, cin)       # layout-preserving when W % 8 == 0
        for kh in range(3):
            patch = slab[kh * W:kh * W + H * W, :]        # sublane-aligned row slice
            contrib = jnp.dot(patch, w_ref[kh * 3 + kw],
                              preferred_element_type=jnp.float32)
            if tap == 0:
                acc_ref[...] = contrib
            else:
                acc_ref[...] += contrib
            tap += 1


def _bn_lrelu(acc, scale_ref, shift_ref):
    """Folded BatchNorm (scale/shift already include conv bias) + LeakyReLU(0.01)."""
    y = acc * scale_ref[...] + shift_ref[...]
    return jnp.where(y >= 0, y, _NEG_SLOPE * y)


def _double_conv_kernel(x_ref, w1_ref, s1_ref, t1_ref, w2_ref, s2_ref, t2_ref,
                        o_ref, acc_ref, mid_ref, *, H, W):
    """One image per grid step.

    x_ref:   (1, H+2, W+2, Cin)  zero-padded input, bf16
    w1_ref:  (9, Cin, Cp)        stage-1 taps, bf16
    w2_ref:  (9, Cp, Cp)         stage-2 taps, bf16
    s*_ref:  (1, Cp)             folded BN scale, f32
    t*_ref:  (1, Cp)             folded BN shift (includes conv bias), f32
    o_ref:   (1, H, W, Cp)       f32 output (lane-dense, Cp multiple of 128)
    acc_ref: (H*W, Cp) f32       VMEM conv accumulator (shared by both stages)
    mid_ref: (H+2, W+2, Cp) bf16 VMEM stage-1 output incl. zero halo
    """
    Cp = o_ref.shape[-1]

    # Zero the intermediate buffer so its 1-pixel halo is zero (interior overwritten below).
    mid_ref[...] = jnp.zeros_like(mid_ref)

    # ---- stage 1: conv3x3 + BN + LeakyReLU -> VMEM intermediate (bf16) ----
    x = x_ref[0]                                                     # (H+2, W+2, Cin)
    _conv3x3_accumulate(lambda kw: x[:, kw:kw + W, :], w1_ref, acc_ref, H=H, W=W)
    y = _bn_lrelu(acc_ref[...], s1_ref, t1_ref)                      # (H*W, Cp) f32
    mid_ref[1:H + 1, 1:W + 1, :] = y.reshape(H, W, Cp).astype(mid_ref.dtype)

    # ---- stage 2: conv3x3 + BN + LeakyReLU -> HBM output (lane-dense store) ----
    _conv3x3_accumulate(lambda kw: mid_ref[:, kw:kw + W, :], w2_ref, acc_ref, H=H, W=W)
    z = _bn_lrelu(acc_ref[...], s2_ref, t2_ref)                      # (H*W, Cp) f32
    o_ref[...] = z.reshape(1, H, W, Cp).astype(o_ref.dtype)


def _fold_conv_bn(w_oihw, bias, bn, eps, cin_pad, cout_pad):
    """Fold Conv2d bias + eval-mode BatchNorm2d into per-channel scale/shift and reorder
    the 3x3 weights to (tap=kh*3+kw, Cin_pad, Cout_pad), zero-padding the channel dims."""
    cout, cin = w_oihw.shape[0], w_oihw.shape[1]
    scale = bn["gamma"] / jnp.sqrt(bn["var"] + eps)            # gamma * rsqrt(var+eps)
    shift = bn["beta"] + (bias - bn["mean"]) * scale           # folds conv bias
    w_taps = jnp.transpose(w_oihw, (2, 3, 1, 0)).reshape(9, cin, cout)
    w_taps = jnp.pad(w_taps, ((0, 0), (0, cin_pad - cin), (0, cout_pad - cout)))
    scale = jnp.pad(scale, (0, cout_pad - cout)).reshape(1, cout_pad)
    shift = jnp.pad(shift, (0, cout_pad - cout)).reshape(1, cout_pad)
    return (w_taps.astype(jnp.bfloat16),
            scale.astype(jnp.float32),
            shift.astype(jnp.float32))


@jax.jit
def double_conv(x_nchw, params, eps=1e-5):
    """Forward pass of DoubleConv(inchannel, outchannel, drop_rate=0).
    Input/output are NCHW (PyTorch layout); compute runs in NHWC inside one Pallas kernel."""
    N, Cin, H, W = x_nchw.shape
    Cout = params["w1"].shape[0]
    Cp = ((Cout + _LANES - 1) // _LANES) * _LANES              # lane-padded channel count

    w1, s1, t1 = _fold_conv_bn(params["w1"], params["b1"], params["bn1"], eps,
                               cin_pad=Cin, cout_pad=Cp)
    w2, s2, t2 = _fold_conv_bn(params["w2"], params["b2"], params["bn2"], eps,
                               cin_pad=Cp, cout_pad=Cp)

    # NCHW -> NHWC (channels on lanes), zero pad H/W by 1, cast activations to bf16.
    x = jnp.transpose(x_nchw, (0, 2, 3, 1))
    x = jnp.pad(x, ((0, 0), (1, 1), (1, 1), (0, 0))).astype(jnp.bfloat16)
    Hp, Wp = H + 2, W + 2

    kernel = functools.partial(_double_conv_kernel, H=H, W=W)

    out_p = pl.pallas_call(
        kernel,
        out_shape=jax.ShapeDtypeStruct((N, H, W, Cp), jnp.float32),
        grid_spec=pltpu.PrefetchScalarGridSpec(
            num_scalar_prefetch=0,
            grid=(N,),
            in_specs=[
                pl.BlockSpec((1, Hp, Wp, Cin), lambda n: (n, 0, 0, 0)),
                pl.BlockSpec((9, Cin, Cp), lambda n: (0, 0, 0)),
                pl.BlockSpec((1, Cp), lambda n: (0, 0)),
                pl.BlockSpec((1, Cp), lambda n: (0, 0)),
                pl.BlockSpec((9, Cp, Cp), lambda n: (0, 0, 0)),
                pl.BlockSpec((1, Cp), lambda n: (0, 0)),
                pl.BlockSpec((1, Cp), lambda n: (0, 0)),
            ],
            out_specs=pl.BlockSpec((1, H, W, Cp), lambda n: (n, 0, 0, 0)),
            scratch_shapes=[
                pltpu.VMEM((H * W, Cp), jnp.float32),      # conv accumulator (both stages)
                pltpu.VMEM((Hp, Wp, Cp), jnp.bfloat16),    # stage-1 output incl. zero halo
            ],
        ),
        compiler_params=pltpu.CompilerParams(
            dimension_semantics=("parallel",),             # batch split across TCs on v7x
            vmem_limit_bytes=32 * 1024 * 1024,             # explicit; fits v5e/v6e/v7x
        ),
    )(x, w1, s1, t1, w2, s2, t2)

    # Drop the lane padding and return PyTorch NCHW.
    return jnp.transpose(out_p[..., :Cout], (0, 3, 1, 2))


def init_double_conv_params(key, inchannel, outchannel):
    ks = jax.random.split(key, 8)

    def conv_w(k, cout, cin):
        bound = 1.0 / jnp.sqrt(cin * 9)
        return jax.random.uniform(k, (cout, cin, 3, 3), jnp.float32, -bound, bound)

    def conv_b(k, cout, cin):
        bound = 1.0 / jnp.sqrt(cin * 9)
        return jax.random.uniform(k, (cout,), jnp.float32, -bound, bound)

    def bn(k, c):
        k1, k2, k3, k4 = jax.random.split(k, 4)
        return dict(
            gamma=jax.random.uniform(k1, (c,), jnp.float32, 0.5, 1.5),
            beta=0.1 * jax.random.normal(k2, (c,), jnp.float32),
            mean=0.1 * jax.random.normal(k3, (c,), jnp.float32),
            var=jax.random.uniform(k4, (c,), jnp.float32, 0.5, 1.5),
        )

    return dict(
        w1=conv_w(ks[0], outchannel, inchannel), b1=conv_b(ks[1], outchannel, inchannel),
        bn1=bn(ks[2], outchannel),
        w2=conv_w(ks[3], outchannel, outchannel), b2=conv_b(ks[4], outchannel, outchannel),
        bn2=bn(ks[5], outchannel),
    )


if __name__ == "__main__":
    key = jax.random.PRNGKey(0)
    k_x, k_p = jax.random.split(key)

    N, Cin, Cout, H, W = 2, 4, 8, 16, 16
    x = jax.random.normal(k_x, (N, Cin, H, W), jnp.float32)
    params = init_double_conv_params(k_p, Cin, Cout)

    out = double_conv(x, params)
    out = jax.block_until_ready(out)
    assert out.shape == (N, Cout, H, W), out.shape
    assert bool(jnp.all(jnp.isfinite(out)))
    print("KERNEL_OK")
</pallas_src>

<mosaic_0001>
module attributes {stable_mosaic.version = 11 : i64} {
  func.func @_double_conv_kernel(%arg0: i32, %arg1: memref<1x18x18x4xbf16, #tpu.memory_space<vmem>>, %arg2: memref<9x4x128xbf16, #tpu.memory_space<vmem>>, %arg3: memref<1x128xf32, #tpu.memory_space<vmem>>, %arg4: memref<1x128xf32, #tpu.memory_space<vmem>>, %arg5: memref<9x128x128xbf16, #tpu.memory_space<vmem>>, %arg6: memref<1x128xf32, #tpu.memory_space<vmem>>, %arg7: memref<1x128xf32, #tpu.memory_space<vmem>>, %arg8: memref<1x16x16x128xf32, #tpu.memory_space<vmem>>, %arg9: memref<256x128xf32, #tpu.memory_space<vmem>>, %arg10: memref<18x18x128xbf16, #tpu.memory_space<vmem>>) attributes {dimension_semantics = [#tpu.dimension_semantics<parallel>], iteration_bounds = array<i64: 2>, scalar_prefetch = 0 : i64, scratch_operands = 2 : i64, tpu.core_type = #tpu.core_type<tc>, window_params = [{transform_indices = @transform_0, window_bounds = array<i64: 1, 18, 18, 4>}, {pipeline_mode = #tpu.pipeline_mode<synchronous>, transform_indices = @transform_1, window_bounds = array<i64: 9, 4, 128>}, {pipeline_mode = #tpu.pipeline_mode<synchronous>, transform_indices = @transform_2, window_bounds = array<i64: 1, 128>}, {pipeline_mode = #tpu.pipeline_mode<synchronous>, transform_indices = @transform_3, window_bounds = array<i64: 1, 128>}, {pipeline_mode = #tpu.pipeline_mode<synchronous>, transform_indices = @transform_4, window_bounds = array<i64: 9, 128, 128>}, {pipeline_mode = #tpu.pipeline_mode<synchronous>, transform_indices = @transform_5, window_bounds = array<i64: 1, 128>}, {pipeline_mode = #tpu.pipeline_mode<synchronous>, transform_indices = @transform_6, window_bounds = array<i64: 1, 128>}, {transform_indices = @transform_7, window_bounds = array<i64: 1, 16, 16, 128>}]} {
    %cst = arith.constant 0.000000e+00 : bf16
    %0 = vector.broadcast %cst : bf16 to vector<18x18x128xbf16>
    %c0 = arith.constant 0 : index
    %c0_0 = arith.constant 0 : index
    %c0_1 = arith.constant 0 : index
    %1 = vector.load %arg10[%c0, %c0_0, %c0_1] : memref<18x18x128xbf16, #tpu.memory_space<vmem>>, vector<18x18x128xbf16>
    tpu.vector_store %arg10[%c0, %c0_0, %c0_1], %0 {strides = array<i32>} : memref<18x18x128xbf16, #tpu.memory_space<vmem>>, vector<18x18x128xbf16>,
    %c0_2 = arith.constant 0 : index
    %c0_3 = arith.constant 0 : index
    %c0_4 = arith.constant 0 : index
    %c0_5 = arith.constant 0 : index
    %2 = vector.load %arg1[%c0_2, %c0_3, %c0_4, %c0_5] : memref<1x18x18x4xbf16, #tpu.memory_space<vmem>>, vector<1x18x18x4xbf16>
    %3 = vector.shape_cast %2 : vector<1x18x18x4xbf16> to vector<18x18x4xbf16>
    %4 = vector.extract_strided_slice %3 {offsets = [0, 0, 0], sizes = [18, 16, 4], strides = [1, 1, 1]} : vector<18x18x4xbf16> to vector<18x16x4xbf16>
    %5 = vector.shape_cast %4 : vector<18x16x4xbf16> to vector<288x4xbf16>
    %6 = vector.extract_strided_slice %5 {offsets = [0, 0], sizes = [256, 4], strides = [1, 1]} : vector<288x4xbf16> to vector<256x4xbf16>
    %c0_6 = arith.constant 0 : index
    %c0_7 = arith.constant 0 : index
    %c0_8 = arith.constant 0 : index
    %7 = vector.load %arg2[%c0_6, %c0_7, %c0_8] : memref<9x4x128xbf16, #tpu.memory_space<vmem>>, vector<1x4x128xbf16>
    %8 = vector.shape_cast %7 : vector<1x4x128xbf16> to vector<4x128xbf16>
    %cst_9 = arith.constant dense<0.000000e+00> : vector<256x128xf32>
    %9 = tpu.matmul %6, %8, %cst_9 {dimension_numbers = #tpu.dot_dimension_numbers<[1], [0], [0], [1], [0, 0, 1, 1], [], []>} : vector<256x4xbf16>, vector<4x128xbf16>, vector<256x128xf32> -> vector<256x128xf32>
    %c0_10 = arith.constant 0 : index
    %c0_11 = arith.constant 0 : index
    %10 = vector.load %arg9[%c0_10, %c0_11] : memref<256x128xf32, #tpu.memory_space<vmem>>, vector<256x128xf32>
    tpu.vector_store %arg9[%c0_10, %c0_11], %9 {strides = array<i32>} : memref<256x128xf32, #tpu.memory_space<vmem>>, vector<256x128xf32>,
    %11 = vector.extract_strided_slice %5 {offsets = [16, 0], sizes = [256, 4], strides = [1, 1]} : vector<288x4xbf16> to vector<256x4xbf16>
    %c3 = arith.constant 3 : index
    %c0_12 = arith.constant 0 : index
    %c0_13 = arith.constant 0 : index
    %12 = vector.load %arg2[%c3, %c0_12, %c0_13] : memref<9x4x128xbf16, #tpu.memory_space<vmem>>, vector<1x4x128xbf16>
    %13 = vector.shape_cast %12 : vector<1x4x128xbf16> to vector<4x128xbf16>
    %cst_14 = arith.constant dense<0.000000e+00> : vector<256x128xf32>
    %14 = tpu.matmul %11, %13, %cst_14 {dimension_numbers = #tpu.dot_dimension_numbers<[1], [0], [0], [1], [0, 0, 1, 1], [], []>} : vector<256x4xbf16>, vector<4x128xbf16>, vector<256x128xf32> -> vector<256x128xf32>
    %c0_15 = arith.constant 0 : index
    %c0_16 = arith.constant 0 : index
    %15 = vector.load %arg9[%c0_15, %c0_16] : memref<256x128xf32, #tpu.memory_space<vmem>>, vector<256x128xf32>
    %16 = arith.addf %15, %14 : vector<256x128xf32>
    %c0_17 = arith.constant 0 : index
    %c0_18 = arith.constant 0 : index
    %17 = vector.load %arg9[%c0_17, %c0_18] : memref<256x128xf32, #tpu.memory_space<vmem>>, vector<256x128xf32>
    tpu.vector_store %arg9[%c0_17, %c0_18], %16 {strides = array<i32>} : memref<256x128xf32, #tpu.memory_space<vmem>>, vector<256x128xf32>,
    %18 = vector.extract_strided_slice %5 {offsets = [32, 0], sizes = [256, 4], strides = [1, 1]} : vector<288x4xbf16> to vector<256x4xbf16>
    %c6 = arith.constant 6 : index
    %c0_19 = arith.constant 0 : index
    %c0_20 = arith.constant 0 : index
    %19 = vector.load %arg2[%c6, %c0_19, %c0_20] : memref<9x4x128xbf16, #tpu.memory_space<vmem>>, vector<1x4x128xbf16>
    %20 = vector.shape_cast %19 : vector<1x4x128xbf16> to vector<4x128xbf16>
    %cst_21 = arith.constant dense<0.000000e+00> : vector<256x128xf32>
    %21 = tpu.matmul %18, %20, %cst_21 {dimension_numbers = #tpu.dot_dimension_numbers<[1], [0], [0], [1], [0, 0, 1, 1], [], []>} : vector<256x4xbf16>, vector<4x128xbf16>, vector<256x128xf32> -> vector<256x128xf32>
    %c0_22 = arith.constant 0 : index
    %c0_23 = arith.constant 0 : index
    %22 = vector.load %arg9[%c0_22, %c0_23] : memref<256x128xf32, #tpu.memory_space<vmem>>, vector<256x128xf32>
    %23 = arith.addf %22, %21 : vector<256x128xf32>
    %c0_24 = arith.constant 0 : index
    %c0_25 = arith.constant 0 : index
    %24 = vector.load %arg9[%c0_24, %c0_25] : memref<256x128xf32, #tpu.memory_space<vmem>>, vector<256x128xf32>
    tpu.vector_store %arg9[%c0_24, %c0_25], %23 {strides = array<i32>} : memref<256x128xf32, #tpu.memory_space<vmem>>, vector<256x128xf32>,
    %25 = vector.extract_strided_slice %3 {offsets = [0, 1, 0], sizes = [18, 16, 4], strides = [1, 1, 1]} : vector<18x18x4xbf16> to vector<18x16x4xbf16>
    %26 = vector.shape_cast %25 : vector<18x16x4xbf16> to vector<288x4xbf16>
    %27 = vector.extract_strided_slice %26 {offsets = [0, 0], sizes = [256, 4], strides = [1, 1]} : vector<288x4xbf16> to vector<256x4xbf16>
    %c1 = arith.constant 1 : index
    %c0_26 = arith.constant 0 : index
    %c0_27 = arith.constant 0 : index
    %28 = vector.load %arg2[%c1, %c0_26, %c0_27] : memref<9x4x128xbf16, #tpu.memory_space<vmem>>, vector<1x4x128xbf16>
    %29 = vector.shape_cast %28 : vector<1x4x128xbf16> to vector<4x128xbf16>
    %cst_28 = arith.constant dense<0.000000e+00> : vector<256x128xf32>
    %30 = tpu.matmul %27, %29, %cst_28 {dimension_numbers = #tpu.dot_dimension_numbers<[1], [0], [0], [1], [0, 0, 1, 1], [], []>} : vector<256x4xbf16>, vector<4x128xbf16>, vector<256x128xf32> -> vector<256x128xf32>
    %c0_29 = arith.constant 0 : index
    %c0_30 = arith.constant 0 : index
    %31 = vector.load %arg9[%c0_29, %c0_30] : memref<256x128xf32, #tpu.memory_space<vmem>>, vector<256x128xf32>
    %32 = arith.addf %31, %30 : vector<256x128xf32>
    %c0_31 = arith.constant 0 : index
    %c0_32 = arith.constant 0 : index
    %33 = vector.load %arg9[%c0_31, %c0_32] : memref<256x128xf32, #tpu.memory_space<vmem>>, vector<256x128xf32>
    tpu.vector_store %arg9[%c0_31, %c0_32], %32 {strides = array<i32>} : memref<256x128xf32, #tpu.memory_space<vmem>>, vector<256x128xf32>,
    %34 = vector.extract_strided_slice %26 {offsets = [16, 0], sizes = [256, 4], strides = [1, 1]} : vector<288x4xbf16> to vector<256x4xbf16>
    %c4 = arith.constant 4 : index
    %c0_33 = arith.constant 0 : index
    %c0_34 = arith.constant 0 : index
    %35 = vector.load %arg2[%c4, %c0_33, %c0_34] : memref<9x4x128xbf16, #tpu.memory_space<vmem>>, vector<1x4x128xbf16>
    %36 = vector.shape_cast %35 : vector<1x4x128xbf16> to vector<4x128xbf16>
    %cst_35 = arith.constant dense<0.000000e+00> : vector<256x128xf32>
    %37 = tpu.matmul %34, %36, %cst_35 {dimension_numbers = #tpu.dot_dimension_numbers<[1], [0], [0], [1], [0, 0, 1, 1], [], []>} : vector<256x4xbf16>, vector<4x128xbf16>, vector<256x128xf32> -> vector<256x128xf32>
    %c0_36 = arith.constant 0 : index
    %c0_37 = arith.constant 0 : index
    %38 = vector.load %arg9[%c0_36, %c0_37] : memref<256x128xf32, #tpu.memory_space<vmem>>, vector<256x128xf32>
    %39 = arith.addf %38, %37 : vector<256x128xf32>
    %c0_38 = arith.constant 0 : index
    %c0_39 = arith.constant 0 : index
    %40 = vector.load %arg9[%c0_38, %c0_39] : memref<256x128xf32, #tpu.memory_space<vmem>>, vector<256x128xf32>
    tpu.vector_store %arg9[%c0_38, %c0_39], %39 {strides = array<i32>} : memref<256x128xf32, #tpu.memory_space<vmem>>, vector<256x128xf32>,
    %41 = vector.extract_strided_slice %26 {offsets = [32, 0], sizes = [256, 4], strides = [1, 1]} : vector<288x4xbf16> to vector<256x4xbf16>
    %c7 = arith.constant 7 : index
    %c0_40 = arith.constant 0 : index
    %c0_41 = arith.constant 0 : index
    %42 = vector.load %arg2[%c7, %c0_40, %c0_41] : memref<9x4x128xbf16, #tpu.memory_space<vmem>>, vector<1x4x128xbf16>
    %43 = vector.shape_cast %42 : vector<1x4x128xbf16> to vector<4x128xbf16>
    %cst_42 = arith.constant dense<0.000000e+00> : vector<256x128xf32>
    %44 = tpu.matmul %41, %43, %cst_42 {dimension_numbers = #tpu.dot_dimension_numbers<[1], [0], [0], [1], [0, 0, 1, 1], [], []>} : vector<256x4xbf16>, vector<4x128xbf16>, vector<256x128xf32> -> vector<256x128xf32>
    %c0_43 = arith.constant 0 : index
    %c0_44 = arith.constant 0 : index
    %45 = vector.load %arg9[%c0_43, %c0_44] : memref<256x128xf32, #tpu.memory_space<vmem>>, vector<256x128xf32>
    %46 = arith.addf %45, %44 : vector<256x128xf32>
    %c0_45 = arith.constant 0 : index
    %c0_46 = arith.constant 0 : index
    %47 = vector.load %arg9[%c0_45, %c0_46] : memref<256x128xf32, #tpu.memory_space<vmem>>, vector<256x128xf32>
    tpu.vector_store %arg9[%c0_45, %c0_46], %46 {strides = array<i32>} : memref<256x128xf32, #tpu.memory_space<vmem>>, vector<256x128xf32>,
    %48 = vector.extract_strided_slice %3 {offsets = [0, 2, 0], sizes = [18, 16, 4], strides = [1, 1, 1]} : vector<18x18x4xbf16> to vector<18x16x4xbf16>
    %49 = vector.shape_cast %48 : vector<18x16x4xbf16> to vector<288x4xbf16>
    %50 = vector.extract_strided_slice %49 {offsets = [0, 0], sizes = [256, 4], strides = [1, 1]} : vector<288x4xbf16> to vector<256x4xbf16>
    %c2 = arith.constant 2 : index
    %c0_47 = arith.constant 0 : index
    %c0_48 = arith.constant 0 : index
    %51 = vector.load %arg2[%c2, %c0_47, %c0_48] : memref<9x4x128xbf16, #tpu.memory_space<vmem>>, vector<1x4x128xbf16>
    %52 = vector.shape_cast %51 : vector<1x4x128xbf16> to vector<4x128xbf16>
    %cst_49 = arith.constant dense<0.000000e+00> : vector<256x128xf32>
    %53 = tpu.matmul %50, %52, %cst_49 {dimension_numbers = #tpu.dot_dimension_numbers<[1], [0], [0], [1], [0, 0, 1, 1], [], []>} : vector<256x4xbf16>, vector<4x128xbf16>, vector<256x128xf32> -> vector<256x128xf32>
    %c0_50 = arith.constant 0 : index
    %c0_51 = arith.constant 0 : index
    %54 = vector.load %arg9[%c0_50, %c0_51] : memref<256x128xf32, #tpu.memory_space<vmem>>, vector<256x128xf32>
    %55 = arith.addf %54, %53 : vector<256x128xf32>
    %c0_52 = arith.constant 0 : index
    %c0_53 = arith.constant 0 : index
    %56 = vector.load %arg9[%c0_52, %c0_53] : memref<256x128xf32, #tpu.memory_space<vmem>>, vector<256x128xf32>
    tpu.vector_store %arg9[%c0_52, %c0_53], %55 {strides = array<i32>} : memref<256x128xf32, #tpu.memory_space<vmem>>, vector<256x128xf32>,
    %57 = vector.extract_strided_slice %49 {offsets = [16, 0], sizes = [256, 4], strides = [1, 1]} : vector<288x4xbf16> to vector<256x4xbf16>
    %c5 = arith.constant 5 : index
    %c0_54 = arith.constant 0 : index
    %c0_55 = arith.constant 0 : index
    %58 = vector.load %arg2[%c5, %c0_54, %c0_55] : memref<9x4x128xbf16, #tpu.memory_space<vmem>>, vector<1x4x128xbf16>
    %59 = vector.shape_cast %58 : vector<1x4x128xbf16> to vector<4x128xbf16>
    %cst_56 = arith.constant dense<0.000000e+00> : vector<256x128xf32>
    %60 = tpu.matmul %57, %59, %cst_56 {dimension_numbers = #tpu.dot_dimension_numbers<[1], [0], [0], [1], [0, 0, 1, 1], [], []>} : vector<256x4xbf16>, vector<4x128xbf16>, vector<256x128xf32> -> vector<256x128xf32>
    %c0_57 = arith.constant 0 : index
    %c0_58 = arith.constant 0 : index
    %61 = vector.load %arg9[%c0_57, %c0_58] : memref<256x128xf32, #tpu.memory_space<vmem>>, vector<256x128xf32>
    %62 = arith.addf %61, %60 : vector<256x128xf32>
    %c0_59 = arith.constant 0 : index
    %c0_60 = arith.constant 0 : index
    %63 = vector.load %arg9[%c0_59, %c0_60] : memref<256x128xf32, #tpu.memory_space<vmem>>, vector<256x128xf32>
    tpu.vector_store %arg9[%c0_59, %c0_60], %62 {strides = array<i32>} : memref<256x128xf32, #tpu.memory_space<vmem>>, vector<256x128xf32>,
    %64 = vector.extract_strided_slice %49 {offsets = [32, 0], sizes = [256, 4], strides = [1, 1]} : vector<288x4xbf16> to vector<256x4xbf16>
    %c8 = arith.constant 8 : index
    %c0_61 = arith.constant 0 : index
    %c0_62 = arith.constant 0 : index
    %65 = vector.load %arg2[%c8, %c0_61, %c0_62] : memref<9x4x128xbf16, #tpu.memory_space<vmem>>, vector<1x4x128xbf16>
    %66 = vector.shape_cast %65 : vector<1x4x128xbf16> to vector<4x128xbf16>
    %cst_63 = arith.constant dense<0.000000e+00> : vector<256x128xf32>
    %67 = tpu.matmul %64, %66, %cst_63 {dimension_numbers = #tpu.dot_dimension_numbers<[1], [0], [0], [1], [0, 0, 1, 1], [], []>} : vector<256x4xbf16>, vector<4x128xbf16>, vector<256x128xf32> -> vector<256x128xf32>
    %c0_64 = arith.constant 0 : index
    %c0_65 = arith.constant 0 : index
    %68 = vector.load %arg9[%c0_64, %c0_65] : memref<256x128xf32, #tpu.memory_space<vmem>>, vector<256x128xf32>
    %69 = arith.addf %68, %67 : vector<256x128xf32>
    %c0_66 = arith.constant 0 : index
    %c0_67 = arith.constant 0 : index
    %70 = vector.load %arg9[%c0_66, %c0_67] : memref<256x128xf32, #tpu.memory_space<vmem>>, vector<256x128xf32>
    tpu.vector_store %arg9[%c0_66, %c0_67], %69 {strides = array<i32>} : memref<256x128xf32, #tpu.memory_space<vmem>>, vector<256x128xf32>,
    %c0_68 = arith.constant 0 : index
    %c0_69 = arith.constant 0 : index
    %71 = vector.load %arg9[%c0_68, %c0_69] : memref<256x128xf32, #tpu.memory_space<vmem>>, vector<256x128xf32>
    %c0_70 = arith.constant 0 : index
    %c0_71 = arith.constant 0 : index
    %72 = vector.load %arg3[%c0_70, %c0_71] : memref<1x128xf32, #tpu.memory_space<vmem>>, vector<1x128xf32>
    %73 = vector.broadcast %72 : vector<1x128xf32> to vector<256x128xf32>
    %74 = arith.mulf %71, %73 : vector<256x128xf32>
    %c0_72 = arith.constant 0 : index
    %c0_73 = arith.constant 0 : index
    %75 = vector.load %arg4[%c0_72, %c0_73] : memref<1x128xf32, #tpu.memory_space<vmem>>, vector<1x128xf32>
    %76 = vector.broadcast %75 : vector<1x128xf32> to vector<256x128xf32>
    %77 = arith.addf %74, %76 : vector<256x128xf32>
    %cst_74 = arith.constant 0.000000e+00 : f32
    %78 = vector.broadcast %cst_74 : f32 to vector<256x128xf32>
    %79 = arith.cmpf oge, %77, %78 : vector<256x128xf32>
    %cst_75 = arith.constant 0.00999999977 : f32
    %80 = vector.broadcast %cst_75 : f32 to vector<256x128xf32>
    %81 = arith.mulf %80, %77 : vector<256x128xf32>
    %82 = arith.select %79, %77, %81 : vector<256x128xi1>, vector<256x128xf32>
    %83 = vector.shape_cast %82 : vector<256x128xf32> to vector<16x16x128xf32>
    %84 = arith.truncf %83 : vector<16x16x128xf32> to vector<16x16x128xbf16>
    %c1_76 = arith.constant 1 : index
    %c1_77 = arith.constant 1 : index
    %c0_78 = arith.constant 0 : index
    %85 = vector.load %arg10[%c1_76, %c1_77, %c0_78] : memref<18x18x128xbf16, #tpu.memory_space<vmem>>, vector<16x16x128xbf16>
    tpu.vector_store %arg10[%c1_76, %c1_77, %c0_78], %84 {strides = array<i32>} : memref<18x18x128xbf16, #tpu.memory_space<vmem>>, vector<16x16x128xbf16>,
    %c0_79 = arith.constant 0 : index
    %c0_80 = arith.constant 0 : index
    %c0_81 = arith.constant 0 : index
    %86 = vector.load %arg10[%c0_79, %c0_80, %c0_81] : memref<18x18x128xbf16, #tpu.memory_space<vmem>>, vector<18x16x128xbf16>
    %87 = vector.shape_cast %86 : vector<18x16x128xbf16> to vector<288x128xbf16>
    %88 = vector.extract_strided_slice %87 {offsets = [0, 0], sizes = [256, 128], strides = [1, 1]} : vector<288x128xbf16> to vector<256x128xbf16>
    %c0_82 = arith.constant 0 : index
    %c0_83 = arith.constant 0 : index
    %c0_84 = arith.constant 0 : index
    %89 = vector.load %arg5[%c0_82, %c0_83, %c0_84] : memref<9x128x128xbf16, #tpu.memory_space<vmem>>, vector<1x128x128xbf16>
    %90 = vector.shape_cast %89 : vector<1x128x128xbf16> to vector<128x128xbf16>
    %cst_85 = arith.constant dense<0.000000e+00> : vector<256x128xf32>
    %91 = tpu.matmul %88, %90, %cst_85 {dimension_numbers = #tpu.dot_dimension_numbers<[1], [0], [0], [1], [0, 0, 1, 1], [], []>} : vector<256x128xbf16>, vector<128x128xbf16>, vector<256x128xf32> -> vector<256x128xf32>
    %c0_86 = arith.constant 0 : index
    %c0_87 = arith.constant 0 : index
    %92 = vector.load %arg9[%c0_86, %c0_87] : memref<256x128xf32, #tpu.memory_space<vmem>>, vector<256x128xf32>
    tpu.vector_store %arg9[%c0_86, %c0_87], %91 {strides = array<i32>} : memref<256x128xf32, #tpu.memory_space<vmem>>, vector<256x128xf32>,
    %93 = vector.extract_strided_slice %87 {offsets = [16, 0], sizes = [256, 128], strides = [1, 1]} : vector<288x128xbf16> to vector<256x128xbf16>
    %c3_88 = arith.constant 3 : index
    %c0_89 = arith.constant 0 : index
    %c0_90 = arith.constant 0 : index
    %94 = vector.load %arg5[%c3_88, %c0_89, %c0_90] : memref<9x128x128xbf16, #tpu.memory_space<vmem>>, vector<1x128x128xbf16>
    %95 = vector.shape_cast %94 : vector<1x128x128xbf16> to vector<128x128xbf16>
    %cst_91 = arith.constant dense<0.000000e+00> : vector<256x128xf32>
    %96 = tpu.matmul %93, %95, %cst_91 {dimension_numbers = #tpu.dot_dimension_numbers<[1], [0], [0], [1], [0, 0, 1, 1], [], []>} : vector<256x128xbf16>, vector<128x128xbf16>, vector<256x128xf32> -> vector<256x128xf32>
    %c0_92 = arith.constant 0 : index
    %c0_93 = arith.constant 0 : index
    %97 = vector.load %arg9[%c0_92, %c0_93] : memref<256x128xf32, #tpu.memory_space<vmem>>, vector<256x128xf32>
    %98 = arith.addf %97, %96 : vector<256x128xf32>
    %c0_94 = arith.constant 0 : index
    %c0_95 = arith.constant 0 : index
    %99 = vector.load %arg9[%c0_94, %c0_95] : memref<256x128xf32, #tpu.memory_space<vmem>>, vector<256x128xf32>
    tpu.vector_store %arg9[%c0_94, %c0_95], %98 {strides = array<i32>} : memref<256x128xf32, #tpu.memory_space<vmem>>, vector<256x128xf32>,
    %100 = vector.extract_strided_slice %87 {offsets = [32, 0], sizes = [256, 128], strides = [1, 1]} : vector<288x128xbf16> to vector<256x128xbf16>
    %c6_96 = arith.constant 6 : index
    %c0_97 = arith.constant 0 : index
    %c0_98 = arith.constant 0 : index
    %101 = vector.load %arg5[%c6_96, %c0_97, %c0_98] : memref<9x128x128xbf16, #tpu.memory_space<vmem>>, vector<1x128x128xbf16>
    %102 = vector.shape_cast %101 : vector<1x128x128xbf16> to vector<128x128xbf16>
    %cst_99 = arith.constant dense<0.000000e+00> : vector<256x128xf32>
    %103 = tpu.matmul %100, %102, %cst_99 {dimension_numbers = #tpu.dot_dimension_numbers<[1], [0], [0], [1], [0, 0, 1, 1], [], []>} : vector<256x128xbf16>, vector<128x128xbf16>, vector<256x128xf32> -> vector<256x128xf32>
    %c0_100 = arith.constant 0 : index
    %c0_101 = arith.constant 0 : index
    %104 = vector.load %arg9[%c0_100, %c0_101] : memref<256x128xf32, #tpu.memory_space<vmem>>, vector<256x128xf32>
    %105 = arith.addf %104, %103 : vector<256x128xf32>
    %c0_102 = arith.constant 0 : index
    %c0_103 = arith.constant 0 : index
    %106 = vector.load %arg9[%c0_102, %c0_103] : memref<256x128xf32, #tpu.memory_space<vmem>>, vector<256x128xf32>
    tpu.vector_store %arg9[%c0_102, %c0_103], %105 {strides = array<i32>} : memref<256x128xf32, #tpu.memory_space<vmem>>, vector<256x128xf32>,
    %c0_104 = arith.constant 0 : index
    %c1_105 = arith.constant 1 : index
    %c0_106 = arith.constant 0 : index
    %107 = vector.load %arg10[%c0_104, %c1_105, %c0_106] : memref<18x18x128xbf16, #tpu.memory_space<vmem>>, vector<18x16x128xbf16>
    %108 = vector.shape_cast %107 : vector<18x16x128xbf16> to vector<288x128xbf16>
    %109 = vector.extract_strided_slice %108 {offsets = [0, 0], sizes = [256, 128], strides = [1, 1]} : vector<288x128xbf16> to vector<256x128xbf16>
    %c1_107 = arith.constant 1 : index
    %c0_108 = arith.constant 0 : index
    %c0_109 = arith.constant 0 : index
    %110 = vector.load %arg5[%c1_107, %c0_108, %c0_109] : memref<9x128x128xbf16, #tpu.memory_space<vmem>>, vector<1x128x128xbf16>
    %111 = vector.shape_cast %110 : vector<1x128x128xbf16> to vector<128x128xbf16>
    %cst_110 = arith.constant dense<0.000000e+00> : vector<256x128xf32>
    %112 = tpu.matmul %109, %111, %cst_110 {dimension_numbers = #tpu.dot_dimension_numbers<[1], [0], [0], [1], [0, 0, 1, 1], [], []>} : vector<256x128xbf16>, vector<128x128xbf16>, vector<256x128xf32> -> vector<256x128xf32>
    %c0_111 = arith.constant 0 : index
    %c0_112 = arith.constant 0 : index
    %113 = vector.load %arg9[%c0_111, %c0_112] : memref<256x128xf32, #tpu.memory_space<vmem>>, vector<256x128xf32>
    %114 = arith.addf %113, %112 : vector<256x128xf32>
    %c0_113 = arith.constant 0 : index
    %c0_114 = arith.constant 0 : index
    %115 = vector.load %arg9[%c0_113, %c0_114] : memref<256x128xf32, #tpu.memory_space<vmem>>, vector<256x128xf32>
    tpu.vector_store %arg9[%c0_113, %c0_114], %114 {strides = array<i32>} : memref<256x128xf32, #tpu.memory_space<vmem>>, vector<256x128xf32>,
    %116 = vector.extract_strided_slice %108 {offsets = [16, 0], sizes = [256, 128], strides = [1, 1]} : vector<288x128xbf16> to vector<256x128xbf16>
    %c4_115 = arith.constant 4 : index
    %c0_116 = arith.constant 0 : index
    %c0_117 = arith.constant 0 : index
    %117 = vector.load %arg5[%c4_115, %c0_116, %c0_117] : memref<9x128x128xbf16, #tpu.memory_space<vmem>>, vector<1x128x128xbf16>
    %118 = vector.shape_cast %117 : vector<1x128x128xbf16> to vector<128x128xbf16>
    %cst_118 = arith.constant dense<0.000000e+00> : vector<256x128xf32>
    %119 = tpu.matmul %116, %118, %cst_118 {dimension_numbers = #tpu.dot_dimension_numbers<[1], [0], [0], [1], [0, 0, 1, 1], [], []>} : vector<256x128xbf16>, vector<128x128xbf16>, vector<256x128xf32> -> vector<256x128xf32>
    %c0_119 = arith.constant 0 : index
    %c0_120 = arith.constant 0 : index
    %120 = vector.load %arg9[%c0_119, %c0_120] : memref<256x128xf32, #tpu.memory_space<vmem>>, vector<256x128xf32>
    %121 = arith.addf %120, %119 : vector<256x128xf32>
    %c0_121 = arith.constant 0 : index
    %c0_122 = arith.constant 0 : index
    %122 = vector.load %arg9[%c0_121, %c0_122] : memref<256x128xf32, #tpu.memory_space<vmem>>, vector<256x128xf32>
    tpu.vector_store %arg9[%c0_121, %c0_122], %121 {strides = array<i32>} : memref<256x128xf32, #tpu.memory_space<vmem>>, vector<256x128xf32>,
    %123 = vector.extract_strided_slice %108 {offsets = [32, 0], sizes = [256, 128], strides = [1, 1]} : vector<288x128xbf16> to vector<256x128xbf16>
    %c7_123 = arith.constant 7 : index
    %c0_124 = arith.constant 0 : index
    %c0_125 = arith.constant 0 : index
    %124 = vector.load %arg5[%c7_123, %c0_124, %c0_125] : memref<9x128x128xbf16, #tpu.memory_space<vmem>>, vector<1x128x128xbf16>
    %125 = vector.shape_cast %124 : vector<1x128x128xbf16> to vector<128x128xbf16>
    %cst_126 = arith.constant dense<0.000000e+00> : vector<256x128xf32>
    %126 = tpu.matmul %123, %125, %cst_126 {dimension_numbers = #tpu.dot_dimension_numbers<[1], [0], [0], [1], [0, 0, 1, 1], [], []>} : vector<256x128xbf16>, vector<128x128xbf16>, vector<256x128xf32> -> vector<256x128xf32>
    %c0_127 = arith.constant 0 : index
    %c0_128 = arith.constant 0 : index
    %127 = vector.load %arg9[%c0_127, %c0_128] : memref<256x128xf32, #tpu.memory_space<vmem>>, vector<256x128xf32>
    %128 = arith.addf %127, %126 : vector<256x128xf32>
    %c0_129 = arith.constant 0 : index
    %c0_130 = arith.constant 0 : index
    %129 = vector.load %arg9[%c0_129, %c0_130] : memref<256x128xf32, #tpu.memory_space<vmem>>, vector<256x128xf32>
    tpu.vector_store %arg9[%c0_129, %c0_130], %128 {strides = array<i32>} : memref<256x128xf32, #tpu.memory_space<vmem>>, vector<256x128xf32>,
    %c0_131 = arith.constant 0 : index
    %c2_132 = arith.constant 2 : index
    %c0_133 = arith.constant 0 : index
    %130 = vector.load %arg10[%c0_131, %c2_132, %c0_133] : memref<18x18x128xbf16, #tpu.memory_space<vmem>>, vector<18x16x128xbf16>
    %131 = vector.shape_cast %130 : vector<18x16x128xbf16> to vector<288x128xbf16>
    %132 = vector.extract_strided_slice %131 {offsets = [0, 0], sizes = [256, 128], strides = [1, 1]} : vector<288x128xbf16> to vector<256x128xbf16>
    %c2_134 = arith.constant 2 : index
    %c0_135 = arith.constant 0 : index
    %c0_136 = arith.constant 0 : index
    %133 = vector.load %arg5[%c2_134, %c0_135, %c0_136] : memref<9x128x128xbf16, #tpu.memory_space<vmem>>, vector<1x128x128xbf16>
    %134 = vector.shape_cast %133 : vector<1x128x128xbf16> to vector<128x128xbf16>
    %cst_137 = arith.constant dense<0.000000e+00> : vector<256x128xf32>
    %135 = tpu.matmul %132, %134, %cst_137 {dimension_numbers = #tpu.dot_dimension_numbers<[1], [0], [0], [1], [0, 0, 1, 1], [], []>} : vector<256x128xbf16>, vector<128x128xbf16>, vector<256x128xf32> -> vector<256x128xf32>
    %c0_138 = arith.constant 0 : index
    %c0_139 = arith.constant 0 : index
    %136 = vector.load %arg9[%c0_138, %c0_139] : memref<256x128xf32, #tpu.memory_space<vmem>>, vector<256x128xf32>
    %137 = arith.addf %136, %135 : vector<256x128xf32>
    %c0_140 = arith.constant 0 : index
    %c0_141 = arith.constant 0 : index
    %138 = vector.load %arg9[%c0_140, %c0_141] : memref<256x128xf32, #tpu.memory_space<vmem>>, vector<256x128xf32>
    tpu.vector_store %arg9[%c0_140, %c0_141], %137 {strides = array<i32>} : memref<256x128xf32, #tpu.memory_space<vmem>>, vector<256x128xf32>,
    %139 = vector.extract_strided_slice %131 {offsets = [16, 0], sizes = [256, 128], strides = [1, 1]} : vector<288x128xbf16> to vector<256x128xbf16>
    %c5_142 = arith.constant 5 : index
    %c0_143 = arith.constant 0 : index
    %c0_144 = arith.constant 0 : index
    %140 = vector.load %arg5[%c5_142, %c0_143, %c0_144] : memref<9x128x128xbf16, #tpu.memory_space<vmem>>, vector<1x128x128xbf16>
    %141 = vector.shape_cast %140 : vector<1x128x128xbf16> to vector<128x128xbf16>
    %cst_145 = arith.constant dense<0.000000e+00> : vector<256x128xf32>
    %142 = tpu.matmul %139, %141, %cst_145 {dimension_numbers = #tpu.dot_dimension_numbers<[1], [0], [0], [1], [0, 0, 1, 1], [], []>} : vector<256x128xbf16>, vector<128x128xbf16>, vector<256x128xf32> -> vector<256x128xf32>
    %c0_146 = arith.constant 0 : index
    %c0_147 = arith.constant 0 : index
    %143 = vector.load %arg9[%c0_146, %c0_147] : memref<256x128xf32, #tpu.memory_space<vmem>>, vector<256x128xf32>
    %144 = arith.addf %143, %142 : vector<256x128xf32>
    %c0_148 = arith.constant 0 : index
    %c0_149 = arith.constant 0 : index
    %145 = vector.load %arg9[%c0_148, %c0_149] : memref<256x128xf32, #tpu.memory_space<vmem>>, vector<256x128xf32>
    tpu.vector_store %arg9[%c0_148, %c0_149], %144 {strides = array<i32>} : memref<256x128xf32, #tpu.memory_space<vmem>>, vector<256x128xf32>,
    %146 = vector.extract_strided_slice %131 {offsets = [32, 0], sizes = [256, 128], strides = [1, 1]} : vector<288x128xbf16> to vector<256x128xbf16>
    %c8_150 = arith.constant 8 : index
    %c0_151 = arith.constant 0 : index
    %c0_152 = arith.constant 0 : index
    %147 = vector.load %arg5[%c8_150, %c0_151, %c0_152] : memref<9x128x128xbf16, #tpu.memory_space<vmem>>, vector<1x128x128xbf16>
    %148 = vector.shape_cast %147 : vector<1x128x128xbf16> to vector<128x128xbf16>
    %cst_153 = arith.constant dense<0.000000e+00> : vector<256x128xf32>
    %149 = tpu.matmul %146, %148, %cst_153 {dimension_numbers = #tpu.dot_dimension_numbers<[1], [0], [0], [1], [0, 0, 1, 1], [], []>} : vector<256x128xbf16>, vector<128x128xbf16>, vector<256x128xf32> -> vector<256x128xf32>
    %c0_154 = arith.constant 0 : index
    %c0_155 = arith.constant 0 : index
    %150 = vector.load %arg9[%c0_154, %c0_155] : memref<256x128xf32, #tpu.memory_space<vmem>>, vector<256x128xf32>
    %151 = arith.addf %150, %149 : vector<256x128xf32>
    %c0_156 = arith.constant 0 : index
    %c0_157 = arith.constant 0 : index
    %152 = vector.load %arg9[%c0_156, %c0_157] : memref<256x128xf32, #tpu.memory_space<vmem>>, vector<256x128xf32>
    tpu.vector_store %arg9[%c0_156, %c0_157], %151 {strides = array<i32>} : memref<256x128xf32, #tpu.memory_space<vmem>>, vector<256x128xf32>,
    %c0_158 = arith.constant 0 : index
    %c0_159 = arith.constant 0 : index
    %153 = vector.load %arg9[%c0_158, %c0_159] : memref<256x128xf32, #tpu.memory_space<vmem>>, vector<256x128xf32>
    %c0_160 = arith.constant 0 : index
    %c0_161 = arith.constant 0 : index
    %154 = vector.load %arg6[%c0_160, %c0_161] : memref<1x128xf32, #tpu.memory_space<vmem>>, vector<1x128xf32>
    %155 = vector.broadcast %154 : vector<1x128xf32> to vector<256x128xf32>
    %156 = arith.mulf %153, %155 : vector<256x128xf32>
    %c0_162 = arith.constant 0 : index
    %c0_163 = arith.constant 0 : index
    %157 = vector.load %arg7[%c0_162, %c0_163] : memref<1x128xf32, #tpu.memory_space<vmem>>, vector<1x128xf32>
    %158 = vector.broadcast %157 : vector<1x128xf32> to vector<256x128xf32>
    %159 = arith.addf %156, %158 : vector<256x128xf32>
    %cst_164 = arith.constant 0.000000e+00 : f32
    %160 = vector.broadcast %cst_164 : f32 to vector<256x128xf32>
    %161 = arith.cmpf oge, %159, %160 : vector<256x128xf32>
    %cst_165 = arith.constant 0.00999999977 : f32
    %162 = vector.broadcast %cst_165 : f32 to vector<256x128xf32>
    %163 = arith.mulf %162, %159 : vector<256x128xf32>
    %164 = arith.select %161, %159, %163 : vector<256x128xi1>, vector<256x128xf32>
    %165 = vector.shape_cast %164 : vector<256x128xf32> to vector<1x16x16x128xf32>
    %c0_166 = arith.constant 0 : index
    %c0_167 = arith.constant 0 : index
    %c0_168 = arith.constant 0 : index
    %c0_169 = arith.constant 0 : index
    %166 = vector.load %arg8[%c0_166, %c0_167, %c0_168, %c0_169] : memref<1x16x16x128xf32, #tpu.memory_space<vmem>>, vector<1x16x16x128xf32>
    tpu.vector_store %arg8[%c0_166, %c0_167, %c0_168, %c0_169], %165 {strides = array<i32>} : memref<1x16x16x128xf32, #tpu.memory_space<vmem>>, vector<1x16x16x128xf32>,
    return
  }
  func.func @transform_0(%arg0: i32) -> (i32, i32, i32, i32) {
    %c0_i32 = arith.constant 0 : i32
    %c0_i32_0 = arith.constant 0 : i32
    %c0_i32_1 = arith.constant 0 : i32
    %c0_i32_2 = arith.constant 0 : i32
    return %arg0, %c0_i32, %c0_i32_0, %c0_i32_1 : i32, i32, i32, i32
  }
  func.func @transform_1(%arg0: i32) -> (i32, i32, i32) {
    %c0_i32 = arith.constant 0 : i32
    %c0_i32_0 = arith.constant 0 : i32
    %c0_i32_1 = arith.constant 0 : i32
    %c0_i32_2 = arith.constant 0 : i32
    return %c0_i32, %c0_i32_0, %c0_i32_1 : i32, i32, i32
  }
  func.func @transform_2(%arg0: i32) -> (i32, i32) {
    %c0_i32 = arith.constant 0 : i32
    %c0_i32_0 = arith.constant 0 : i32
    %c0_i32_1 = arith.constant 0 : i32
    return %c0_i32, %c0_i32_0 : i32, i32
  }
  func.func @transform_3(%arg0: i32) -> (i32, i32) {
    %c0_i32 = arith.constant 0 : i32
    %c0_i32_0 = arith.constant 0 : i32
    %c0_i32_1 = arith.constant 0 : i32
    return %c0_i32, %c0_i32_0 : i32, i32
  }
  func.func @transform_4(%arg0: i32) -> (i32, i32, i32) {
    %c0_i32 = arith.constant 0 : i32
    %c0_i32_0 = arith.constant 0 : i32
    %c0_i32_1 = arith.constant 0 : i32
    %c0_i32_2 = arith.constant 0 : i32
    return %c0_i32, %c0_i32_0, %c0_i32_1 : i32, i32, i32
  }
  func.func @transform_5(%arg0: i32) -> (i32, i32) {
    %c0_i32 = arith.constant 0 : i32
    %c0_i32_0 = arith.constant 0 : i32
    %c0_i32_1 = arith.constant 0 : i32
    return %c0_i32, %c0_i32_0 : i32, i32
  }
  func.func @transform_6(%arg0: i32) -> (i32, i32) {
    %c0_i32 = arith.constant 0 : i32
    %c0_i32_0 = arith.constant 0 : i32
    %c0_i32_1 = arith.constant 0 : i32
    return %c0_i32, %c0_i32_0 : i32, i32
  }
  func.func @transform_7(%arg0: i32) -> (i32, i32, i32, i32) {
    %c0_i32 = arith.constant 0 : i32
    %c0_i32_0 = arith.constant 0 : i32
    %c0_i32_1 = arith.constant 0 : i32
    %c0_i32_2 = arith.constant 0 : i32
    return %arg0, %c0_i32, %c0_i32_0, %c0_i32_1 : i32, i32, i32, i32
  }
}

</mosaic_0001>

<llo_original>
// kernel: double_conv.1
$region0: #{double_conv.1}
  #allocation0 [shape = 'u32[]', space=smem, size = 0x4, offset = 0x4, fixed_abs, tag = 'smem constant byte address 0x4 - core index']
  #allocation1 [shape = 'u32[144,128]{1,0:T(1,128)}', space=vmem, size = 0x12000, scoped, tag = 'internal scratch']
  #allocation2 [shape = 'f32[256,128]{1,0:T(8,128)}', space=vmem, size = 0x20000, scoped, tag = 'scratch operand']
  #allocation3 [shape = 'bf16[18,18,128]{2,1,0:T(8,128)(2,1)}', space=vmem, size = 0x1b000, scoped, tag = 'scratch operand']
  %s0 = inlined_call_operand.vmem [shape: bf16[2,18,18,4], index: 0, kind: input, shape index: {}]
  %s1 = inlined_call_operand.vmem [shape: bf16[9,4,128], index: 1, kind: input, shape index: {}]
  %s2 = inlined_call_operand.vmem [shape: f32[1,128], index: 2, kind: input, shape index: {}]
  %s3 = inlined_call_operand.vmem [shape: f32[1,128], index: 3, kind: input, shape index: {}]
  %s4 = inlined_call_operand.vmem [shape: bf16[9,128,128], index: 4, kind: input, shape index: {}]
  %s5 = inlined_call_operand.vmem [shape: f32[1,128], index: 5, kind: input, shape index: {}]
  %s6 = inlined_call_operand.vmem [shape: f32[1,128], index: 6, kind: input, shape index: {}]
  %s7 = inlined_call_operand.vmem [shape: f32[2,16,16,128], index: 7, kind: output, shape index: {}]
  %s8 = sld [smem:[#allocation0]]
  $region61: #{double_conv.1} parent=0
    _
  %s10 = ssub.s32 1, %s8
  %s11 = scalar_select 0, %s10, %s8
  loop: start=0, step=1, limit=4
  $region2: #{double_conv.1} parent=0 // loop_pre_header
    _
  $region3: #{double_conv.1} parent=0 // loop_header
    %s13 = sphi 0, %s17
    %p14 = scmp.ge.s32.totalorder %s13, 4
    %s23 = sphi 0, %s25
    %s26 = sphi 0, %s23
    %s27 = sphi 0, %s26
    %s43 = sphi 0, %s27
    %s47 = sphi 0, %s47
    %s49 = sphi 0, %s47
    %s50 = sphi 0, %s49
    %s64 = sphi 0, %s50
    %s68 = sphi 0, %s68
    %s70 = sphi 0, %s68
    %s71 = sphi 0, %s70
    %s85 = sphi 0, %s71
    %s89 = sphi 0, %s89
    %s91 = sphi 0, %s89
    %s92 = sphi 0, %s91
    %s106 = sphi 0, %s92
    %s110 = sphi 0, %s110
    %s112 = sphi 0, %s110
    %s113 = sphi 0, %s112
    %s127 = sphi 0, %s113
    %s131 = sphi 0, %s131
    %s133 = sphi 0, %s131
    %s134 = sphi 0, %s133
    %s148 = sphi 0, %s134
    %s152 = sphi 0, %s152
    %s154 = sphi 0, %s152
    %s155 = sphi 0, %s154
    %s169 = sphi 0, %s155
    %s175 = sphi 0, %s177
    %s178 = sphi 0, %s175
    %s179 = sphi 0, %s178
    %s195 = sphi 0, %s179
  $region4: #{double_conv.1} parent=0 // loop_header_branch
    %16 = sbr.rel (%p14) target = $region8
  $region5: #{double_conv.1} parent=0 // loop_body
    %s18 = ssub.s32 %s13, 1
    %s19 = ssub.s32 %s13, 2
    %s20 = sadd.s32 %s13, 1
    %s21 = ssub.s32 %s13, %s20
    %p22 = scmp.eq.s32.totalorder %s21, 0
    %s24 = sadd.s32 %s23, 1
    %s25 = scalar_select %p22, %s23, %s24
    %p28 = pneg %p22
    %p29 = scmp.eq.s32.totalorder %s13, 1
    %p30 = por %p28, %p29
    %p31 = scmp.ne.s32.totalorder %s23, %s26
    %p32 = scmp.eq.s32.totalorder %s13, 0
    %p33 = por %p31, %p32
    %p34 = scmp.ne.s32.totalorder %s23, %s26
    %p35 = scmp.eq.s32.totalorder %s18, 1
    %p36 = por %p34, %p35
    %p37 = scmp.ne.s32.totalorder %s26, %s27
    %p38 = scmp.eq.s32.totalorder %s18, 0
    %p39 = por %p37, %p38
    %p40 = scmp.ne.s32.totalorder %s26, %s27
    %p41 = scmp.eq.s32.totalorder %s19, 1
    %p42 = por %p40, %p41
    %p44 = scmp.ne.s32.totalorder %s27, %s43
    %p45 = scmp.eq.s32.totalorder %s19, 0
    %p46 = por %p44, %p45
    %s48 = sadd.s32 %s47, 1
    %p51 = scmp.eq.s32.totalorder %s13, 1
    %p52 = scmp.ne.s32.totalorder %s47, %s49
    %p53 = scmp.eq.s32.totalorder %s13, 0
    %p54 = por %p52, %p53
    %p55 = scmp.ne.s32.totalorder %s47, %s49
    %p56 = scmp.eq.s32.totalorder %s18, 1
    %p57 = por %p55, %p56
    %p58 = scmp.ne.s32.totalorder %s49, %s50
    %p59 = scmp.eq.s32.totalorder %s18, 0
    %p60 = por %p58, %p59
    %p61 = scmp.ne.s32.totalorder %s49, %s50
    %p62 = scmp.eq.s32.totalorder %s19, 1
    %p63 = por %p61, %p62
    %p65 = scmp.ne.s32.totalorder %s50, %s64
    %p66 = scmp.eq.s32.totalorder %s19, 0
    %p67 = por %p65, %p66
    %s69 = sadd.s32 %s68, 1
    %p72 = scmp.eq.s32.totalorder %s13, 1
    %p73 = scmp.ne.s32.totalorder %s68, %s70
    %p74 = scmp.eq.s32.totalorder %s13, 0
    %p75 = por %p73, %p74
    %p76 = scmp.ne.s32.totalorder %s68, %s70
    %p77 = scmp.eq.s32.totalorder %s18, 1
    %p78 = por %p76, %p77
    %p79 = scmp.ne.s32.totalorder %s70, %s71
    %p80 = scmp.eq.s32.totalorder %s18, 0
    %p81 = por %p79, %p80
    %p82 = scmp.ne.s32.totalorder %s70, %s71
    %p83 = scmp.eq.s32.totalorder %s19, 1
    %p84 = por %p82, %p83
    %p86 = scmp.ne.s32.totalorder %s71, %s85
    %p87 = scmp.eq.s32.totalorder %s19, 0
    %p88 = por %p86, %p87
    %s90 = sadd.s32 %s89, 1
    %p93 = scmp.eq.s32.totalorder %s13, 1
    %p94 = scmp.ne.s32.totalorder %s89, %s91
    %p95 = scmp.eq.s32.totalorder %s13, 0
    %p96 = por %p94, %p95
    %p97 = scmp.ne.s32.totalorder %s89, %s91
    %p98 = scmp.eq.s32.totalorder %s18, 1
    %p99 = por %p97, %p98
    %p100 = scmp.ne.s32.totalorder %s91, %s92
    %p101 = scmp.eq.s32.totalorder %s18, 0
    %p102 = por %p100, %p101
    %p103 = scmp.ne.s32.totalorder %s91, %s92
    %p104 = scmp.eq.s32.totalorder %s19, 1
    %p105 = por %p103, %p104
    %p107 = scmp.ne.s32.totalorder %s92, %s106
    %p108 = scmp.eq.s32.totalorder %s19, 0
    %p109 = por %p107, %p108
    %s111 = sadd.s32 %s110, 1
    %p114 = scmp.eq.s32.totalorder %s13, 1
    %p115 = scmp.ne.s32.totalorder %s110, %s112
    %p116 = scmp.eq.s32.totalorder %s13, 0
    %p117 = por %p115, %p116
    %p118 = scmp.ne.s32.totalorder %s110, %s112
    %p119 = scmp.eq.s32.totalorder %s18, 1
    %p120 = por %p118, %p119
    %p121 = scmp.ne.s32.totalorder %s112, %s113
    %p122 = scmp.eq.s32.totalorder %s18, 0
    %p123 = por %p121, %p122
    %p124 = scmp.ne.s32.totalorder %s112, %s113
    %p125 = scmp.eq.s32.totalorder %s19, 1
    %p126 = por %p124, %p125
    %p128 = scmp.ne.s32.totalorder %s113, %s127
    %p129 = scmp.eq.s32.totalorder %s19, 0
    %p130 = por %p128, %p129
    %s132 = sadd.s32 %s131, 1
    %p135 = scmp.eq.s32.totalorder %s13, 1
    %p136 = scmp.ne.s32.totalorder %s131, %s133
    %p137 = scmp.eq.s32.totalorder %s13, 0
    %p138 = por %p136, %p137
    %p139 = scmp.ne.s32.totalorder %s131, %s133
    %p140 = scmp.eq.s32.totalorder %s18, 1
    %p141 = por %p139, %p140
    %p142 = scmp.ne.s32.totalorder %s133, %s134
    %p143 = scmp.eq.s32.totalorder %s18, 0
    %p144 = por %p142, %p143
    %p145 = scmp.ne.s32.totalorder %s133, %s134
    %p146 = scmp.eq.s32.totalorder %s19, 1
    %p147 = por %p145, %p146
    %p149 = scmp.ne.s32.totalorder %s134, %s148
    %p150 = scmp.eq.s32.totalorder %s19, 0
    %p151 = por %p149, %p150
    %s153 = sadd.s32 %s152, 1
    %p156 = scmp.eq.s32.totalorder %s13, 1
    %p157 = scmp.ne.s32.totalorder %s152, %s154
    %p158 = scmp.eq.s32.totalorder %s13, 0
    %p159 = por %p157, %p158
    %p160 = scmp.ne.s32.totalorder %s152, %s154
    %p161 = scmp.eq.s32.totalorder %s18, 1
    %p162 = por %p160, %p161
    %p163 = scmp.ne.s32.totalorder %s154, %s155
    %p164 = scmp.eq.s32.totalorder %s18, 0
    %p165 = por %p163, %p164
    %p166 = scmp.ne.s32.totalorder %s154, %s155
    %p167 = scmp.eq.s32.totalorder %s19, 1
    %p168 = por %p166, %p167
    %p170 = scmp.ne.s32.totalorder %s155, %s169
    %p171 = scmp.eq.s32.totalorder %s19, 0
    %p172 = por %p170, %p171
    %s173 = ssub.s32 %s13, %s20
    %p174 = scmp.eq.s32.totalorder %s173, 0
    %s176 = sadd.s32 %s175, 1
    %s177 = scalar_select %p174, %s175, %s176
    %p180 = pneg %p174
    %p181 = scmp.eq.s32.totalorder %s13, 1
    %p182 = por %p180, %p181
    %p183 = scmp.ne.s32.totalorder %s175, %s178
    %p184 = scmp.eq.s32.totalorder %s13, 0
    %p185 = por %p183, %p184
    %p186 = scmp.ne.s32.totalorder %s175, %s178
    %p187 = scmp.eq.s32.totalorder %s18, 1
    %p188 = por %p186, %p187
    %p189 = scmp.ne.s32.totalorder %s178, %s179
    %p190 = scmp.eq.s32.totalorder %s18, 0
    %p191 = por %p189, %p190
    %p192 = scmp.ne.s32.totalorder %s178, %s179
    %p193 = scmp.eq.s32.totalorder %s19, 1
    %p194 = por %p192, %p193
    %p196 = scmp.ne.s32.totalorder %s179, %s195
    %p197 = scmp.eq.s32.totalorder %s19, 0
    %p198 = por %p196, %p197
    %p199 = scmp.le.s32.totalorder 1, %s13
    %p200 = scmp.lt.s32.totalorder %s13, 3
    %p201 = pnand %p199, %p200
    %p202 = pneg %p201
    // Predicated region
    $region9: #{double_conv.1} parent=5 // pred_check
      _
    $region10: #{double_conv.1} parent=5 // pred_check_branch
      %204 = sbr.rel (%p201) target = $region12
    $region11: #{double_conv.1} parent=5 // pred_region
      %s205 = ssub.s32 %s13, 1
      // Predicated region
      $region13: #{double_conv.1} parent=11 // pred_check
        %p206 = pneg %p60
      $region14: #{double_conv.1} parent=11 // pred_check_branch
        %208 = sbr.rel (%p206) target = $region16
      $region15: #{double_conv.1} parent=11 // pred_region
        _
      $region16: #{double_conv.1} parent=11 // pred_fallthru
        _
      // Predicated region
      $region17: #{double_conv.1} parent=11 // pred_check
        %p209 = pneg %p81
      $region18: #{double_conv.1} parent=11 // pred_check_branch
        %211 = sbr.rel (%p209) target = $region20
      $region19: #{double_conv.1} parent=11 // pred_region
        _
      $region20: #{double_conv.1} parent=11 // pred_fallthru
        _
      // Predicated region
      $region21: #{double_conv.1} parent=11 // pred_check
        %p212 = pneg %p102
      $region22: #{double_conv.1} parent=11 // pred_check_branch
        %214 = sbr.rel (%p212) target = $region24
      $region23: #{double_conv.1} parent=11 // pred_region
        _
      $region24: #{double_conv.1} parent=11 // pred_fallthru
        _
      // Predicated region
      $region25: #{double_conv.1} parent=11 // pred_check
        %p215 = pneg %p123
      $region26: #{double_conv.1} parent=11 // pred_check_branch
        %217 = sbr.rel (%p215) target = $region28
      $region27: #{double_conv.1} parent=11 // pred_region
        _
      $region28: #{double_conv.1} parent=11 // pred_fallthru
        _
      // Predicated region
      $region29: #{double_conv.1} parent=11 // pred_check
        %p218 = pneg %p144
      $region30: #{double_conv.1} parent=11 // pred_check_branch
        %220 = sbr.rel (%p218) target = $region32
      $region31: #{double_conv.1} parent=11 // pred_region
        _
      $region32: #{double_conv.1} parent=11 // pred_fallthru
        _
      // Predicated region
      $region33: #{double_conv.1} parent=11 // pred_check
        %p221 = pneg %p165
      $region34: #{double_conv.1} parent=11 // pred_check_branch
        %223 = sbr.rel (%p221) target = $region36
      $region35: #{double_conv.1} parent=11 // pred_region
        _
      $region36: #{double_conv.1} parent=11 // pred_fallthru
        _
    $region12: #{double_conv.1} parent=5 // pred_fallthru
      _
    %p224 = scmp.lt.s32.totalorder %s13, 2
    // Predicated region
    $region37: #{double_conv.1} parent=5 // pred_check
      %p225 = pneg %p224
    $region38: #{double_conv.1} parent=5 // pred_check_branch
      %227 = sbr.rel (%p225) target = $region40
    $region39: #{double_conv.1} parent=5 // pred_region
      // Predicated region
      $region41: #{double_conv.1} parent=39 // pred_check
        %p228 = pneg %p33
      $region42: #{double_conv.1} parent=39 // pred_check_branch
        %230 = sbr.rel (%p228) target = $region44
      $region43: #{double_conv.1} parent=39 // pred_region
        %p231 = scmp.lt.s32.totalorder %s13, 1
        %s232 = scalar_select %p231, %s13, 1
        %s233 = smul.addr %s232, 54
        %s234 = smul.addr %s233, 4
        %s235 = scalar_lea.vmem %s0, %s234
      $region44: #{double_conv.1} parent=39 // pred_fallthru
        _
    $region40: #{double_conv.1} parent=5 // pred_fallthru
      _
    %p236 = scmp.le.s32.totalorder 1, %s13
    %p237 = scmp.lt.s32.totalorder %s13, 3
    %p238 = pnand %p236, %p237
    %p239 = pneg %p238
    // Predicated region
    $region45: #{double_conv.1} parent=5 // pred_check
      _
    $region46: #{double_conv.1} parent=5 // pred_check_branch
      %241 = sbr.rel (%p238) target = $region48
    $region47: #{double_conv.1} parent=5 // pred_region
      %s242 = ssub.s32 %s13, 1
      %p243 = scmp.lt.s32.totalorder %s18, 1
      %s244 = scalar_select %p243, %s18, 1
      %s245 = smul.addr %s244, 54
      %s246 = smul.addr %s245, 4
      %s247 = scalar_lea.vmem %s0, %s246
      %p248 = pneg %p39
      %p249 = pneg %p36
      %p250 = pneg %p60
      %p251 = pneg %p57
      %p252 = pneg %p81
      %p253 = pneg %p78
      %p254 = pneg %p102
      %p255 = pneg %p99
      %p256 = pneg %p123
      %p257 = pneg %p120
      %p258 = pneg %p144
      %p259 = pneg %p141
      %p260 = pneg %p165
      %p261 = pneg %p162
      %p262 = pneg %p191
      %p263 = pneg %p188
      %p264 = scmp.lt.s32.totalorder %s18, 1
      %s265 = scalar_select %p264, %s18, 1
      %s266 = smul.addr %s265, 32
      %s267 = smul.addr %s266, 8
      %s268 = scalar_lea.vmem %s7, %s267
      %p269 = scmp.lt.s32.totalorder %s18, 1
      %s270 = scalar_select %p269, %s18, 1
      %s271 = smul.addr %s270, 54
      %s272 = smul.addr %s271, 4
      %s273 = scalar_lea.vmem %s0, %s272
      %p274 = scmp.lt.s32.totalorder %s18, 1
      %s275 = scalar_select %p274, %s18, 1
      %s276 = smul.addr %s275, 32
      %s277 = smul.addr %s276, 8
      %s278 = scalar_lea.vmem %s7, %s277
      %280 = vst [vmem:[#allocation3] sm:$0xf] 0
      %281 = vst [vmem:[#allocation3 + $0x4] sm:$0xf] 0
      %282 = vst [vmem:[#allocation3 + $0x8] sm:$0x1] 0
      %283 = vst [vmem:[#allocation3 + $0xc] sm:$0xf] 0
      %284 = vst [vmem:[#allocation3 + $0x10] sm:$0xf] 0
      %285 = vst [vmem:[#allocation3 + $0x14] sm:$0x1] 0
      %286 = vst [vmem:[#allocation3 + $0x18] sm:$0xf] 0
      %287 = vst [vmem:[#allocation3 + $0x1c] sm:$0xf] 0
      %288 = vst [vmem:[#allocation3 + $0x20] sm:$0x1] 0
      %289 = vst [vmem:[#allocation3 + $0x24] sm:$0xf] 0
      %290 = vst [vmem:[#allocation3 + $0x28] sm:$0xf] 0
      %291 = vst [vmem:[#allocation3 + $0x2c] sm:$0x1] 0
      %292 = vst [vmem:[#allocation3 + $0x30] sm:$0xf] 0
      %293 = vst [vmem:[#allocation3 + $0x34] sm:$0xf] 0
      %294 = vst [vmem:[#allocation3 + $0x38] sm:$0x1] 0
      %295 = vst [vmem:[#allocation3 + $0x3c] sm:$0xf] 0
      %296 = vst [vmem:[#allocation3 + $0x40] sm:$0xf] 0
      %297 = vst [vmem:[#allocation3 + $0x44] sm:$0x1] 0
      %298 = vst [vmem:[#allocation3 + $0x48] sm:$0xf] 0
      %299 = vst [vmem:[#allocation3 + $0x4c] sm:$0xf] 0
      %300 = vst [vmem:[#allocation3 + $0x50] sm:$0x1] 0
      %301 = vst [vmem:[#allocation3 + $0x54] sm:$0xf] 0
      %302 = vst [vmem:[#allocation3 + $0x58] sm:$0xf] 0
      %303 = vst [vmem:[#allocation3 + $0x5c] sm:$0x1] 0
      %304 = vst [vmem:[#allocation3 + $0x60] sm:$0xf] 0
      %305 = vst [vmem:[#allocation3 + $0x64] sm:$0xf] 0
      %306 = vst [vmem:[#allocation3 + $0x68] sm:$0x1] 0
      %307 = vst [vmem:[#allocation3 + $0x6c] sm:$0xf] 0
      %308 = vst [vmem:[#allocation3 + $0x70] sm:$0xf] 0
      %309 = vst [vmem:[#allocation3 + $0x74] sm:$0x1] 0
      %310 = vst [vmem:[#allocation3 + $0x78] sm:$0xf] 0
      %311 = vst [vmem:[#allocation3 + $0x7c] sm:$0xf] 0
      %312 = vst [vmem:[#allocation3 + $0x80] sm:$0x1] 0
      %313 = vst [vmem:[#allocation3 + $0x84] sm:$0xf] 0
      %314 = vst [vmem:[#allocation3 + $0x88] sm:$0xf] 0
      %315 = vst [vmem:[#allocation3 + $0x8c] sm:$0x1] 0
      %316 = vst [vmem:[#allocation3 + $0x90] sm:$0xf] 0
      %317 = vst [vmem:[#allocation3 + $0x94] sm:$0xf] 0
      %318 = vst [vmem:[#allocation3 + $0x98] sm:$0x1] 0
      %319 = vst [vmem:[#allocation3 + $0x9c] sm:$0xf] 0
      %320 = vst [vmem:[#allocation3 + $0xa0] sm:$0xf] 0
      %321 = vst [vmem:[#allocation3 + $0xa4] sm:$0x1] 0
      %322 = vst [vmem:[#allocation3 + $0xa8] sm:$0xf] 0
      %323 = vst [vmem:[#allocation3 + $0xac] sm:$0xf] 0
      %324 = vst [vmem:[#allocation3 + $0xb0] sm:$0x1] 0
      %325 = vst [vmem:[#allocation3 + $0xb4] sm:$0xf] 0
      %326 = vst [vmem:[#allocation3 + $0xb8] sm:$0xf] 0
      %327 = vst [vmem:[#allocation3 + $0xbc] sm:$0x1] 0
      %328 = vst [vmem:[#allocation3 + $0xc0] sm:$0xf] 0
      %329 = vst [vmem:[#allocation3 + $0xc4] sm:$0xf] 0
      %330 = vst [vmem:[#allocation3 + $0xc8] sm:$0x1] 0
      %331 = vst [vmem:[#allocation3 + $0xcc] sm:$0xf] 0
      %332 = vst [vmem:[#allocation3 + $0xd0] sm:$0xf] 0
      %333 = vst [vmem:[#allocation3 + $0xd4] sm:$0x1] 0
      %v334 = vld [vmem:[%s273] sm:$0xf]
      %v335 = vld [vmem:[%s273 + $0x4] sm:$0xf]
      %v336 = vld [vmem:[%s273 + $0x8] sm:$0x1]
      %v337 = vld [vmem:[%s273 + $0xc] sm:$0xf]
      %v338 = vld [vmem:[%s273 + $0x10] sm:$0xf]
      %v339 = vld [vmem:[%s273 + $0x14] sm:$0x1]
      %v340 = vld [vmem:[%s273 + $0x18] sm:$0xf]
      %v341 = vld [vmem:[%s273 + $0x1c] sm:$0xf]
      %v342 = vld [vmem:[%s273 + $0x20] sm:$0x1]
      %v343 = vld [vmem:[%s273 + $0x24] sm:$0xf]
      %v344 = vld [vmem:[%s273 + $0x28] sm:$0xf]
      %v345 = vld [vmem:[%s273 + $0x2c] sm:$0x1]
      %v346 = vld [vmem:[%s273 + $0x30] sm:$0xf]
      %v347 = vld [vmem:[%s273 + $0x34] sm:$0xf]
      %v348 = vld [vmem:[%s273 + $0x38] sm:$0x1]
      %v349 = vld [vmem:[%s273 + $0x3c] sm:$0xf]
      %v350 = vld [vmem:[%s273 + $0x40] sm:$0xf]
      %v351 = vld [vmem:[%s273 + $0x44] sm:$0x1]
      %v352 = vld [vmem:[%s273 + $0x48] sm:$0xf]
      %v353 = vld [vmem:[%s273 + $0x4c] sm:$0xf]
      %v354 = vld [vmem:[%s273 + $0x50] sm:$0x1]
      %v355 = vld [vmem:[%s273 + $0x54] sm:$0xf]
      %v356 = vld [vmem:[%s273 + $0x58] sm:$0xf]
      %v357 = vld [vmem:[%s273 + $0x5c] sm:$0x1]
      %v358 = vld [vmem:[%s273 + $0x60] sm:$0xf]
      %v359 = vld [vmem:[%s273 + $0x64] sm:$0xf]
      %v360 = vld [vmem:[%s273 + $0x68] sm:$0x1]
      %v361 = vld [vmem:[%s273 + $0x6c] sm:$0xf]
      %v362 = vld [vmem:[%s273 + $0x70] sm:$0xf]
      %v363 = vld [vmem:[%s273 + $0x74] sm:$0x1]
      %v364 = vld [vmem:[%s273 + $0x78] sm:$0xf]
      %v365 = vld [vmem:[%s273 + $0x7c] sm:$0xf]
      %v366 = vld [vmem:[%s273 + $0x80] sm:$0x1]
      %v367 = vld [vmem:[%s273 + $0x84] sm:$0xf]
      %v368 = vld [vmem:[%s273 + $0x88] sm:$0xf]
      %v369 = vld [vmem:[%s273 + $0x8c] sm:$0x1]
      %v370 = vld [vmem:[%s273 + $0x90] sm:$0xf]
      %v371 = vld [vmem:[%s273 + $0x94] sm:$0xf]
      %v372 = vld [vmem:[%s273 + $0x98] sm:$0x1]
      %v373 = vld [vmem:[%s273 + $0x9c] sm:$0xf]
      %v374 = vld [vmem:[%s273 + $0xa0] sm:$0xf]
      %v375 = vld [vmem:[%s273 + $0xa4] sm:$0x1]
      %v376 = vld [vmem:[%s273 + $0xa8] sm:$0xf]
      %v377 = vld [vmem:[%s273 + $0xac] sm:$0xf]
      %v378 = vld [vmem:[%s273 + $0xb0] sm:$0x1]
      %v379 = vld [vmem:[%s273 + $0xb4] sm:$0xf]
      %v380 = vld [vmem:[%s273 + $0xb8] sm:$0xf]
      %v381 = vld [vmem:[%s273 + $0xbc] sm:$0x1]
      %v382 = vld [vmem:[%s273 + $0xc0] sm:$0xf]
      %v383 = vld [vmem:[%s273 + $0xc4] sm:$0xf]
      %v384 = vld [vmem:[%s273 + $0xc8] sm:$0x1]
      %v385 = vld [vmem:[%s273 + $0xcc] sm:$0xf]
      %v386 = vld [vmem:[%s273 + $0xd0] sm:$0xf]
      %v387 = vld [vmem:[%s273 + $0xd4] sm:$0x1]
      %v388 = vld [vmem:[%s1] sm:$0x3]
      %v421 = vunpack.c.l.b16 %v334
      %v422 = vunpack.c.l.b16 %v335
      %v423 = vunpack.c.l.b16 %v337
      %v424 = vunpack.c.l.b16 %v338
      %v425 = vunpack.c.l.b16 %v340
      %v426 = vunpack.c.l.b16 %v341
      %v427 = vunpack.c.l.b16 %v343
      %v428 = vunpack.c.l.b16 %v344
      %v429 = vunpack.c.l.b16 %v346
      %v430 = vunpack.c.l.b16 %v347
      %v431 = vunpack.c.l.b16 %v349
      %v432 = vunpack.c.l.b16 %v350
      %v433 = vunpack.c.l.b16 %v352
      %v434 = vunpack.c.l.b16 %v353
      %v435 = vunpack.c.l.b16 %v355
      %v436 = vunpack.c.l.b16 %v356
      %v437 = vunpack.c.l.b16 %v358
      %v438 = vunpack.c.l.b16 %v359
      %v439 = vunpack.c.l.b16 %v361
      %v440 = vunpack.c.l.b16 %v362
      %v441 = vunpack.c.l.b16 %v364
      %v442 = vunpack.c.l.b16 %v365
      %v443 = vunpack.c.l.b16 %v367
      %v444 = vunpack.c.l.b16 %v368
      %v445 = vunpack.c.l.b16 %v370
      %v446 = vunpack.c.l.b16 %v371
      %v447 = vunpack.c.l.b16 %v373
      %v448 = vunpack.c.l.b16 %v374
      %v449 = vunpack.c.l.b16 %v376
      %v450 = vunpack.c.l.b16 %v377
      %v451 = vunpack.c.l.b16 %v379
      %v452 = vunpack.c.l.b16 %v380
      %v453 = vpack.c.b16 %v422, %v421
      %v454 = vpack.c.b16 %v424, %v423
      %v455 = vpack.c.b16 %v426, %v425
      %v456 = vpack.c.b16 %v428, %v427
      %v457 = vpack.c.b16 %v430, %v429
      %v458 = vpack.c.b16 %v432, %v431
      %v459 = vpack.c.b16 %v434, %v433
      %v460 = vpack.c.b16 %v436, %v435
      %v461 = vpack.c.b16 %v438, %v437
      %v462 = vpack.c.b16 %v440, %v439
      %v463 = vpack.c.b16 %v442, %v441
      %v464 = vpack.c.b16 %v444, %v443
      %v465 = vpack.c.b16 %v446, %v445
      %v466 = vpack.c.b16 %v448, %v447
      %v467 = vpack.c.b16 %v450, %v449
      %v468 = vpack.c.b16 %v452, %v451
      %vm469 = vcmask 31744
      %v471 = vsel %vm469, %v453, 0
      %v474 = vsel %vm469, %v454, 0
      %v477 = vsel %vm469, %v455, 0
      %v480 = vsel %vm469, %v456, 0
      %v483 = vsel %vm469, %v457, 0
      %v486 = vsel %vm469, %v458, 0
      %v489 = vsel %vm469, %v459, 0
      %v492 = vsel %vm469, %v460, 0
      %v495 = vsel %vm469, %v461, 0
      %v498 = vsel %vm469, %v462, 0
      %v501 = vsel %vm469, %v463, 0
      %v504 = vsel %vm469, %v464, 0
      %v507 = vsel %vm469, %v465, 0
      %v510 = vsel %vm469, %v466, 0
      %v513 = vsel %vm469, %v467, 0
      %v516 = vsel %vm469, %v468, 0
      %vm518 = vcmask 1041408
      %v520 = vsel %vm518, %v388, 0
      %522 = vmatprep.subr.bf16.mxu0 0
      %523 = vmatpush1.bf16.msra.mxu0 %v520
      %524 = vmatprep.subr.bf16.mxu0 0
      %525 = vmatpush1.bf16.msra.mxu0 0
      %526 = vmatprep.subr.bf16.mxu0 0
      %527 = vmatpush1.bf16.msra.mxu0 0
      %528 = vmatprep.subr.bf16.mxu0 0
      %529 = vmatpush1.bf16.msra.mxu0 0
      %530 = vmatprep.subr.bf16.mxu0 0
      %531 = vmatpush1.bf16.msra.mxu0 0
      %532 = vmatprep.subr.bf16.mxu0 0
      %533 = vmatpush1.bf16.msra.mxu0 0
      %534 = vmatprep.subr.bf16.mxu0 0
      %535 = vmatpush1.bf16.msra.mxu0 0
      %536 = vmatprep.subr.bf16.mxu0 0
      %537 = vmatpush1.bf16.msra.mxu0 0
      %538 = vmatprep.subr.bf16.mxu0 0
      %539 = vmatpush1.bf16.msra.mxu0 0
      %540 = vmatprep.subr.bf16.mxu0 0
      %541 = vmatpush1.bf16.msra.mxu0 0
      %542 = vmatprep.subr.bf16.mxu0 0
      %543 = vmatpush1.bf16.msra.mxu0 0
      %544 = vmatprep.subr.bf16.mxu0 0
      %545 = vmatpush1.bf16.msra.mxu0 0
      %546 = vmatprep.subr.bf16.mxu0 0
      %547 = vmatpush1.bf16.msra.mxu0 0
      %548 = vmatprep.subr.bf16.mxu0 0
      %549 = vmatpush1.bf16.msra.mxu0 0
      %550 = vmatprep.subr.bf16.mxu0 0
      %551 = vmatpush1.bf16.msra.mxu0 0
      %552 = vmatprep.subr.bf16.mxu0 0
      %553 = vmatpush1.bf16.msra.mxu0 0
      %554 = vmatprep.mubr.bf16.mxu0 0
      %555 = vmatmul.mubr.bf16.gmra.mrb[0].mxu0 %v471
      %v556 = vpop.f32.mrb[0].mxu0
      %v557 = vadd.f32 0.0, %v556
      %v558 = vpop.f32.mrb[0].mxu0
      %v559 = vpop.f32.mrb[0].mxu0
      %v560 = vadd.f32 0.0, %v559
      %v561 = vpop.f32.mrb[0].mxu0
      %562 = vmatprep.mubr.bf16.mxu0 0
      %563 = vmatmul.mubr.bf16.gmra.mrb[0].mxu0 %v474
      %v564 = vpop.f32.mrb[0].mxu0
      %v565 = vadd.f32 0.0, %v564
      %v566 = vpop.f32.mrb[0].mxu0
      %v567 = vpop.f32.mrb[0].mxu0
      %v568 = vadd.f32 0.0, %v567
      %v569 = vpop.f32.mrb[0].mxu0
      %570 = vmatprep.mubr.bf16.mxu0 0
      %571 = vmatmul.mubr.bf16.gmra.mrb[0].mxu0 %v477
      %v572 = vpop.f32.mrb[0].mxu0
      %v573 = vadd.f32 0.0, %v572
      %v574 = vpop.f32.mrb[0].mxu0
      %v575 = vpop.f32.mrb[0].mxu0
      %v576 = vadd.f32 0.0, %v575
      %v577 = vpop.f32.mrb[0].mxu0
      %578 = vmatprep.mubr.bf16.mxu0 0
      %579 = vmatmul.mubr.bf16.gmra.mrb[0].mxu0 %v480
      %v580 = vpop.f32.mrb[0].mxu0
      %v581 = vadd.f32 0.0, %v580
      %v582 = vpop.f32.mrb[0].mxu0
      %v583 = vpop.f32.mrb[0].mxu0
      %v584 = vadd.f32 0.0, %v583
      %v585 = vpop.f32.mrb[0].mxu0
      %586 = vmatprep.mubr.bf16.mxu0 0
      %587 = vmatmul.mubr.bf16.gmra.mrb[0].mxu0 %v483
      %v588 = vpop.f32.mrb[0].mxu0
      %v589 = vadd.f32 0.0, %v588
      %v590 = vpop.f32.mrb[0].mxu0
      %v591 = vpop.f32.mrb[0].mxu0
      %v592 = vadd.f32 0.0, %v591
      %v593 = vpop.f32.mrb[0].mxu0
      %594 = vmatprep.mubr.bf16.mxu0 0
      %595 = vmatmul.mubr.bf16.gmra.mrb[0].mxu0 %v486
      %v596 = vpop.f32.mrb[0].mxu0
      %v597 = vadd.f32 0.0, %v596
      %v598 = vpop.f32.mrb[0].mxu0
      %v599 = vpop.f32.mrb[0].mxu0
      %v600 = vadd.f32 0.0, %v599
      %v601 = vpop.f32.mrb[0].mxu0
      %602 = vmatprep.mubr.bf16.mxu0 0
      %603 = vmatmul.mubr.bf16.gmra.mrb[0].mxu0 %v489
      %v604 = vpop.f32.mrb[0].mxu0
      %v605 = vadd.f32 0.0, %v604
      %v606 = vpop.f32.mrb[0].mxu0
      %v607 = vpop.f32.mrb[0].mxu0
      %v608 = vadd.f32 0.0, %v607
      %v609 = vpop.f32.mrb[0].mxu0
      %610 = vmatprep.mubr.bf16.mxu0 0
      %611 = vmatmul.mubr.bf16.gmra.mrb[0].mxu0 %v492
      %v612 = vpop.f32.mrb[0].mxu0
      %v613 = vadd.f32 0.0, %v612
      %v614 = vpop.f32.mrb[0].mxu0
      %v615 = vpop.f32.mrb[0].mxu0
      %v616 = vadd.f32 0.0, %v615
      %v617 = vpop.f32.mrb[0].mxu0
      %618 = vmatprep.mubr.bf16.mxu0 0
      %619 = vmatmul.mubr.bf16.gmra.mrb[0].mxu0 %v495
      %v620 = vpop.f32.mrb[0].mxu0
      %v621 = vadd.f32 0.0, %v620
      %v622 = vpop.f32.mrb[0].mxu0
      %v623 = vpop.f32.mrb[0].mxu0
      %v624 = vadd.f32 0.0, %v623
      %v625 = vpop.f32.mrb[0].mxu0
      %626 = vmatprep.mubr.bf16.mxu0 0
      %627 = vmatmul.mubr.bf16.gmra.mrb[0].mxu0 %v498
      %v628 = vpop.f32.mrb[0].mxu0
      %v629 = vadd.f32 0.0, %v628
      %v630 = vpop.f32.mrb[0].mxu0
      %v631 = vpop.f32.mrb[0].mxu0
      %v632 = vadd.f32 0.0, %v631
      %v633 = vpop.f32.mrb[0].mxu0
      %634 = vmatprep.mubr.bf16.mxu0 0
      %635 = vmatmul.mubr.bf16.gmra.mrb[0].mxu0 %v501
      %v636 = vpop.f32.mrb[0].mxu0
      %v637 = vadd.f32 0.0, %v636
      %v638 = vpop.f32.mrb[0].mxu0
      %v639 = vpop.f32.mrb[0].mxu0
      %v640 = vadd.f32 0.0, %v639
      %v641 = vpop.f32.mrb[0].mxu0
      %642 = vmatprep.mubr.bf16.mxu0 0
      %643 = vmatmul.mubr.bf16.gmra.mrb[0].mxu0 %v504
      %v644 = vpop.f32.mrb[0].mxu0
      %v645 = vadd.f32 0.0, %v644
      %v646 = vpop.f32.mrb[0].mxu0
      %v647 = vpop.f32.mrb[0].mxu0
      %v648 = vadd.f32 0.0, %v647
      %v649 = vpop.f32.mrb[0].mxu0
      %650 = vmatprep.mubr.bf16.mxu0 0
      %651 = vmatmul.mubr.bf16.gmra.mrb[0].mxu0 %v507
      %v652 = vpop.f32.mrb[0].mxu0
      %v653 = vadd.f32 0.0, %v652
      %v654 = vpop.f32.mrb[0].mxu0
      %v655 = vpop.f32.mrb[0].mxu0
      %v656 = vadd.f32 0.0, %v655
      %v657 = vpop.f32.mrb[0].mxu0
      %658 = vmatprep.mubr.bf16.mxu0 0
      %659 = vmatmul.mubr.bf16.gmra.mrb[0].mxu0 %v510
      %v660 = vpop.f32.mrb[0].mxu0
      %v661 = vadd.f32 0.0, %v660
      %v662 = vpop.f32.mrb[0].mxu0
      %v663 = vpop.f32.mrb[0].mxu0
      %v664 = vadd.f32 0.0, %v663
      %v665 = vpop.f32.mrb[0].mxu0
      %666 = vmatprep.mubr.bf16.mxu0 0
      %667 = vmatmul.mubr.bf16.gmra.mrb[0].mxu0 %v513
      %v668 = vpop.f32.mrb[0].mxu0
      %v669 = vadd.f32 0.0, %v668
      %v670 = vpop.f32.mrb[0].mxu0
      %v671 = vpop.f32.mrb[0].mxu0
      %v672 = vadd.f32 0.0, %v671
      %v673 = vpop.f32.mrb[0].mxu0
      %674 = vmatprep.mubr.bf16.mxu0 0
      %675 = vmatmul.mubr.bf16.gmra.mrb[0].mxu0 %v516
      %v676 = vpop.f32.mrb[0].mxu0
      %v677 = vadd.f32 0.0, %v676
      %v678 = vpop.f32.mrb[0].mxu0
      %v679 = vpop.f32.mrb[0].mxu0
      %v680 = vadd.f32 0.0, %v679
      %v681 = vpop.f32.mrb[0].mxu0
      %682 = vdwg.mxu0
      %683 = vst [vmem:[#allocation2] sm:$0xff] %v557
      %684 = vst [vmem:[#allocation2 + $0x8] sm:$0xff] %v560
      %685 = vst [vmem:[#allocation2 + $0x10] sm:$0xff] %v565
      %686 = vst [vmem:[#allocation2 + $0x18] sm:$0xff] %v568
      %687 = vst [vmem:[#allocation2 + $0x20] sm:$0xff] %v573
      %688 = vst [vmem:[#allocation2 + $0x28] sm:$0xff] %v576
      %689 = vst [vmem:[#allocation2 + $0x30] sm:$0xff] %v581
      %690 = vst [vmem:[#allocation2 + $0x38] sm:$0xff] %v584
      %691 = vst [vmem:[#allocation2 + $0x40] sm:$0xff] %v589
      %692 = vst [vmem:[#allocation2 + $0x48] sm:$0xff] %v592
      %693 = vst [vmem:[#allocation2 + $0x50] sm:$0xff] %v597
      %694 = vst [vmem:[#allocation2 + $0x58] sm:$0xff] %v600
      %695 = vst [vmem:[#allocation2 + $0x60] sm:$0xff] %v605
      %696 = vst [vmem:[#allocation2 + $0x68] sm:$0xff] %v608
      %697 = vst [vmem:[#allocation2 + $0x70] sm:$0xff] %v613
      %698 = vst [vmem:[#allocation2 + $0x78] sm:$0xff] %v616
      %699 = vst [vmem:[#allocation2 + $0x80] sm:$0xff] %v621
      %700 = vst [vmem:[#allocation2 + $0x88] sm:$0xff] %v624
      %701 = vst [vmem:[#allocation2 + $0x90] sm:$0xff] %v629
      %702 = vst [vmem:[#allocation2 + $0x98] sm:$0xff] %v632
      %703 = vst [vmem:[#allocation2 + $0xa0] sm:$0xff] %v637
      %704 = vst [vmem:[#allocation2 + $0xa8] sm:$0xff] %v640
      %705 = vst [vmem:[#allocation2 + $0xb0] sm:$0xff] %v645
      %706 = vst [vmem:[#allocation2 + $0xb8] sm:$0xff] %v648
      %707 = vst [vmem:[#allocation2 + $0xc0] sm:$0xff] %v653
      %708 = vst [vmem:[#allocation2 + $0xc8] sm:$0xff] %v656
      %709 = vst [vmem:[#allocation2 + $0xd0] sm:$0xff] %v661
      %710 = vst [vmem:[#allocation2 + $0xd8] sm:$0xff] %v664
      %711 = vst [vmem:[#allocation2 + $0xe0] sm:$0xff] %v669
      %712 = vst [vmem:[#allocation2 + $0xe8] sm:$0xff] %v672
      %713 = vst [vmem:[#allocation2 + $0xf0] sm:$0xff] %v677
      %714 = vst [vmem:[#allocation2 + $0xf8] sm:$0xff] %v680
      %s715 = scalar_lea.vmem %s1, 6
      %v716 = vld [vmem:[%s715] sm:$0x3]
      %v719 = vunpack.c.l.b16 %v382
      %v720 = vunpack.c.l.b16 %v383
      %v721 = vpack.c.b16 %v720, %v719
      %v723 = vsel %vm469, %v721, 0
      %v726 = vsel %vm518, %v716, 0
      %728 = vmatprep.subr.bf16.mxu0 0
      %729 = vmatpush1.bf16.msra.mxu0 %v726
      %730 = vmatprep.subr.bf16.mxu0 0
      %731 = vmatpush1.bf16.msra.mxu0 0
      %732 = vmatprep.subr.bf16.mxu0 0
      %733 = vmatpush1.bf16.msra.mxu0 0
      %734 = vmatprep.subr.bf16.mxu0 0
      %735 = vmatpush1.bf16.msra.mxu0 0
      %736 = vmatprep.subr.bf16.mxu0 0
      %737 = vmatpush1.bf16.msra.mxu0 0
      %738 = vmatprep.subr.bf16.mxu0 0
      %739 = vmatpush1.bf16.msra.mxu0 0
      %740 = vmatprep.subr.bf16.mxu0 0
      %741 = vmatpush1.bf16.msra.mxu0 0
      %742 = vmatprep.subr.bf16.mxu0 0
      %743 = vmatpush1.bf16.msra.mxu0 0
      %744 = vmatprep.subr.bf16.mxu0 0
      %745 = vmatpush1.bf16.msra.mxu0 0
      %746 = vmatprep.subr.bf16.mxu0 0
      %747 = vmatpush1.bf16.msra.mxu0 0
      %748 = vmatprep.subr.bf16.mxu0 0
      %749 = vmatpush1.bf16.msra.mxu0 0
      %750 = vmatprep.subr.bf16.mxu0 0
      %751 = vmatpush1.bf16.msra.mxu0 0
      %752 = vmatprep.subr.bf16.mxu0 0
      %753 = vmatpush1.bf16.msra.mxu0 0
      %754 = vmatprep.subr.bf16.mxu0 0
      %755 = vmatpush1.bf16.msra.mxu0 0
      %756 = vmatprep.subr.bf16.mxu0 0
      %757 = vmatpush1.bf16.msra.mxu0 0
      %758 = vmatprep.subr.bf16.mxu0 0
      %759 = vmatpush1.bf16.msra.mxu0 0
      %760 = vmatprep.mubr.bf16.mxu0 0
      %761 = vmatmul.mubr.bf16.gmra.mrb[0].mxu0 %v474
      %v762 = vpop.f32.mrb[0].mxu0
      %v763 = vadd.f32 0.0, %v762
      %v764 = vpop.f32.mrb[0].mxu0
      %v765 = vpop.f32.mrb[0].mxu0
      %v766 = vadd.f32 0.0, %v765
      %v767 = vpop.f32.mrb[0].mxu0
      %768 = vmatprep.mubr.bf16.mxu0 0
      %769 = vmatmul.mubr.bf16.gmra.mrb[0].mxu0 %v477
      %v770 = vpop.f32.mrb[0].mxu0
      %v771 = vadd.f32 0.0, %v770
      %v772 = vpop.f32.mrb[0].mxu0
      %v773 = vpop.f32.mrb[0].mxu0
      %v774 = vadd.f32 0.0, %v773
      %v775 = vpop.f32.mrb[0].mxu0
      %776 = vmatprep.mubr.bf16.mxu0 0
      %777 = vmatmul.mubr.bf16.gmra.mrb[0].mxu0 %v480
      %v778 = vpop.f32.mrb[0].mxu0
      %v779 = vadd.f32 0.0, %v778
      %v780 = vpop.f32.mrb[0].mxu0
      %v781 = vpop.f32.mrb[0].mxu0
      %v782 = vadd.f32 0.0, %v781
      %v783 = vpop.f32.mrb[0].mxu0
      %784 = vmatprep.mubr.bf16.mxu0 0
      %785 = vmatmul.mubr.bf16.gmra.mrb[0].mxu0 %v483
      %v786 = vpop.f32.mrb[0].mxu0
      %v787 = vadd.f32 0.0, %v786
      %v788 = vpop.f32.mrb[0].mxu0
      %v789 = vpop.f32.mrb[0].mxu0
      %v790 = vadd.f32 0.0, %v789
      %v791 = vpop.f32.mrb[0].mxu0
      %792 = vmatprep.mubr.bf16.mxu0 0
      %793 = vmatmul.mubr.bf16.gmra.mrb[0].mxu0 %v486
      %v794 = vpop.f32.mrb[0].mxu0
      %v795 = vadd.f32 0.0, %v794
      %v796 = vpop.f32.mrb[0].mxu0
      %v797 = vpop.f32.mrb[0].mxu0
      %v798 = vadd.f32 0.0, %v797
      %v799 = vpop.f32.mrb[0].mxu0
      %800 = vmatprep.mubr.bf16.mxu0 0
      %801 = vmatmul.mubr.bf16.gmra.mrb[0].mxu0 %v489
      %v802 = vpop.f32.mrb[0].mxu0
      %v803 = vadd.f32 0.0, %v802
      %v804 = vpop.f32.mrb[0].mxu0
      %v805 = vpop.f32.mrb[0].mxu0
      %v806 = vadd.f32 0.0, %v805
      %v807 = vpop.f32.mrb[0].mxu0
      %808 = vmatprep.mubr.bf16.mxu0 0
      %809 = vmatmul.mubr.bf16.gmra.mrb[0].mxu0 %v492
      %v810 = vpop.f32.mrb[0].mxu0
      %v811 = vadd.f32 0.0, %v810
      %v812 = vpop.f32.mrb[0].mxu0
      %v813 = vpop.f32.mrb[0].mxu0
      %v814 = vadd.f32 0.0, %v813
      %v815 = vpop.f32.mrb[0].mxu0
      %816 = vmatprep.mubr.bf16.mxu0 0
      %817 = vmatmul.mubr.bf16.gmra.mrb[0].mxu0 %v495
      %v818 = vpop.f32.mrb[0].mxu0
      %v819 = vadd.f32 0.0, %v818
      %v820 = vpop.f32.mrb[0].mxu0
      %v821 = vpop.f32.mrb[0].mxu0
      %v822 = vadd.f32 0.0, %v821
      %v823 = vpop.f32.mrb[0].mxu0
      %824 = vmatprep.mubr.bf16.mxu0 0
      %825 = vmatmul.mubr.bf16.gmra.mrb[0].mxu0 %v498
      %v826 = vpop.f32.mrb[0].mxu0
      %v827 = vadd.f32 0.0, %v826
      %v828 = vpop.f32.mrb[0].mxu0
      %v829 = vpop.f32.mrb[0].mxu0
      %v830 = vadd.f32 0.0, %v829
      %v831 = vpop.f32.mrb[0].mxu0
      %832 = vmatprep.mubr.bf16.mxu0 0
      %833 = vmatmul.mubr.bf16.gmra.mrb[0].mxu0 %v501
      %v834 = vpop.f32.mrb[0].mxu0
      %v835 = vadd.f32 0.0, %v834
      %v836 = vpop.f32.mrb[0].mxu0
      %v837 = vpop.f32.mrb[0].mxu0
      %v838 = vadd.f32 0.0, %v837
      %v839 = vpop.f32.mrb[0].mxu0
      %840 = vmatprep.mubr.bf16.mxu0 0
      %841 = vmatmul.mubr.bf16.gmra.mrb[0].mxu0 %v504
      %v842 = vpop.f32.mrb[0].mxu0
      %v843 = vadd.f32 0.0, %v842
      %v844 = vpop.f32.mrb[0].mxu0
      %v845 = vpop.f32.mrb[0].mxu0
      %v846 = vadd.f32 0.0, %v845
      %v847 = vpop.f32.mrb[0].mxu0
      %848 = vmatprep.mubr.bf16.mxu0 0
      %849 = vmatmul.mubr.bf16.gmra.mrb[0].mxu0 %v507
      %v850 = vpop.f32.mrb[0].mxu0
      %v851 = vadd.f32 0.0, %v850
      %v852 = vpop.f32.mrb[0].mxu0
      %v853 = vpop.f32.mrb[0].mxu0
      %v854 = vadd.f32 0.0, %v853
      %v855 = vpop.f32.mrb[0].mxu0
      %856 = vmatprep.mubr.bf16.mxu0 0
      %857 = vmatmul.mubr.bf16.gmra.mrb[0].mxu0 %v510
      %v858 = vpop.f32.mrb[0].mxu0
      %v859 = vadd.f32 0.0, %v858
      %v860 = vpop.f32.mrb[0].mxu0
      %v861 = vpop.f32.mrb[0].mxu0
      %v862 = vadd.f32 0.0, %v861
      %v863 = vpop.f32.mrb[0].mxu0
      %864 = vmatprep.mubr.bf16.mxu0 0
      %865 = vmatmul.mubr.bf16.gmra.mrb[0].mxu0 %v513
      %v866 = vpop.f32.mrb[0].mxu0
      %v867 = vadd.f32 0.0, %v866
      %v868 = vpop.f32.mrb[0].mxu0
      %v869 = vpop.f32.mrb[0].mxu0
      %v870 = vadd.f32 0.0, %v869
      %v871 = vpop.f32.mrb[0].mxu0
      %872 = vmatprep.mubr.bf16.mxu0 0
      %873 = vmatmul.mubr.bf16.gmra.mrb[0].mxu0 %v516
      %v874 = vpop.f32.mrb[0].mxu0
      %v875 = vadd.f32 0.0, %v874
      %v876 = vpop.f32.mrb[0].mxu0
      %v877 = vpop.f32.mrb[0].mxu0
      %v878 = vadd.f32 0.0, %v877
      %v879 = vpop.f32.mrb[0].mxu0
      %880 = vmatprep.mubr.bf16.mxu0 0
      %881 = vmatmul.mubr.bf16.gmra.mrb[0].mxu0 %v723
      %v882 = vpop.f32.mrb[0].mxu0
      %v883 = vadd.f32 0.0, %v882
      %v884 = vpop.f32.mrb[0].mxu0
      %v885 = vpop.f32.mrb[0].mxu0
      %v886 = vadd.f32 0.0, %v885
      %v887 = vpop.f32.mrb[0].mxu0
      %888 = vdwg.mxu0
      %v889 = vld [vmem:[#allocation2] sm:$0xff]
      %v890 = vld [vmem:[#allocation2 + $0x8] sm:$0xff]
      %v891 = vld [vmem:[#allocation2 + $0x10] sm:$0xff]
      %v892 = vld [vmem:[#allocation2 + $0x18] sm:$0xff]
      %v893 = vld [vmem:[#allocation2 + $0x20] sm:$0xff]
      %v894 = vld [vmem:[#allocation2 + $0x28] sm:$0xff]
      %v895 = vld [vmem:[#allocation2 + $0x30] sm:$0xff]
      %v896 = vld [vmem:[#allocation2 + $0x38] sm:$0xff]
      %v897 = vld [vmem:[#allocation2 + $0x40] sm:$0xff]
      %v898 = vld [vmem:[#allocation2 + $0x48] sm:$0xff]
      %v899 = vld [vmem:[#allocation2 + $0x50] sm:$0xff]
      %v900 = vld [vmem:[#allocation2 + $0x58] sm:$0xff]
      %v901 = vld [vmem:[#allocation2 + $0x60] sm:$0xff]
      %v902 = vld [vmem:[#allocation2 + $0x68] sm:$0xff]
      %v903 = vld [vmem:[#allocation2 + $0x70] sm:$0xff]
      %v904 = vld [vmem:[#allocation2 + $0x78] sm:$0xff]
      %v905 = vld [vmem:[#allocation2 + $0x80] sm:$0xff]
      %v906 = vld [vmem:[#allocation2 + $0x88] sm:$0xff]
      %v907 = vld [vmem:[#allocation2 + $0x90] sm:$0xff]
      %v908 = vld [vmem:[#allocation2 + $0x98] sm:$0xff]
      %v909 = vld [vmem:[#allocation2 + $0xa0] sm:$0xff]
      %v910 = vld [vmem:[#allocation2 + $0xa8] sm:$0xff]
      %v911 = vld [vmem:[#allocation2 + $0xb0] sm:$0xff]
      %v912 = vld [vmem:[#allocation2 + $0xb8] sm:$0xff]
      %v913 = vld [vmem:[#allocation2 + $0xc0] sm:$0xff]
      %v914 = vld [vmem:[#allocation2 + $0xc8] sm:$0xff]
      %v915 = vld [vmem:[#allocation2 + $0xd0] sm:$0xff]
      %v916 = vld [vmem:[#allocation2 + $0xd8] sm:$0xff]
      %v917 = vld [vmem:[#allocation2 + $0xe0] sm:$0xff]
      %v918 = vld [vmem:[#allocation2 + $0xe8] sm:$0xff]
      %v919 = vld [vmem:[#allocation2 + $0xf0] sm:$0xff]
      %v920 = vld [vmem:[#allocation2 + $0xf8] sm:$0xff]
      %v921 = vadd.f32 %v889, %v763
      %v922 = vadd.f32 %v890, %v766
      %v923 = vadd.f32 %v891, %v771
      %v924 = vadd.f32 %v892, %v774
      %v925 = vadd.f32 %v893, %v779
      %v926 = vadd.f32 %v894, %v782
      %v927 = vadd.f32 %v895, %v787
      %v928 = vadd.f32 %v896, %v790
      %v929 = vadd.f32 %v897, %v795
      %v930 = vadd.f32 %v898, %v798
      %v931 = vadd.f32 %v899, %v803
      %v932 = vadd.f32 %v900, %v806
      %v933 = vadd.f32 %v901, %v811
      %v934 = vadd.f32 %v902, %v814
      %v935 = vadd.f32 %v903, %v819
      %v936 = vadd.f32 %v904, %v822
      %v937 = vadd.f32 %v905, %v827
      %v938 = vadd.f32 %v906, %v830
      %v939 = vadd.f32 %v907, %v835
      %v940 = vadd.f32 %v908, %v838
      %v941 = vadd.f32 %v909, %v843
      %v942 = vadd.f32 %v910, %v846
      %v943 = vadd.f32 %v911, %v851
      %v944 = vadd.f32 %v912, %v854
      %v945 = vadd.f32 %v913, %v859
      %v946 = vadd.f32 %v914, %v862
      %v947 = vadd.f32 %v915, %v867
      %v948 = vadd.f32 %v916, %v870
      %v949 = vadd.f32 %v917, %v875
      %v950 = vadd.f32 %v918, %v878
      %v951 = vadd.f32 %v919, %v883
      %v952 = vadd.f32 %v920, %v886
      %953 = vst [vmem:[#allocation2] sm:$0xff] %v921
      %954 = vst [vmem:[#allocation2 + $0x8] sm:$0xff] %v922
      %955 = vst [vmem:[#allocation2 + $0x10] sm:$0xff] %v923
      %956 = vst [vmem:[#allocation2 + $0x18] sm:$0xff] %v924
      %957 = vst [vmem:[#allocation2 + $0x20] sm:$0xff] %v925
      %958 = vst [vmem:[#allocation2 + $0x28] sm:$0xff] %v926
      %959 = vst [vmem:[#allocation2 + $0x30] sm:$0xff] %v927
      %960 = vst [vmem:[#allocation2 + $0x38] sm:$0xff] %v928
      %961 = vst [vmem:[#allocation2 + $0x40] sm:$0xff] %v929
      %962 = vst [vmem:[#allocation2 + $0x48] sm:$0xff] %v930
      %963 = vst [vmem:[#allocation2 + $0x50] sm:$0xff] %v931
      %964 = vst [vmem:[#allocation2 + $0x58] sm:$0xff] %v932
      %965 = vst [vmem:[#allocation2 + $0x60] sm:$0xff] %v933
      %966 = vst [vmem:[#allocation2 + $0x68] sm:$0xff] %v934
      %967 = vst [vmem:[#allocation2 + $0x70] sm:$0xff] %v935
      %968 = vst [vmem:[#allocation2 + $0x78] sm:$0xff] %v936
      %969 = vst [vmem:[#allocation2 + $0x80] sm:$0xff] %v937
      %970 = vst [vmem:[#allocation2 + $0x88] sm:$0xff] %v938
      %971 = vst [vmem:[#allocation2 + $0x90] sm:$0xff] %v939
      %972 = vst [vmem:[#allocation2 + $0x98] sm:$0xff] %v940
      %973 = vst [vmem:[#allocation2 + $0xa0] sm:$0xff] %v941
      %974 = vst [vmem:[#allocation2 + $0xa8] sm:$0xff] %v942
      %975 = vst [vmem:[#allocation2 + $0xb0] sm:$0xff] %v943
      %976 = vst [vmem:[#allocation2 + $0xb8] sm:$0xff] %v944
      %977 = vst [vmem:[#allocation2 + $0xc0] sm:$0xff] %v945
      %978 = vst [vmem:[#allocation2 + $0xc8] sm:$0xff] %v946
      %979 = vst [vmem:[#allocation2 + $0xd0] sm:$0xff] %v947
      %980 = vst [vmem:[#allocation2 + $0xd8] sm:$0xff] %v948
      %981 = vst [vmem:[#allocation2 + $0xe0] sm:$0xff] %v949
      %982 = vst [vmem:[#allocation2 + $0xe8] sm:$0xff] %v950
      %983 = vst [vmem:[#allocation2 + $0xf0] sm:$0xff] %v951
      %984 = vst [vmem:[#allocation2 + $0xf8] sm:$0xff] %v952
      %s985 = scalar_lea.vmem %s1, 12
      %v986 = vld [vmem:[%s985] sm:$0x3]
      %v989 = vunpack.c.l.b16 %v385
      %v990 = vunpack.c.l.b16 %v386
      %v991 = vpack.c.b16 %v990, %v989
      %v993 = vsel %vm469, %v991, 0
      %v996 = vsel %vm518, %v986, 0
      %998 = vmatprep.subr.bf16.mxu0 0
      %999 = vmatpush1.bf16.msra.mxu0 %v996
      %1000 = vmatprep.subr.bf16.mxu0 0
      %1001 = vmatpush1.bf16.msra.mxu0 0
      %1002 = vmatprep.subr.bf16.mxu0 0
      %1003 = vmatpush1.bf16.msra.mxu0 0
      %1004 = vmatprep.subr.bf16.mxu0 0
      %1005 = vmatpush1.bf16.msra.mxu0 0
      %1006 = vmatprep.subr.bf16.mxu0 0
      %1007 = vmatpush1.bf16.msra.mxu0 0
      %1008 = vmatprep.subr.bf16.mxu0 0
      %1009 = vmatpush1.bf16.msra.mxu0 0
      %1010 = vmatprep.subr.bf16.mxu0 0
      %1011 = vmatpush1.bf16.msra.mxu0 0
      %1012 = vmatprep.subr.bf16.mxu0 0
      %1013 = vmatpush1.bf16.msra.mxu0 0
      %1014 = vmatprep.subr.bf16.mxu0 0
      %1015 = vmatpush1.bf16.msra.mxu0 0
      %1016 = vmatprep.subr.bf16.mxu0 0
      %1017 = vmatpush1.bf16.msra.mxu0 0
      %1018 = vmatprep.subr.bf16.mxu0 0
      %1019 = vmatpush1.bf16.msra.mxu0 0
      %1020 = vmatprep.subr.bf16.mxu0 0
      %1021 = vmatpush1.bf16.msra.mxu0 0
      %1022 = vmatprep.subr.bf16.mxu0 0
      %1023 = vmatpush1.bf16.msra.mxu0 0
      %1024 = vmatprep.subr.bf16.mxu0 0
      %1025 = vmatpush1.bf16.msra.mxu0 0
      %1026 = vmatprep.subr.bf16.mxu0 0
      %1027 = vmatpush1.bf16.msra.mxu0 0
      %1028 = vmatprep.subr.bf16.mxu0 0
      %1029 = vmatpush1.bf16.msra.mxu0 0
      %1030 = vmatprep.mubr.bf16.mxu0 0
      %1031 = vmatmul.mubr.bf16.gmra.mrb[0].mxu0 %v477
      %v1032 = vpop.f32.mrb[0].mxu0
      %v1033 = vadd.f32 0.0, %v1032
      %v1034 = vpop.f32.mrb[0].mxu0
      %v1035 = vpop.f32.mrb[0].mxu0
      %v1036 = vadd.f32 0.0, %v1035
      %v1037 = vpop.f32.mrb[0].mxu0
      %1038 = vmatprep.mubr.bf16.mxu0 0
      %1039 = vmatmul.mubr.bf16.gmra.mrb[0].mxu0 %v480
      %v1040 = vpop.f32.mrb[0].mxu0
      %v1041 = vadd.f32 0.0, %v1040
      %v1042 = vpop.f32.mrb[0].mxu0
      %v1043 = vpop.f32.mrb[0].mxu0
      %v1044 = vadd.f32 0.0, %v1043
      %v1045 = vpop.f32.mrb[0].mxu0
      %1046 = vmatprep.mubr.bf16.mxu0 0
      %1047 = vmatmul.mubr.bf16.gmra.mrb[0].mxu0 %v483
      %v1048 = vpop.f32.mrb[0].mxu0
      %v1049 = vadd.f32 0.0, %v1048
      %v1050 = vpop.f32.mrb[0].mxu0
      %v1051 = vpop.f32.mrb[0].mxu0
      %v1052 = vadd.f32 0.0, %v1051
      %v1053 = vpop.f32.mrb[0].mxu0
      %1054 = vmatprep.mubr.bf16.mxu0 0
      %1055 = vmatmul.mubr.bf16.gmra.mrb[0].mxu0 %v486
      %v1056 = vpop.f32.mrb[0].mxu0
      %v1057 = vadd.f32 0.0, %v1056
      %v1058 = vpop.f32.mrb[0].mxu0
      %v1059 = vpop.f32.mrb[0].mxu0
      %v1060 = vadd.f32 0.0, %v1059
      %v1061 = vpop.f32.mrb[0].mxu0
      %1062 = vmatprep.mubr.bf16.mxu0 0
      %1063 = vmatmul.mubr.bf16.gmra.mrb[0].mxu0 %v489
      %v1064 = vpop.f32.mrb[0].mxu0
      %v1065 = vadd.f32 0.0, %v1064
      %v1066 = vpop.f32.mrb[0].mxu0
      %v1067 = vpop.f32.mrb[0].mxu0
      %v1068 = vadd.f32 0.0, %v1067
      %v1069 = vpop.f32.mrb[0].mxu0
      %1070 = vmatprep.mubr.bf16.mxu0 0
      %1071 = vmatmul.mubr.bf16.gmra.mrb[0].mxu0 %v492
      %v1072 = vpop.f32.mrb[0].mxu0
      %v1073 = vadd.f32 0.0, %v1072
      %v1074 = vpop.f32.mrb[0].mxu0
      %v1075 = vpop.f32.mrb[0].mxu0
      %v1076 = vadd.f32 0.0, %v1075
      %v1077 = vpop.f32.mrb[0].mxu0
      %1078 = vmatprep.mubr.bf16.mxu0 0
      %1079 = vmatmul.mubr.bf16.gmra.mrb[0].mxu0 %v495
      %v1080 = vpop.f32.mrb[0].mxu0
      %v1081 = vadd.f32 0.0, %v1080
      %v1082 = vpop.f32.mrb[0].mxu0
      %v1083 = vpop.f32.mrb[0].mxu0
      %v1084 = vadd.f32 0.0, %v1083
      %v1085 = vpop.f32.mrb[0].mxu0
      %1086 = vmatprep.mubr.bf16.mxu0 0
      %1087 = vmatmul.mubr.bf16.gmra.mrb[0].mxu0 %v498
      %v1088 = vpop.f32.mrb[0].mxu0
      %v1089 = vadd.f32 0.0, %v1088
      %v1090 = vpop.f32.mrb[0].mxu0
      %v1091 = vpop.f32.mrb[0].mxu0
      %v1092 = vadd.f32 0.0, %v1091
      %v1093 = vpop.f32.mrb[0].mxu0
      %1094 = vmatprep.mubr.bf16.mxu0 0
      %1095 = vmatmul.mubr.bf16.gmra.mrb[0].mxu0 %v501
      %v1096 = vpop.f32.mrb[0].mxu0
      %v1097 = vadd.f32 0.0, %v1096
      %v1098 = vpop.f32.mrb[0].mxu0
      %v1099 = vpop.f32.mrb[0].mxu0
      %v1100 = vadd.f32 0.0, %v1099
      %v1101 = vpop.f32.mrb[0].mxu0
      %1102 = vmatprep.mubr.bf16.mxu0 0
      %1103 = vmatmul.mubr.bf16.gmra.mrb[0].mxu0 %v504
      %v1104 = vpop.f32.mrb[0].mxu0
      %v1105 = vadd.f32 0.0, %v1104
      %v1106 = vpop.f32.mrb[0].mxu0
      %v1107 = vpop.f32.mrb[0].mxu0
      %v1108 = vadd.f32 0.0, %v1107
      %v1109 = vpop.f32.mrb[0].mxu0
      %1110 = vmatprep.mubr.bf16.mxu0 0
      %1111 = vmatmul.mubr.bf16.gmra.mrb[0].mxu0 %v507
      %v1112 = vpop.f32.mrb[0].mxu0
      %v1113 = vadd.f32 0.0, %v1112
      %v1114 = vpop.f32.mrb[0].mxu0
      %v1115 = vpop.f32.mrb[0].mxu0
      %v1116 = vadd.f32 0.0, %v1115
      %v1117 = vpop.f32.mrb[0].mxu0
      %1118 = vmatprep.mubr.bf16.mxu0 0
      %1119 = vmatmul.mubr.bf16.gmra.mrb[0].mxu0 %v510
      %v1120 = vpop.f32.mrb[0].mxu0
      %v1121 = vadd.f32 0.0, %v1120
      %v1122 = vpop.f32.mrb[0].mxu0
      %v1123 = vpop.f32.mrb[0].mxu0
      %v1124 = vadd.f32 0.0, %v1123
      %v1125 = vpop.f32.mrb[0].mxu0
      %1126 = vmatprep.mubr.bf16.mxu0 0
      %1127 = vmatmul.mubr.bf16.gmra.mrb[0].mxu0 %v513
      %v1128 = vpop.f32.mrb[0].mxu0
      %v1129 = vadd.f32 0.0, %v1128
      %v1130 = vpop.f32.mrb[0].mxu0
      %v1131 = vpop.f32.mrb[0].mxu0
      %v1132 = vadd.f32 0.0, %v1131
      %v1133 = vpop.f32.mrb[0].mxu0
      %1134 = vmatprep.mubr.bf16.mxu0 0
      %1135 = vmatmul.mubr.bf16.gmra.mrb[0].mxu0 %v516
      %v1136 = vpop.f32.mrb[0].mxu0
      %v1137 = vadd.f32 0.0, %v1136
      %v1138 = vpop.f32.mrb[0].mxu0
      %v1139 = vpop.f32.mrb[0].mxu0
      %v1140 = vadd.f32 0.0, %v1139
      %v1141 = vpop.f32.mrb[0].mxu0
      %1142 = vmatprep.mubr.bf16.mxu0 0
      %1143 = vmatmul.mubr.bf16.gmra.mrb[0].mxu0 %v723
      %v1144 = vpop.f32.mrb[0].mxu0
      %v1145 = vadd.f32 0.0, %v1144
      %v1146 = vpop.f32.mrb[0].mxu0
      %v1147 = vpop.f32.mrb[0].mxu0
      %v1148 = vadd.f32 0.0, %v1147
      %v1149 = vpop.f32.mrb[0].mxu0
      %1150 = vmatprep.mubr.bf16.mxu0 0
      %1151 = vmatmul.mubr.bf16.gmra.mrb[0].mxu0 %v993
      %v1152 = vpop.f32.mrb[0].mxu0
      %v1153 = vadd.f32 0.0, %v1152
      %v1154 = vpop.f32.mrb[0].mxu0
      %v1155 = vpop.f32.mrb[0].mxu0
      %v1156 = vadd.f32 0.0, %v1155
      %v1157 = vpop.f32.mrb[0].mxu0
      %1158 = vdwg.mxu0
      %v1159 = vld [vmem:[#allocation2] sm:$0xff]
      %v1160 = vld [vmem:[#allocation2 + $0x8] sm:$0xff]
      %v1161 = vld [vmem:[#allocation2 + $0x10] sm:$0xff]
      %v1162 = vld [vmem:[#allocation2 + $0x18] sm:$0xff]
      %v1163 = vld [vmem:[#allocation2 + $0x20] sm:$0xff]
      %v1164 = vld [vmem:[#allocation2 + $0x28] sm:$0xff]
      %v1165 = vld [vmem:[#allocation2 + $0x30] sm:$0xff]
      %v1166 = vld [vmem:[#allocation2 + $0x38] sm:$0xff]
      %v1167 = vld [vmem:[#allocation2 + $0x40] sm:$0xff]
      %v1168 = vld [vmem:[#allocation2 + $0x48] sm:$0xff]
      %v1169 = vld [vmem:[#allocation2 + $0x50] sm:$0xff]
      %v1170 = vld [vmem:[#allocation2 + $0x58] sm:$0xff]
      %v1171 = vld [vmem:[#allocation2 + $0x60] sm:$0xff]
      %v1172 = vld [vmem:[#allocation2 + $0x68] sm:$0xff]
      %v1173 = vld [vmem:[#allocation2 + $0x70] sm:$0xff]
      %v1174 = vld [vmem:[#allocation2 + $0x78] sm:$0xff]
      %v1175 = vld [vmem:[#allocation2 + $0x80] sm:$0xff]
      %v1176 = vld [vmem:[#allocation2 + $0x88] sm:$0xff]
      %v1177 = vld [vmem:[#allocation2 + $0x90] sm:$0xff]
      %v1178 = vld [vmem:[#allocation2 + $0x98] sm:$0xff]
      %v1179 = vld [vmem:[#allocation2 + $0xa0] sm:$0xff]
      %v1180 = vld [vmem:[#allocation2 + $0xa8] sm:$0xff]
      %v1181 = vld [vmem:[#allocation2 + $0xb0] sm:$0xff]
      %v1182 = vld [vmem:[#allocation2 + $0xb8] sm:$0xff]
      %v1183 = vld [vmem:[#allocation2 + $0xc0] sm:$0xff]
      %v1184 = vld [vmem:[#allocation2 + $0xc8] sm:$0xff]
      %v1185 = vld [vmem:[#allocation2 + $0xd0] sm:$0xff]
      %v1186 = vld [vmem:[#allocation2 + $0xd8] sm:$0xff]
      %v1187 = vld [vmem:[#allocation2 + $0xe0] sm:$0xff]
      %v1188 = vld [vmem:[#allocation2 + $0xe8] sm:$0xff]
      %v1189 = vld [vmem:[#allocation2 + $0xf0] sm:$0xff]
      %v1190 = vld [vmem:[#allocation2 + $0xf8] sm:$0xff]
      %v1191 = vadd.f32 %v1159, %v1033
      %v1192 = vadd.f32 %v1160, %v1036
      %v1193 = vadd.f32 %v1161, %v1041
      %v1194 = vadd.f32 %v1162, %v1044
      %v1195 = vadd.f32 %v1163, %v1049
      %v1196 = vadd.f32 %v1164, %v1052
      %v1197 = vadd.f32 %v1165, %v1057
      %v1198 = vadd.f32 %v1166, %v1060
      %v1199 = vadd.f32 %v1167, %v1065
      %v1200 = vadd.f32 %v1168, %v1068
      %v1201 = vadd.f32 %v1169, %v1073
      %v1202 = vadd.f32 %v1170, %v1076
      %v1203 = vadd.f32 %v1171, %v1081
      %v1204 = vadd.f32 %v1172, %v1084
      %v1205 = vadd.f32 %v1173, %v1089
      %v1206 = vadd.f32 %v1174, %v1092
      %v1207 = vadd.f32 %v1175, %v1097
      %v1208 = vadd.f32 %v1176, %v1100
      %v1209 = vadd.f32 %v1177, %v1105
      %v1210 = vadd.f32 %v1178, %v1108
      %v1211 = vadd.f32 %v1179, %v1113
      %v1212 = vadd.f32 %v1180, %v1116
      %v1213 = vadd.f32 %v1181, %v1121
      %v1214 = vadd.f32 %v1182, %v1124
      %v1215 = vadd.f32 %v1183, %v1129
      %v1216 = vadd.f32 %v1184, %v1132
      %v1217 = vadd.f32 %v1185, %v1137
      %v1218 = vadd.f32 %v1186, %v1140
      %v1219 = vadd.f32 %v1187, %v1145
      %v1220 = vadd.f32 %v1188, %v1148
      %v1221 = vadd.f32 %v1189, %v1153
      %v1222 = vadd.f32 %v1190, %v1156
      %1223 = vst [vmem:[#allocation2] sm:$0xff] %v1191
      %1224 = vst [vmem:[#allocation2 + $0x8] sm:$0xff] %v1192
      %1225 = vst [vmem:[#allocation2 + $0x10] sm:$0xff] %v1193
      %1226 = vst [vmem:[#allocation2 + $0x18] sm:$0xff] %v1194
      %1227 = vst [vmem:[#allocation2 + $0x20] sm:$0xff] %v1195
      %1228 = vst [vmem:[#allocation2 + $0x28] sm:$0xff] %v1196
      %1229 = vst [vmem:[#allocation2 + $0x30] sm:$0xff] %v1197
      %1230 = vst [vmem:[#allocation2 + $0x38] sm:$0xff] %v1198
      %1231 = vst [vmem:[#allocation2 + $0x40] sm:$0xff] %v1199
      %1232 = vst [vmem:[#allocation2 + $0x48] sm:$0xff] %v1200
      %1233 = vst [vmem:[#allocation2 + $0x50] sm:$0xff] %v1201
      %1234 = vst [vmem:[#allocation2 + $0x58] sm:$0xff] %v1202
      %1235 = vst [vmem:[#allocation2 + $0x60] sm:$0xff] %v1203
      %1236 = vst [vmem:[#allocation2 + $0x68] sm:$0xff] %v1204
      %1237 = vst [vmem:[#allocation2 + $0x70] sm:$0xff] %v1205
      %1238 = vst [vmem:[#allocation2 + $0x78] sm:$0xff] %v1206
      %1239 = vst [vmem:[#allocation2 + $0x80] sm:$0xff] %v1207
      %1240 = vst [vmem:[#allocation2 + $0x88] sm:$0xff] %v1208
      %1241 = vst [vmem:[#allocation2 + $0x90] sm:$0xff] %v1209
      %1242 = vst [vmem:[#allocation2 + $0x98] sm:$0xff] %v1210
      %1243 = vst [vmem:[#allocation2 + $0xa0] sm:$0xff] %v1211
      %1244 = vst [vmem:[#allocation2 + $0xa8] sm:$0xff] %v1212
      %1245 = vst [vmem:[#allocation2 + $0xb0] sm:$0xff] %v1213
      %1246 = vst [vmem:[#allocation2 + $0xb8] sm:$0xff] %v1214
      %1247 = vst [vmem:[#allocation2 + $0xc0] sm:$0xff] %v1215
      %1248 = vst [vmem:[#allocation2 + $0xc8] sm:$0xff] %v1216
      %1249 = vst [vmem:[#allocation2 + $0xd0] sm:$0xff] %v1217
      %1250 = vst [vmem:[#allocation2 + $0xd8] sm:$0xff] %v1218
      %1251 = vst [vmem:[#allocation2 + $0xe0] sm:$0xff] %v1219
      %1252 = vst [vmem:[#allocation2 + $0xe8] sm:$0xff] %v1220
      %1253 = vst [vmem:[#allocation2 + $0xf0] sm:$0xff] %v1221
      %1254 = vst [vmem:[#allocation2 + $0xf8] sm:$0xff] %v1222
      %vm1255 = vsmask.f32 3328
      %vm1256 = vsmask.f32 7440
      %vm1257 = vmor %vm1255, %vm1256
      %v1259 = vshrl.u32 %v334, 16
      %v1261 = vrot.slane %v1259, 4
      %v1262 = vshll.u32 %v334, 16
      %v1264 = vrot.slane %v1262, 5
      %v1265 = vor.u32 %v1261, %v1264
      %v1266 = vrot.slane %v1265, 4
      %v1268 = vshll.u32 %v335, 16
      %v1270 = vrot.slane %v1268, 5
      %v1271 = vsel %vm1257, %v1266, %v1270
      %v1272 = vshrl.u32 %v335, 16
      %v1274 = vrot.slane %v1272, 4
      %v1275 = vor.u32 %v1274, %v1270
      %v1276 = vrot.slane %v1275, 4
      %v1278 = vshll.u32 %v336, 16
      %v1280 = vrot.slane %v1278, 5
      %v1281 = vsel %vm1257, %v1276, %v1280
      %v1283 = vshrl.u32 %v337, 16
      %v1285 = vrot.slane %v1283, 4
      %v1286 = vshll.u32 %v337, 16
      %v1288 = vrot.slane %v1286, 5
      %v1289 = vor.u32 %v1285, %v1288
      %v1290 = vrot.slane %v1289, 4
      %v1292 = vshll.u32 %v338, 16
      %v1294 = vrot.slane %v1292, 5
      %v1295 = vsel %vm1257, %v1290, %v1294
      %v1296 = vshrl.u32 %v338, 16
      %v1298 = vrot.slane %v1296, 4
      %v1299 = vor.u32 %v1298, %v1294
      %v1300 = vrot.slane %v1299, 4
      %v1302 = vshll.u32 %v339, 16
      %v1304 = vrot.slane %v1302, 5
      %v1305 = vsel %vm1257, %v1300, %v1304
      %v1307 = vshrl.u32 %v340, 16
      %v1309 = vrot.slane %v1307, 4
      %v1310 = vshll.u32 %v340, 16
      %v1312 = vrot.slane %v1310, 5
      %v1313 = vor.u32 %v1309, %v1312
      %v1314 = vrot.slane %v1313, 4
      %v1316 = vshll.u32 %v341, 16
      %v1318 = vrot.slane %v1316, 5
      %v1319 = vsel %vm1257, %v1314, %v1318
      %v1320 = vshrl.u32 %v341, 16
      %v1322 = vrot.slane %v1320, 4
      %v1323 = vor.u32 %v1322, %v1318
      %v1324 = vrot.slane %v1323, 4
      %v1326 = vshll.u32 %v342, 16
      %v1328 = vrot.slane %v1326, 5
      %v1329 = vsel %vm1257, %v1324, %v1328
      %v1331 = vshrl.u32 %v343, 16
      %v1333 = vrot.slane %v1331, 4
      %v1334 = vshll.u32 %v343, 16
      %v1336 = vrot.slane %v1334, 5
      %v1337 = vor.u32 %v1333, %v1336
      %v1338 = vrot.slane %v1337, 4
      %v1340 = vshll.u32 %v344, 16
      %v1342 = vrot.slane %v1340, 5
      %v1343 = vsel %vm1257, %v1338, %v1342
      %v1344 = vshrl.u32 %v344, 16
      %v1346 = vrot.slane %v1344, 4
      %v1347 = vor.u32 %v1346, %v1342
      %v1348 = vrot.slane %v1347, 4
      %v1350 = vshll.u32 %v345, 16
      %v1352 = vrot.slane %v1350, 5
      %v1353 = vsel %vm1257, %v1348, %v1352
      %v1355 = vshrl.u32 %v346, 16
      %v1357 = vrot.slane %v1355, 4
      %v1358 = vshll.u32 %v346, 16
      %v1360 = vrot.slane %v1358, 5
      %v1361 = vor.u32 %v1357, %v1360
      %v1362 = vrot.slane %v1361, 4
      %v1364 = vshll.u32 %v347, 16
      %v1366 = vrot.slane %v1364, 5
      %v1367 = vsel %vm1257, %v1362, %v1366
      %v1368 = vshrl.u32 %v347, 16
      %v1370 = vrot.slane %v1368, 4
      %v1371 = vor.u32 %v1370, %v1366
      %v1372 = vrot.slane %v1371, 4
      %v1374 = vshll.u32 %v348, 16
      %v1376 = vrot.slane %v1374, 5
      %v1377 = vsel %vm1257, %v1372, %v1376
      %v1379 = vshrl.u32 %v349, 16
      %v1381 = vrot.slane %v1379, 4
      %v1382 = vshll.u32 %v349, 16
      %v1384 = vrot.slane %v1382, 5
      %v1385 = vor.u32 %v1381, %v1384
      %v1386 = vrot.slane %v1385, 4
      %v1388 = vshll.u32 %v350, 16
      %v1390 = vrot.slane %v1388, 5
      %v1391 = vsel %vm1257, %v1386, %v1390
      %v1392 = vshrl.u32 %v350, 16
      %v1394 = vrot.slane %v1392, 4
      %v1395 = vor.u32 %v1394, %v1390
      %v1396 = vrot.slane %v1395, 4
      %v1398 = vshll.u32 %v351, 16
      %v1400 = vrot.slane %v1398, 5
      %v1401 = vsel %vm1257, %v1396, %v1400
      %v1403 = vshrl.u32 %v352, 16
      %v1405 = vrot.slane %v1403, 4
      %v1406 = vshll.u32 %v352, 16
      %v1408 = vrot.slane %v1406, 5
      %v1409 = vor.u32 %v1405, %v1408
      %v1410 = vrot.slane %v1409, 4
      %v1412 = vshll.u32 %v353, 16
      %v1414 = vrot.slane %v1412, 5
      %v1415 = vsel %vm1257, %v1410, %v1414
      %v1416 = vshrl.u32 %v353, 16
      %v1418 = vrot.slane %v1416, 4
      %v1419 = vor.u32 %v1418, %v1414
      %v1420 = vrot.slane %v1419, 4
      %v1422 = vshll.u32 %v354, 16
      %v1424 = vrot.slane %v1422, 5
      %v1425 = vsel %vm1257, %v1420, %v1424
      %v1427 = vshrl.u32 %v355, 16
      %v1429 = vrot.slane %v1427, 4
      %v1430 = vshll.u32 %v355, 16
      %v1432 = vrot.slane %v1430, 5
      %v1433 = vor.u32 %v1429, %v1432
      %v1434 = vrot.slane %v1433, 4
      %v1436 = vshll.u32 %v356, 16
      %v1438 = vrot.slane %v1436, 5
      %v1439 = vsel %vm1257, %v1434, %v1438
      %v1440 = vshrl.u32 %v356, 16
      %v1442 = vrot.slane %v1440, 4
      %v1443 = vor.u32 %v1442, %v1438
      %v1444 = vrot.slane %v1443, 4
      %v1446 = vshll.u32 %v357, 16
      %v1448 = vrot.slane %v1446, 5
      %v1449 = vsel %vm1257, %v1444, %v1448
      %v1451 = vshrl.u32 %v358, 16
      %v1453 = vrot.slane %v1451, 4
      %v1454 = vshll.u32 %v358, 16
      %v1456 = vrot.slane %v1454, 5
      %v1457 = vor.u32 %v1453, %v1456
      %v1458 = vrot.slane %v1457, 4
      %v1460 = vshll.u32 %v359, 16
      %v1462 = vrot.slane %v1460, 5
      %v1463 = vsel %vm1257, %v1458, %v1462
      %v1464 = vshrl.u32 %v359, 16
      %v1466 = vrot.slane %v1464, 4
      %v1467 = vor.u32 %v1466, %v1462
      %v1468 = vrot.slane %v1467, 4
      %v1470 = vshll.u32 %v360, 16
      %v1472 = vrot.slane %v1470, 5
      %v1473 = vsel %vm1257, %v1468, %v1472
      %v1475 = vshrl.u32 %v361, 16
      %v1477 = vrot.slane %v1475, 4
      %v1478 = vshll.u32 %v361, 16
      %v1480 = vrot.slane %v1478, 5
      %v1481 = vor.u32 %v1477, %v1480
      %v1482 = vrot.slane %v1481, 4
      %v1484 = vshll.u32 %v362, 16
      %v1486 = vrot.slane %v1484, 5
      %v1487 = vsel %vm1257, %v1482, %v1486
      %v1488 = vshrl.u32 %v362, 16
      %v1490 = vrot.slane %v1488, 4
      %v1491 = vor.u32 %v1490, %v1486
      %v1492 = vrot.slane %v1491, 4
      %v1494 = vshll.u32 %v363, 16
      %v1496 = vrot.slane %v1494, 5
      %v1497 = vsel %vm1257, %v1492, %v1496
      %v1499 = vshrl.u32 %v364, 16
      %v1501 = vrot.slane %v1499, 4
      %v1502 = vshll.u32 %v364, 16
      %v1504 = vrot.slane %v1502, 5
      %v1505 = vor.u32 %v1501, %v1504
      %v1506 = vrot.slane %v1505, 4
      %v1508 = vshll.u32 %v365, 16
      %v1510 = vrot.slane %v1508, 5
      %v1511 = vsel %vm1257, %v1506, %v1510
      %v1512 = vshrl.u32 %v365, 16
      %v1514 = vrot.slane %v1512, 4
      %v1515 = vor.u32 %v1514, %v1510
      %v1516 = vrot.slane %v1515, 4
      %v1518 = vshll.u32 %v366, 16
      %v1520 = vrot.slane %v1518, 5
      %v1521 = vsel %vm1257, %v1516, %v1520
      %v1523 = vshrl.u32 %v367, 16
      %v1525 = vrot.slane %v1523, 4
      %v1526 = vshll.u32 %v367, 16
      %v1528 = vrot.slane %v1526, 5
      %v1529 = vor.u32 %v1525, %v1528
      %v1530 = vrot.slane %v1529, 4
      %v1532 = vshll.u32 %v368, 16
      %v1534 = vrot.slane %v1532, 5
      %v1535 = vsel %vm1257, %v1530, %v1534
      %v1536 = vshrl.u32 %v368, 16
      %v1538 = vrot.slane %v1536, 4
      %v1539 = vor.u32 %v1538, %v1534
      %v1540 = vrot.slane %v1539, 4
      %v1542 = vshll.u32 %v369, 16
      %v1544 = vrot.slane %v1542, 5
      %v1545 = vsel %vm1257, %v1540, %v1544
      %v1547 = vshrl.u32 %v370, 16
      %v1549 = vrot.slane %v1547, 4
      %v1550 = vshll.u32 %v370, 16
      %v1552 = vrot.slane %v1550, 5
      %v1553 = vor.u32 %v1549, %v1552
      %v1554 = vrot.slane %v1553, 4
      %v1556 = vshll.u32 %v371, 16
      %v1558 = vrot.slane %v1556, 5
      %v1559 = vsel %vm1257, %v1554, %v1558
      %v1560 = vshrl.u32 %v371, 16
      %v1562 = vrot.slane %v1560, 4
      %v1563 = vor.u32 %v1562, %v1558
      %v1564 = vrot.slane %v1563, 4
      %v1566 = vshll.u32 %v372, 16
      %v1568 = vrot.slane %v1566, 5
      %v1569 = vsel %vm1257, %v1564, %v1568
      %v1571 = vshrl.u32 %v373, 16
      %v1573 = vrot.slane %v1571, 4
      %v1574 = vshll.u32 %v373, 16
      %v1576 = vrot.slane %v1574, 5
      %v1577 = vor.u32 %v1573, %v1576
      %v1578 = vrot.slane %v1577, 4
      %v1580 = vshll.u32 %v374, 16
      %v1582 = vrot.slane %v1580, 5
      %v1583 = vsel %vm1257, %v1578, %v1582
      %v1584 = vshrl.u32 %v374, 16
      %v1586 = vrot.slane %v1584, 4
      %v1587 = vor.u32 %v1586, %v1582
      %v1588 = vrot.slane %v1587, 4
      %v1590 = vshll.u32 %v375, 16
      %v1592 = vrot.slane %v1590, 5
      %v1593 = vsel %vm1257, %v1588, %v1592
      %v1595 = vshrl.u32 %v376, 16
      %v1597 = vrot.slane %v1595, 4
      %v1598 = vshll.u32 %v376, 16
      %v1600 = vrot.slane %v1598, 5
      %v1601 = vor.u32 %v1597, %v1600
      %v1602 = vrot.slane %v1601, 4
      %v1604 = vshll.u32 %v377, 16
      %v1606 = vrot.slane %v1604, 5
      %v1607 = vsel %vm1257, %v1602, %v1606
      %v1608 = vshrl.u32 %v377, 16
      %v1610 = vrot.slane %v1608, 4
      %v1611 = vor.u32 %v1610, %v1606
      %v1612 = vrot.slane %v1611, 4
      %v1614 = vshll.u32 %v378, 16
      %v1616 = vrot.slane %v1614, 5
      %v1617 = vsel %vm1257, %v1612, %v1616
      %v1619 = vshrl.u32 %v379, 16
      %v1621 = vrot.slane %v1619, 4
      %v1622 = vshll.u32 %v379, 16
      %v1624 = vrot.slane %v1622, 5
      %v1625 = vor.u32 %v1621, %v1624
      %v1626 = vrot.slane %v1625, 4
      %v1628 = vshll.u32 %v380, 16
      %v1630 = vrot.slane %v1628, 5
      %v1631 = vsel %vm1257, %v1626, %v1630
      %v1632 = vshrl.u32 %v380, 16
      %v1634 = vrot.slane %v1632, 4
      %v1635 = vor.u32 %v1634, %v1630
      %v1636 = vrot.slane %v1635, 4
      %v1638 = vshll.u32 %v381, 16
      %v1640 = vrot.slane %v1638, 5
      %v1641 = vsel %vm1257, %v1636, %v1640
      %v1643 = vshrl.u32 %v382, 16
      %v1645 = vrot.slane %v1643, 4
      %v1646 = vshll.u32 %v382, 16
      %v1648 = vrot.slane %v1646, 5
      %v1649 = vor.u32 %v1645, %v1648
      %v1650 = vrot.slane %v1649, 4
      %v1652 = vshll.u32 %v383, 16
      %v1654 = vrot.slane %v1652, 5
      %v1655 = vsel %vm1257, %v1650, %v1654
      %v1656 = vshrl.u32 %v383, 16
      %v1658 = vrot.slane %v1656, 4
      %v1659 = vor.u32 %v1658, %v1654
      %v1660 = vrot.slane %v1659, 4
      %v1662 = vshll.u32 %v384, 16
      %v1664 = vrot.slane %v1662, 5
      %v1665 = vsel %vm1257, %v1660, %v1664
      %v1667 = vshrl.u32 %v385, 16
      %v1669 = vrot.slane %v1667, 4
      %v1670 = vshll.u32 %v385, 16
      %v1672 = vrot.slane %v1670, 5
      %v1673 = vor.u32 %v1669, %v1672
      %v1674 = vrot.slane %v1673, 4
      %v1676 = vshll.u32 %v386, 16
      %v1678 = vrot.slane %v1676, 5
      %v1679 = vsel %vm1257, %v1674, %v1678
      %v1680 = vshrl.u32 %v386, 16
      %v1682 = vrot.slane %v1680, 4
      %v1683 = vor.u32 %v1682, %v1678
      %v1684 = vrot.slane %v1683, 4
      %v1686 = vshll.u32 %v387, 16
      %v1688 = vrot.slane %v1686, 5
      %v1689 = vsel %vm1257, %v1684, %v1688
      %s1690 = scalar_lea.vmem %s1, 2
      %v1691 = vld [vmem:[%s1690] sm:$0x3]
      %v1692 = vunpack.c.l.b16 %v1271
      %v1693 = vunpack.c.l.b16 %v1281
      %v1694 = vunpack.c.l.b16 %v1295
      %v1695 = vunpack.c.l.b16 %v1305
      %v1696 = vunpack.c.l.b16 %v1319
      %v1697 = vunpack.c.l.b16 %v1329
      %v1698 = vunpack.c.l.b16 %v1343
      %v1699 = vunpack.c.l.b16 %v1353
      %v1700 = vunpack.c.l.b16 %v1367
      %v1701 = vunpack.c.l.b16 %v1377
      %v1702 = vunpack.c.l.b16 %v1391
      %v1703 = vunpack.c.l.b16 %v1401
      %v1704 = vunpack.c.l.b16 %v1415
      %v1705 = vunpack.c.l.b16 %v1425
      %v1706 = vunpack.c.l.b16 %v1439
      %v1707 = vunpack.c.l.b16 %v1449
      %v1708 = vunpack.c.l.b16 %v1463
      %v1709 = vunpack.c.l.b16 %v1473
      %v1710 = vunpack.c.l.b16 %v1487
      %v1711 = vunpack.c.l.b16 %v1497
      %v1712 = vunpack.c.l.b16 %v1511
      %v1713 = vunpack.c.l.b16 %v1521
      %v1714 = vunpack.c.l.b16 %v1535
      %v1715 = vunpack.c.l.b16 %v1545
      %v1716 = vunpack.c.l.b16 %v1559
      %v1717 = vunpack.c.l.b16 %v1569
      %v1718 = vunpack.c.l.b16 %v1583
      %v1719 = vunpack.c.l.b16 %v1593
      %v1720 = vunpack.c.l.b16 %v1607
      %v1721 = vunpack.c.l.b16 %v1617
      %v1722 = vunpack.c.l.b16 %v1631
      %v1723 = vunpack.c.l.b16 %v1641
      %v1724 = vpack.c.b16 %v1693, %v1692
      %v1725 = vpack.c.b16 %v1695, %v1694
      %v1726 = vpack.c.b16 %v1697, %v1696
      %v1727 = vpack.c.b16 %v1699, %v1698
      %v1728 = vpack.c.b16 %v1701, %v1700
      %v1729 = vpack.c.b16 %v1703, %v1702
      %v1730 = vpack.c.b16 %v1705, %v1704
      %v1731 = vpack.c.b16 %v1707, %v1706
      %v1732 = vpack.c.b16 %v1709, %v1708
      %v1733 = vpack.c.b16 %v1711, %v1710
      %v1734 = vpack.c.b16 %v1713, %v1712
      %v1735 = vpack.c.b16 %v1715, %v1714
      %v1736 = vpack.c.b16 %v1717, %v1716
      %v1737 = vpack.c.b16 %v1719, %v1718
      %v1738 = vpack.c.b16 %v1721, %v1720
      %v1739 = vpack.c.b16 %v1723, %v1722
      %v1741 = vsel %vm469, %v1724, 0
      %v1744 = vsel %vm469, %v1725, 0
      %v1747 = vsel %vm469, %v1726, 0
      %v1750 = vsel %vm469, %v1727, 0
      %v1753 = vsel %vm469, %v1728, 0
      %v1756 = vsel %vm469, %v1729, 0
      %v1759 = vsel %vm469, %v1730, 0
      %v1762 = vsel %vm469, %v1731, 0
      %v1765 = vsel %vm469, %v1732, 0
      %v1768 = vsel %vm469, %v1733, 0
      %v1771 = vsel %vm469, %v1734, 0
      %v1774 = vsel %vm469, %v1735, 0
      %v1777 = vsel %vm469, %v1736, 0
      %v1780 = vsel %vm469, %v1737, 0
      %v1783 = vsel %vm469, %v1738, 0
      %v1786 = vsel %vm469, %v1739, 0
      %v1789 = vsel %vm518, %v1691, 0
      %1791 = vmatprep.subr.bf16.mxu0 0
      %1792 = vmatpush1.bf16.msra.mxu0 %v1789
      %1793 = vmatprep.subr.bf16.mxu0 0
      %1794 = vmatpush1.bf16.msra.mxu0 0
      %1795 = vmatprep.subr.bf16.mxu0 0
      %1796 = vmatpush1.bf16.msra.mxu0 0
      %1797 = vmatprep.subr.bf16.mxu0 0
      %1798 = vmatpush1.bf16.msra.mxu0 0
      %1799 = vmatprep.subr.bf16.mxu0 0
      %1800 = vmatpush1.bf16.msra.mxu0 0
      %1801 = vmatprep.subr.bf16.mxu0 0
      %1802 = vmatpush1.bf16.msra.mxu0 0
      %1803 = vmatprep.subr.bf16.mxu0 0
      %1804 = vmatpush1.bf16.msra.mxu0 0
      %1805 = vmatprep.subr.bf16.mxu0 0
      %1806 = vmatpush1.bf16.msra.mxu0 0
      %1807 = vmatprep.subr.bf16.mxu0 0
      %1808 = vmatpush1.bf16.msra.mxu0 0
      %1809 = vmatprep.subr.bf16.mxu0 0
      %1810 = vmatpush1.bf16.msra.mxu0 0
      %1811 = vmatprep.subr.bf16.mxu0 0
      %1812 = vmatpush1.bf16.msra.mxu0 0
      %1813 = vmatprep.subr.bf16.mxu0 0
      %1814 = vmatpush1.bf16.msra.mxu0 0
      %1815 = vmatprep.subr.bf16.mxu0 0
      %1816 = vmatpush1.bf16.msra.mxu0 0
      %1817 = vmatprep.subr.bf16.mxu0 0
      %1818 = vmatpush1.bf16.msra.mxu0 0
      %1819 = vmatprep.subr.bf16.mxu0 0
      %1820 = vmatpush1.bf16.msra.mxu0 0
      %1821 = vmatprep.subr.bf16.mxu0 0
      %1822 = vmatpush1.bf16.msra.mxu0 0
      %1823 = vmatprep.mubr.bf16.mxu0 0
      %1824 = vmatmul.mubr.bf16.gmra.mrb[0].mxu0 %v1741
      %v1825 = vpop.f32.mrb[0].mxu0
      %v1826 = vadd.f32 0.0, %v1825
      %v1827 = vpop.f32.mrb[0].mxu0
      %v1828 = vpop.f32.mrb[0].mxu0
      %v1829 = vadd.f32 0.0, %v1828
      %v1830 = vpop.f32.mrb[0].mxu0
      %1831 = vmatprep.mubr.bf16.mxu0 0
      %1832 = vmatmul.mubr.bf16.gmra.mrb[0].mxu0 %v1744
      %v1833 = vpop.f32.mrb[0].mxu0
      %v1834 = vadd.f32 0.0, %v1833
      %v1835 = vpop.f32.mrb[0].mxu0
      %v1836 = vpop.f32.mrb[0].mxu0
      %v1837 = vadd.f32 0.0, %v1836
      %v1838 = vpop.f32.mrb[0].mxu0
      %1839 = vmatprep.mubr.bf16.mxu0 0
      %1840 = vmatmul.mubr.bf16.gmra.mrb[0].mxu0 %v1747
      %v1841 = vpop.f32.mrb[0].mxu0
      %v1842 = vadd.f32 0.0, %v1841
      %v1843 = vpop.f32.mrb[0].mxu0
      %v1844 = vpop.f32.mrb[0].mxu0
      %v1845 = vadd.f32 0.0, %v1844
      %v1846 = vpop.f32.mrb[0].mxu0
      %1847 = vmatprep.mubr.bf16.mxu0 0
      %1848 = vmatmul.mubr.bf16.gmra.mrb[0].mxu0 %v1750
      %v1849 = vpop.f32.mrb[0].mxu0
      %v1850 = vadd.f32 0.0, %v1849
      %v1851 = vpop.f32.mrb[0].mxu0
      %v1852 = vpop.f32.mrb[0].mxu0
      %v1853 = vadd.f32 0.0, %v1852
      %v1854 = vpop.f32.mrb[0].mxu0
      %1855 = vmatprep.mubr.bf16.mxu0 0
      %1856 = vmatmul.mubr.bf16.gmra.mrb[0].mxu0 %v1753
      %v1857 = vpop.f32.mrb[0].mxu0
      %v1858 = vadd.f32 0.0, %v1857
      %v1859 = vpop.f32.mrb[0].mxu0
      %v1860 = vpop.f32.mrb[0].mxu0
      %v1861 = vadd.f32 0.0, %v1860
      %v1862 = vpop.f32.mrb[0].mxu0
      %1863 = vmatprep.mubr.bf16.mxu0 0
      %1864 = vmatmul.mubr.bf16.gmra.mrb[0].mxu0 %v1756
      %v1865 = vpop.f32.mrb[0].mxu0
      %v1866 = vadd.f32 0.0, %v1865
      %v1867 = vpop.f32.mrb[0].mxu0
      %v1868 = vpop.f32.mrb[0].mxu0
      %v1869 = vadd.f32 0.0, %v1868
      %v1870 = vpop.f32.mrb[0].mxu0
      %1871 = vmatprep.mubr.bf16.mxu0 0
      %1872 = vmatmul.mubr.bf16.gmra.mrb[0].mxu0 %v1759
      %v1873 = vpop.f32.mrb[0].mxu0
      %v1874 = vadd.f32 0.0, %v1873
      %v1875 = vpop.f32.mrb[0].mxu0
      %v1876 = vpop.f32.mrb[0].mxu0
      %v1877 = vadd.f32 0.0, %v1876
      %v1878 = vpop.f32.mrb[0].mxu0
      %1879 = vmatprep.mubr.bf16.mxu0 0
      %1880 = vmatmul.mubr.bf16.gmra.mrb[0].mxu0 %v1762
      %v1881 = vpop.f32.mrb[0].mxu0
      %v1882 = vadd.f32 0.0, %v1881
      %v1883 = vpop.f32.mrb[0].mxu0
      %v1884 = vpop.f32.mrb[0].mxu0
      %v1885 = vadd.f32 0.0, %v1884
      %v1886 = vpop.f32.mrb[0].mxu0
      %1887 = vmatprep.mubr.bf16.mxu0 0
      %1888 = vmatmul.mubr.bf16.gmra.mrb[0].mxu0 %v1765
      %v1889 = vpop.f32.mrb[0].mxu0
      %v1890 = vadd.f32 0.0, %v1889
      %v1891 = vpop.f32.mrb[0].mxu0
      %v1892 = vpop.f32.mrb[0].mxu0
      %v1893 = vadd.f32 0.0, %v1892
      %v1894 = vpop.f32.mrb[0].mxu0
      %1895 = vmatprep.mubr.bf16.mxu0 0
      %1896 = vmatmul.mubr.bf16.gmra.mrb[0].mxu0 %v1768
      %v1897 = vpop.f32.mrb[0].mxu0
      %v1898 = vadd.f32 0.0, %v1897
      %v1899 = vpop.f32.mrb[0].mxu0
      %v1900 = vpop.f32.mrb[0].mxu0
      %v1901 = vadd.f32 0.0, %v1900
      %v1902 = vpop.f32.mrb[0].mxu0
      %1903 = vmatprep.mubr.bf16.mxu0 0
      %1904 = vmatmul.mubr.bf16.gmra.mrb[0].mxu0 %v1771
      %v1905 = vpop.f32.mrb[0].mxu0
      %v1906 = vadd.f32 0.0, %v1905
      %v1907 = vpop.f32.mrb[0].mxu0
      %v1908 = vpop.f32.mrb[0].mxu0
      %v1909 = vadd.f32 0.0, %v1908
      %v1910 = vpop.f32.mrb[0].mxu0
      %1911 = vmatprep.mubr.bf16.mxu0 0
      %1912 = vmatmul.mubr.bf16.gmra.mrb[0].mxu0 %v1774
      %v1913 = vpop.f32.mrb[0].mxu0
      %v1914 = vadd.f32 0.0, %v1913
      %v1915 = vpop.f32.mrb[0].mxu0
      %v1916 = vpop.f32.mrb[0].mxu0
      %v1917 = vadd.f32 0.0, %v1916
      %v1918 = vpop.f32.mrb[0].mxu0
      %1919 = vmatprep.mubr.bf16.mxu0 0
      %1920 = vmatmul.mubr.bf16.gmra.mrb[0].mxu0 %v1777
      %v1921 = vpop.f32.mrb[0].mxu0
      %v1922 = vadd.f32 0.0, %v1921
      %v1923 = vpop.f32.mrb[0].mxu0
      %v1924 = vpop.f32.mrb[0].mxu0
      %v1925 = vadd.f32 0.0, %v1924
      %v1926 = vpop.f32.mrb[0].mxu0
      %1927 = vmatprep.mubr.bf16.mxu0 0
      %1928 = vmatmul.mubr.bf16.gmra.mrb[0].mxu0 %v1780
      %v1929 = vpop.f32.mrb[0].mxu0
      %v1930 = vadd.f32 0.0, %v1929
      %v1931 = vpop.f32.mrb[0].mxu0
      %v1932 = vpop.f32.mrb[0].mxu0
      %v1933 = vadd.f32 0.0, %v1932
      %v1934 = vpop.f32.mrb[0].mxu0
      %1935 = vmatprep.mubr.bf16.mxu0 0
      %1936 = vmatmul.mubr.bf16.gmra.mrb[0].mxu0 %v1783
      %v1937 = vpop.f32.mrb[0].mxu0
      %v1938 = vadd.f32 0.0, %v1937
      %v1939 = vpop.f32.mrb[0].mxu0
      %v1940 = vpop.f32.mrb[0].mxu0
      %v1941 = vadd.f32 0.0, %v1940
      %v1942 = vpop.f32.mrb[0].mxu0
      %1943 = vmatprep.mubr.bf16.mxu0 0
      %1944 = vmatmul.mubr.bf16.gmra.mrb[0].mxu0 %v1786
      %v1945 = vpop.f32.mrb[0].mxu0
      %v1946 = vadd.f32 0.0, %v1945
      %v1947 = vpop.f32.mrb[0].mxu0
      %v1948 = vpop.f32.mrb[0].mxu0
      %v1949 = vadd.f32 0.0, %v1948
      %v1950 = vpop.f32.mrb[0].mxu0
      %1951 = vdwg.mxu0
      %v1952 = vld [vmem:[#allocation2] sm:$0xff]
      %v1953 = vld [vmem:[#allocation2 + $0x8] sm:$0xff]
      %v1954 = vld [vmem:[#allocation2 + $0x10] sm:$0xff]
      %v1955 = vld [vmem:[#allocation2 + $0x18] sm:$0xff]
      %v1956 = vld [vmem:[#allocation2 + $0x20] sm:$0xff]
      %v1957 = vld [vmem:[#allocation2 + $0x28] sm:$0xff]
      %v1958 = vld [vmem:[#allocation2 + $0x30] sm:$0xff]
      %v1959 = vld [vmem:[#allocation2 + $0x38] sm:$0xff]
      %v1960 = vld [vmem:[#allocation2 + $0x40] sm:$0xff]
      %v1961 = vld [vmem:[#allocation2 + $0x48] sm:$0xff]
      %v1962 = vld [vmem:[#allocation2 + $0x50] sm:$0xff]
      %v1963 = vld [vmem:[#allocation2 + $0x58] sm:$0xff]
      %v1964 = vld [vmem:[#allocation2 + $0x60] sm:$0xff]
      %v1965 = vld [vmem:[#allocation2 + $0x68] sm:$0xff]
      %v1966 = vld [vmem:[#allocation2 + $0x70] sm:$0xff]
      %v1967 = vld [vmem:[#allocation2 + $0x78] sm:$0xff]
      %v1968 = vld [vmem:[#allocation2 + $0x80] sm:$0xff]
      %v1969 = vld [vmem:[#allocation2 + $0x88] sm:$0xff]
      %v1970 = vld [vmem:[#allocation2 + $0x90] sm:$0xff]
      %v1971 = vld [vmem:[#allocation2 + $0x98] sm:$0xff]
      %v1972 = vld [vmem:[#allocation2 + $0xa0] sm:$0xff]
      %v1973 = vld [vmem:[#allocation2 + $0xa8] sm:$0xff]
      %v1974 = vld [vmem:[#allocation2 + $0xb0] sm:$0xff]
      %v1975 = vld [vmem:[#allocation2 + $0xb8] sm:$0xff]
      %v1976 = vld [vmem:[#allocation2 + $0xc0] sm:$0xff]
      %v1977 = vld [vmem:[#allocation2 + $0xc8] sm:$0xff]
      %v1978 = vld [vmem:[#allocation2 + $0xd0] sm:$0xff]
      %v1979 = vld [vmem:[#allocation2 + $0xd8] sm:$0xff]
      %v1980 = vld [vmem:[#allocation2 + $0xe0] sm:$0xff]
      %v1981 = vld [vmem:[#allocation2 + $0xe8] sm:$0xff]
      %v1982 = vld [vmem:[#allocation2 + $0xf0] sm:$0xff]
      %v1983 = vld [vmem:[#allocation2 + $0xf8] sm:$0xff]
      %v1984 = vadd.f32 %v1952, %v1826
      %v1985 = vadd.f32 %v1953, %v1829
      %v1986 = vadd.f32 %v1954, %v1834
      %v1987 = vadd.f32 %v1955, %v1837
      %v1988 = vadd.f32 %v1956, %v1842
      %v1989 = vadd.f32 %v1957, %v1845
      %v1990 = vadd.f32 %v1958, %v1850
      %v1991 = vadd.f32 %v1959, %v1853
      %v1992 = vadd.f32 %v1960, %v1858
      %v1993 = vadd.f32 %v1961, %v1861
      %v1994 = vadd.f32 %v1962, %v1866
      %v1995 = vadd.f32 %v1963, %v1869
      %v1996 = vadd.f32 %v1964, %v1874
      %v1997 = vadd.f32 %v1965, %v1877
      %v1998 = vadd.f32 %v1966, %v1882
      %v1999 = vadd.f32 %v1967, %v1885
      %v2000 = vadd.f32 %v1968, %v1890
      %v2001 = vadd.f32 %v1969, %v1893
      %v2002 = vadd.f32 %v1970, %v1898
      %v2003 = vadd.f32 %v1971, %v1901
      %v2004 = vadd.f32 %v1972, %v1906
      %v2005 = vadd.f32 %v1973, %v1909
      %v2006 = vadd.f32 %v1974, %v1914
      %v2007 = vadd.f32 %v1975, %v1917
      %v2008 = vadd.f32 %v1976, %v1922
      %v2009 = vadd.f32 %v1977, %v1925
      %v2010 = vadd.f32 %v1978, %v1930
      %v2011 = vadd.f32 %v1979, %v1933
      %v2012 = vadd.f32 %v1980, %v1938
      %v2013 = vadd.f32 %v1981, %v1941
      %v2014 = vadd.f32 %v1982, %v1946
      %v2015 = vadd.f32 %v1983, %v1949
      %2016 = vst [vmem:[#allocation2] sm:$0xff] %v1984
      %2017 = vst [vmem:[#allocation2 + $0x8] sm:$0xff] %v1985
      %2018 = vst [vmem:[#allocation2 + $0x10] sm:$0xff] %v1986
      %2019 = vst [vmem:[#allocation2 + $0x18] sm:$0xff] %v1987
      %2020 = vst [vmem:[#allocation2 + $0x20] sm:$0xff] %v1988
      %2021 = vst [vmem:[#allocation2 + $0x28] sm:$0xff] %v1989
      %2022 = vst [vmem:[#allocation2 + $0x30] sm:$0xff] %v1990
      %2023 = vst [vmem:[#allocation2 + $0x38] sm:$0xff] %v1991
      %2024 = vst [vmem:[#allocation2 + $0x40] sm:$0xff] %v1992
      %2025 = vst [vmem:[#allocation2 + $0x48] sm:$0xff] %v1993
      %2026 = vst [vmem:[#allocation2 + $0x50] sm:$0xff] %v1994
      %2027 = vst [vmem:[#allocation2 + $0x58] sm:$0xff] %v1995
      %2028 = vst [vmem:[#allocation2 + $0x60] sm:$0xff] %v1996
      %2029 = vst [vmem:[#allocation2 + $0x68] sm:$0xff] %v1997
      %2030 = vst [vmem:[#allocation2 + $0x70] sm:$0xff] %v1998
      %2031 = vst [vmem:[#allocation2 + $0x78] sm:$0xff] %v1999
      %2032 = vst [vmem:[#allocation2 + $0x80] sm:$0xff] %v2000
      %2033 = vst [vmem:[#allocation2 + $0x88] sm:$0xff] %v2001
      %2034 = vst [vmem:[#allocation2 + $0x90] sm:$0xff] %v2002
      %2035 = vst [vmem:[#allocation2 + $0x98] sm:$0xff] %v2003
      %2036 = vst [vmem:[#allocation2 + $0xa0] sm:$0xff] %v2004
      %2037 = vst [vmem:[#allocation2 + $0xa8] sm:$0xff] %v2005
      %2038 = vst [vmem:[#allocation2 + $0xb0] sm:$0xff] %v2006
      %2039 = vst [vmem:[#allocation2 + $0xb8] sm:$0xff] %v2007
      %2040 = vst [vmem:[#allocation2 + $0xc0] sm:$0xff] %v2008
      %2041 = vst [vmem:[#allocation2 + $0xc8] sm:$0xff] %v2009
      %2042 = vst [vmem:[#allocation2 + $0xd0] sm:$0xff] %v2010
      %2043 = vst [vmem:[#allocation2 + $0xd8] sm:$0xff] %v2011
      %2044 = vst [vmem:[#allocation2 + $0xe0] sm:$0xff] %v2012
      %2045 = vst [vmem:[#allocation2 + $0xe8] sm:$0xff] %v2013
      %2046 = vst [vmem:[#allocation2 + $0xf0] sm:$0xff] %v2014
      %2047 = vst [vmem:[#allocation2 + $0xf8] sm:$0xff] %v2015
      %s2048 = scalar_lea.vmem %s1, 8
      %v2049 = vld [vmem:[%s2048] sm:$0x3]
      %v2050 = vunpack.c.l.b16 %v1655
      %v2051 = vunpack.c.l.b16 %v1665
      %v2052 = vpack.c.b16 %v2051, %v2050
      %v2054 = vsel %vm469, %v2052, 0
      %v2057 = vsel %vm518, %v2049, 0
      %2059 = vmatprep.subr.bf16.mxu0 0
      %2060 = vmatpush1.bf16.msra.mxu0 %v2057
      %2061 = vmatprep.subr.bf16.mxu0 0
      %2062 = vmatpush1.bf16.msra.mxu0 0
      %2063 = vmatprep.subr.bf16.mxu0 0
      %2064 = vmatpush1.bf16.msra.mxu0 0
      %2065 = vmatprep.subr.bf16.mxu0 0
      %2066 = vmatpush1.bf16.msra.mxu0 0
      %2067 = vmatprep.subr.bf16.mxu0 0
      %2068 = vmatpush1.bf16.msra.mxu0 0
      %2069 = vmatprep.subr.bf16.mxu0 0
      %2070 = vmatpush1.bf16.msra.mxu0 0
      %2071 = vmatprep.subr.bf16.mxu0 0
      %2072 = vmatpush1.bf16.msra.mxu0 0
      %2073 = vmatprep.subr.bf16.mxu0 0
      %2074 = vmatpush1.bf16.msra.mxu0 0
      %2075 = vmatprep.subr.bf16.mxu0 0
      %2076 = vmatpush1.bf16.msra.mxu0 0
      %2077 = vmatprep.subr.bf16.mxu0 0
      %2078 = vmatpush1.bf16.msra.mxu0 0
      %2079 = vmatprep.subr.bf16.mxu0 0
      %2080 = vmatpush1.bf16.msra.mxu0 0
      %2081 = vmatprep.subr.bf16.mxu0 0
      %2082 = vmatpush1.bf16.msra.mxu0 0
      %2083 = vmatprep.subr.bf16.mxu0 0
      %2084 = vmatpush1.bf16.msra.mxu0 0
      %2085 = vmatprep.subr.bf16.mxu0 0
      %2086 = vmatpush1.bf16.msra.mxu0 0
      %2087 = vmatprep.subr.bf16.mxu0 0
      %2088 = vmatpush1.bf16.msra.mxu0 0
      %2089 = vmatprep.subr.bf16.mxu0 0
      %2090 = vmatpush1.bf16.msra.mxu0 0
      %2091 = vmatprep.mubr.bf16.mxu0 0
      %2092 = vmatmul.mubr.bf16.gmra.mrb[0].mxu0 %v1744
      %v2093 = vpop.f32.mrb[0].mxu0
      %v2094 = vadd.f32 0.0, %v2093
      %v2095 = vpop.f32.mrb[0].mxu0
      %v2096 = vpop.f32.mrb[0].mxu0
      %v2097 = vadd.f32 0.0, %v2096
      %v2098 = vpop.f32.mrb[0].mxu0
      %2099 = vmatprep.mubr.bf16.mxu0 0
      %2100 = vmatmul.mubr.bf16.gmra.mrb[0].mxu0 %v1747
      %v2101 = vpop.f32.mrb[0].mxu0
      %v2102 = vadd.f32 0.0, %v2101
      %v2103 = vpop.f32.mrb[0].mxu0
      %v2104 = vpop.f32.mrb[0].mxu0
      %v2105 = vadd.f32 0.0, %v2104
      %v2106 = vpop.f32.mrb[0].mxu0
      %2107 = vmatprep.mubr.bf16.mxu0 0
      %2108 = vmatmul.mubr.bf16.gmra.mrb[0].mxu0 %v1750
      %v2109 = vpop.f32.mrb[0].mxu0
      %v2110 = vadd.f32 0.0, %v2109
      %v2111 = vpop.f32.mrb[0].mxu0
      %v2112 = vpop.f32.mrb[0].mxu0
      %v2113 = vadd.f32 0.0, %v2112
      %v2114 = vpop.f32.mrb[0].mxu0
      %2115 = vmatprep.mubr.bf16.mxu0 0
      %2116 = vmatmul.mubr.bf16.gmra.mrb[0].mxu0 %v1753
      %v2117 = vpop.f32.mrb[0].mxu0
      %v2118 = vadd.f32 0.0, %v2117
      %v2119 = vpop.f32.mrb[0].mxu0
      %v2120 = vpop.f32.mrb[0].mxu0
      %v2121 = vadd.f32 0.0, %v2120
      %v2122 = vpop.f32.mrb[0].mxu0
      %2123 = vmatprep.mubr.bf16.mxu0 0
      %2124 = vmatmul.mubr.bf16.gmra.mrb[0].mxu0 %v1756
      %v2125 = vpop.f32.mrb[0].mxu0
      %v2126 = vadd.f32 0.0, %v2125
      %v2127 = vpop.f32.mrb[0].mxu0
      %v2128 = vpop.f32.mrb[0].mxu0
      %v2129 = vadd.f32 0.0, %v2128
      %v2130 = vpop.f32.mrb[0].mxu0
      %2131 = vmatprep.mubr.bf16.mxu0 0
      %2132 = vmatmul.mubr.bf16.gmra.mrb[0].mxu0 %v1759
      %v2133 = vpop.f32.mrb[0].mxu0
      %v2134 = vadd.f32 0.0, %v2133
      %v2135 = vpop.f32.mrb[0].mxu0
      %v2136 = vpop.f32.mrb[0].mxu0
      %v2137 = vadd.f32 0.0, %v2136
      %v2138 = vpop.f32.mrb[0].mxu0
      %2139 = vmatprep.mubr.bf16.mxu0 0
      %2140 = vmatmul.mubr.bf16.gmra.mrb[0].mxu0 %v1762
      %v2141 = vpop.f32.mrb[0].mxu0
      %v2142 = vadd.f32 0.0, %v2141
      %v2143 = vpop.f32.mrb[0].mxu0
      %v2144 = vpop.f32.mrb[0].mxu0
      %v2145 = vadd.f32 0.0, %v2144
      %v2146 = vpop.f32.mrb[0].mxu0
      %2147 = vmatprep.mubr.bf16.mxu0 0
      %2148 = vmatmul.mubr.bf16.gmra.mrb[0].mxu0 %v1765
      %v2149 = vpop.f32.mrb[0].mxu0
      %v2150 = vadd.f32 0.0, %v2149
      %v2151 = vpop.f32.mrb[0].mxu0
      %v2152 = vpop.f32.mrb[0].mxu0
      %v2153 = vadd.f32 0.0, %v2152
      %v2154 = vpop.f32.mrb[0].mxu0
      %2155 = vmatprep.mubr.bf16.mxu0 0
      %2156 = vmatmul.mubr.bf16.gmra.mrb[0].mxu0 %v1768
      %v2157 = vpop.f32.mrb[0].mxu0
      %v2158 = vadd.f32 0.0, %v2157
      %v2159 = vpop.f32.mrb[0].mxu0
      %v2160 = vpop.f32.mrb[0].mxu0
      %v2161 = vadd.f32 0.0, %v2160
      %v2162 = vpop.f32.mrb[0].mxu0
      %2163 = vmatprep.mubr.bf16.mxu0 0
      %2164 = vmatmul.mubr.bf16.gmra.mrb[0].mxu0 %v1771
      %v2165 = vpop.f32.mrb[0].mxu0
      %v2166 = vadd.f32 0.0, %v2165
      %v2167 = vpop.f32.mrb[0].mxu0
      %v2168 = vpop.f32.mrb[0].mxu0
      %v2169 = vadd.f32 0.0, %v2168
      %v2170 = vpop.f32.mrb[0].mxu0
      %2171 = vmatprep.mubr.bf16.mxu0 0
      %2172 = vmatmul.mubr.bf16.gmra.mrb[0].mxu0 %v1774
      %v2173 = vpop.f32.mrb[0].mxu0
      %v2174 = vadd.f32 0.0, %v2173
      %v2175 = vpop.f32.mrb[0].mxu0
      %v2176 = vpop.f32.mrb[0].mxu0
      %v2177 = vadd.f32 0.0, %v2176
      %v2178 = vpop.f32.mrb[0].mxu0
      %2179 = vmatprep.mubr.bf16.mxu0 0
      %2180 = vmatmul.mubr.bf16.gmra.mrb[0].mxu0 %v1777
      %v2181 = vpop.f32.mrb[0].mxu0
      %v2182 = vadd.f32 0.0, %v2181
      %v2183 = vpop.f32.mrb[0].mxu0
      %v2184 = vpop.f32.mrb[0].mxu0
      %v2185 = vadd.f32 0.0, %v2184
      %v2186 = vpop.f32.mrb[0].mxu0
      %2187 = vmatprep.mubr.bf16.mxu0 0
      %2188 = vmatmul.mubr.bf16.gmra.mrb[0].mxu0 %v1780
      %v2189 = vpop.f32.mrb[0].mxu0
      %v2190 = vadd.f32 0.0, %v2189
      %v2191 = vpop.f32.mrb[0].mxu0
      %v2192 = vpop.f32.mrb[0].mxu0
      %v2193 = vadd.f32 0.0, %v2192
      %v2194 = vpop.f32.mrb[0].mxu0
      %2195 = vmatprep.mubr.bf16.mxu0 0
      %2196 = vmatmul.mubr.bf16.gmra.mrb[0].mxu0 %v1783
      %v2197 = vpop.f32.mrb[0].mxu0
      %v2198 = vadd.f32 0.0, %v2197
      %v2199 = vpop.f32.mrb[0].mxu0
      %v2200 = vpop.f32.mrb[0].mxu0
      %v2201 = vadd.f32 0.0, %v2200
      %v2202 = vpop.f32.mrb[0].mxu0
      %2203 = vmatprep.mubr.bf16.mxu0 0
      %2204 = vmatmul.mubr.bf16.gmra.mrb[0].mxu0 %v1786
      %v2205 = vpop.f32.mrb[0].mxu0
      %v2206 = vadd.f32 0.0, %v2205
      %v2207 = vpop.f32.mrb[0].mxu0
      %v2208 = vpop.f32.mrb[0].mxu0
      %v2209 = vadd.f32 0.0, %v2208
      %v2210 = vpop.f32.mrb[0].mxu0
      %2211 = vmatprep.mubr.bf16.mxu0 0
      %2212 = vmatmul.mubr.bf16.gmra.mrb[0].mxu0 %v2054
      %v2213 = vpop.f32.mrb[0].mxu0
      %v2214 = vadd.f32 0.0, %v2213
      %v2215 = vpop.f32.mrb[0].mxu0
      %v2216 = vpop.f32.mrb[0].mxu0
      %v2217 = vadd.f32 0.0, %v2216
      %v2218 = vpop.f32.mrb[0].mxu0
      %2219 = vdwg.mxu0
      %v2220 = vld [vmem:[#allocation2] sm:$0xff]
      %v2221 = vld [vmem:[#allocation2 + $0x8] sm:$0xff]
      %v2222 = vld [vmem:[#allocation2 + $0x10] sm:$0xff]
      %v2223 = vld [vmem:[#allocation2 + $0x18] sm:$0xff]
      %v2224 = vld [vmem:[#allocation2 + $0x20] sm:$0xff]
      %v2225 = vld [vmem:[#allocation2 + $0x28] sm:$0xff]
      %v2226 = vld [vmem:[#allocation2 + $0x30] sm:$0xff]
      %v2227 = vld [vmem:[#allocation2 + $0x38] sm:$0xff]
      %v2228 = vld [vmem:[#allocation2 + $0x40] sm:$0xff]
      %v2229 = vld [vmem:[#allocation2 + $0x48] sm:$0xff]
      %v2230 = vld [vmem:[#allocation2 + $0x50] sm:$0xff]
      %v2231 = vld [vmem:[#allocation2 + $0x58] sm:$0xff]
      %v2232 = vld [vmem:[#allocation2 + $0x60] sm:$0xff]
      %v2233 = vld [vmem:[#allocation2 + $0x68] sm:$0xff]
      %v2234 = vld [vmem:[#allocation2 + $0x70] sm:$0xff]
      %v2235 = vld [vmem:[#allocation2 + $0x78] sm:$0xff]
      %v2236 = vld [vmem:[#allocation2 + $0x80] sm:$0xff]
      %v2237 = vld [vmem:[#allocation2 + $0x88] sm:$0xff]
      %v2238 = vld [vmem:[#allocation2 + $0x90] sm:$0xff]
      %v2239 = vld [vmem:[#allocation2 + $0x98] sm:$0xff]
      %v2240 = vld [vmem:[#allocation2 + $0xa0] sm:$0xff]
      %v2241 = vld [vmem:[#allocation2 + $0xa8] sm:$0xff]
      %v2242 = vld [vmem:[#allocation2 + $0xb0] sm:$0xff]
      %v2243 = vld [vmem:[#allocation2 + $0xb8] sm:$0xff]
      %v2244 = vld [vmem:[#allocation2 + $0xc0] sm:$0xff]
      %v2245 = vld [vmem:[#allocation2 + $0xc8] sm:$0xff]
      %v2246 = vld [vmem:[#allocation2 + $0xd0] sm:$0xff]
      %v2247 = vld [vmem:[#allocation2 + $0xd8] sm:$0xff]
      %v2248 = vld [vmem:[#allocation2 + $0xe0] sm:$0xff]
      %v2249 = vld [vmem:[#allocation2 + $0xe8] sm:$0xff]
      %v2250 = vld [vmem:[#allocation2 + $0xf0] sm:$0xff]
      %v2251 = vld [vmem:[#allocation2 + $0xf8] sm:$0xff]
      %v2252 = vadd.f32 %v2220, %v2094
      %v2253 = vadd.f32 %v2221, %v2097
      %v2254 = vadd.f32 %v2222, %v2102
      %v2255 = vadd.f32 %v2223, %v2105
      %v2256 = vadd.f32 %v2224, %v2110
      %v2257 = vadd.f32 %v2225, %v2113
      %v2258 = vadd.f32 %v2226, %v2118
      %v2259 = vadd.f32 %v2227, %v2121
      %v2260 = vadd.f32 %v2228, %v2126
      %v2261 = vadd.f32 %v2229, %v2129
      %v2262 = vadd.f32 %v2230, %v2134
      %v2263 = vadd.f32 %v2231, %v2137
      %v2264 = vadd.f32 %v2232, %v2142
      %v2265 = vadd.f32 %v2233, %v2145
      %v2266 = vadd.f32 %v2234, %v2150
      %v2267 = vadd.f32 %v2235, %v2153
      %v2268 = vadd.f32 %v2236, %v2158
      %v2269 = vadd.f32 %v2237, %v2161
      %v2270 = vadd.f32 %v2238, %v2166
      %v2271 = vadd.f32 %v2239, %v2169
      %v2272 = vadd.f32 %v2240, %v2174
      %v2273 = vadd.f32 %v2241, %v2177
      %v2274 = vadd.f32 %v2242, %v2182
      %v2275 = vadd.f32 %v2243, %v2185
      %v2276 = vadd.f32 %v2244, %v2190
      %v2277 = vadd.f32 %v2245, %v2193
      %v2278 = vadd.f32 %v2246, %v2198
      %v2279 = vadd.f32 %v2247, %v2201
      %v2280 = vadd.f32 %v2248, %v2206
      %v2281 = vadd.f32 %v2249, %v2209
      %v2282 = vadd.f32 %v2250, %v2214
      %v2283 = vadd.f32 %v2251, %v2217
      %2284 = vst [vmem:[#allocation2] sm:$0xff] %v2252
      %2285 = vst [vmem:[#allocation2 + $0x8] sm:$0xff] %v2253
      %2286 = vst [vmem:[#allocation2 + $0x10] sm:$0xff] %v2254
      %2287 = vst [vmem:[#allocation2 + $0x18] sm:$0xff] %v2255
      %2288 = vst [vmem:[#allocation2 + $0x20] sm:$0xff] %v2256
      %2289 = vst [vmem:[#allocation2 + $0x28] sm:$0xff] %v2257
      %2290 = vst [vmem:[#allocation2 + $0x30] sm:$0xff] %v2258
      %2291 = vst [vmem:[#allocation2 + $0x38] sm:$0xff] %v2259
      %2292 = vst [vmem:[#allocation2 + $0x40] sm:$0xff] %v2260
      %2293 = vst [vmem:[#allocation2 + $0x48] sm:$0xff] %v2261
      %2294 = vst [vmem:[#allocation2 + $0x50] sm:$0xff] %v2262
      %2295 = vst [vmem:[#allocation2 + $0x58] sm:$0xff] %v2263
      %2296 = vst [vmem:[#allocation2 + $0x60] sm:$0xff] %v2264
      %2297 = vst [vmem:[#allocation2 + $0x68] sm:$0xff] %v2265
      %2298 = vst [vmem:[#allocation2 + $0x70] sm:$0xff] %v2266
      %2299 = vst [vmem:[#allocation2 + $0x78] sm:$0xff] %v2267
      %2300 = vst [vmem:[#allocation2 + $0x80] sm:$0xff] %v2268
      %2301 = vst [vmem:[#allocation2 + $0x88] sm:$0xff] %v2269
      %2302 = vst [vmem:[#allocation2 + $0x90] sm:$0xff] %v2270
      %2303 = vst [vmem:[#allocation2 + $0x98] sm:$0xff] %v2271
      %2304 = vst [vmem:[#allocation2 + $0xa0] sm:$0xff] %v2272
      %2305 = vst [vmem:[#allocation2 + $0xa8] sm:$0xff] %v2273
      %2306 = vst [vmem:[#allocation2 + $0xb0] sm:$0xff] %v2274
      %2307 = vst [vmem:[#allocation2 + $0xb8] sm:$0xff] %v2275
      %2308 = vst [vmem:[#allocation2 + $0xc0] sm:$0xff] %v2276
      %2309 = vst [vmem:[#allocation2 + $0xc8] sm:$0xff] %v2277
      %2310 = vst [vmem:[#allocation2 + $0xd0] sm:$0xff] %v2278
      %2311 = vst [vmem:[#allocation2 + $0xd8] sm:$0xff] %v2279
      %2312 = vst [vmem:[#allocation2 + $0xe0] sm:$0xff] %v2280
      %2313 = vst [vmem:[#allocation2 + $0xe8] sm:$0xff] %v2281
      %2314 = vst [vmem:[#allocation2 + $0xf0] sm:$0xff] %v2282
      %2315 = vst [vmem:[#allocation2 + $0xf8] sm:$0xff] %v2283
      %s2316 = scalar_lea.vmem %s1, 14
      %v2317 = vld [vmem:[%s2316] sm:$0x3]
      %v2318 = vunpack.c.l.b16 %v1679
      %v2319 = vunpack.c.l.b16 %v1689
      %v2320 = vpack.c.b16 %v2319, %v2318
      %v2322 = vsel %vm469, %v2320, 0
      %v2325 = vsel %vm518, %v2317, 0
      %2327 = vmatprep.subr.bf16.mxu0 0
      %2328 = vmatpush1.bf16.msra.mxu0 %v2325
      %2329 = vmatprep.subr.bf16.mxu0 0
      %2330 = vmatpush1.bf16.msra.mxu0 0
      %2331 = vmatprep.subr.bf16.mxu0 0
      %2332 = vmatpush1.bf16.msra.mxu0 0
      %2333 = vmatprep.subr.bf16.mxu0 0
      %2334 = vmatpush1.bf16.msra.mxu0 0
      %2335 = vmatprep.subr.bf16.mxu0 0
      %2336 = vmatpush1.bf16.msra.mxu0 0
      %2337 = vmatprep.subr.bf16.mxu0 0
      %2338 = vmatpush1.bf16.msra.mxu0 0
      %2339 = vmatprep.subr.bf16.mxu0 0
      %2340 = vmatpush1.bf16.msra.mxu0 0
      %2341 = vmatprep.subr.bf16.mxu0 0
      %2342 = vmatpush1.bf16.msra.mxu0 0
      %2343 = vmatprep.subr.bf16.mxu0 0
      %2344 = vmatpush1.bf16.msra.mxu0 0
      %2345 = vmatprep.subr.bf16.mxu0 0
      %2346 = vmatpush1.bf16.msra.mxu0 0
      %2347 = vmatprep.subr.bf16.mxu0 0
      %2348 = vmatpush1.bf16.msra.mxu0 0
      %2349 = vmatprep.subr.bf16.mxu0 0
      %2350 = vmatpush1.bf16.msra.mxu0 0
      %2351 = vmatprep.subr.bf16.mxu0 0
      %2352 = vmatpush1.bf16.msra.mxu0 0
      %2353 = vmatprep.subr.bf16.mxu0 0
      %2354 = vmatpush1.bf16.msra.mxu0 0
      %2355 = vmatprep.subr.bf16.mxu0 0
      %2356 = vmatpush1.bf16.msra.mxu0 0
      %2357 = vmatprep.subr.bf16.mxu0 0
      %2358 = vmatpush1.bf16.msra.mxu0 0
      %2359 = vmatprep.mubr.bf16.mxu0 0
      %2360 = vmatmul.mubr.bf16.gmra.mrb[0].mxu0 %v1747
      %v2361 = vpop.f32.mrb[0].mxu0
      %v2362 = vadd.f32 0.0, %v2361
      %v2363 = vpop.f32.mrb[0].mxu0
      %v2364 = vpop.f32.mrb[0].mxu0
      %v2365 = vadd.f32 0.0, %v2364
      %v2366 = vpop.f32.mrb[0].mxu0
      %2367 = vmatprep.mubr.bf16.mxu0 0
      %2368 = vmatmul.mubr.bf16.gmra.mrb[0].mxu0 %v1750
      %v2369 = vpop.f32.mrb[0].mxu0
      %v2370 = vadd.f32 0.0, %v2369
      %v2371 = vpop.f32.mrb[0].mxu0
      %v2372 = vpop.f32.mrb[0].mxu0
      %v2373 = vadd.f32 0.0, %v2372
      %v2374 = vpop.f32.mrb[0].mxu0
      %2375 = vmatprep.mubr.bf16.mxu0 0
      %2376 = vmatmul.mubr.bf16.gmra.mrb[0].mxu0 %v1753
      %v2377 = vpop.f32.mrb[0].mxu0
      %v2378 = vadd.f32 0.0, %v2377
      %v2379 = vpop.f32.mrb[0].mxu0
      %v2380 = vpop.f32.mrb[0].mxu0
      %v2381 = vadd.f32 0.0, %v2380
      %v2382 = vpop.f32.mrb[0].mxu0
      %2383 = vmatprep.mubr.bf16.mxu0 0
      %2384 = vmatmul.mubr.bf16.gmra.mrb[0].mxu0 %v1756
      %v2385 = vpop.f32.mrb[0].mxu0
      %v2386 = vadd.f32 0.0, %v2385
      %v2387 = vpop.f32.mrb[0].mxu0
      %v2388 = vpop.f32.mrb[0].mxu0
      %v2389 = vadd.f32 0.0, %v2388
      %v2390 = vpop.f32.mrb[0].mxu0
      %2391 = vmatprep.mubr.bf16.mxu0 0
      %2392 = vmatmul.mubr.bf16.gmra.mrb[0].mxu0 %v1759
      %v2393 = vpop.f32.mrb[0].mxu0
      %v2394 = vadd.f32 0.0, %v2393
      %v2395 = vpop.f32.mrb[0].mxu0
      %v2396 = vpop.f32.mrb[0].mxu0
      %v2397 = vadd.f32 0.0, %v2396
      %v2398 = vpop.f32.mrb[0].mxu0
      %2399 = vmatprep.mubr.bf16.mxu0 0
      %2400 = vmatmul.mubr.bf16.gmra.mrb[0].mxu0 %v1762
      %v2401 = vpop.f32.mrb[0].mxu0
      %v2402 = vadd.f32 0.0, %v2401
      %v2403 = vpop.f32.mrb[0].mxu0
      %v2404 = vpop.f32.mrb[0].mxu0
      %v2405 = vadd.f32 0.0, %v2404
      %v2406 = vpop.f32.mrb[0].mxu0
      %2407 = vmatprep.mubr.bf16.mxu0 0
      %2408 = vmatmul.mubr.bf16.gmra.mrb[0].mxu0 %v1765
      %v2409 = vpop.f32.mrb[0].mxu0
      %v2410 = vadd.f32 0.0, %v2409
      %v2411 = vpop.f32.mrb[0].mxu0
      %v2412 = vpop.f32.mrb[0].mxu0
      %v2413 = vadd.f32 0.0, %v2412
      %v2414 = vpop.f32.mrb[0].mxu0
      %2415 = vmatprep.mubr.bf16.mxu0 0
      %2416 = vmatmul.mubr.bf16.gmra.mrb[0].mxu0 %v1768
      %v2417 = vpop.f32.mrb[0].mxu0
      %v2418 = vadd.f32 0.0, %v2417
      %v2419 = vpop.f32.mrb[0].mxu0
      %v2420 = vpop.f32.mrb[0].mxu0
      %v2421 = vadd.f32 0.0, %v2420
      %v2422 = vpop.f32.mrb[0].mxu0
      %2423 = vmatprep.mubr.bf16.mxu0 0
      %2424 = vmatmul.mubr.bf16.gmra.mrb[0].mxu0 %v1771
      %v2425 = vpop.f32.mrb[0].mxu0
      %v2426 = vadd.f32 0.0, %v2425
      %v2427 = vpop.f32.mrb[0].mxu0
      %v2428 = vpop.f32.mrb[0].mxu0
      %v2429 = vadd.f32 0.0, %v2428
      %v2430 = vpop.f32.mrb[0].mxu0
      %2431 = vmatprep.mubr.bf16.mxu0 0
      %2432 = vmatmul.mubr.bf16.gmra.mrb[0].mxu0 %v1774
      %v2433 = vpop.f32.mrb[0].mxu0
      %v2434 = vadd.f32 0.0, %v2433
      %v2435 = vpop.f32.mrb[0].mxu0
      %v2436 = vpop.f32.mrb[0].mxu0
      %v2437 = vadd.f32 0.0, %v2436
      %v2438 = vpop.f32.mrb[0].mxu0
      %2439 = vmatprep.mubr.bf16.mxu0 0
      %2440 = vmatmul.mubr.bf16.gmra.mrb[0].mxu0 %v1777
      %v2441 = vpop.f32.mrb[0].mxu0
      %v2442 = vadd.f32 0.0, %v2441
      %v2443 = vpop.f32.mrb[0].mxu0
      %v2444 = vpop.f32.mrb[0].mxu0
      %v2445 = vadd.f32 0.0, %v2444
      %v2446 = vpop.f32.mrb[0].mxu0
      %2447 = vmatprep.mubr.bf16.mxu0 0
      %2448 = vmatmul.mubr.bf16.gmra.mrb[0].mxu0 %v1780
      %v2449 = vpop.f32.mrb[0].mxu0
      %v2450 = vadd.f32 0.0, %v2449
      %v2451 = vpop.f32.mrb[0].mxu0
      %v2452 = vpop.f32.mrb[0].mxu0
      %v2453 = vadd.f32 0.0, %v2452
      %v2454 = vpop.f32.mrb[0].mxu0
      %2455 = vmatprep.mubr.bf16.mxu0 0
      %2456 = vmatmul.mubr.bf16.gmra.mrb[0].mxu0 %v1783
      %v2457 = vpop.f32.mrb[0].mxu0
      %v2458 = vadd.f32 0.0, %v2457
      %v2459 = vpop.f32.mrb[0].mxu0
      %v2460 = vpop.f32.mrb[0].mxu0
      %v2461 = vadd.f32 0.0, %v2460
      %v2462 = vpop.f32.mrb[0].mxu0
      %2463 = vmatprep.mubr.bf16.mxu0 0
      %2464 = vmatmul.mubr.bf16.gmra.mrb[0].mxu0 %v1786
      %v2465 = vpop.f32.mrb[0].mxu0
      %v2466 = vadd.f32 0.0, %v2465
      %v2467 = vpop.f32.mrb[0].mxu0
      %v2468 = vpop.f32.mrb[0].mxu0
      %v2469 = vadd.f32 0.0, %v2468
      %v2470 = vpop.f32.mrb[0].mxu0
      %2471 = vmatprep.mubr.bf16.mxu0 0
      %2472 = vmatmul.mubr.bf16.gmra.mrb[0].mxu0 %v2054
      %v2473 = vpop.f32.mrb[0].mxu0
      %v2474 = vadd.f32 0.0, %v2473
      %v2475 = vpop.f32.mrb[0].mxu0
      %v2476 = vpop.f32.mrb[0].mxu0
      %v2477 = vadd.f32 0.0, %v2476
      %v2478 = vpop.f32.mrb[0].mxu0
      %2479 = vmatprep.mubr.bf16.mxu0 0
      %2480 = vmatmul.mubr.bf16.gmra.mrb[0].mxu0 %v2322
      %v2481 = vpop.f32.mrb[0].mxu0
      %v2482 = vadd.f32 0.0, %v2481
      %v2483 = vpop.f32.mrb[0].mxu0
      %v2484 = vpop.f32.mrb[0].mxu0
      %v2485 = vadd.f32 0.0, %v2484
      %v2486 = vpop.f32.mrb[0].mxu0
      %2487 = vdwg.mxu0
      %v2488 = vld [vmem:[#allocation2] sm:$0xff]
      %v2489 = vld [vmem:[#allocation2 + $0x8] sm:$0xff]
      %v2490 = vld [vmem:[#allocation2 + $0x10] sm:$0xff]
      %v2491 = vld [vmem:[#allocation2 + $0x18] sm:$0xff]
      %v2492 = vld [vmem:[#allocation2 + $0x20] sm:$0xff]
      %v2493 = vld [vmem:[#allocation2 + $0x28] sm:$0xff]
      %v2494 = vld [vmem:[#allocation2 + $0x30] sm:$0xff]
      %v2495 = vld [vmem:[#allocation2 + $0x38] sm:$0xff]
      %v2496 = vld [vmem:[#allocation2 + $0x40] sm:$0xff]
      %v2497 = vld [vmem:[#allocation2 + $0x48] sm:$0xff]
      %v2498 = vld [vmem:[#allocation2 + $0x50] sm:$0xff]
      %v2499 = vld [vmem:[#allocation2 + $0x58] sm:$0xff]
      %v2500 = vld [vmem:[#allocation2 + $0x60] sm:$0xff]
      %v2501 = vld [vmem:[#allocation2 + $0x68] sm:$0xff]
      %v2502 = vld [vmem:[#allocation2 + $0x70] sm:$0xff]
      %v2503 = vld [vmem:[#allocation2 + $0x78] sm:$0xff]
      %v2504 = vld [vmem:[#allocation2 + $0x80] sm:$0xff]
      %v2505 = vld [vmem:[#allocation2 + $0x88] sm:$0xff]
      %v2506 = vld [vmem:[#allocation2 + $0x90] sm:$0xff]
      %v2507 = vld [vmem:[#allocation2 + $0x98] sm:$0xff]
      %v2508 = vld [vmem:[#allocation2 + $0xa0] sm:$0xff]
      %v2509 = vld [vmem:[#allocation2 + $0xa8] sm:$0xff]
      %v2510 = vld [vmem:[#allocation2 + $0xb0] sm:$0xff]
      %v2511 = vld [vmem:[#allocation2 + $0xb8] sm:$0xff]
      %v2512 = vld [vmem:[#allocation2 + $0xc0] sm:$0xff]
      %v2513 = vld [vmem:[#allocation2 + $0xc8] sm:$0xff]
      %v2514 = vld [vmem:[#allocation2 + $0xd0] sm:$0xff]
      %v2515 = vld [vmem:[#allocation2 + $0xd8] sm:$0xff]
      %v2516 = vld [vmem:[#allocation2 + $0xe0] sm:$0xff]
      %v2517 = vld [vmem:[#allocation2 + $0xe8] sm:$0xff]
      %v2518 = vld [vmem:[#allocation2 + $0xf0] sm:$0xff]
      %v2519 = vld [vmem:[#allocation2 + $0xf8] sm:$0xff]
      %v2520 = vadd.f32 %v2488, %v2362
      %v2521 = vadd.f32 %v2489, %v2365
      %v2522 = vadd.f32 %v2490, %v2370
      %v2523 = vadd.f32 %v2491, %v2373
      %v2524 = vadd.f32 %v2492, %v2378
      %v2525 = vadd.f32 %v2493, %v2381
      %v2526 = vadd.f32 %v2494, %v2386
      %v2527 = vadd.f32 %v2495, %v2389
      %v2528 = vadd.f32 %v2496, %v2394
      %v2529 = vadd.f32 %v2497, %v2397
      %v2530 = vadd.f32 %v2498, %v2402
      %v2531 = vadd.f32 %v2499, %v2405
      %v2532 = vadd.f32 %v2500, %v2410
      %v2533 = vadd.f32 %v2501, %v2413
      %v2534 = vadd.f32 %v2502, %v2418
      %v2535 = vadd.f32 %v2503, %v2421
      %v2536 = vadd.f32 %v2504, %v2426
      %v2537 = vadd.f32 %v2505, %v2429
      %v2538 = vadd.f32 %v2506, %v2434
      %v2539 = vadd.f32 %v2507, %v2437
      %v2540 = vadd.f32 %v2508, %v2442
      %v2541 = vadd.f32 %v2509, %v2445
      %v2542 = vadd.f32 %v2510, %v2450
      %v2543 = vadd.f32 %v2511, %v2453
      %v2544 = vadd.f32 %v2512, %v2458
      %v2545 = vadd.f32 %v2513, %v2461
      %v2546 = vadd.f32 %v2514, %v2466
      %v2547 = vadd.f32 %v2515, %v2469
      %v2548 = vadd.f32 %v2516, %v2474
      %v2549 = vadd.f32 %v2517, %v2477
      %v2550 = vadd.f32 %v2518, %v2482
      %v2551 = vadd.f32 %v2519, %v2485
      %2552 = vst [vmem:[#allocation2] sm:$0xff] %v2520
      %2553 = vst [vmem:[#allocation2 + $0x8] sm:$0xff] %v2521
      %2554 = vst [vmem:[#allocation2 + $0x10] sm:$0xff] %v2522
      %2555 = vst [vmem:[#allocation2 + $0x18] sm:$0xff] %v2523
      %2556 = vst [vmem:[#allocation2 + $0x20] sm:$0xff] %v2524
      %2557 = vst [vmem:[#allocation2 + $0x28] sm:$0xff] %v2525
      %2558 = vst [vmem:[#allocation2 + $0x30] sm:$0xff] %v2526
      %2559 = vst [vmem:[#allocation2 + $0x38] sm:$0xff] %v2527
      %2560 = vst [vmem:[#allocation2 + $0x40] sm:$0xff] %v2528
      %2561 = vst [vmem:[#allocation2 + $0x48] sm:$0xff] %v2529
      %2562 = vst [vmem:[#allocation2 + $0x50] sm:$0xff] %v2530
      %2563 = vst [vmem:[#allocation2 + $0x58] sm:$0xff] %v2531
      %2564 = vst [vmem:[#allocation2 + $0x60] sm:$0xff] %v2532
      %2565 = vst [vmem:[#allocation2 + $0x68] sm:$0xff] %v2533
      %2566 = vst [vmem:[#allocation2 + $0x70] sm:$0xff] %v2534
      %2567 = vst [vmem:[#allocation2 + $0x78] sm:$0xff] %v2535
      %2568 = vst [vmem:[#allocation2 + $0x80] sm:$0xff] %v2536
      %2569 = vst [vmem:[#allocation2 + $0x88] sm:$0xff] %v2537
      %2570 = vst [vmem:[#allocation2 + $0x90] sm:$0xff] %v2538
      %2571 = vst [vmem:[#allocation2 + $0x98] sm:$0xff] %v2539
      %2572 = vst [vmem:[#allocation2 + $0xa0] sm:$0xff] %v2540
      %2573 = vst [vmem:[#allocation2 + $0xa8] sm:$0xff] %v2541
      %2574 = vst [vmem:[#allocation2 + $0xb0] sm:$0xff] %v2542
      %2575 = vst [vmem:[#allocation2 + $0xb8] sm:$0xff] %v2543
      %2576 = vst [vmem:[#allocation2 + $0xc0] sm:$0xff] %v2544
      %2577 = vst [vmem:[#allocation2 + $0xc8] sm:$0xff] %v2545
      %2578 = vst [vmem:[#allocation2 + $0xd0] sm:$0xff] %v2546
      %2579 = vst [vmem:[#allocation2 + $0xd8] sm:$0xff] %v2547
      %2580 = vst [vmem:[#allocation2 + $0xe0] sm:$0xff] %v2548
      %2581 = vst [vmem:[#allocation2 + $0xe8] sm:$0xff] %v2549
      %2582 = vst [vmem:[#allocation2 + $0xf0] sm:$0xff] %v2550
      %2583 = vst [vmem:[#allocation2 + $0xf8] sm:$0xff] %v2551
      %vm2602 = vcmask 1042432
      %vm2603 = vcmask 1046532
      %vm2604 = vmor %vm2602, %vm2603
      %v2605 = vrot.slane %v334, 5
      %v2606 = vrot.slane %v2605, 4
      %v2607 = vrot.slane %v335, 5
      %v2608 = vsel %vm2604, %v2606, %v2607
      %v2609 = vrot.slane %v2607, 4
      %v2610 = vrot.slane %v336, 5
      %v2611 = vsel %vm2604, %v2609, %v2610
      %v2612 = vrot.slane %v337, 5
      %v2613 = vrot.slane %v2612, 4
      %v2614 = vrot.slane %v338, 5
      %v2615 = vsel %vm2604, %v2613, %v2614
      %v2616 = vrot.slane %v2614, 4
      %v2617 = vrot.slane %v339, 5
      %v2618 = vsel %vm2604, %v2616, %v2617
      %v2619 = vrot.slane %v340, 5
      %v2620 = vrot.slane %v2619, 4
      %v2621 = vrot.slane %v341, 5
      %v2622 = vsel %vm2604, %v2620, %v2621
      %v2623 = vrot.slane %v2621, 4
      %v2624 = vrot.slane %v342, 5
      %v2625 = vsel %vm2604, %v2623, %v2624
      %v2626 = vrot.slane %v343, 5
      %v2627 = vrot.slane %v2626, 4
      %v2628 = vrot.slane %v344, 5
      %v2629 = vsel %vm2604, %v2627, %v2628
      %v2630 = vrot.slane %v2628, 4
      %v2631 = vrot.slane %v345, 5
      %v2632 = vsel %vm2604, %v2630, %v2631
      %v2633 = vrot.slane %v346, 5
      %v2634 = vrot.slane %v2633, 4
      %v2635 = vrot.slane %v347, 5
      %v2636 = vsel %vm2604, %v2634, %v2635
      %v2637 = vrot.slane %v2635, 4
      %v2638 = vrot.slane %v348, 5
      %v2639 = vsel %vm2604, %v2637, %v2638
      %v2640 = vrot.slane %v349, 5
      %v2641 = vrot.slane %v2640, 4
      %v2642 = vrot.slane %v350, 5
      %v2643 = vsel %vm2604, %v2641, %v2642
      %v2644 = vrot.slane %v2642, 4
      %v2645 = vrot.slane %v351, 5
      %v2646 = vsel %vm2604, %v2644, %v2645
      %v2647 = vrot.slane %v352, 5
      %v2648 = vrot.slane %v2647, 4
      %v2649 = vrot.slane %v353, 5
      %v2650 = vsel %vm2604, %v2648, %v2649
      %v2651 = vrot.slane %v2649, 4
      %v2652 = vrot.slane %v354, 5
      %v2653 = vsel %vm2604, %v2651, %v2652
      %v2654 = vrot.slane %v355, 5
      %v2655 = vrot.slane %v2654, 4
      %v2656 = vrot.slane %v356, 5
      %v2657 = vsel %vm2604, %v2655, %v2656
      %v2658 = vrot.slane %v2656, 4
      %v2659 = vrot.slane %v357, 5
      %v2660 = vsel %vm2604, %v2658, %v2659
      %v2661 = vrot.slane %v358, 5
      %v2662 = vrot.slane %v2661, 4
      %v2663 = vrot.slane %v359, 5
      %v2664 = vsel %vm2604, %v2662, %v2663
      %v2665 = vrot.slane %v2663, 4
      %v2666 = vrot.slane %v360, 5
      %v2667 = vsel %vm2604, %v2665, %v2666
      %v2668 = vrot.slane %v361, 5
      %v2669 = vrot.slane %v2668, 4
      %v2670 = vrot.slane %v362, 5
      %v2671 = vsel %vm2604, %v2669, %v2670
      %v2672 = vrot.slane %v2670, 4
      %v2673 = vrot.slane %v363, 5
      %v2674 = vsel %vm2604, %v2672, %v2673
      %v2675 = vrot.slane %v364, 5
      %v2676 = vrot.slane %v2675, 4
      %v2677 = vrot.slane %v365, 5
      %v2678 = vsel %vm2604, %v2676, %v2677
      %v2679 = vrot.slane %v2677, 4
      %v2680 = vrot.slane %v366, 5
      %v2681 = vsel %vm2604, %v2679, %v2680
      %v2682 = vrot.slane %v367, 5
      %v2683 = vrot.slane %v2682, 4
      %v2684 = vrot.slane %v368, 5
      %v2685 = vsel %vm2604, %v2683, %v2684
      %v2686 = vrot.slane %v2684, 4
      %v2687 = vrot.slane %v369, 5
      %v2688 = vsel %vm2604, %v2686, %v2687
      %v2689 = vrot.slane %v370, 5
      %v2690 = vrot.slane %v2689, 4
      %v2691 = vrot.slane %v371, 5
      %v2692 = vsel %vm2604, %v2690, %v2691
      %v2693 = vrot.slane %v2691, 4
      %v2694 = vrot.slane %v372, 5
      %v2695 = vsel %vm2604, %v2693, %v2694
      %v2696 = vrot.slane %v373, 5
      %v2697 = vrot.slane %v2696, 4
      %v2698 = vrot.slane %v374, 5
      %v2699 = vsel %vm2604, %v2697, %v2698
      %v2700 = vrot.slane %v2698, 4
      %v2701 = vrot.slane %v375, 5
      %v2702 = vsel %vm2604, %v2700, %v2701
      %v2703 = vrot.slane %v376, 5
      %v2704 = vrot.slane %v2703, 4
      %v2705 = vrot.slane %v377, 5
      %v2706 = vsel %vm2604, %v2704, %v2705
      %v2707 = vrot.slane %v2705, 4
      %v2708 = vrot.slane %v378, 5
      %v2709 = vsel %vm2604, %v2707, %v2708
      %v2710 = vrot.slane %v379, 5
      %v2711 = vrot.slane %v2710, 4
      %v2712 = vrot.slane %v380, 5
      %v2713 = vsel %vm2604, %v2711, %v2712
      %v2714 = vrot.slane %v2712, 4
      %v2715 = vrot.slane %v381, 5
      %v2716 = vsel %vm2604, %v2714, %v2715
      %v2717 = vrot.slane %v382, 5
      %v2718 = vrot.slane %v2717, 4
      %v2719 = vrot.slane %v383, 5
      %v2720 = vsel %vm2604, %v2718, %v2719
      %v2721 = vrot.slane %v2719, 4
      %v2722 = vrot.slane %v384, 5
      %v2723 = vsel %vm2604, %v2721, %v2722
      %v2724 = vrot.slane %v385, 5
      %v2725 = vrot.slane %v2724, 4
      %v2726 = vrot.slane %v386, 5
      %v2727 = vsel %vm2604, %v2725, %v2726
      %v2728 = vrot.slane %v2726, 4
      %v2729 = vrot.slane %v387, 5
      %v2730 = vsel %vm2604, %v2728, %v2729
      %s2731 = scalar_lea.vmem %s1, 4
      %v2732 = vld [vmem:[%s2731] sm:$0x3]
      %v2733 = vunpack.c.l.b16 %v2608
      %v2734 = vunpack.c.l.b16 %v2611
      %v2735 = vunpack.c.l.b16 %v2615
      %v2736 = vunpack.c.l.b16 %v2618
      %v2737 = vunpack.c.l.b16 %v2622
      %v2738 = vunpack.c.l.b16 %v2625
      %v2739 = vunpack.c.l.b16 %v2629
      %v2740 = vunpack.c.l.b16 %v2632
      %v2741 = vunpack.c.l.b16 %v2636
      %v2742 = vunpack.c.l.b16 %v2639
      %v2743 = vunpack.c.l.b16 %v2643
      %v2744 = vunpack.c.l.b16 %v2646
      %v2745 = vunpack.c.l.b16 %v2650
      %v2746 = vunpack.c.l.b16 %v2653
      %v2747 = vunpack.c.l.b16 %v2657
      %v2748 = vunpack.c.l.b16 %v2660
      %v2749 = vunpack.c.l.b16 %v2664
      %v2750 = vunpack.c.l.b16 %v2667
      %v2751 = vunpack.c.l.b16 %v2671
      %v2752 = vunpack.c.l.b16 %v2674
      %v2753 = vunpack.c.l.b16 %v2678
      %v2754 = vunpack.c.l.b16 %v2681
      %v2755 = vunpack.c.l.b16 %v2685
      %v2756 = vunpack.c.l.b16 %v2688
      %v2757 = vunpack.c.l.b16 %v2692
      %v2758 = vunpack.c.l.b16 %v2695
      %v2759 = vunpack.c.l.b16 %v2699
      %v2760 = vunpack.c.l.b16 %v2702
      %v2761 = vunpack.c.l.b16 %v2706
      %v2762 = vunpack.c.l.b16 %v2709
      %v2763 = vunpack.c.l.b16 %v2713
      %v2764 = vunpack.c.l.b16 %v2716
      %v2765 = vpack.c.b16 %v2734, %v2733
      %v2766 = vpack.c.b16 %v2736, %v2735
      %v2767 = vpack.c.b16 %v2738, %v2737
      %v2768 = vpack.c.b16 %v2740, %v2739
      %v2769 = vpack.c.b16 %v2742, %v2741
      %v2770 = vpack.c.b16 %v2744, %v2743
      %v2771 = vpack.c.b16 %v2746, %v2745
      %v2772 = vpack.c.b16 %v2748, %v2747
      %v2773 = vpack.c.b16 %v2750, %v2749
      %v2774 = vpack.c.b16 %v2752, %v2751
      %v2775 = vpack.c.b16 %v2754, %v2753
      %v2776 = vpack.c.b16 %v2756, %v2755
      %v2777 = vpack.c.b16 %v2758, %v2757
      %v2778 = vpack.c.b16 %v2760, %v2759
      %v2779 = vpack.c.b16 %v2762, %v2761
      %v2780 = vpack.c.b16 %v2764, %v2763
      %v2782 = vsel %vm469, %v2765, 0
      %v2785 = vsel %vm469, %v2766, 0
      %v2788 = vsel %vm469, %v2767, 0
      %v2791 = vsel %vm469, %v2768, 0
      %v2794 = vsel %vm469, %v2769, 0
      %v2797 = vsel %vm469, %v2770, 0
      %v2800 = vsel %vm469, %v2771, 0
      %v2803 = vsel %vm469, %v2772, 0
      %v2806 = vsel %vm469, %v2773, 0
      %v2809 = vsel %vm469, %v2774, 0
      %v2812 = vsel %vm469, %v2775, 0
      %v2815 = vsel %vm469, %v2776, 0
      %v2818 = vsel %vm469, %v2777, 0
      %v2821 = vsel %vm469, %v2778, 0
      %v2824 = vsel %vm469, %v2779, 0
      %v2827 = vsel %vm469, %v2780, 0
      %v2830 = vsel %vm518, %v2732, 0
      %2832 = vmatprep.subr.bf16.mxu0 0
      %2833 = vmatpush1.bf16.msra.mxu0 %v2830
      %2834 = vmatprep.subr.bf16.mxu0 0
      %2835 = vmatpush1.bf16.msra.mxu0 0
      %2836 = vmatprep.subr.bf16.mxu0 0
      %2837 = vmatpush1.bf16.msra.mxu0 0
      %2838 = vmatprep.subr.bf16.mxu0 0
      %2839 = vmatpush1.bf16.msra.mxu0 0
      %2840 = vmatprep.subr.bf16.mxu0 0
      %2841 = vmatpush1.bf16.msra.mxu0 0
      %2842 = vmatprep.subr.bf16.mxu0 0
      %2843 = vmatpush1.bf16.msra.mxu0 0
      %2844 = vmatprep.subr.bf16.mxu0 0
      %2845 = vmatpush1.bf16.msra.mxu0 0
      %2846 = vmatprep.subr.bf16.mxu0 0
      %2847 = vmatpush1.bf16.msra.mxu0 0
      %2848 = vmatprep.subr.bf16.mxu0 0
      %2849 = vmatpush1.bf16.msra.mxu0 0
      %2850 = vmatprep.subr.bf16.mxu0 0
      %2851 = vmatpush1.bf16.msra.mxu0 0
      %2852 = vmatprep.subr.bf16.mxu0 0
      %2853 = vmatpush1.bf16.msra.mxu0 0
      %2854 = vmatprep.subr.bf16.mxu0 0
      %2855 = vmatpush1.bf16.msra.mxu0 0
      %2856 = vmatprep.subr.bf16.mxu0 0
      %2857 = vmatpush1.bf16.msra.mxu0 0
      %2858 = vmatprep.subr.bf16.mxu0 0
      %2859 = vmatpush1.bf16.msra.mxu0 0
      %2860 = vmatprep.subr.bf16.mxu0 0
      %2861 = vmatpush1.bf16.msra.mxu0 0
      %2862 = vmatprep.subr.bf16.mxu0 0
      %2863 = vmatpush1.bf16.msra.mxu0 0
      %2864 = vmatprep.mubr.bf16.mxu0 0
      %2865 = vmatmul.mubr.bf16.gmra.mrb[0].mxu0 %v2782
      %v2866 = vpop.f32.mrb[0].mxu0
      %v2867 = vadd.f32 0.0, %v2866
      %v2868 = vpop.f32.mrb[0].mxu0
      %v2869 = vpop.f32.mrb[0].mxu0
      %v2870 = vadd.f32 0.0, %v2869
      %v2871 = vpop.f32.mrb[0].mxu0
      %2872 = vmatprep.mubr.bf16.mxu0 0
      %2873 = vmatmul.mubr.bf16.gmra.mrb[0].mxu0 %v2785
      %v2874 = vpop.f32.mrb[0].mxu0
      %v2875 = vadd.f32 0.0, %v2874
      %v2876 = vpop.f32.mrb[0].mxu0
      %v2877 = vpop.f32.mrb[0].mxu0
      %v2878 = vadd.f32 0.0, %v2877
      %v2879 = vpop.f32.mrb[0].mxu0
      %2880 = vmatprep.mubr.bf16.mxu0 0
      %2881 = vmatmul.mubr.bf16.gmra.mrb[0].mxu0 %v2788
      %v2882 = vpop.f32.mrb[0].mxu0
      %v2883 = vadd.f32 0.0, %v2882
      %v2884 = vpop.f32.mrb[0].mxu0
      %v2885 = vpop.f32.mrb[0].mxu0
      %v2886 = vadd.f32 0.0, %v2885
      %v2887 = vpop.f32.mrb[0].mxu0
      %2888 = vmatprep.mubr.bf16.mxu0 0
      %2889 = vmatmul.mubr.bf16.gmra.mrb[0].mxu0 %v2791
      %v2890 = vpop.f32.mrb[0].mxu0
      %v2891 = vadd.f32 0.0, %v2890
      %v2892 = vpop.f32.mrb[0].mxu0
      %v2893 = vpop.f32.mrb[0].mxu0
      %v2894 = vadd.f32 0.0, %v2893
      %v2895 = vpop.f32.mrb[0].mxu0
      %2896 = vmatprep.mubr.bf16.mxu0 0
      %2897 = vmatmul.mubr.bf16.gmra.mrb[0].mxu0 %v2794
      %v2898 = vpop.f32.mrb[0].mxu0
      %v2899 = vadd.f32 0.0, %v2898
      %v2900 = vpop.f32.mrb[0].mxu0
      %v2901 = vpop.f32.mrb[0].mxu0
      %v2902 = vadd.f32 0.0, %v2901
      %v2903 = vpop.f32.mrb[0].mxu0
      %2904 = vmatprep.mubr.bf16.mxu0 0
      %2905 = vmatmul.mubr.bf16.gmra.mrb[0].mxu0 %v2797
      %v2906 = vpop.f32.mrb[0].mxu0
      %v2907 = vadd.f32 0.0, %v2906
      %v2908 = vpop.f32.mrb[0].mxu0
      %v2909 = vpop.f32.mrb[0].mxu0
      %v2910 = vadd.f32 0.0, %v2909
      %v2911 = vpop.f32.mrb[0].mxu0
      %2912 = vmatprep.mubr.bf16.mxu0 0
      %2913 = vmatmul.mubr.bf16.gmra.mrb[0].mxu0 %v2800
      %v2914 = vpop.f32.mrb[0].mxu0
      %v2915 = vadd.f32 0.0, %v2914
      %v2916 = vpop.f32.mrb[0].mxu0
      %v2917 = vpop.f32.mrb[0].mxu0
      %v2918 = vadd.f32 0.0, %v2917
      %v2919 = vpop.f32.mrb[0].mxu0
      %2920 = vmatprep.mubr.bf16.mxu0 0
      %2921 = vmatmul.mubr.bf16.gmra.mrb[0].mxu0 %v2803
      %v2922 = vpop.f32.mrb[0].mxu0
      %v2923 = vadd.f32 0.0, %v2922
      %v2924 = vpop.f32.mrb[0].mxu0
      %v2925 = vpop.f32.mrb[0].mxu0
      %v2926 = vadd.f32 0.0, %v2925
      %v2927 = vpop.f32.mrb[0].mxu0
      %2928 = vmatprep.mubr.bf16.mxu0 0
      %2929 = vmatmul.mubr.bf16.gmra.mrb[0].mxu0 %v2806
      %v2930 = vpop.f32.mrb[0].mxu0
      %v2931 = vadd.f32 0.0, %v2930
      %v2932 = vpop.f32.mrb[0].mxu0
      %v2933 = vpop.f32.mrb[0].mxu0
      %v2934 = vadd.f32 0.0, %v2933
      %v2935 = vpop.f32.mrb[0].mxu0
      %2936 = vmatprep.mubr.bf16.mxu0 0
      %2937 = vmatmul.mubr.bf16.gmra.mrb[0].mxu0 %v2809
      %v2938 = vpop.f32.mrb[0].mxu0
      %v2939 = vadd.f32 0.0, %v2938
      %v2940 = vpop.f32.mrb[0].mxu0
      %v2941 = vpop.f32.mrb[0].mxu0
      %v2942 = vadd.f32 0.0, %v2941
      %v2943 = vpop.f32.mrb[0].mxu0
      %2944 = vmatprep.mubr.bf16.mxu0 0
      %2945 = vmatmul.mubr.bf16.gmra.mrb[0].mxu0 %v2812
      %v2946 = vpop.f32.mrb[0].mxu0
      %v2947 = vadd.f32 0.0, %v2946
      %v2948 = vpop.f32.mrb[0].mxu0
      %v2949 = vpop.f32.mrb[0].mxu0
      %v2950 = vadd.f32 0.0, %v2949
      %v2951 = vpop.f32.mrb[0].mxu0
      %2952 = vmatprep.mubr.bf16.mxu0 0
      %2953 = vmatmul.mubr.bf16.gmra.mrb[0].mxu0 %v2815
      %v2954 = vpop.f32.mrb[0].mxu0
      %v2955 = vadd.f32 0.0, %v2954
      %v2956 = vpop.f32.mrb[0].mxu0
      %v2957 = vpop.f32.mrb[0].mxu0
      %v2958 = vadd.f32 0.0, %v2957
      %v2959 = vpop.f32.mrb[0].mxu0
      %2960 = vmatprep.mubr.bf16.mxu0 0
      %2961 = vmatmul.mubr.bf16.gmra.mrb[0].mxu0 %v2818
      %v2962 = vpop.f32.mrb[0].mxu0
      %v2963 = vadd.f32 0.0, %v2962
      %v2964 = vpop.f32.mrb[0].mxu0
      %v2965 = vpop.f32.mrb[0].mxu0
      %v2966 = vadd.f32 0.0, %v2965
      %v2967 = vpop.f32.mrb[0].mxu0
      %2968 = vmatprep.mubr.bf16.mxu0 0
      %2969 = vmatmul.mubr.bf16.gmra.mrb[0].mxu0 %v2821
      %v2970 = vpop.f32.mrb[0].mxu0
      %v2971 = vadd.f32 0.0, %v2970
      %v2972 = vpop.f32.mrb[0].mxu0
      %v2973 = vpop.f32.mrb[0].mxu0
      %v2974 = vadd.f32 0.0, %v2973
      %v2975 = vpop.f32.mrb[0].mxu0
      %2976 = vmatprep.mubr.bf16.mxu0 0
      %2977 = vmatmul.mubr.bf16.gmra.mrb[0].mxu0 %v2824
      %v2978 = vpop.f32.mrb[0].mxu0
      %v2979 = vadd.f32 0.0, %v2978
      %v2980 = vpop.f32.mrb[0].mxu0
      %v2981 = vpop.f32.mrb[0].mxu0
      %v2982 = vadd.f32 0.0, %v2981
      %v2983 = vpop.f32.mrb[0].mxu0
      %2984 = vmatprep.mubr.bf16.mxu0 0
      %2985 = vmatmul.mubr.bf16.gmra.mrb[0].mxu0 %v2827
      %v2986 = vpop.f32.mrb[0].mxu0
      %v2987 = vadd.f32 0.0, %v2986
      %v2988 = vpop.f32.mrb[0].mxu0
      %v2989 = vpop.f32.mrb[0].mxu0
      %v2990 = vadd.f32 0.0, %v2989
      %v2991 = vpop.f32.mrb[0].mxu0
      %2992 = vdwg.mxu0
      %v2993 = vld [vmem:[#allocation2] sm:$0xff]
      %v2994 = vld [vmem:[#allocation2 + $0x8] sm:$0xff]
      %v2995 = vld [vmem:[#allocation2 + $0x10] sm:$0xff]
      %v2996 = vld [vmem:[#allocation2 + $0x18] sm:$0xff]
      %v2997 = vld [vmem:[#allocation2 + $0x20] sm:$0xff]
      %v2998 = vld [vmem:[#allocation2 + $0x28] sm:$0xff]
      %v2999 = vld [vmem:[#allocation2 + $0x30] sm:$0xff]
      %v3000 = vld [vmem:[#allocation2 + $0x38] sm:$0xff]
      %v3001 = vld [vmem:[#allocation2 + $0x40] sm:$0xff]
      %v3002 = vld [vmem:[#allocation2 + $0x48] sm:$0xff]
      %v3003 = vld [vmem:[#allocation2 + $0x50] sm:$0xff]
      %v3004 = vld [vmem:[#allocation2 + $0x58] sm:$0xff]
      %v3005 = vld [vmem:[#allocation2 + $0x60] sm:$0xff]
      %v3006 = vld [vmem:[#allocation2 + $0x68] sm:$0xff]
      %v3007 = vld [vmem:[#allocation2 + $0x70] sm:$0xff]
      %v3008 = vld [vmem:[#allocation2 + $0x78] sm:$0xff]
      %v3009 = vld [vmem:[#allocation2 + $0x80] sm:$0xff]
      %v3010 = vld [vmem:[#allocation2 + $0x88] sm:$0xff]
      %v3011 = vld [vmem:[#allocation2 + $0x90] sm:$0xff]
      %v3012 = vld [vmem:[#allocation2 + $0x98] sm:$0xff]
      %v3013 = vld [vmem:[#allocation2 + $0xa0] sm:$0xff]
      %v3014 = vld [vmem:[#allocation2 + $0xa8] sm:$0xff]
      %v3015 = vld [vmem:[#allocation2 + $0xb0] sm:$0xff]
      %v3016 = vld [vmem:[#allocation2 + $0xb8] sm:$0xff]
      %v3017 = vld [vmem:[#allocation2 + $0xc0] sm:$0xff]
      %v3018 = vld [vmem:[#allocation2 + $0xc8] sm:$0xff]
      %v3019 = vld [vmem:[#allocation2 + $0xd0] sm:$0xff]
      %v3020 = vld [vmem:[#allocation2 + $0xd8] sm:$0xff]
      %v3021 = vld [vmem:[#allocation2 + $0xe0] sm:$0xff]
      %v3022 = vld [vmem:[#allocation2 + $0xe8] sm:$0xff]
      %v3023 = vld [vmem:[#allocation2 + $0xf0] sm:$0xff]
      %v3024 = vld [vmem:[#allocation2 + $0xf8] sm:$0xff]
      %v3025 = vadd.f32 %v2993, %v2867
      %v3026 = vadd.f32 %v2994, %v2870
      %v3027 = vadd.f32 %v2995, %v2875
      %v3028 = vadd.f32 %v2996, %v2878
      %v3029 = vadd.f32 %v2997, %v2883
      %v3030 = vadd.f32 %v2998, %v2886
      %v3031 = vadd.f32 %v2999, %v2891
      %v3032 = vadd.f32 %v3000, %v2894
      %v3033 = vadd.f32 %v3001, %v2899
      %v3034 = vadd.f32 %v3002, %v2902
      %v3035 = vadd.f32 %v3003, %v2907
      %v3036 = vadd.f32 %v3004, %v2910
      %v3037 = vadd.f32 %v3005, %v2915
      %v3038 = vadd.f32 %v3006, %v2918
      %v3039 = vadd.f32 %v3007, %v2923
      %v3040 = vadd.f32 %v3008, %v2926
      %v3041 = vadd.f32 %v3009, %v2931
      %v3042 = vadd.f32 %v3010, %v2934
      %v3043 = vadd.f32 %v3011, %v2939
      %v3044 = vadd.f32 %v3012, %v2942
      %v3045 = vadd.f32 %v3013, %v2947
      %v3046 = vadd.f32 %v3014, %v2950
      %v3047 = vadd.f32 %v3015, %v2955
      %v3048 = vadd.f32 %v3016, %v2958
      %v3049 = vadd.f32 %v3017, %v2963
      %v3050 = vadd.f32 %v3018, %v2966
      %v3051 = vadd.f32 %v3019, %v2971
      %v3052 = vadd.f32 %v3020, %v2974
      %v3053 = vadd.f32 %v3021, %v2979
      %v3054 = vadd.f32 %v3022, %v2982
      %v3055 = vadd.f32 %v3023, %v2987
      %v3056 = vadd.f32 %v3024, %v2990
      %3057 = vst [vmem:[#allocation2] sm:$0xff] %v3025
      %3058 = vst [vmem:[#allocation2 + $0x8] sm:$0xff] %v3026
      %3059 = vst [vmem:[#allocation2 + $0x10] sm:$0xff] %v3027
      %3060 = vst [vmem:[#allocation2 + $0x18] sm:$0xff] %v3028
      %3061 = vst [vmem:[#allocation2 + $0x20] sm:$0xff] %v3029
      %3062 = vst [vmem:[#allocation2 + $0x28] sm:$0xff] %v3030
      %3063 = vst [vmem:[#allocation2 + $0x30] sm:$0xff] %v3031
      %3064 = vst [vmem:[#allocation2 + $0x38] sm:$0xff] %v3032
      %3065 = vst [vmem:[#allocation2 + $0x40] sm:$0xff] %v3033
      %3066 = vst [vmem:[#allocation2 + $0x48] sm:$0xff] %v3034
      %3067 = vst [vmem:[#allocation2 + $0x50] sm:$0xff] %v3035
      %3068 = vst [vmem:[#allocation2 + $0x58] sm:$0xff] %v3036
      %3069 = vst [vmem:[#allocation2 + $0x60] sm:$0xff] %v3037
      %3070 = vst [vmem:[#allocation2 + $0x68] sm:$0xff] %v3038
      %3071 = vst [vmem:[#allocation2 + $0x70] sm:$0xff] %v3039
      %3072 = vst [vmem:[#allocation2 + $0x78] sm:$0xff] %v3040
      %3073 = vst [vmem:[#allocation2 + $0x80] sm:$0xff] %v3041
      %3074 = vst [vmem:[#allocation2 + $0x88] sm:$0xff] %v3042
      %3075 = vst [vmem:[#allocation2 + $0x90] sm:$0xff] %v3043
      %3076 = vst [vmem:[#allocation2 + $0x98] sm:$0xff] %v3044
      %3077 = vst [vmem:[#allocation2 + $0xa0] sm:$0xff] %v3045
      %3078 = vst [vmem:[#allocation2 + $0xa8] sm:$0xff] %v3046
      %3079 = vst [vmem:[#allocation2 + $0xb0] sm:$0xff] %v3047
      %3080 = vst [vmem:[#allocation2 + $0xb8] sm:$0xff] %v3048
      %3081 = vst [vmem:[#allocation2 + $0xc0] sm:$0xff] %v3049
      %3082 = vst [vmem:[#allocation2 + $0xc8] sm:$0xff] %v3050
      %3083 = vst [vmem:[#allocation2 + $0xd0] sm:$0xff] %v3051
      %3084 = vst [vmem:[#allocation2 + $0xd8] sm:$0xff] %v3052
      %3085 = vst [vmem:[#allocation2 + $0xe0] sm:$0xff] %v3053
      %3086 = vst [vmem:[#allocation2 + $0xe8] sm:$0xff] %v3054
      %3087 = vst [vmem:[#allocation2 + $0xf0] sm:$0xff] %v3055
      %3088 = vst [vmem:[#allocation2 + $0xf8] sm:$0xff] %v3056
      %s3089 = scalar_lea.vmem %s1, 10
      %v3090 = vld [vmem:[%s3089] sm:$0x3]
      %v3091 = vunpack.c.l.b16 %v2720
      %v3092 = vunpack.c.l.b16 %v2723
      %v3093 = vpack.c.b16 %v3092, %v3091
      %v3095 = vsel %vm469, %v3093, 0
      %v3098 = vsel %vm518, %v3090, 0
      %3100 = vmatprep.subr.bf16.mxu0 0
      %3101 = vmatpush1.bf16.msra.mxu0 %v3098
      %3102 = vmatprep.subr.bf16.mxu0 0
      %3103 = vmatpush1.bf16.msra.mxu0 0
      %3104 = vmatprep.subr.bf16.mxu0 0
      %3105 = vmatpush1.bf16.msra.mxu0 0
      %3106 = vmatprep.subr.bf16.mxu0 0
      %3107 = vmatpush1.bf16.msra.mxu0 0
      %3108 = vmatprep.subr.bf16.mxu0 0
      %3109 = vmatpush1.bf16.msra.mxu0 0
      %3110 = vmatprep.subr.bf16.mxu0 0
      %3111 = vmatpush1.bf16.msra.mxu0 0
      %3112 = vmatprep.subr.bf16.mxu0 0
      %3113 = vmatpush1.bf16.msra.mxu0 0
      %3114 = vmatprep.subr.bf16.mxu0 0
      %3115 = vmatpush1.bf16.msra.mxu0 0
      %3116 = vmatprep.subr.bf16.mxu0 0
      %3117 = vmatpush1.bf16.msra.mxu0 0
      %3118 = vmatprep.subr.bf16.mxu0 0
      %3119 = vmatpush1.bf16.msra.mxu0 0
      %3120 = vmatprep.subr.bf16.mxu0 0
      %3121 = vmatpush1.bf16.msra.mxu0 0
      %3122 = vmatprep.subr.bf16.mxu0 0
      %3123 = vmatpush1.bf16.msra.mxu0 0
      %3124 = vmatprep.subr.bf16.mxu0 0
      %3125 = vmatpush1.bf16.msra.mxu0 0
      %3126 = vmatprep.subr.bf16.mxu0 0
      %3127 = vmatpush1.bf16.msra.mxu0 0
      %3128 = vmatprep.subr.bf16.mxu0 0
      %3129 = vmatpush1.bf16.msra.mxu0 0
      %3130 = vmatprep.subr.bf16.mxu0 0
      %3131 = vmatpush1.bf16.msra.mxu0 0
      %3132 = vmatprep.mubr.bf16.mxu0 0
      %3133 = vmatmul.mubr.bf16.gmra.mrb[0].mxu0 %v2785
      %v3134 = vpop.f32.mrb[0].mxu0
      %v3135 = vadd.f32 0.0, %v3134
      %v3136 = vpop.f32.mrb[0].mxu0
      %v3137 = vpop.f32.mrb[0].mxu0
      %v3138 = vadd.f32 0.0, %v3137
      %v3139 = vpop.f32.mrb[0].mxu0
      %3140 = vmatprep.mubr.bf16.mxu0 0
      %3141 = vmatmul.mubr.bf16.gmra.mrb[0].mxu0 %v2788
      %v3142 = vpop.f32.mrb[0].mxu0
      %v3143 = vadd.f32 0.0, %v3142
      %v3144 = vpop.f32.mrb[0].mxu0
      %v3145 = vpop.f32.mrb[0].mxu0
      %v3146 = vadd.f32 0.0, %v3145
      %v3147 = vpop.f32.mrb[0].mxu0
      %3148 = vmatprep.mubr.bf16.mxu0 0
      %3149 = vmatmul.mubr.bf16.gmra.mrb[0].mxu0 %v2791
      %v3150 = vpop.f32.mrb[0].mxu0
      %v3151 = vadd.f32 0.0, %v3150
      %v3152 = vpop.f32.mrb[0].mxu0
      %v3153 = vpop.f32.mrb[0].mxu0
      %v3154 = vadd.f32 0.0, %v3153
      %v3155 = vpop.f32.mrb[0].mxu0
      %3156 = vmatprep.mubr.bf16.mxu0 0
      %3157 = vmatmul.mubr.bf16.gmra.mrb[0].mxu0 %v2794
      %v3158 = vpop.f32.mrb[0].mxu0
      %v3159 = vadd.f32 0.0, %v3158
      %v3160 = vpop.f32.mrb[0].mxu0
      %v3161 = vpop.f32.mrb[0].mxu0
      %v3162 = vadd.f32 0.0, %v3161
      %v3163 = vpop.f32.mrb[0].mxu0
      %3164 = vmatprep.mubr.bf16.mxu0 0
      %3165 = vmatmul.mubr.bf16.gmra.mrb[0].mxu0 %v2797
      %v3166 = vpop.f32.mrb[0].mxu0
      %v3167 = vadd.f32 0.0, %v3166
      %v3168 = vpop.f32.mrb[0].mxu0
      %v3169 = vpop.f32.mrb[0].mxu0
      %v3170 = vadd.f32 0.0, %v3169
      %v3171 = vpop.f32.mrb[0].mxu0
      %3172 = vmatprep.mubr.bf16.mxu0 0
      %3173 = vmatmul.mubr.bf16.gmra.mrb[0].mxu0 %v2800
      %v3174 = vpop.f32.mrb[0].mxu0
      %v3175 = vadd.f32 0.0, %v3174
      %v3176 = vpop.f32.mrb[0].mxu0
      %v3177 = vpop.f32.mrb[0].mxu0
      %v3178 = vadd.f32 0.0, %v3177
      %v3179 = vpop.f32.mrb[0].mxu0
      %3180 = vmatprep.mubr.bf16.mxu0 0
      %3181 = vmatmul.mubr.bf16.gmra.mrb[0].mxu0 %v2803
      %v3182 = vpop.f32.mrb[0].mxu0
      %v3183 = vadd.f32 0.0, %v3182
      %v3184 = vpop.f32.mrb[0].mxu0
      %v3185 = vpop.f32.mrb[0].mxu0
      %v3186 = vadd.f32 0.0, %v3185
      %v3187 = vpop.f32.mrb[0].mxu0
      %3188 = vmatprep.mubr.bf16.mxu0 0
      %3189 = vmatmul.mubr.bf16.gmra.mrb[0].mxu0 %v2806
      %v3190 = vpop.f32.mrb[0].mxu0
      %v3191 = vadd.f32 0.0, %v3190
      %v3192 = vpop.f32.mrb[0].mxu0
      %v3193 = vpop.f32.mrb[0].mxu0
      %v3194 = vadd.f32 0.0, %v3193
      %v3195 = vpop.f32.mrb[0].mxu0
      %3196 = vmatprep.mubr.bf16.mxu0 0
      %3197 = vmatmul.mubr.bf16.gmra.mrb[0].mxu0 %v2809
      %v3198 = vpop.f32.mrb[0].mxu0
      %v3199 = vadd.f32 0.0, %v3198
      %v3200 = vpop.f32.mrb[0].mxu0
      %v3201 = vpop.f32.mrb[0].mxu0
      %v3202 = vadd.f32 0.0, %v3201
      %v3203 = vpop.f32.mrb[0].mxu0
      %3204 = vmatprep.mubr.bf16.mxu0 0
      %3205 = vmatmul.mubr.bf16.gmra.mrb[0].mxu0 %v2812
      %v3206 = vpop.f32.mrb[0].mxu0
      %v3207 = vadd.f32 0.0, %v3206
      %v3208 = vpop.f32.mrb[0].mxu0
      %v3209 = vpop.f32.mrb[0].mxu0
      %v3210 = vadd.f32 0.0, %v3209
      %v3211 = vpop.f32.mrb[0].mxu0
      %3212 = vmatprep.mubr.bf16.mxu0 0
      %3213 = vmatmul.mubr.bf16.gmra.mrb[0].mxu0 %v2815
      %v3214 = vpop.f32.mrb[0].mxu0
      %v3215 = vadd.f32 0.0, %v3214
      %v3216 = vpop.f32.mrb[0].mxu0
      %v3217 = vpop.f32.mrb[0].mxu0
      %v3218 = vadd.f32 0.0, %v3217
      %v3219 = vpop.f32.mrb[0].mxu0
      %3220 = vmatprep.mubr.bf16.mxu0 0
      %3221 = vmatmul.mubr.bf16.gmra.mrb[0].mxu0 %v2818
      %v3222 = vpop.f32.mrb[0].mxu0
      %v3223 = vadd.f32 0.0, %v3222
      %v3224 = vpop.f32.mrb[0].mxu0
      %v3225 = vpop.f32.mrb[0].mxu0
      %v3226 = vadd.f32 0.0, %v3225
      %v3227 = vpop.f32.mrb[0].mxu0
      %3228 = vmatprep.mubr.bf16.mxu0 0
      %3229 = vmatmul.mubr.bf16.gmra.mrb[0].mxu0 %v2821
      %v3230 = vpop.f32.mrb[0].mxu0
      %v3231 = vadd.f32 0.0, %v3230
      %v3232 = vpop.f32.mrb[0].mxu0
      %v3233 = vpop.f32.mrb[0].mxu0
      %v3234 = vadd.f32 0.0, %v3233
      %v3235 = vpop.f32.mrb[0].mxu0
      %3236 = vmatprep.mubr.bf16.mxu0 0
      %3237 = vmatmul.mubr.bf16.gmra.mrb[0].mxu0 %v2824
      %v3238 = vpop.f32.mrb[0].mxu0
      %v3239 = vadd.f32 0.0, %v3238
      %v3240 = vpop.f32.mrb[0].mxu0
      %v3241 = vpop.f32.mrb[0].mxu0
      %v3242 = vadd.f32 0.0, %v3241
      %v3243 = vpop.f32.mrb[0].mxu0
      %3244 = vmatprep.mubr.bf16.mxu0 0
      %3245 = vmatmul.mubr.bf16.gmra.mrb[0].mxu0 %v2827
      %v3246 = vpop.f32.mrb[0].mxu0
      %v3247 = vadd.f32 0.0, %v3246
      %v3248 = vpop.f32.mrb[0].mxu0
      %v3249 = vpop.f32.mrb[0].mxu0
      %v3250 = vadd.f32 0.0, %v3249
      %v3251 = vpop.f32.mrb[0].mxu0
      %3252 = vmatprep.mubr.bf16.mxu0 0
      %3253 = vmatmul.mubr.bf16.gmra.mrb[0].mxu0 %v3095
      %v3254 = vpop.f32.mrb[0].mxu0
      %v3255 = vadd.f32 0.0, %v3254
      %v3256 = vpop.f32.mrb[0].mxu0
      %v3257 = vpop.f32.mrb[0].mxu0
      %v3258 = vadd.f32 0.0, %v3257
      %v3259 = vpop.f32.mrb[0].mxu0
      %3260 = vdwg.mxu0
      %v3261 = vld [vmem:[#allocation2] sm:$0xff]
      %v3262 = vld [vmem:[#allocation2 + $0x8] sm:$0xff]
      %v3263 = vld [vmem:[#allocation2 + $0x10] sm:$0xff]
      %v3264 = vld [vmem:[#allocation2 + $0x18] sm:$0xff]
      %v3265 = vld [vmem:[#allocation2 + $0x20] sm:$0xff]
      %v3266 = vld [vmem:[#allocation2 + $0x28] sm:$0xff]
      %v3267 = vld [vmem:[#allocation2 + $0x30] sm:$0xff]
      %v3268 = vld [vmem:[#allocation2 + $0x38] sm:$0xff]
      %v3269 = vld [vmem:[#allocation2 + $0x40] sm:$0xff]
      %v3270 = vld [vmem:[#allocation2 + $0x48] sm:$0xff]
      %v3271 = vld [vmem:[#allocation2 + $0x50] sm:$0xff]
      %v3272 = vld [vmem:[#allocation2 + $0x58] sm:$0xff]
      %v3273 = vld [vmem:[#allocation2 + $0x60] sm:$0xff]
      %v3274 = vld [vmem:[#allocation2 + $0x68] sm:$0xff]
      %v3275 = vld [vmem:[#allocation2 + $0x70] sm:$0xff]
      %v3276 = vld [vmem:[#allocation2 + $0x78] sm:$0xff]
      %v3277 = vld [vmem:[#allocation2 + $0x80] sm:$0xff]
      %v3278 = vld [vmem:[#allocation2 + $0x88] sm:$0xff]
      %v3279 = vld [vmem:[#allocation2 + $0x90] sm:$0xff]
      %v3280 = vld [vmem:[#allocation2 + $0x98] sm:$0xff]
      %v3281 = vld [vmem:[#allocation2 + $0xa0] sm:$0xff]
      %v3282 = vld [vmem:[#allocation2 + $0xa8] sm:$0xff]
      %v3283 = vld [vmem:[#allocation2 + $0xb0] sm:$0xff]
      %v3284 = vld [vmem:[#allocation2 + $0xb8] sm:$0xff]
      %v3285 = vld [vmem:[#allocation2 + $0xc0] sm:$0xff]
      %v3286 = vld [vmem:[#allocation2 + $0xc8] sm:$0xff]
      %v3287 = vld [vmem:[#allocation2 + $0xd0] sm:$0xff]
      %v3288 = vld [vmem:[#allocation2 + $0xd8] sm:$0xff]
      %v3289 = vld [vmem:[#allocation2 + $0xe0] sm:$0xff]
      %v3290 = vld [vmem:[#allocation2 + $0xe8] sm:$0xff]
      %v3291 = vld [vmem:[#allocation2 + $0xf0] sm:$0xff]
      %v3292 = vld [vmem:[#allocation2 + $0xf8] sm:$0xff]
      %v3293 = vadd.f32 %v3261, %v3135
      %v3294 = vadd.f32 %v3262, %v3138
      %v3295 = vadd.f32 %v3263, %v3143
      %v3296 = vadd.f32 %v3264, %v3146
      %v3297 = vadd.f32 %v3265, %v3151
      %v3298 = vadd.f32 %v3266, %v3154
      %v3299 = vadd.f32 %v3267, %v3159
      %v3300 = vadd.f32 %v3268, %v3162
      %v3301 = vadd.f32 %v3269, %v3167
      %v3302 = vadd.f32 %v3270, %v3170
      %v3303 = vadd.f32 %v3271, %v3175
      %v3304 = vadd.f32 %v3272, %v3178
      %v3305 = vadd.f32 %v3273, %v3183
      %v3306 = vadd.f32 %v3274, %v3186
      %v3307 = vadd.f32 %v3275, %v3191
      %v3308 = vadd.f32 %v3276, %v3194
      %v3309 = vadd.f32 %v3277, %v3199
      %v3310 = vadd.f32 %v3278, %v3202
      %v3311 = vadd.f32 %v3279, %v3207
      %v3312 = vadd.f32 %v3280, %v3210
      %v3313 = vadd.f32 %v3281, %v3215
      %v3314 = vadd.f32 %v3282, %v3218
      %v3315 = vadd.f32 %v3283, %v3223
      %v3316 = vadd.f32 %v3284, %v3226
      %v3317 = vadd.f32 %v3285, %v3231
      %v3318 = vadd.f32 %v3286, %v3234
      %v3319 = vadd.f32 %v3287, %v3239
      %v3320 = vadd.f32 %v3288, %v3242
      %v3321 = vadd.f32 %v3289, %v3247
      %v3322 = vadd.f32 %v3290, %v3250
      %v3323 = vadd.f32 %v3291, %v3255
      %v3324 = vadd.f32 %v3292, %v3258
      %3325 = vst [vmem:[#allocation2] sm:$0xff] %v3293
      %3326 = vst [vmem:[#allocation2 + $0x8] sm:$0xff] %v3294
      %3327 = vst [vmem:[#allocation2 + $0x10] sm:$0xff] %v3295
      %3328 = vst [vmem:[#allocation2 + $0x18] sm:$0xff] %v3296
      %3329 = vst [vmem:[#allocation2 + $0x20] sm:$0xff] %v3297
      %3330 = vst [vmem:[#allocation2 + $0x28] sm:$0xff] %v3298
      %3331 = vst [vmem:[#allocation2 + $0x30] sm:$0xff] %v3299
      %3332 = vst [vmem:[#allocation2 + $0x38] sm:$0xff] %v3300
      %3333 = vst [vmem:[#allocation2 + $0x40] sm:$0xff] %v3301
      %3334 = vst [vmem:[#allocation2 + $0x48] sm:$0xff] %v3302
      %3335 = vst [vmem:[#allocation2 + $0x50] sm:$0xff] %v3303
      %3336 = vst [vmem:[#allocation2 + $0x58] sm:$0xff] %v3304
      %3337 = vst [vmem:[#allocation2 + $0x60] sm:$0xff] %v3305
      %3338 = vst [vmem:[#allocation2 + $0x68] sm:$0xff] %v3306
      %3339 = vst [vmem:[#allocation2 + $0x70] sm:$0xff] %v3307
      %3340 = vst [vmem:[#allocation2 + $0x78] sm:$0xff] %v3308
      %3341 = vst [vmem:[#allocation2 + $0x80] sm:$0xff] %v3309
      %3342 = vst [vmem:[#allocation2 + $0x88] sm:$0xff] %v3310
      %3343 = vst [vmem:[#allocation2 + $0x90] sm:$0xff] %v3311
      %3344 = vst [vmem:[#allocation2 + $0x98] sm:$0xff] %v3312
      %3345 = vst [vmem:[#allocation2 + $0xa0] sm:$0xff] %v3313
      %3346 = vst [vmem:[#allocation2 + $0xa8] sm:$0xff] %v3314
      %3347 = vst [vmem:[#allocation2 + $0xb0] sm:$0xff] %v3315
      %3348 = vst [vmem:[#allocation2 + $0xb8] sm:$0xff] %v3316
      %3349 = vst [vmem:[#allocation2 + $0xc0] sm:$0xff] %v3317
      %3350 = vst [vmem:[#allocation2 + $0xc8] sm:$0xff] %v3318
      %3351 = vst [vmem:[#allocation2 + $0xd0] sm:$0xff] %v3319
      %3352 = vst [vmem:[#allocation2 + $0xd8] sm:$0xff] %v3320
      %3353 = vst [vmem:[#allocation2 + $0xe0] sm:$0xff] %v3321
      %3354 = vst [vmem:[#allocation2 + $0xe8] sm:$0xff] %v3322
      %3355 = vst [vmem:[#allocation2 + $0xf0] sm:$0xff] %v3323
      %3356 = vst [vmem:[#allocation2 + $0xf8] sm:$0xff] %v3324
      %s3357 = scalar_lea.vmem %s1, 16
      %v3358 = vld [vmem:[%s3357] sm:$0x3]
      %v3359 = vunpack.c.l.b16 %v2727
      %v3360 = vunpack.c.l.b16 %v2730
      %v3361 = vpack.c.b16 %v3360, %v3359
      %v3363 = vsel %vm469, %v3361, 0
      %v3366 = vsel %vm518, %v3358, 0
      %3368 = vmatprep.subr.bf16.mxu0 0
      %3369 = vmatpush1.bf16.msra.mxu0 %v3366
      %3370 = vmatprep.subr.bf16.mxu0 0
      %3371 = vmatpush1.bf16.msra.mxu0 0
      %3372 = vmatprep.subr.bf16.mxu0 0
      %3373 = vmatpush1.bf16.msra.mxu0 0
      %3374 = vmatprep.subr.bf16.mxu0 0
      %3375 = vmatpush1.bf16.msra.mxu0 0
      %3376 = vmatprep.subr.bf16.mxu0 0
      %3377 = vmatpush1.bf16.msra.mxu0 0
      %3378 = vmatprep.subr.bf16.mxu0 0
      %3379 = vmatpush1.bf16.msra.mxu0 0
      %3380 = vmatprep.subr.bf16.mxu0 0
      %3381 = vmatpush1.bf16.msra.mxu0 0
      %3382 = vmatprep.subr.bf16.mxu0 0
      %3383 = vmatpush1.bf16.msra.mxu0 0
      %3384 = vmatprep.subr.bf16.mxu0 0
      %3385 = vmatpush1.bf16.msra.mxu0 0
      %3386 = vmatprep.subr.bf16.mxu0 0
      %3387 = vmatpush1.bf16.msra.mxu0 0
      %3388 = vmatprep.subr.bf16.mxu0 0
      %3389 = vmatpush1.bf16.msra.mxu0 0
      %3390 = vmatprep.subr.bf16.mxu0 0
      %3391 = vmatpush1.bf16.msra.mxu0 0
      %3392 = vmatprep.subr.bf16.mxu0 0
      %3393 = vmatpush1.bf16.msra.mxu0 0
      %3394 = vmatprep.subr.bf16.mxu0 0
      %3395 = vmatpush1.bf16.msra.mxu0 0
      %3396 = vmatprep.subr.bf16.mxu0 0
      %3397 = vmatpush1.bf16.msra.mxu0 0
      %3398 = vmatprep.subr.bf16.mxu0 0
      %3399 = vmatpush1.bf16.msra.mxu0 0
      %3400 = vmatprep.mubr.bf16.mxu0 0
      %3401 = vmatmul.mubr.bf16.gmra.mrb[0].mxu0 %v2788
      %v3402 = vpop.f32.mrb[0].mxu0
      %v3403 = vadd.f32 0.0, %v3402
      %v3404 = vpop.f32.mrb[0].mxu0
      %v3405 = vpop.f32.mrb[0].mxu0
      %v3406 = vadd.f32 0.0, %v3405
      %v3407 = vpop.f32.mrb[0].mxu0
      %3408 = vmatprep.mubr.bf16.mxu0 0
      %3409 = vmatmul.mubr.bf16.gmra.mrb[0].mxu0 %v2791
      %v3410 = vpop.f32.mrb[0].mxu0
      %v3411 = vadd.f32 0.0, %v3410
      %v3412 = vpop.f32.mrb[0].mxu0
      %v3413 = vpop.f32.mrb[0].mxu0
      %v3414 = vadd.f32 0.0, %v3413
      %v3415 = vpop.f32.mrb[0].mxu0
      %3416 = vmatprep.mubr.bf16.mxu0 0
      %3417 = vmatmul.mubr.bf16.gmra.mrb[0].mxu0 %v2794
      %v3418 = vpop.f32.mrb[0].mxu0
      %v3419 = vadd.f32 0.0, %v3418
      %v3420 = vpop.f32.mrb[0].mxu0
      %v3421 = vpop.f32.mrb[0].mxu0
      %v3422 = vadd.f32 0.0, %v3421
      %v3423 = vpop.f32.mrb[0].mxu0
      %3424 = vmatprep.mubr.bf16.mxu0 0
      %3425 = vmatmul.mubr.bf16.gmra.mrb[0].mxu0 %v2797
      %v3426 = vpop.f32.mrb[0].mxu0
      %v3427 = vadd.f32 0.0, %v3426
      %v3428 = vpop.f32.mrb[0].mxu0
      %v3429 = vpop.f32.mrb[0].mxu0
      %v3430 = vadd.f32 0.0, %v3429
      %v3431 = vpop.f32.mrb[0].mxu0
      %3432 = vmatprep.mubr.bf16.mxu0 0
      %3433 = vmatmul.mubr.bf16.gmra.mrb[0].mxu0 %v2800
      %v3434 = vpop.f32.mrb[0].mxu0
      %v3435 = vadd.f32 0.0, %v3434
      %v3436 = vpop.f32.mrb[0].mxu0
      %v3437 = vpop.f32.mrb[0].mxu0
      %v3438 = vadd.f32 0.0, %v3437
      %v3439 = vpop.f32.mrb[0].mxu0
      %3440 = vmatprep.mubr.bf16.mxu0 0
      %3441 = vmatmul.mubr.bf16.gmra.mrb[0].mxu0 %v2803
      %v3442 = vpop.f32.mrb[0].mxu0
      %v3443 = vadd.f32 0.0, %v3442
      %v3444 = vpop.f32.mrb[0].mxu0
      %v3445 = vpop.f32.mrb[0].mxu0
      %v3446 = vadd.f32 0.0, %v3445
      %v3447 = vpop.f32.mrb[0].mxu0
      %3448 = vmatprep.mubr.bf16.mxu0 0
      %3449 = vmatmul.mubr.bf16.gmra.mrb[0].mxu0 %v2806
      %v3450 = vpop.f32.mrb[0].mxu0
      %v3451 = vadd.f32 0.0, %v3450
      %v3452 = vpop.f32.mrb[0].mxu0
      %v3453 = vpop.f32.mrb[0].mxu0
      %v3454 = vadd.f32 0.0, %v3453
      %v3455 = vpop.f32.mrb[0].mxu0
      %3456 = vmatprep.mubr.bf16.mxu0 0
      %3457 = vmatmul.mubr.bf16.gmra.mrb[0].mxu0 %v2809
      %v3458 = vpop.f32.mrb[0].mxu0
      %v3459 = vadd.f32 0.0, %v3458
      %v3460 = vpop.f32.mrb[0].mxu0
      %v3461 = vpop.f32.mrb[0].mxu0
      %v3462 = vadd.f32 0.0, %v3461
      %v3463 = vpop.f32.mrb[0].mxu0
      %3464 = vmatprep.mubr.bf16.mxu0 0
      %3465 = vmatmul.mubr.bf16.gmra.mrb[0].mxu0 %v2812
      %v3466 = vpop.f32.mrb[0].mxu0
      %v3467 = vadd.f32 0.0, %v3466
      %v3468 = vpop.f32.mrb[0].mxu0
      %v3469 = vpop.f32.mrb[0].mxu0
      %v3470 = vadd.f32 0.0, %v3469
      %v3471 = vpop.f32.mrb[0].mxu0
      %3472 = vmatprep.mubr.bf16.mxu0 0
      %3473 = vmatmul.mubr.bf16.gmra.mrb[0].mxu0 %v2815
      %v3474 = vpop.f32.mrb[0].mxu0
      %v3475 = vadd.f32 0.0, %v3474
      %v3476 = vpop.f32.mrb[0].mxu0
      %v3477 = vpop.f32.mrb[0].mxu0
      %v3478 = vadd.f32 0.0, %v3477
      %v3479 = vpop.f32.mrb[0].mxu0
      %3480 = vmatprep.mubr.bf16.mxu0 0
      %3481 = vmatmul.mubr.bf16.gmra.mrb[0].mxu0 %v2818
      %v3482 = vpop.f32.mrb[0].mxu0
      %v3483 = vadd.f32 0.0, %v3482
      %v3484 = vpop.f32.mrb[0].mxu0
      %v3485 = vpop.f32.mrb[0].mxu0
      %v3486 = vadd.f32 0.0, %v3485
      %v3487 = vpop.f32.mrb[0].mxu0
      %3488 = vmatprep.mubr.bf16.mxu0 0
      %3489 = vmatmul.mubr.bf16.gmra.mrb[0].mxu0 %v2821
      %v3490 = vpop.f32.mrb[0].mxu0
      %v3491 = vadd.f32 0.0, %v3490
      %v3492 = vpop.f32.mrb[0].mxu0
      %v3493 = vpop.f32.mrb[0].mxu0
      %v3494 = vadd.f32 0.0, %v3493
      %v3495 = vpop.f32.mrb[0].mxu0
      %3496 = vmatprep.mubr.bf16.mxu0 0
      %3497 = vmatmul.mubr.bf16.gmra.mrb[0].mxu0 %v2824
      %v3498 = vpop.f32.mrb[0].mxu0
      %v3499 = vadd.f32 0.0, %v3498
      %v3500 = vpop.f32.mrb[0].mxu0
      %v3501 = vpop.f32.mrb[0].mxu0
      %v3502 = vadd.f32 0.0, %v3501
      %v3503 = vpop.f32.mrb[0].mxu0
      %3504 = vmatprep.mubr.bf16.mxu0 0
      %3505 = vmatmul.mubr.bf16.gmra.mrb[0].mxu0 %v2827
      %v3506 = vpop.f32.mrb[0].mxu0
      %v3507 = vadd.f32 0.0, %v3506
      %v3508 = vpop.f32.mrb[0].mxu0
      %v3509 = vpop.f32.mrb[0].mxu0
      %v3510 = vadd.f32 0.0, %v3509
      %v3511 = vpop.f32.mrb[0].mxu0
      %3512 = vmatprep.mubr.bf16.mxu0 0
      %3513 = vmatmul.mubr.bf16.gmra.mrb[0].mxu0 %v3095
      %v3514 = vpop.f32.mrb[0].mxu0
      %v3515 = vadd.f32 0.0, %v3514
      %v3516 = vpop.f32.mrb[0].mxu0
      %v3517 = vpop.f32.mrb[0].mxu0
      %v3518 = vadd.f32 0.0, %v3517
      %v3519 = vpop.f32.mrb[0].mxu0
      %3520 = vmatprep.mubr.bf16.mxu0 0
      %3521 = vmatmul.mubr.bf16.gmra.mrb[0].mxu0 %v3363
      %v3522 = vpop.f32.mrb[0].mxu0
      %v3523 = vadd.f32 0.0, %v3522
      %v3524 = vpop.f32.mrb[0].mxu0
      %v3525 = vpop.f32.mrb[0].mxu0
      %v3526 = vadd.f32 0.0, %v3525
      %v3527 = vpop.f32.mrb[0].mxu0
      %3528 = vdwg.mxu0
      %v3529 = vld [vmem:[#allocation2] sm:$0xff]
      %v3530 = vld [vmem:[#allocation2 + $0x8] sm:$0xff]
      %v3531 = vld [vmem:[#allocation2 + $0x10] sm:$0xff]
      %v3532 = vld [vmem:[#allocation2 + $0x18] sm:$0xff]
      %v3533 = vld [vmem:[#allocation2 + $0x20] sm:$0xff]
      %v3534 = vld [vmem:[#allocation2 + $0x28] sm:$0xff]
      %v3535 = vld [vmem:[#allocation2 + $0x30] sm:$0xff]
      %v3536 = vld [vmem:[#allocation2 + $0x38] sm:$0xff]
      %v3537 = vld [vmem:[#allocation2 + $0x40] sm:$0xff]
      %v3538 = vld [vmem:[#allocation2 + $0x48] sm:$0xff]
      %v3539 = vld [vmem:[#allocation2 + $0x50] sm:$0xff]
      %v3540 = vld [vmem:[#allocation2 + $0x58] sm:$0xff]
      %v3541 = vld [vmem:[#allocation2 + $0x60] sm:$0xff]
      %v3542 = vld [vmem:[#allocation2 + $0x68] sm:$0xff]
      %v3543 = vld [vmem:[#allocation2 + $0x70] sm:$0xff]
      %v3544 = vld [vmem:[#allocation2 + $0x78] sm:$0xff]
      %v3545 = vld [vmem:[#allocation2 + $0x80] sm:$0xff]
      %v3546 = vld [vmem:[#allocation2 + $0x88] sm:$0xff]
      %v3547 = vld [vmem:[#allocation2 + $0x90] sm:$0xff]
      %v3548 = vld [vmem:[#allocation2 + $0x98] sm:$0xff]
      %v3549 = vld [vmem:[#allocation2 + $0xa0] sm:$0xff]
      %v3550 = vld [vmem:[#allocation2 + $0xa8] sm:$0xff]
      %v3551 = vld [vmem:[#allocation2 + $0xb0] sm:$0xff]
      %v3552 = vld [vmem:[#allocation2 + $0xb8] sm:$0xff]
      %v3553 = vld [vmem:[#allocation2 + $0xc0] sm:$0xff]
      %v3554 = vld [vmem:[#allocation2 + $0xc8] sm:$0xff]
      %v3555 = vld [vmem:[#allocation2 + $0xd0] sm:$0xff]
      %v3556 = vld [vmem:[#allocation2 + $0xd8] sm:$0xff]
      %v3557 = vld [vmem:[#allocation2 + $0xe0] sm:$0xff]
      %v3558 = vld [vmem:[#allocation2 + $0xe8] sm:$0xff]
      %v3559 = vld [vmem:[#allocation2 + $0xf0] sm:$0xff]
      %v3560 = vld [vmem:[#allocation2 + $0xf8] sm:$0xff]
      %v3561 = vadd.f32 %v3529, %v3403
      %v3562 = vadd.f32 %v3530, %v3406
      %v3563 = vadd.f32 %v3531, %v3411
      %v3564 = vadd.f32 %v3532, %v3414
      %v3565 = vadd.f32 %v3533, %v3419
      %v3566 = vadd.f32 %v3534, %v3422
      %v3567 = vadd.f32 %v3535, %v3427
      %v3568 = vadd.f32 %v3536, %v3430
      %v3569 = vadd.f32 %v3537, %v3435
      %v3570 = vadd.f32 %v3538, %v3438
      %v3571 = vadd.f32 %v3539, %v3443
      %v3572 = vadd.f32 %v3540, %v3446
      %v3573 = vadd.f32 %v3541, %v3451
      %v3574 = vadd.f32 %v3542, %v3454
      %v3575 = vadd.f32 %v3543, %v3459
      %v3576 = vadd.f32 %v3544, %v3462
      %v3577 = vadd.f32 %v3545, %v3467
      %v3578 = vadd.f32 %v3546, %v3470
      %v3579 = vadd.f32 %v3547, %v3475
      %v3580 = vadd.f32 %v3548, %v3478
      %v3581 = vadd.f32 %v3549, %v3483
      %v3582 = vadd.f32 %v3550, %v3486
      %v3583 = vadd.f32 %v3551, %v3491
      %v3584 = vadd.f32 %v3552, %v3494
      %v3585 = vadd.f32 %v3553, %v3499
      %v3586 = vadd.f32 %v3554, %v3502
      %v3587 = vadd.f32 %v3555, %v3507
      %v3588 = vadd.f32 %v3556, %v3510
      %v3589 = vadd.f32 %v3557, %v3515
      %v3590 = vadd.f32 %v3558, %v3518
      %v3591 = vadd.f32 %v3559, %v3523
      %v3592 = vadd.f32 %v3560, %v3526
      %3593 = vst [vmem:[#allocation2] sm:$0xff] %v3561
      %3594 = vst [vmem:[#allocation2 + $0x8] sm:$0xff] %v3562
      %3595 = vst [vmem:[#allocation2 + $0x10] sm:$0xff] %v3563
      %3596 = vst [vmem:[#allocation2 + $0x18] sm:$0xff] %v3564
      %3597 = vst [vmem:[#allocation2 + $0x20] sm:$0xff] %v3565
      %3598 = vst [vmem:[#allocation2 + $0x28] sm:$0xff] %v3566
      %3599 = vst [vmem:[#allocation2 + $0x30] sm:$0xff] %v3567
      %3600 = vst [vmem:[#allocation2 + $0x38] sm:$0xff] %v3568
      %3601 = vst [vmem:[#allocation2 + $0x40] sm:$0xff] %v3569
      %3602 = vst [vmem:[#allocation2 + $0x48] sm:$0xff] %v3570
      %3603 = vst [vmem:[#allocation2 + $0x50] sm:$0xff] %v3571
      %3604 = vst [vmem:[#allocation2 + $0x58] sm:$0xff] %v3572
      %3605 = vst [vmem:[#allocation2 + $0x60] sm:$0xff] %v3573
      %3606 = vst [vmem:[#allocation2 + $0x68] sm:$0xff] %v3574
      %3607 = vst [vmem:[#allocation2 + $0x70] sm:$0xff] %v3575
      %3608 = vst [vmem:[#allocation2 + $0x78] sm:$0xff] %v3576
      %3609 = vst [vmem:[#allocation2 + $0x80] sm:$0xff] %v3577
      %3610 = vst [vmem:[#allocation2 + $0x88] sm:$0xff] %v3578
      %3611 = vst [vmem:[#allocation2 + $0x90] sm:$0xff] %v3579
      %3612 = vst [vmem:[#allocation2 + $0x98] sm:$0xff] %v3580
      %3613 = vst [vmem:[#allocation2 + $0xa0] sm:$0xff] %v3581
      %3614 = vst [vmem:[#allocation2 + $0xa8] sm:$0xff] %v3582
      %3615 = vst [vmem:[#allocation2 + $0xb0] sm:$0xff] %v3583
      %3616 = vst [vmem:[#allocation2 + $0xb8] sm:$0xff] %v3584
      %3617 = vst [vmem:[#allocation2 + $0xc0] sm:$0xff] %v3585
      %3618 = vst [vmem:[#allocation2 + $0xc8] sm:$0xff] %v3586
      %3619 = vst [vmem:[#allocation2 + $0xd0] sm:$0xff] %v3587
      %3620 = vst [vmem:[#allocation2 + $0xd8] sm:$0xff] %v3588
      %3621 = vst [vmem:[#allocation2 + $0xe0] sm:$0xff] %v3589
      %3622 = vst [vmem:[#allocation2 + $0xe8] sm:$0xff] %v3590
      %3623 = vst [vmem:[#allocation2 + $0xf0] sm:$0xff] %v3591
      %3624 = vst [vmem:[#allocation2 + $0xf8] sm:$0xff] %v3592
      %v3625 = vld [vmem:[#allocation2] sm:$0xff]
      %v3626 = vld [vmem:[#allocation2 + $0x8] sm:$0xff]
      %v3627 = vld [vmem:[#allocation2 + $0x10] sm:$0xff]
      %v3628 = vld [vmem:[#allocation2 + $0x18] sm:$0xff]
      %v3629 = vld [vmem:[#allocation2 + $0x20] sm:$0xff]
      %v3630 = vld [vmem:[#allocation2 + $0x28] sm:$0xff]
      %v3631 = vld [vmem:[#allocation2 + $0x30] sm:$0xff]
      %v3632 = vld [vmem:[#allocation2 + $0x38] sm:$0xff]
      %v3633 = vld [vmem:[#allocation2 + $0x40] sm:$0xff]
      %v3634 = vld [vmem:[#allocation2 + $0x48] sm:$0xff]
      %v3635 = vld [vmem:[#allocation2 + $0x50] sm:$0xff]
      %v3636 = vld [vmem:[#allocation2 + $0x58] sm:$0xff]
      %v3637 = vld [vmem:[#allocation2 + $0x60] sm:$0xff]
      %v3638 = vld [vmem:[#allocation2 + $0x68] sm:$0xff]
      %v3639 = vld [vmem:[#allocation2 + $0x70] sm:$0xff]
      %v3640 = vld [vmem:[#allocation2 + $0x78] sm:$0xff]
      %v3641 = vld [vmem:[#allocation2 + $0x80] sm:$0xff]
      %v3642 = vld [vmem:[#allocation2 + $0x88] sm:$0xff]
      %v3643 = vld [vmem:[#allocation2 + $0x90] sm:$0xff]
      %v3644 = vld [vmem:[#allocation2 + $0x98] sm:$0xff]
      %v3645 = vld [vmem:[#allocation2 + $0xa0] sm:$0xff]
      %v3646 = vld [vmem:[#allocation2 + $0xa8] sm:$0xff]
      %v3647 = vld [vmem:[#allocation2 + $0xb0] sm:$0xff]
      %v3648 = vld [vmem:[#allocation2 + $0xb8] sm:$0xff]
      %v3649 = vld [vmem:[#allocation2 + $0xc0] sm:$0xff]
      %v3650 = vld [vmem:[#allocation2 + $0xc8] sm:$0xff]
      %v3651 = vld [vmem:[#allocation2 + $0xd0] sm:$0xff]
      %v3652 = vld [vmem:[#allocation2 + $0xd8] sm:$0xff]
      %v3653 = vld [vmem:[#allocation2 + $0xe0] sm:$0xff]
      %v3654 = vld [vmem:[#allocation2 + $0xe8] sm:$0xff]
      %v3655 = vld [vmem:[#allocation2 + $0xf0] sm:$0xff]
      %v3656 = vld [vmem:[#allocation2 + $0xf8] sm:$0xff]
      %v3657 = vld [vmem:[%s2] sm:$0x1]
      %v3659 = vlaneseq
      %v3660 = vshrl.u32 %v3659, 7
      %v3661 = vsub.s32 0, %v3660
      %v3662 = vrot.slane %v3657, %v3661
      %v3664 = vmul.f32 %v3625, %v3662
      %v3665 = vmul.f32 %v3626, %v3662
      %v3666 = vmul.f32 %v3627, %v3662
      %v3667 = vmul.f32 %v3628, %v3662
      %v3668 = vmul.f32 %v3629, %v3662
      %v3669 = vmul.f32 %v3630, %v3662
      %v3670 = vmul.f32 %v3631, %v3662
      %v3671 = vmul.f32 %v3632, %v3662
      %v3672 = vmul.f32 %v3633, %v3662
      %v3673 = vmul.f32 %v3634, %v3662
      %v3674 = vmul.f32 %v3635, %v3662
      %v3675 = vmul.f32 %v3636, %v3662
      %v3676 = vmul.f32 %v3637, %v3662
      %v3677 = vmul.f32 %v3638, %v3662
      %v3678 = vmul.f32 %v3639, %v3662
      %v3679 = vmul.f32 %v3640, %v3662
      %v3680 = vmul.f32 %v3641, %v3662
      %v3681 = vmul.f32 %v3642, %v3662
      %v3682 = vmul.f32 %v3643, %v3662
      %v3683 = vmul.f32 %v3644, %v3662
      %v3684 = vmul.f32 %v3645, %v3662
      %v3685 = vmul.f32 %v3646, %v3662
      %v3686 = vmul.f32 %v3647, %v3662
      %v3687 = vmul.f32 %v3648, %v3662
      %v3688 = vmul.f32 %v3649, %v3662
      %v3689 = vmul.f32 %v3650, %v3662
      %v3690 = vmul.f32 %v3651, %v3662
      %v3691 = vmul.f32 %v3652, %v3662
      %v3692 = vmul.f32 %v3653, %v3662
      %v3693 = vmul.f32 %v3654, %v3662
      %v3694 = vmul.f32 %v3655, %v3662
      %v3695 = vmul.f32 %v3656, %v3662
      %v3696 = vld [vmem:[%s3] sm:$0x1]
      %v3698 = vlaneseq
      %v3699 = vshrl.u32 %v3698, 7
      %v3700 = vsub.s32 0, %v3699
      %v3701 = vrot.slane %v3696, %v3700
      %v3703 = vadd.f32 %v3664, %v3701
      %v3704 = vadd.f32 %v3665, %v3701
      %v3705 = vadd.f32 %v3666, %v3701
      %v3706 = vadd.f32 %v3667, %v3701
      %v3707 = vadd.f32 %v3668, %v3701
      %v3708 = vadd.f32 %v3669, %v3701
      %v3709 = vadd.f32 %v3670, %v3701
      %v3710 = vadd.f32 %v3671, %v3701
      %v3711 = vadd.f32 %v3672, %v3701
      %v3712 = vadd.f32 %v3673, %v3701
      %v3713 = vadd.f32 %v3674, %v3701
      %v3714 = vadd.f32 %v3675, %v3701
      %v3715 = vadd.f32 %v3676, %v3701
      %v3716 = vadd.f32 %v3677, %v3701
      %v3717 = vadd.f32 %v3678, %v3701
      %v3718 = vadd.f32 %v3679, %v3701
      %v3719 = vadd.f32 %v3680, %v3701
      %v3720 = vadd.f32 %v3681, %v3701
      %v3721 = vadd.f32 %v3682, %v3701
      %v3722 = vadd.f32 %v3683, %v3701
      %v3723 = vadd.f32 %v3684, %v3701
      %v3724 = vadd.f32 %v3685, %v3701
      %v3725 = vadd.f32 %v3686, %v3701
      %v3726 = vadd.f32 %v3687, %v3701
      %v3727 = vadd.f32 %v3688, %v3701
      %v3728 = vadd.f32 %v3689, %v3701
      %v3729 = vadd.f32 %v3690, %v3701
      %v3730 = vadd.f32 %v3691, %v3701
      %v3731 = vadd.f32 %v3692, %v3701
      %v3732 = vadd.f32 %v3693, %v3701
      %v3733 = vadd.f32 %v3694, %v3701
      %v3734 = vadd.f32 %v3695, %v3701
      %vm3735 = vcmp.ge.f32.partialorder %v3703, 0.0
      %vm3736 = vcmp.ge.f32.partialorder %v3704, 0.0
      %vm3737 = vcmp.ge.f32.partialorder %v3705, 0.0
      %vm3738 = vcmp.ge.f32.partialorder %v3706, 0.0
      %vm3739 = vcmp.ge.f32.partialorder %v3707, 0.0
      %vm3740 = vcmp.ge.f32.partialorder %v3708, 0.0
      %vm3741 = vcmp.ge.f32.partialorder %v3709, 0.0
      %vm3742 = vcmp.ge.f32.partialorder %v3710, 0.0
      %vm3743 = vcmp.ge.f32.partialorder %v3711, 0.0
      %vm3744 = vcmp.ge.f32.partialorder %v3712, 0.0
      %vm3745 = vcmp.ge.f32.partialorder %v3713, 0.0
      %vm3746 = vcmp.ge.f32.partialorder %v3714, 0.0
      %vm3747 = vcmp.ge.f32.partialorder %v3715, 0.0
      %vm3748 = vcmp.ge.f32.partialorder %v3716, 0.0
      %vm3749 = vcmp.ge.f32.partialorder %v3717, 0.0
      %vm3750 = vcmp.ge.f32.partialorder %v3718, 0.0
      %vm3751 = vcmp.ge.f32.partialorder %v3719, 0.0
      %vm3752 = vcmp.ge.f32.partialorder %v3720, 0.0
      %vm3753 = vcmp.ge.f32.partialorder %v3721, 0.0
      %vm3754 = vcmp.ge.f32.partialorder %v3722, 0.0
      %vm3755 = vcmp.ge.f32.partialorder %v3723, 0.0
      %vm3756 = vcmp.ge.f32.partialorder %v3724, 0.0
      %vm3757 = vcmp.ge.f32.partialorder %v3725, 0.0
      %vm3758 = vcmp.ge.f32.partialorder %v3726, 0.0
      %vm3759 = vcmp.ge.f32.partialorder %v3727, 0.0
      %vm3760 = vcmp.ge.f32.partialorder %v3728, 0.0
      %vm3761 = vcmp.ge.f32.partialorder %v3729, 0.0
      %vm3762 = vcmp.ge.f32.partialorder %v3730, 0.0
      %vm3763 = vcmp.ge.f32.partialorder %v3731, 0.0
      %vm3764 = vcmp.ge.f32.partialorder %v3732, 0.0
      %vm3765 = vcmp.ge.f32.partialorder %v3733, 0.0
      %vm3766 = vcmp.ge.f32.partialorder %v3734, 0.0
      %v3767 = vmul.f32 %v3703, 0.01
      %v3768 = vmul.f32 %v3704, 0.01
      %v3769 = vmul.f32 %v3705, 0.01
      %v3770 = vmul.f32 %v3706, 0.01
      %v3771 = vmul.f32 %v3707, 0.01
      %v3772 = vmul.f32 %v3708, 0.01
      %v3773 = vmul.f32 %v3709, 0.01
      %v3774 = vmul.f32 %v3710, 0.01
      %v3775 = vmul.f32 %v3711, 0.01
      %v3776 = vmul.f32 %v3712, 0.01
      %v3777 = vmul.f32 %v3713, 0.01
      %v3778 = vmul.f32 %v3714, 0.01
      %v3779 = vmul.f32 %v3715, 0.01
      %v3780 = vmul.f32 %v3716, 0.01
      %v3781 = vmul.f32 %v3717, 0.01
      %v3782 = vmul.f32 %v3718, 0.01
      %v3783 = vmul.f32 %v3719, 0.01
      %v3784 = vmul.f32 %v3720, 0.01
      %v3785 = vmul.f32 %v3721, 0.01
      %v3786 = vmul.f32 %v3722, 0.01
      %v3787 = vmul.f32 %v3723, 0.01
      %v3788 = vmul.f32 %v3724, 0.01
      %v3789 = vmul.f32 %v3725, 0.01
      %v3790 = vmul.f32 %v3726, 0.01
      %v3791 = vmul.f32 %v3727, 0.01
      %v3792 = vmul.f32 %v3728, 0.01
      %v3793 = vmul.f32 %v3729, 0.01
      %v3794 = vmul.f32 %v3730, 0.01
      %v3795 = vmul.f32 %v3731, 0.01
      %v3796 = vmul.f32 %v3732, 0.01
      %v3797 = vmul.f32 %v3733, 0.01
      %v3798 = vmul.f32 %v3734, 0.01
      %v3799 = vsel %vm3735, %v3703, %v3767
      %v3800 = vsel %vm3736, %v3704, %v3768
      %v3801 = vsel %vm3737, %v3705, %v3769
      %v3802 = vsel %vm3738, %v3706, %v3770
      %v3803 = vsel %vm3739, %v3707, %v3771
      %v3804 = vsel %vm3740, %v3708, %v3772
      %v3805 = vsel %vm3741, %v3709, %v3773
      %v3806 = vsel %vm3742, %v3710, %v3774
      %v3807 = vsel %vm3743, %v3711, %v3775
      %v3808 = vsel %vm3744, %v3712, %v3776
      %v3809 = vsel %vm3745, %v3713, %v3777
      %v3810 = vsel %vm3746, %v3714, %v3778
      %v3811 = vsel %vm3747, %v3715, %v3779
      %v3812 = vsel %vm3748, %v3716, %v3780
      %v3813 = vsel %vm3749, %v3717, %v3781
      %v3814 = vsel %vm3750, %v3718, %v3782
      %v3815 = vsel %vm3751, %v3719, %v3783
      %v3816 = vsel %vm3752, %v3720, %v3784
      %v3817 = vsel %vm3753, %v3721, %v3785
      %v3818 = vsel %vm3754, %v3722, %v3786
      %v3819 = vsel %vm3755, %v3723, %v3787
      %v3820 = vsel %vm3756, %v3724, %v3788
      %v3821 = vsel %vm3757, %v3725, %v3789
      %v3822 = vsel %vm3758, %v3726, %v3790
      %v3823 = vsel %vm3759, %v3727, %v3791
      %v3824 = vsel %vm3760, %v3728, %v3792
      %v3825 = vsel %vm3761, %v3729, %v3793
      %v3826 = vsel %vm3762, %v3730, %v3794
      %v3827 = vsel %vm3763, %v3731, %v3795
      %v3828 = vsel %vm3764, %v3732, %v3796
      %v3829 = vsel %vm3765, %v3733, %v3797
      %v3830 = vsel %vm3766, %v3734, %v3798
      %v3831 = vpack.c.bf16 %v3800, %v3799
      %v3832 = vpack.c.bf16 %v3802, %v3801
      %v3833 = vpack.c.bf16 %v3804, %v3803
      %v3834 = vpack.c.bf16 %v3806, %v3805
      %v3835 = vpack.c.bf16 %v3808, %v3807
      %v3836 = vpack.c.bf16 %v3810, %v3809
      %v3837 = vpack.c.bf16 %v3812, %v3811
      %v3838 = vpack.c.bf16 %v3814, %v3813
      %v3839 = vpack.c.bf16 %v3816, %v3815
      %v3840 = vpack.c.bf16 %v3818, %v3817
      %v3841 = vpack.c.bf16 %v3820, %v3819
      %v3842 = vpack.c.bf16 %v3822, %v3821
      %v3843 = vpack.c.bf16 %v3824, %v3823
      %v3844 = vpack.c.bf16 %v3826, %v3825
      %v3845 = vpack.c.bf16 %v3828, %v3827
      %v3846 = vpack.c.bf16 %v3830, %v3829
      %v3863 = vunpack.c.l.b16 %v3831
      %v3864 = vunpack.c.h.b16 %v3831
      %v3865 = vunpack.c.l.b16 %v3832
      %v3866 = vunpack.c.h.b16 %v3832
      %v3867 = vunpack.c.l.b16 %v3833
      %v3868 = vunpack.c.h.b16 %v3833
      %v3869 = vunpack.c.l.b16 %v3834
      %v3870 = vunpack.c.h.b16 %v3834
      %v3871 = vunpack.c.l.b16 %v3835
      %v3872 = vunpack.c.h.b16 %v3835
      %v3873 = vunpack.c.l.b16 %v3836
      %v3874 = vunpack.c.h.b16 %v3836
      %v3875 = vunpack.c.l.b16 %v3837
      %v3876 = vunpack.c.h.b16 %v3837
      %v3877 = vunpack.c.l.b16 %v3838
      %v3878 = vunpack.c.h.b16 %v3838
      %v3879 = vunpack.c.l.b16 %v3839
      %v3880 = vunpack.c.h.b16 %v3839
      %v3881 = vunpack.c.l.b16 %v3840
      %v3882 = vunpack.c.h.b16 %v3840
      %v3883 = vunpack.c.l.b16 %v3841
      %v3884 = vunpack.c.h.b16 %v3841
      %v3885 = vunpack.c.l.b16 %v3842
      %v3886 = vunpack.c.h.b16 %v3842
      %v3887 = vunpack.c.l.b16 %v3843
      %v3888 = vunpack.c.h.b16 %v3843
      %v3889 = vunpack.c.l.b16 %v3844
      %v3890 = vunpack.c.h.b16 %v3844
      %v3891 = vunpack.c.l.b16 %v3845
      %v3892 = vunpack.c.h.b16 %v3845
      %v3893 = vunpack.c.l.b16 %v3846
      %v3894 = vunpack.c.h.b16 %v3846
      %v3895 = vpack.c.b16 %v3863, %v3863
      %v3896 = vpack.c.b16 %v3864, %v3864
      %v3897 = vpack.c.b16 %v3865, %v3865
      %v3898 = vpack.c.b16 %v3866, %v3866
      %v3899 = vpack.c.b16 %v3867, %v3867
      %v3900 = vpack.c.b16 %v3868, %v3868
      %v3901 = vpack.c.b16 %v3869, %v3869
      %v3902 = vpack.c.b16 %v3870, %v3870
      %v3903 = vpack.c.b16 %v3871, %v3871
      %v3904 = vpack.c.b16 %v3872, %v3872
      %v3905 = vpack.c.b16 %v3873, %v3873
      %v3906 = vpack.c.b16 %v3874, %v3874
      %v3907 = vpack.c.b16 %v3875, %v3875
      %v3908 = vpack.c.b16 %v3876, %v3876
      %v3909 = vpack.c.b16 %v3877, %v3877
      %v3910 = vpack.c.b16 %v3878, %v3878
      %v3911 = vpack.c.b16 %v3879, %v3879
      %v3912 = vpack.c.b16 %v3880, %v3880
      %v3913 = vpack.c.b16 %v3881, %v3881
      %v3914 = vpack.c.b16 %v3882, %v3882
      %v3915 = vpack.c.b16 %v3883, %v3883
      %v3916 = vpack.c.b16 %v3884, %v3884
      %v3917 = vpack.c.b16 %v3885, %v3885
      %v3918 = vpack.c.b16 %v3886, %v3886
      %v3919 = vpack.c.b16 %v3887, %v3887
      %v3920 = vpack.c.b16 %v3888, %v3888
      %v3921 = vpack.c.b16 %v3889, %v3889
      %v3922 = vpack.c.b16 %v3890, %v3890
      %v3923 = vpack.c.b16 %v3891, %v3891
      %v3924 = vpack.c.b16 %v3892, %v3892
      %v3925 = vpack.c.b16 %v3893, %v3893
      %v3926 = vpack.c.b16 %v3894, %v3894
      %vm3927 = vsmask.f32 256
      %vm3928 = vsmask.f32 4368
      %vm3929 = vmor %vm3927, %vm3928
      %v3931 = vshrl.u32 %v3895, 16
      %v3933 = vrot.slane %v3931, 7
      %v3934 = vshll.u32 %v3895, 16
      %v3936 = vor.u32 %v3933, %v3934
      %v3937 = vrot.slane %v3933, 4
      %v3939 = vshrl.u32 %v3896, 16
      %v3941 = vrot.slane %v3939, 7
      %v3942 = vshll.u32 %v3896, 16
      %v3944 = vor.u32 %v3941, %v3942
      %v3945 = vsel %vm3929, %v3937, %v3944
      %v3946 = vrot.slane %v3941, 4
      %v3948 = vshrl.u32 %v3897, 16
      %v3950 = vrot.slane %v3948, 7
      %v3951 = vshll.u32 %v3897, 16
      %v3953 = vor.u32 %v3950, %v3951
      %v3954 = vrot.slane %v3950, 4
      %v3956 = vshrl.u32 %v3898, 16
      %v3958 = vrot.slane %v3956, 7
      %v3959 = vshll.u32 %v3898, 16
      %v3961 = vor.u32 %v3958, %v3959
      %v3962 = vsel %vm3929, %v3954, %v3961
      %v3963 = vrot.slane %v3958, 4
      %v3965 = vshrl.u32 %v3899, 16
      %v3967 = vrot.slane %v3965, 7
      %v3968 = vshll.u32 %v3899, 16
      %v3970 = vor.u32 %v3967, %v3968
      %v3971 = vrot.slane %v3967, 4
      %v3973 = vshrl.u32 %v3900, 16
      %v3975 = vrot.slane %v3973, 7
      %v3976 = vshll.u32 %v3900, 16
      %v3978 = vor.u32 %v3975, %v3976
      %v3979 = vsel %vm3929, %v3971, %v3978
      %v3980 = vrot.slane %v3975, 4
      %v3982 = vshrl.u32 %v3901, 16
      %v3984 = vrot.slane %v3982, 7
      %v3985 = vshll.u32 %v3901, 16
      %v3987 = vor.u32 %v3984, %v3985
      %v3988 = vrot.slane %v3984, 4
      %v3990 = vshrl.u32 %v3902, 16
      %v3992 = vrot.slane %v3990, 7
      %v3993 = vshll.u32 %v3902, 16
      %v3995 = vor.u32 %v3992, %v3993
      %v3996 = vsel %vm3929, %v3988, %v3995
      %v3997 = vrot.slane %v3992, 4
      %v3999 = vshrl.u32 %v3903, 16
      %v4001 = vrot.slane %v3999, 7
      %v4002 = vshll.u32 %v3903, 16
      %v4004 = vor.u32 %v4001, %v4002
      %v4005 = vrot.slane %v4001, 4
      %v4007 = vshrl.u32 %v3904, 16
      %v4009 = vrot.slane %v4007, 7
      %v4010 = vshll.u32 %v3904, 16
      %v4012 = vor.u32 %v4009, %v4010
      %v4013 = vsel %vm3929, %v4005, %v4012
      %v4014 = vrot.slane %v4009, 4
      %v4016 = vshrl.u32 %v3905, 16
      %v4018 = vrot.slane %v4016, 7
      %v4019 = vshll.u32 %v3905, 16
      %v4021 = vor.u32 %v4018, %v4019
      %v4022 = vrot.slane %v4018, 4
      %v4024 = vshrl.u32 %v3906, 16
      %v4026 = vrot.slane %v4024, 7
      %v4027 = vshll.u32 %v3906, 16
      %v4029 = vor.u32 %v4026, %v4027
      %v4030 = vsel %vm3929, %v4022, %v4029
      %v4031 = vrot.slane %v4026, 4
      %v4033 = vshrl.u32 %v3907, 16
      %v4035 = vrot.slane %v4033, 7
      %v4036 = vshll.u32 %v3907, 16
      %v4038 = vor.u32 %v4035, %v4036
      %v4039 = vrot.slane %v4035, 4
      %v4041 = vshrl.u32 %v3908, 16
      %v4043 = vrot.slane %v4041, 7
      %v4044 = vshll.u32 %v3908, 16
      %v4046 = vor.u32 %v4043, %v4044
      %v4047 = vsel %vm3929, %v4039, %v4046
      %v4048 = vrot.slane %v4043, 4
      %v4050 = vshrl.u32 %v3909, 16
      %v4052 = vrot.slane %v4050, 7
      %v4053 = vshll.u32 %v3909, 16
      %v4055 = vor.u32 %v4052, %v4053
      %v4056 = vrot.slane %v4052, 4
      %v4058 = vshrl.u32 %v3910, 16
      %v4060 = vrot.slane %v4058, 7
      %v4061 = vshll.u32 %v3910, 16
      %v4063 = vor.u32 %v4060, %v4061
      %v4064 = vsel %vm3929, %v4056, %v4063
      %v4065 = vrot.slane %v4060, 4
      %v4067 = vshrl.u32 %v3911, 16
      %v4069 = vrot.slane %v4067, 7
      %v4070 = vshll.u32 %v3911, 16
      %v4072 = vor.u32 %v4069, %v4070
      %v4073 = vrot.slane %v4069, 4
      %v4075 = vshrl.u32 %v3912, 16
      %v4077 = vrot.slane %v4075, 7
      %v4078 = vshll.u32 %v3912, 16
      %v4080 = vor.u32 %v4077, %v4078
      %v4081 = vsel %vm3929, %v4073, %v4080
      %v4082 = vrot.slane %v4077, 4
      %v4084 = vshrl.u32 %v3913, 16
      %v4086 = vrot.slane %v4084, 7
      %v4087 = vshll.u32 %v3913, 16
      %v4089 = vor.u32 %v4086, %v4087
      %v4090 = vrot.slane %v4086, 4
      %v4092 = vshrl.u32 %v3914, 16
      %v4094 = vrot.slane %v4092, 7
      %v4095 = vshll.u32 %v3914, 16
      %v4097 = vor.u32 %v4094, %v4095
      %v4098 = vsel %vm3929, %v4090, %v4097
      %v4099 = vrot.slane %v4094, 4
      %v4101 = vshrl.u32 %v3915, 16
      %v4103 = vrot.slane %v4101, 7
      %v4104 = vshll.u32 %v3915, 16
      %v4106 = vor.u32 %v4103, %v4104
      %v4107 = vrot.slane %v4103, 4
      %v4109 = vshrl.u32 %v3916, 16
      %v4111 = vrot.slane %v4109, 7
      %v4112 = vshll.u32 %v3916, 16
      %v4114 = vor.u32 %v4111, %v4112
      %v4115 = vsel %vm3929, %v4107, %v4114
      %v4116 = vrot.slane %v4111, 4
      %v4118 = vshrl.u32 %v3917, 16
      %v4120 = vrot.slane %v4118, 7
      %v4121 = vshll.u32 %v3917, 16
      %v4123 = vor.u32 %v4120, %v4121
      %v4124 = vrot.slane %v4120, 4
      %v4126 = vshrl.u32 %v3918, 16
      %v4128 = vrot.slane %v4126, 7
      %v4129 = vshll.u32 %v3918, 16
      %v4131 = vor.u32 %v4128, %v4129
      %v4132 = vsel %vm3929, %v4124, %v4131
      %v4133 = vrot.slane %v4128, 4
      %v4135 = vshrl.u32 %v3919, 16
      %v4137 = vrot.slane %v4135, 7
      %v4138 = vshll.u32 %v3919, 16
      %v4140 = vor.u32 %v4137, %v4138
      %v4141 = vrot.slane %v4137, 4
      %v4143 = vshrl.u32 %v3920, 16
      %v4145 = vrot.slane %v4143, 7
      %v4146 = vshll.u32 %v3920, 16
      %v4148 = vor.u32 %v4145, %v4146
      %v4149 = vsel %vm3929, %v4141, %v4148
      %v4150 = vrot.slane %v4145, 4
      %v4152 = vshrl.u32 %v3921, 16
      %v4154 = vrot.slane %v4152, 7
      %v4155 = vshll.u32 %v3921, 16
      %v4157 = vor.u32 %v4154, %v4155
      %v4158 = vrot.slane %v4154, 4
      %v4160 = vshrl.u32 %v3922, 16
      %v4162 = vrot.slane %v4160, 7
      %v4163 = vshll.u32 %v3922, 16
      %v4165 = vor.u32 %v4162, %v4163
      %v4166 = vsel %vm3929, %v4158, %v4165
      %v4167 = vrot.slane %v4162, 4
      %v4169 = vshrl.u32 %v3923, 16
      %v4171 = vrot.slane %v4169, 7
      %v4172 = vshll.u32 %v3923, 16
      %v4174 = vor.u32 %v4171, %v4172
      %v4175 = vrot.slane %v4171, 4
      %v4177 = vshrl.u32 %v3924, 16
      %v4179 = vrot.slane %v4177, 7
      %v4180 = vshll.u32 %v3924, 16
      %v4182 = vor.u32 %v4179, %v4180
      %v4183 = vsel %vm3929, %v4175, %v4182
      %v4184 = vrot.slane %v4179, 4
      %v4186 = vshrl.u32 %v3925, 16
      %v4188 = vrot.slane %v4186, 7
      %v4189 = vshll.u32 %v3925, 16
      %v4191 = vor.u32 %v4188, %v4189
      %v4192 = vrot.slane %v4188, 4
      %v4194 = vshrl.u32 %v3926, 16
      %v4196 = vrot.slane %v4194, 7
      %v4197 = vshll.u32 %v3926, 16
      %v4199 = vor.u32 %v4196, %v4197
      %v4200 = vsel %vm3929, %v4192, %v4199
      %v4201 = vrot.slane %v4196, 4
      %s4250 = scalar_lea.vmem [#allocation3], 12
      %vm4251 = vcmask 1043456
      %vm4252 = vsmask.f32 7938
      %vm4253 = vmand %vm4251, %vm4252
      %v4254 = vld [vmem:[%s4250] sm:$0xf]
      %v4255 = vsel %vm4253, %v3936, %v4254
      %4256 = vst [vmem:[%s4250] sm:$0xf] %v4255
      %4257 = vst [vmem:[%s4250 + $0x4] sm:$0xf] %v3945
      %vm4258 = vcmask 1040384
      %vm4259 = vmand %vm4258, %vm3927
      %v4260 = vld [vmem:[%s4250 + $0x8] sm:$0x1]
      %v4261 = vsel %vm4259, %v3946, %v4260
      %4262 = vst [vmem:[%s4250 + $0x8] sm:$0x1] %v4261
      %v4263 = vld [vmem:[%s4250 + $0xc] sm:$0xf]
      %v4264 = vsel %vm4253, %v3953, %v4263
      %4265 = vst [vmem:[%s4250 + $0xc] sm:$0xf] %v4264
      %4266 = vst [vmem:[%s4250 + $0x10] sm:$0xf] %v3962
      %v4267 = vld [vmem:[%s4250 + $0x14] sm:$0x1]
      %v4268 = vsel %vm4259, %v3963, %v4267
      %4269 = vst [vmem:[%s4250 + $0x14] sm:$0x1] %v4268
      %v4270 = vld [vmem:[%s4250 + $0x18] sm:$0xf]
      %v4271 = vsel %vm4253, %v3970, %v4270
      %4272 = vst [vmem:[%s4250 + $0x18] sm:$0xf] %v4271
      %4273 = vst [vmem:[%s4250 + $0x1c] sm:$0xf] %v3979
      %v4274 = vld [vmem:[%s4250 + $0x20] sm:$0x1]
      %v4275 = vsel %vm4259, %v3980, %v4274
      %4276 = vst [vmem:[%s4250 + $0x20] sm:$0x1] %v4275
      %v4277 = vld [vmem:[%s4250 + $0x24] sm:$0xf]
      %v4278 = vsel %vm4253, %v3987, %v4277
      %4279 = vst [vmem:[%s4250 + $0x24] sm:$0xf] %v4278
      %4280 = vst [vmem:[%s4250 + $0x28] sm:$0xf] %v3996
      %v4281 = vld [vmem:[%s4250 + $0x2c] sm:$0x1]
      %v4282 = vsel %vm4259, %v3997, %v4281
      %4283 = vst [vmem:[%s4250 + $0x2c] sm:$0x1] %v4282
      %v4284 = vld [vmem:[%s4250 + $0x30] sm:$0xf]
      %v4285 = vsel %vm4253, %v4004, %v4284
      %4286 = vst [vmem:[%s4250 + $0x30] sm:$0xf] %v4285
      %4287 = vst [vmem:[%s4250 + $0x34] sm:$0xf] %v4013
      %v4288 = vld [vmem:[%s4250 + $0x38] sm:$0x1]
      %v4289 = vsel %vm4259, %v4014, %v4288
      %4290 = vst [vmem:[%s4250 + $0x38] sm:$0x1] %v4289
      %v4291 = vld [vmem:[%s4250 + $0x3c] sm:$0xf]
      %v4292 = vsel %vm4253, %v4021, %v4291
      %4293 = vst [vmem:[%s4250 + $0x3c] sm:$0xf] %v4292
      %4294 = vst [vmem:[%s4250 + $0x40] sm:$0xf] %v4030
      %v4295 = vld [vmem:[%s4250 + $0x44] sm:$0x1]
      %v4296 = vsel %vm4259, %v4031, %v4295
      %4297 = vst [vmem:[%s4250 + $0x44] sm:$0x1] %v4296
      %v4298 = vld [vmem:[%s4250 + $0x48] sm:$0xf]
      %v4299 = vsel %vm4253, %v4038, %v4298
      %4300 = vst [vmem:[%s4250 + $0x48] sm:$0xf] %v4299
      %4301 = vst [vmem:[%s4250 + $0x4c] sm:$0xf] %v4047
      %v4302 = vld [vmem:[%s4250 + $0x50] sm:$0x1]
      %v4303 = vsel %vm4259, %v4048, %v4302
      %4304 = vst [vmem:[%s4250 + $0x50] sm:$0x1] %v4303
      %v4305 = vld [vmem:[%s4250 + $0x54] sm:$0xf]
      %v4306 = vsel %vm4253, %v4055, %v4305
      %4307 = vst [vmem:[%s4250 + $0x54] sm:$0xf] %v4306
      %4308 = vst [vmem:[%s4250 + $0x58] sm:$0xf] %v4064
      %v4309 = vld [vmem:[%s4250 + $0x5c] sm:$0x1]
      %v4310 = vsel %vm4259, %v4065, %v4309
      %4311 = vst [vmem:[%s4250 + $0x5c] sm:$0x1] %v4310
      %v4312 = vld [vmem:[%s4250 + $0x60] sm:$0xf]
      %v4313 = vsel %vm4253, %v4072, %v4312
      %4314 = vst [vmem:[%s4250 + $0x60] sm:$0xf] %v4313
      %4315 = vst [vmem:[%s4250 + $0x64] sm:$0xf] %v4081
      %v4316 = vld [vmem:[%s4250 + $0x68] sm:$0x1]
      %v4317 = vsel %vm4259, %v4082, %v4316
      %4318 = vst [vmem:[%s4250 + $0x68] sm:$0x1] %v4317
      %v4319 = vld [vmem:[%s4250 + $0x6c] sm:$0xf]
      %v4320 = vsel %vm4253, %v4089, %v4319
      %4321 = vst [vmem:[%s4250 + $0x6c] sm:$0xf] %v4320
      %4322 = vst [vmem:[%s4250 + $0x70] sm:$0xf] %v4098
      %v4323 = vld [vmem:[%s4250 + $0x74] sm:$0x1]
      %v4324 = vsel %vm4259, %v4099, %v4323
      %4325 = vst [vmem:[%s4250 + $0x74] sm:$0x1] %v4324
      %v4326 = vld [vmem:[%s4250 + $0x78] sm:$0xf]
      %v4327 = vsel %vm4253, %v4106, %v4326
      %4328 = vst [vmem:[%s4250 + $0x78] sm:$0xf] %v4327
      %4329 = vst [vmem:[%s4250 + $0x7c] sm:$0xf] %v4115
      %v4330 = vld [vmem:[%s4250 + $0x80] sm:$0x1]
      %v4331 = vsel %vm4259, %v4116, %v4330
      %4332 = vst [vmem:[%s4250 + $0x80] sm:$0x1] %v4331
      %v4333 = vld [vmem:[%s4250 + $0x84] sm:$0xf]
      %v4334 = vsel %vm4253, %v4123, %v4333
      %4335 = vst [vmem:[%s4250 + $0x84] sm:$0xf] %v4334
      %4336 = vst [vmem:[%s4250 + $0x88] sm:$0xf] %v4132
      %v4337 = vld [vmem:[%s4250 + $0x8c] sm:$0x1]
      %v4338 = vsel %vm4259, %v4133, %v4337
      %4339 = vst [vmem:[%s4250 + $0x8c] sm:$0x1] %v4338
      %v4340 = vld [vmem:[%s4250 + $0x90] sm:$0xf]
      %v4341 = vsel %vm4253, %v4140, %v4340
      %4342 = vst [vmem:[%s4250 + $0x90] sm:$0xf] %v4341
      %4343 = vst [vmem:[%s4250 + $0x94] sm:$0xf] %v4149
      %v4344 = vld [vmem:[%s4250 + $0x98] sm:$0x1]
      %v4345 = vsel %vm4259, %v4150, %v4344
      %4346 = vst [vmem:[%s4250 + $0x98] sm:$0x1] %v4345
      %v4347 = vld [vmem:[%s4250 + $0x9c] sm:$0xf]
      %v4348 = vsel %vm4253, %v4157, %v4347
      %4349 = vst [vmem:[%s4250 + $0x9c] sm:$0xf] %v4348
      %4350 = vst [vmem:[%s4250 + $0xa0] sm:$0xf] %v4166
      %v4351 = vld [vmem:[%s4250 + $0xa4] sm:$0x1]
      %v4352 = vsel %vm4259, %v4167, %v4351
      %4353 = vst [vmem:[%s4250 + $0xa4] sm:$0x1] %v4352
      %v4354 = vld [vmem:[%s4250 + $0xa8] sm:$0xf]
      %v4355 = vsel %vm4253, %v4174, %v4354
      %4356 = vst [vmem:[%s4250 + $0xa8] sm:$0xf] %v4355
      %4357 = vst [vmem:[%s4250 + $0xac] sm:$0xf] %v4183
      %v4358 = vld [vmem:[%s4250 + $0xb0] sm:$0x1]
      %v4359 = vsel %vm4259, %v4184, %v4358
      %4360 = vst [vmem:[%s4250 + $0xb0] sm:$0x1] %v4359
      %v4361 = vld [vmem:[%s4250 + $0xb4] sm:$0xf]
      %v4362 = vsel %vm4253, %v4191, %v4361
      %4363 = vst [vmem:[%s4250 + $0xb4] sm:$0xf] %v4362
      %4364 = vst [vmem:[%s4250 + $0xb8] sm:$0xf] %v4200
      %v4365 = vld [vmem:[%s4250 + $0xbc] sm:$0x1]
      %v4366 = vsel %vm4259, %v4201, %v4365
      %4367 = vst [vmem:[%s4250 + $0xbc] sm:$0x1] %v4366
      %v4368 = vld [vmem:[#allocation3] sm:$0xf]
      %v4369 = vld [vmem:[#allocation3 + $0x4] sm:$0xf]
      %v4370 = vld [vmem:[#allocation3 + $0xc] sm:$0xf]
      %v4371 = vld [vmem:[#allocation3 + $0x10] sm:$0xf]
      %v4372 = vld [vmem:[#allocation3 + $0x18] sm:$0xf]
      %v4373 = vld [vmem:[#allocation3 + $0x1c] sm:$0xf]
      %v4374 = vld [vmem:[#allocation3 + $0x24] sm:$0xf]
      %v4375 = vld [vmem:[#allocation3 + $0x28] sm:$0xf]
      %v4376 = vld [vmem:[#allocation3 + $0x30] sm:$0xf]
      %v4377 = vld [vmem:[#allocation3 + $0x34] sm:$0xf]
      %v4378 = vld [vmem:[#allocation3 + $0x3c] sm:$0xf]
      %v4379 = vld [vmem:[#allocation3 + $0x40] sm:$0xf]
      %v4380 = vld [vmem:[#allocation3 + $0x48] sm:$0xf]
      %v4381 = vld [vmem:[#allocation3 + $0x4c] sm:$0xf]
      %v4382 = vld [vmem:[#allocation3 + $0x54] sm:$0xf]
      %v4383 = vld [vmem:[#allocation3 + $0x58] sm:$0xf]
      %v4384 = vld [vmem:[#allocation3 + $0x60] sm:$0xf]
      %v4385 = vld [vmem:[#allocation3 + $0x64] sm:$0xf]
      %v4386 = vld [vmem:[#allocation3 + $0x6c] sm:$0xf]
      %v4387 = vld [vmem:[#allocation3 + $0x70] sm:$0xf]
      %v4388 = vld [vmem:[#allocation3 + $0x78] sm:$0xf]
      %v4389 = vld [vmem:[#allocation3 + $0x7c] sm:$0xf]
      %v4390 = vld [vmem:[#allocation3 + $0x84] sm:$0xf]
      %v4391 = vld [vmem:[#allocation3 + $0x88] sm:$0xf]
      %v4392 = vld [vmem:[#allocation3 + $0x90] sm:$0xf]
      %v4393 = vld [vmem:[#allocation3 + $0x94] sm:$0xf]
      %v4394 = vld [vmem:[#allocation3 + $0x9c] sm:$0xf]
      %v4395 = vld [vmem:[#allocation3 + $0xa0] sm:$0xf]
      %v4396 = vld [vmem:[#allocation3 + $0xa8] sm:$0xf]
      %v4397 = vld [vmem:[#allocation3 + $0xac] sm:$0xf]
      %v4398 = vld [vmem:[#allocation3 + $0xb4] sm:$0xf]
      %v4399 = vld [vmem:[#allocation3 + $0xb8] sm:$0xf]
      %v4400 = vld [vmem:[#allocation3 + $0xc0] sm:$0xf]
      %v4401 = vld [vmem:[#allocation3 + $0xc4] sm:$0xf]
      %v4402 = vld [vmem:[#allocation3 + $0xcc] sm:$0xf]
      %v4403 = vld [vmem:[#allocation3 + $0xd0] sm:$0xf]
      %v4404 = vld [vmem:[%s4] sm:$0xf]
      %v4405 = vld [vmem:[%s4 + $0x4] sm:$0xf]
      %v4406 = vld [vmem:[%s4 + $0x8] sm:$0xf]
      %v4407 = vld [vmem:[%s4 + $0xc] sm:$0xf]
      %v4408 = vld [vmem:[%s4 + $0x10] sm:$0xf]
      %v4409 = vld [vmem:[%s4 + $0x14] sm:$0xf]
      %v4410 = vld [vmem:[%s4 + $0x18] sm:$0xf]
      %v4411 = vld [vmem:[%s4 + $0x1c] sm:$0xf]
      %v4412 = vld [vmem:[%s4 + $0x20] sm:$0xf]
      %v4413 = vld [vmem:[%s4 + $0x24] sm:$0xf]
      %v4414 = vld [vmem:[%s4 + $0x28] sm:$0xf]
      %v4415 = vld [vmem:[%s4 + $0x2c] sm:$0xf]
      %v4416 = vld [vmem:[%s4 + $0x30] sm:$0xf]
      %v4417 = vld [vmem:[%s4 + $0x34] sm:$0xf]
      %v4418 = vld [vmem:[%s4 + $0x38] sm:$0xf]
      %v4419 = vld [vmem:[%s4 + $0x3c] sm:$0xf]
      %v4452 = vunpack.c.l.b16 %v4368
      %v4453 = vunpack.c.l.b16 %v4369
      %v4454 = vunpack.c.l.b16 %v4370
      %v4455 = vunpack.c.l.b16 %v4371
      %v4456 = vunpack.c.l.b16 %v4372
      %v4457 = vunpack.c.l.b16 %v4373
      %v4458 = vunpack.c.l.b16 %v4374
      %v4459 = vunpack.c.l.b16 %v4375
      %v4460 = vunpack.c.l.b16 %v4376
      %v4461 = vunpack.c.l.b16 %v4377
      %v4462 = vunpack.c.l.b16 %v4378
      %v4463 = vunpack.c.l.b16 %v4379
      %v4464 = vunpack.c.l.b16 %v4380
      %v4465 = vunpack.c.l.b16 %v4381
      %v4466 = vunpack.c.l.b16 %v4382
      %v4467 = vunpack.c.l.b16 %v4383
      %v4468 = vunpack.c.l.b16 %v4384
      %v4469 = vunpack.c.l.b16 %v4385
      %v4470 = vunpack.c.l.b16 %v4386
      %v4471 = vunpack.c.l.b16 %v4387
      %v4472 = vunpack.c.l.b16 %v4388
      %v4473 = vunpack.c.l.b16 %v4389
      %v4474 = vunpack.c.l.b16 %v4390
      %v4475 = vunpack.c.l.b16 %v4391
      %v4476 = vunpack.c.l.b16 %v4392
      %v4477 = vunpack.c.l.b16 %v4393
      %v4478 = vunpack.c.l.b16 %v4394
      %v4479 = vunpack.c.l.b16 %v4395
      %v4480 = vunpack.c.l.b16 %v4396
      %v4481 = vunpack.c.l.b16 %v4397
      %v4482 = vunpack.c.l.b16 %v4398
      %v4483 = vunpack.c.l.b16 %v4399
      %v4484 = vpack.c.b16 %v4453, %v4452
      %v4485 = vpack.c.b16 %v4455, %v4454
      %v4486 = vpack.c.b16 %v4457, %v4456
      %v4487 = vpack.c.b16 %v4459, %v4458
      %v4488 = vpack.c.b16 %v4461, %v4460
      %v4489 = vpack.c.b16 %v4463, %v4462
      %v4490 = vpack.c.b16 %v4465, %v4464
      %v4491 = vpack.c.b16 %v4467, %v4466
      %v4492 = vpack.c.b16 %v4469, %v4468
      %v4493 = vpack.c.b16 %v4471, %v4470
      %v4494 = vpack.c.b16 %v4473, %v4472
      %v4495 = vpack.c.b16 %v4475, %v4474
      %v4496 = vpack.c.b16 %v4477, %v4476
      %v4497 = vpack.c.b16 %v4479, %v4478
      %v4498 = vpack.c.b16 %v4481, %v4480
      %v4499 = vpack.c.b16 %v4483, %v4482
      %v4532 = vunpack.c.l.b16 %v4404
      %v4533 = vunpack.c.l.b16 %v4405
      %v4534 = vunpack.c.l.b16 %v4406
      %v4535 = vunpack.c.l.b16 %v4407
      %v4536 = vunpack.c.l.b16 %v4408
      %v4537 = vunpack.c.l.b16 %v4409
      %v4538 = vunpack.c.l.b16 %v4410
      %v4539 = vunpack.c.l.b16 %v4411
      %v4540 = vunpack.c.l.b16 %v4412
      %v4541 = vunpack.c.l.b16 %v4413
      %v4542 = vunpack.c.l.b16 %v4414
      %v4543 = vunpack.c.l.b16 %v4415
      %v4544 = vunpack.c.l.b16 %v4416
      %v4545 = vunpack.c.l.b16 %v4417
      %v4546 = vunpack.c.l.b16 %v4418
      %v4547 = vunpack.c.l.b16 %v4419
      %v4548 = vpack.c.b16 %v4533, %v4532
      %v4549 = vpack.c.b16 %v4535, %v4534
      %v4550 = vpack.c.b16 %v4537, %v4536
      %v4551 = vpack.c.b16 %v4539, %v4538
      %v4552 = vpack.c.b16 %v4541, %v4540
      %v4553 = vpack.c.b16 %v4543, %v4542
      %v4554 = vpack.c.b16 %v4545, %v4544
      %v4555 = vpack.c.b16 %v4547, %v4546
      %4564 = vmatprep.subr.bf16.mxu0 0
      %4565 = vmatpush1.bf16.msra.mxu0 %v4548
      %4566 = vmatprep.subr.bf16.mxu0 0
      %4567 = vmatpush1.bf16.msra.mxu0 %v4549
      %4568 = vmatprep.subr.bf16.mxu0 0
      %4569 = vmatpush1.bf16.msra.mxu0 %v4550
      %4570 = vmatprep.subr.bf16.mxu0 0
      %4571 = vmatpush1.bf16.msra.mxu0 %v4551
      %4572 = vmatprep.subr.bf16.mxu0 0
      %4573 = vmatpush1.bf16.msra.mxu0 %v4552
      %4574 = vmatprep.subr.bf16.mxu0 0
      %4575 = vmatpush1.bf16.msra.mxu0 %v4553
      %4576 = vmatprep.subr.bf16.mxu0 0
      %4577 = vmatpush1.bf16.msra.mxu0 %v4554
      %4578 = vmatprep.subr.bf16.mxu0 0
      %4579 = vmatpush1.bf16.msra.mxu0 %v4555
      %4580 = vmatprep.subr.bf16.mxu0 0
      %4581 = vmatpush1.bf16.msra.mxu0 0
      %4582 = vmatprep.subr.bf16.mxu0 0
      %4583 = vmatpush1.bf16.msra.mxu0 0
      %4584 = vmatprep.subr.bf16.mxu0 0
      %4585 = vmatpush1.bf16.msra.mxu0 0
      %4586 = vmatprep.subr.bf16.mxu0 0
      %4587 = vmatpush1.bf16.msra.mxu0 0
      %4588 = vmatprep.subr.bf16.mxu0 0
      %4589 = vmatpush1.bf16.msra.mxu0 0
      %4590 = vmatprep.subr.bf16.mxu0 0
      %4591 = vmatpush1.bf16.msra.mxu0 0
      %4592 = vmatprep.subr.bf16.mxu0 0
      %4593 = vmatpush1.bf16.msra.mxu0 0
      %4594 = vmatprep.subr.bf16.mxu0 0
      %4595 = vmatpush1.bf16.msra.mxu0 0
      %4596 = vmatprep.mubr.bf16.mxu0 0
      %4597 = vmatmul.mubr.bf16.gmra.mrb[0].mxu0 %v4484
      %v4598 = vpop.f32.mrb[0].mxu0
      %v4599 = vadd.f32 0.0, %v4598
      %v4600 = vpop.f32.mrb[0].mxu0
      %v4601 = vpop.f32.mrb[0].mxu0
      %v4602 = vadd.f32 0.0, %v4601
      %v4603 = vpop.f32.mrb[0].mxu0
      %4604 = vmatprep.mubr.bf16.mxu0 0
      %4605 = vmatmul.mubr.bf16.gmra.mrb[0].mxu0 %v4485
      %v4606 = vpop.f32.mrb[0].mxu0
      %v4607 = vadd.f32 0.0, %v4606
      %v4608 = vpop.f32.mrb[0].mxu0
      %v4609 = vpop.f32.mrb[0].mxu0
      %v4610 = vadd.f32 0.0, %v4609
      %v4611 = vpop.f32.mrb[0].mxu0
      %4612 = vmatprep.mubr.bf16.mxu0 0
      %4613 = vmatmul.mubr.bf16.gmra.mrb[0].mxu0 %v4486
      %v4614 = vpop.f32.mrb[0].mxu0
      %v4615 = vadd.f32 0.0, %v4614
      %v4616 = vpop.f32.mrb[0].mxu0
      %v4617 = vpop.f32.mrb[0].mxu0
      %v4618 = vadd.f32 0.0, %v4617
      %v4619 = vpop.f32.mrb[0].mxu0
      %4620 = vmatprep.mubr.bf16.mxu0 0
      %4621 = vmatmul.mubr.bf16.gmra.mrb[0].mxu0 %v4487
      %v4622 = vpop.f32.mrb[0].mxu0
      %v4623 = vadd.f32 0.0, %v4622
      %v4624 = vpop.f32.mrb[0].mxu0
      %v4625 = vpop.f32.mrb[0].mxu0
      %v4626 = vadd.f32 0.0, %v4625
      %v4627 = vpop.f32.mrb[0].mxu0
      %4628 = vmatprep.mubr.bf16.mxu0 0
      %4629 = vmatmul.mubr.bf16.gmra.mrb[0].mxu0 %v4488
      %v4630 = vpop.f32.mrb[0].mxu0
      %v4631 = vadd.f32 0.0, %v4630
      %v4632 = vpop.f32.mrb[0].mxu0
      %v4633 = vpop.f32.mrb[0].mxu0
      %v4634 = vadd.f32 0.0, %v4633
      %v4635 = vpop.f32.mrb[0].mxu0
      %4636 = vmatprep.mubr.bf16.mxu0 0
      %4637 = vmatmul.mubr.bf16.gmra.mrb[0].mxu0 %v4489
      %v4638 = vpop.f32.mrb[0].mxu0
      %v4639 = vadd.f32 0.0, %v4638
      %v4640 = vpop.f32.mrb[0].mxu0
      %v4641 = vpop.f32.mrb[0].mxu0
      %v4642 = vadd.f32 0.0, %v4641
      %v4643 = vpop.f32.mrb[0].mxu0
      %4644 = vmatprep.mubr.bf16.mxu0 0
      %4645 = vmatmul.mubr.bf16.gmra.mrb[0].mxu0 %v4490
      %v4646 = vpop.f32.mrb[0].mxu0
      %v4647 = vadd.f32 0.0, %v4646
      %v4648 = vpop.f32.mrb[0].mxu0
      %v4649 = vpop.f32.mrb[0].mxu0
      %v4650 = vadd.f32 0.0, %v4649
      %v4651 = vpop.f32.mrb[0].mxu0
      %4652 = vmatprep.mubr.bf16.mxu0 0
      %4653 = vmatmul.mubr.bf16.gmra.mrb[0].mxu0 %v4491
      %v4654 = vpop.f32.mrb[0].mxu0
      %v4655 = vadd.f32 0.0, %v4654
      %v4656 = vpop.f32.mrb[0].mxu0
      %v4657 = vpop.f32.mrb[0].mxu0
      %v4658 = vadd.f32 0.0, %v4657
      %v4659 = vpop.f32.mrb[0].mxu0
      %4660 = vmatprep.mubr.bf16.mxu0 0
      %4661 = vmatmul.mubr.bf16.gmra.mrb[0].mxu0 %v4492
      %v4662 = vpop.f32.mrb[0].mxu0
      %v4663 = vadd.f32 0.0, %v4662
      %v4664 = vpop.f32.mrb[0].mxu0
      %v4665 = vpop.f32.mrb[0].mxu0
      %v4666 = vadd.f32 0.0, %v4665
      %v4667 = vpop.f32.mrb[0].mxu0
      %4668 = vmatprep.mubr.bf16.mxu0 0
      %4669 = vmatmul.mubr.bf16.gmra.mrb[0].mxu0 %v4493
      %v4670 = vpop.f32.mrb[0].mxu0
      %v4671 = vadd.f32 0.0, %v4670
      %v4672 = vpop.f32.mrb[0].mxu0
      %v4673 = vpop.f32.mrb[0].mxu0
      %v4674 = vadd.f32 0.0, %v4673
      %v4675 = vpop.f32.mrb[0].mxu0
      %4676 = vmatprep.mubr.bf16.mxu0 0
      %4677 = vmatmul.mubr.bf16.gmra.mrb[0].mxu0 %v4494
      %v4678 = vpop.f32.mrb[0].mxu0
      %v4679 = vadd.f32 0.0, %v4678
      %v4680 = vpop.f32.mrb[0].mxu0
      %v4681 = vpop.f32.mrb[0].mxu0
      %v4682 = vadd.f32 0.0, %v4681
      %v4683 = vpop.f32.mrb[0].mxu0
      %4684 = vmatprep.mubr.bf16.mxu0 0
      %4685 = vmatmul.mubr.bf16.gmra.mrb[0].mxu0 %v4495
      %v4686 = vpop.f32.mrb[0].mxu0
      %v4687 = vadd.f32 0.0, %v4686
      %v4688 = vpop.f32.mrb[0].mxu0
      %v4689 = vpop.f32.mrb[0].mxu0
      %v4690 = vadd.f32 0.0, %v4689
      %v4691 = vpop.f32.mrb[0].mxu0
      %4692 = vmatprep.mubr.bf16.mxu0 0
      %4693 = vmatmul.mubr.bf16.gmra.mrb[0].mxu0 %v4496
      %v4694 = vpop.f32.mrb[0].mxu0
      %v4695 = vadd.f32 0.0, %v4694
      %v4696 = vpop.f32.mrb[0].mxu0
      %v4697 = vpop.f32.mrb[0].mxu0
      %v4698 = vadd.f32 0.0, %v4697
      %v4699 = vpop.f32.mrb[0].mxu0
      %4700 = vmatprep.mubr.bf16.mxu0 0
      %4701 = vmatmul.mubr.bf16.gmra.mrb[0].mxu0 %v4497
      %v4702 = vpop.f32.mrb[0].mxu0
      %v4703 = vadd.f32 0.0, %v4702
      %v4704 = vpop.f32.mrb[0].mxu0
      %v4705 = vpop.f32.mrb[0].mxu0
      %v4706 = vadd.f32 0.0, %v4705
      %v4707 = vpop.f32.mrb[0].mxu0
      %4708 = vmatprep.mubr.bf16.mxu0 0
      %4709 = vmatmul.mubr.bf16.gmra.mrb[0].mxu0 %v4498
      %v4710 = vpop.f32.mrb[0].mxu0
      %v4711 = vadd.f32 0.0, %v4710
      %v4712 = vpop.f32.mrb[0].mxu0
      %v4713 = vpop.f32.mrb[0].mxu0
      %v4714 = vadd.f32 0.0, %v4713
      %v4715 = vpop.f32.mrb[0].mxu0
      %4716 = vmatprep.mubr.bf16.mxu0 0
      %4717 = vmatmul.mubr.bf16.gmra.mrb[0].mxu0 %v4499
      %v4718 = vpop.f32.mrb[0].mxu0
      %v4719 = vadd.f32 0.0, %v4718
      %v4720 = vpop.f32.mrb[0].mxu0
      %v4721 = vpop.f32.mrb[0].mxu0
      %v4722 = vadd.f32 0.0, %v4721
      %v4723 = vpop.f32.mrb[0].mxu0
      %4724 = vdwg.mxu0
      %4725 = vst [vmem:[#allocation2] sm:$0xff] %v4599
      %4726 = vst [vmem:[#allocation2 + $0x8] sm:$0xff] %v4602
      %4727 = vst [vmem:[#allocation2 + $0x10] sm:$0xff] %v4607
      %4728 = vst [vmem:[#allocation2 + $0x18] sm:$0xff] %v4610
      %4729 = vst [vmem:[#allocation2 + $0x20] sm:$0xff] %v4615
      %4730 = vst [vmem:[#allocation2 + $0x28] sm:$0xff] %v4618
      %4731 = vst [vmem:[#allocation2 + $0x30] sm:$0xff] %v4623
      %4732 = vst [vmem:[#allocation2 + $0x38] sm:$0xff] %v4626
      %4733 = vst [vmem:[#allocation2 + $0x40] sm:$0xff] %v4631
      %4734 = vst [vmem:[#allocation2 + $0x48] sm:$0xff] %v4634
      %4735 = vst [vmem:[#allocation2 + $0x50] sm:$0xff] %v4639
      %4736 = vst [vmem:[#allocation2 + $0x58] sm:$0xff] %v4642
      %4737 = vst [vmem:[#allocation2 + $0x60] sm:$0xff] %v4647
      %4738 = vst [vmem:[#allocation2 + $0x68] sm:$0xff] %v4650
      %4739 = vst [vmem:[#allocation2 + $0x70] sm:$0xff] %v4655
      %4740 = vst [vmem:[#allocation2 + $0x78] sm:$0xff] %v4658
      %4741 = vst [vmem:[#allocation2 + $0x80] sm:$0xff] %v4663
      %4742 = vst [vmem:[#allocation2 + $0x88] sm:$0xff] %v4666
      %4743 = vst [vmem:[#allocation2 + $0x90] sm:$0xff] %v4671
      %4744 = vst [vmem:[#allocation2 + $0x98] sm:$0xff] %v4674
      %4745 = vst [vmem:[#allocation2 + $0xa0] sm:$0xff] %v4679
      %4746 = vst [vmem:[#allocation2 + $0xa8] sm:$0xff] %v4682
      %4747 = vst [vmem:[#allocation2 + $0xb0] sm:$0xff] %v4687
      %4748 = vst [vmem:[#allocation2 + $0xb8] sm:$0xff] %v4690
      %4749 = vst [vmem:[#allocation2 + $0xc0] sm:$0xff] %v4695
      %4750 = vst [vmem:[#allocation2 + $0xc8] sm:$0xff] %v4698
      %4751 = vst [vmem:[#allocation2 + $0xd0] sm:$0xff] %v4703
      %4752 = vst [vmem:[#allocation2 + $0xd8] sm:$0xff] %v4706
      %4753 = vst [vmem:[#allocation2 + $0xe0] sm:$0xff] %v4711
      %4754 = vst [vmem:[#allocation2 + $0xe8] sm:$0xff] %v4714
      %4755 = vst [vmem:[#allocation2 + $0xf0] sm:$0xff] %v4719
      %4756 = vst [vmem:[#allocation2 + $0xf8] sm:$0xff] %v4722
      %s4757 = scalar_lea.vmem %s4, 192
      %v4758 = vld [vmem:[%s4757] sm:$0xf]
      %v4759 = vld [vmem:[%s4757 + $0x4] sm:$0xf]
      %v4760 = vld [vmem:[%s4757 + $0x8] sm:$0xf]
      %v4761 = vld [vmem:[%s4757 + $0xc] sm:$0xf]
      %v4762 = vld [vmem:[%s4757 + $0x10] sm:$0xf]
      %v4763 = vld [vmem:[%s4757 + $0x14] sm:$0xf]
      %v4764 = vld [vmem:[%s4757 + $0x18] sm:$0xf]
      %v4765 = vld [vmem:[%s4757 + $0x1c] sm:$0xf]
      %v4766 = vld [vmem:[%s4757 + $0x20] sm:$0xf]
      %v4767 = vld [vmem:[%s4757 + $0x24] sm:$0xf]
      %v4768 = vld [vmem:[%s4757 + $0x28] sm:$0xf]
      %v4769 = vld [vmem:[%s4757 + $0x2c] sm:$0xf]
      %v4770 = vld [vmem:[%s4757 + $0x30] sm:$0xf]
      %v4771 = vld [vmem:[%s4757 + $0x34] sm:$0xf]
      %v4772 = vld [vmem:[%s4757 + $0x38] sm:$0xf]
      %v4773 = vld [vmem:[%s4757 + $0x3c] sm:$0xf]
      %v4776 = vunpack.c.l.b16 %v4400
      %v4777 = vunpack.c.l.b16 %v4401
      %v4778 = vpack.c.b16 %v4777, %v4776
      %v4796 = vunpack.c.l.b16 %v4758
      %v4797 = vunpack.c.l.b16 %v4759
      %v4798 = vunpack.c.l.b16 %v4760
      %v4799 = vunpack.c.l.b16 %v4761
      %v4800 = vunpack.c.l.b16 %v4762
      %v4801 = vunpack.c.l.b16 %v4763
      %v4802 = vunpack.c.l.b16 %v4764
      %v4803 = vunpack.c.l.b16 %v4765
      %v4804 = vunpack.c.l.b16 %v4766
      %v4805 = vunpack.c.l.b16 %v4767
      %v4806 = vunpack.c.l.b16 %v4768
      %v4807 = vunpack.c.l.b16 %v4769
      %v4808 = vunpack.c.l.b16 %v4770
      %v4809 = vunpack.c.l.b16 %v4771
      %v4810 = vunpack.c.l.b16 %v4772
      %v4811 = vunpack.c.l.b16 %v4773
      %v4812 = vpack.c.b16 %v4797, %v4796
      %v4813 = vpack.c.b16 %v4799, %v4798
      %v4814 = vpack.c.b16 %v4801, %v4800
      %v4815 = vpack.c.b16 %v4803, %v4802
      %v4816 = vpack.c.b16 %v4805, %v4804
      %v4817 = vpack.c.b16 %v4807, %v4806
      %v4818 = vpack.c.b16 %v4809, %v4808
      %v4819 = vpack.c.b16 %v4811, %v4810
      %4828 = vmatprep.subr.bf16.mxu0 0
      %4829 = vmatpush1.bf16.msra.mxu0 %v4812
      %4830 = vmatprep.subr.bf16.mxu0 0
      %4831 = vmatpush1.bf16.msra.mxu0 %v4813
      %4832 = vmatprep.subr.bf16.mxu0 0
      %4833 = vmatpush1.bf16.msra.mxu0 %v4814
      %4834 = vmatprep.subr.bf16.mxu0 0
      %4835 = vmatpush1.bf16.msra.mxu0 %v4815
      %4836 = vmatprep.subr.bf16.mxu0 0
      %4837 = vmatpush1.bf16.msra.mxu0 %v4816
      %4838 = vmatprep.subr.bf16.mxu0 0
      %4839 = vmatpush1.bf16.msra.mxu0 %v4817
      %4840 = vmatprep.subr.bf16.mxu0 0
      %4841 = vmatpush1.bf16.msra.mxu0 %v4818
      %4842 = vmatprep.subr.bf16.mxu0 0
      %4843 = vmatpush1.bf16.msra.mxu0 %v4819
      %4844 = vmatprep.subr.bf16.mxu0 0
      %4845 = vmatpush1.bf16.msra.mxu0 0
      %4846 = vmatprep.subr.bf16.mxu0 0
      %4847 = vmatpush1.bf16.msra.mxu0 0
      %4848 = vmatprep.subr.bf16.mxu0 0
      %4849 = vmatpush1.bf16.msra.mxu0 0
      %4850 = vmatprep.subr.bf16.mxu0 0
      %4851 = vmatpush1.bf16.msra.mxu0 0
      %4852 = vmatprep.subr.bf16.mxu0 0
      %4853 = vmatpush1.bf16.msra.mxu0 0
      %4854 = vmatprep.subr.bf16.mxu0 0
      %4855 = vmatpush1.bf16.msra.mxu0 0
      %4856 = vmatprep.subr.bf16.mxu0 0
      %4857 = vmatpush1.bf16.msra.mxu0 0
      %4858 = vmatprep.subr.bf16.mxu0 0
      %4859 = vmatpush1.bf16.msra.mxu0 0
      %4860 = vmatprep.mubr.bf16.mxu0 0
      %4861 = vmatmul.mubr.bf16.gmra.mrb[0].mxu0 %v4485
      %v4862 = vpop.f32.mrb[0].mxu0
      %v4863 = vadd.f32 0.0, %v4862
      %v4864 = vpop.f32.mrb[0].mxu0
      %v4865 = vpop.f32.mrb[0].mxu0
      %v4866 = vadd.f32 0.0, %v4865
      %v4867 = vpop.f32.mrb[0].mxu0
      %4868 = vmatprep.mubr.bf16.mxu0 0
      %4869 = vmatmul.mubr.bf16.gmra.mrb[0].mxu0 %v4486
      %v4870 = vpop.f32.mrb[0].mxu0
      %v4871 = vadd.f32 0.0, %v4870
      %v4872 = vpop.f32.mrb[0].mxu0
      %v4873 = vpop.f32.mrb[0].mxu0
      %v4874 = vadd.f32 0.0, %v4873
      %v4875 = vpop.f32.mrb[0].mxu0
      %4876 = vmatprep.mubr.bf16.mxu0 0
      %4877 = vmatmul.mubr.bf16.gmra.mrb[0].mxu0 %v4487
      %v4878 = vpop.f32.mrb[0].mxu0
      %v4879 = vadd.f32 0.0, %v4878
      %v4880 = vpop.f32.mrb[0].mxu0
      %v4881 = vpop.f32.mrb[0].mxu0
      %v4882 = vadd.f32 0.0, %v4881
      %v4883 = vpop.f32.mrb[0].mxu0
      %4884 = vmatprep.mubr.bf16.mxu0 0
      %4885 = vmatmul.mubr.bf16.gmra.mrb[0].mxu0 %v4488
      %v4886 = vpop.f32.mrb[0].mxu0
      %v4887 = vadd.f32 0.0, %v4886
      %v4888 = vpop.f32.mrb[0].mxu0
      %v4889 = vpop.f32.mrb[0].mxu0
      %v4890 = vadd.f32 0.0, %v4889
      %v4891 = vpop.f32.mrb[0].mxu0
      %4892 = vmatprep.mubr.bf16.mxu0 0
      %4893 = vmatmul.mubr.bf16.gmra.mrb[0].mxu0 %v4489
      %v4894 = vpop.f32.mrb[0].mxu0
      %v4895 = vadd.f32 0.0, %v4894
      %v4896 = vpop.f32.mrb[0].mxu0
      %v4897 = vpop.f32.mrb[0].mxu0
      %v4898 = vadd.f32 0.0, %v4897
      %v4899 = vpop.f32.mrb[0].mxu0
      %4900 = vmatprep.mubr.bf16.mxu0 0
      %4901 = vmatmul.mubr.bf16.gmra.mrb[0].mxu0 %v4490
      %v4902 = vpop.f32.mrb[0].mxu0
      %v4903 = vadd.f32 0.0, %v4902
      %v4904 = vpop.f32.mrb[0].mxu0
      %v4905 = vpop.f32.mrb[0].mxu0
      %v4906 = vadd.f32 0.0, %v4905
      %v4907 = vpop.f32.mrb[0].mxu0
      %4908 = vmatprep.mubr.bf16.mxu0 0
      %4909 = vmatmul.mubr.bf16.gmra.mrb[0].mxu0 %v4491
      %v4910 = vpop.f32.mrb[0].mxu0
      %v4911 = vadd.f32 0.0, %v4910
      %v4912 = vpop.f32.mrb[0].mxu0
      %v4913 = vpop.f32.mrb[0].mxu0
      %v4914 = vadd.f32 0.0, %v4913
      %v4915 = vpop.f32.mrb[0].mxu0
      %4916 = vmatprep.mubr.bf16.mxu0 0
      %4917 = vmatmul.mubr.bf16.gmra.mrb[0].mxu0 %v4492
      %v4918 = vpop.f32.mrb[0].mxu0
      %v4919 = vadd.f32 0.0, %v4918
      %v4920 = vpop.f32.mrb[0].mxu0
      %v4921 = vpop.f32.mrb[0].mxu0
      %v4922 = vadd.f32 0.0, %v4921
      %v4923 = vpop.f32.mrb[0].mxu0
      %4924 = vmatprep.mubr.bf16.mxu0 0
      %4925 = vmatmul.mubr.bf16.gmra.mrb[0].mxu0 %v4493
      %v4926 = vpop.f32.mrb[0].mxu0
      %v4927 = vadd.f32 0.0, %v4926
      %v4928 = vpop.f32.mrb[0].mxu0
      %v4929 = vpop.f32.mrb[0].mxu0
      %v4930 = vadd.f32 0.0, %v4929
      %v4931 = vpop.f32.mrb[0].mxu0
      %4932 = vmatprep.mubr.bf16.mxu0 0
      %4933 = vmatmul.mubr.bf16.gmra.mrb[0].mxu0 %v4494
      %v4934 = vpop.f32.mrb[0].mxu0
      %v4935 = vadd.f32 0.0, %v4934
      %v4936 = vpop.f32.mrb[0].mxu0
      %v4937 = vpop.f32.mrb[0].mxu0
      %v4938 = vadd.f32 0.0, %v4937
      %v4939 = vpop.f32.mrb[0].mxu0
      %4940 = vmatprep.mubr.bf16.mxu0 0
      %4941 = vmatmul.mubr.bf16.gmra.mrb[0].mxu0 %v4495
      %v4942 = vpop.f32.mrb[0].mxu0
      %v4943 = vadd.f32 0.0, %v4942
      %v4944 = vpop.f32.mrb[0].mxu0
      %v4945 = vpop.f32.mrb[0].mxu0
      %v4946 = vadd.f32 0.0, %v4945
      %v4947 = vpop.f32.mrb[0].mxu0
      %4948 = vmatprep.mubr.bf16.mxu0 0
      %4949 = vmatmul.mubr.bf16.gmra.mrb[0].mxu0 %v4496
      %v4950 = vpop.f32.mrb[0].mxu0
      %v4951 = vadd.f32 0.0, %v4950
      %v4952 = vpop.f32.mrb[0].mxu0
      %v4953 = vpop.f32.mrb[0].mxu0
      %v4954 = vadd.f32 0.0, %v4953
      %v4955 = vpop.f32.mrb[0].mxu0
      %4956 = vmatprep.mubr.bf16.mxu0 0
      %4957 = vmatmul.mubr.bf16.gmra.mrb[0].mxu0 %v4497
      %v4958 = vpop.f32.mrb[0].mxu0
      %v4959 = vadd.f32 0.0, %v4958
      %v4960 = vpop.f32.mrb[0].mxu0
      %v4961 = vpop.f32.mrb[0].mxu0
      %v4962 = vadd.f32 0.0, %v4961
      %v4963 = vpop.f32.mrb[0].mxu0
      %4964 = vmatprep.mubr.bf16.mxu0 0
      %4965 = vmatmul.mubr.bf16.gmra.mrb[0].mxu0 %v4498
      %v4966 = vpop.f32.mrb[0].mxu0
      %v4967 = vadd.f32 0.0, %v4966
      %v4968 = vpop.f32.mrb[0].mxu0
      %v4969 = vpop.f32.mrb[0].mxu0
      %v4970 = vadd.f32 0.0, %v4969
      %v4971 = vpop.f32.mrb[0].mxu0
      %4972 = vmatprep.mubr.bf16.mxu0 0
      %4973 = vmatmul.mubr.bf16.gmra.mrb[0].mxu0 %v4499
      %v4974 = vpop.f32.mrb[0].mxu0
      %v4975 = vadd.f32 0.0, %v4974
      %v4976 = vpop.f32.mrb[0].mxu0
      %v4977 = vpop.f32.mrb[0].mxu0
      %v4978 = vadd.f32 0.0, %v4977
      %v4979 = vpop.f32.mrb[0].mxu0
      %4980 = vmatprep.mubr.bf16.mxu0 0
      %4981 = vmatmul.mubr.bf16.gmra.mrb[0].mxu0 %v4778
      %v4982 = vpop.f32.mrb[0].mxu0
      %v4983 = vadd.f32 0.0, %v4982
      %v4984 = vpop.f32.mrb[0].mxu0
      %v4985 = vpop.f32.mrb[0].mxu0
      %v4986 = vadd.f32 0.0, %v4985
      %v4987 = vpop.f32.mrb[0].mxu0
      %4988 = vdwg.mxu0
      %v4989 = vld [vmem:[#allocation2] sm:$0xff]
      %v4990 = vld [vmem:[#allocation2 + $0x8] sm:$0xff]
      %v4991 = vld [vmem:[#allocation2 + $0x10] sm:$0xff]
      %v4992 = vld [vmem:[#allocation2 + $0x18] sm:$0xff]
      %v4993 = vld [vmem:[#allocation2 + $0x20] sm:$0xff]
      %v4994 = vld [vmem:[#allocation2 + $0x28] sm:$0xff]
      %v4995 = vld [vmem:[#allocation2 + $0x30] sm:$0xff]
      %v4996 = vld [vmem:[#allocation2 + $0x38] sm:$0xff]
      %v4997 = vld [vmem:[#allocation2 + $0x40] sm:$0xff]
      %v4998 = vld [vmem:[#allocation2 + $0x48] sm:$0xff]
      %v4999 = vld [vmem:[#allocation2 + $0x50] sm:$0xff]
      %v5000 = vld [vmem:[#allocation2 + $0x58] sm:$0xff]
      %v5001 = vld [vmem:[#allocation2 + $0x60] sm:$0xff]
      %v5002 = vld [vmem:[#allocation2 + $0x68] sm:$0xff]
      %v5003 = vld [vmem:[#allocation2 + $0x70] sm:$0xff]
      %v5004 = vld [vmem:[#allocation2 + $0x78] sm:$0xff]
      %v5005 = vld [vmem:[#allocation2 + $0x80] sm:$0xff]
      %v5006 = vld [vmem:[#allocation2 + $0x88] sm:$0xff]
      %v5007 = vld [vmem:[#allocation2 + $0x90] sm:$0xff]
      %v5008 = vld [vmem:[#allocation2 + $0x98] sm:$0xff]
      %v5009 = vld [vmem:[#allocation2 + $0xa0] sm:$0xff]
      %v5010 = vld [vmem:[#allocation2 + $0xa8] sm:$0xff]
      %v5011 = vld [vmem:[#allocation2 + $0xb0] sm:$0xff]
      %v5012 = vld [vmem:[#allocation2 + $0xb8] sm:$0xff]
      %v5013 = vld [vmem:[#allocation2 + $0xc0] sm:$0xff]
      %v5014 = vld [vmem:[#allocation2 + $0xc8] sm:$0xff]
      %v5015 = vld [vmem:[#allocation2 + $0xd0] sm:$0xff]
      %v5016 = vld [vmem:[#allocation2 + $0xd8] sm:$0xff]
      %v5017 = vld [vmem:[#allocation2 + $0xe0] sm:$0xff]
      %v5018 = vld [vmem:[#allocation2 + $0xe8] sm:$0xff]
      %v5019 = vld [vmem:[#allocation2 + $0xf0] sm:$0xff]
      %v5020 = vld [vmem:[#allocation2 + $0xf8] sm:$0xff]
      %v5021 = vadd.f32 %v4989, %v4863
      %v5022 = vadd.f32 %v4990, %v4866
      %v5023 = vadd.f32 %v4991, %v4871
      %v5024 = vadd.f32 %v4992, %v4874
      %v5025 = vadd.f32 %v4993, %v4879
      %v5026 = vadd.f32 %v4994, %v4882
      %v5027 = vadd.f32 %v4995, %v4887
      %v5028 = vadd.f32 %v4996, %v4890
      %v5029 = vadd.f32 %v4997, %v4895
      %v5030 = vadd.f32 %v4998, %v4898
      %v5031 = vadd.f32 %v4999, %v4903
      %v5032 = vadd.f32 %v5000, %v4906
      %v5033 = vadd.f32 %v5001, %v4911
      %v5034 = vadd.f32 %v5002, %v4914
      %v5035 = vadd.f32 %v5003, %v4919
      %v5036 = vadd.f32 %v5004, %v4922
      %v5037 = vadd.f32 %v5005, %v4927
      %v5038 = vadd.f32 %v5006, %v4930
      %v5039 = vadd.f32 %v5007, %v4935
      %v5040 = vadd.f32 %v5008, %v4938
      %v5041 = vadd.f32 %v5009, %v4943
      %v5042 = vadd.f32 %v5010, %v4946
      %v5043 = vadd.f32 %v5011, %v4951
      %v5044 = vadd.f32 %v5012, %v4954
      %v5045 = vadd.f32 %v5013, %v4959
      %v5046 = vadd.f32 %v5014, %v4962
      %v5047 = vadd.f32 %v5015, %v4967
      %v5048 = vadd.f32 %v5016, %v4970
      %v5049 = vadd.f32 %v5017, %v4975
      %v5050 = vadd.f32 %v5018, %v4978
      %v5051 = vadd.f32 %v5019, %v4983
      %v5052 = vadd.f32 %v5020, %v4986
      %5053 = vst [vmem:[#allocation2] sm:$0xff] %v5021
      %5054 = vst [vmem:[#allocation2 + $0x8] sm:$0xff] %v5022
      %5055 = vst [vmem:[#allocation2 + $0x10] sm:$0xff] %v5023
      %5056 = vst [vmem:[#allocation2 + $0x18] sm:$0xff] %v5024
      %5057 = vst [vmem:[#allocation2 + $0x20] sm:$0xff] %v5025
      %5058 = vst [vmem:[#allocation2 + $0x28] sm:$0xff] %v5026
      %5059 = vst [vmem:[#allocation2 + $0x30] sm:$0xff] %v5027
      %5060 = vst [vmem:[#allocation2 + $0x38] sm:$0xff] %v5028
      %5061 = vst [vmem:[#allocation2 + $0x40] sm:$0xff] %v5029
      %5062 = vst [vmem:[#allocation2 + $0x48] sm:$0xff] %v5030
      %5063 = vst [vmem:[#allocation2 + $0x50] sm:$0xff] %v5031
      %5064 = vst [vmem:[#allocation2 + $0x58] sm:$0xff] %v5032
      %5065 = vst [vmem:[#allocation2 + $0x60] sm:$0xff] %v5033
      %5066 = vst [vmem:[#allocation2 + $0x68] sm:$0xff] %v5034
      %5067 = vst [vmem:[#allocation2 + $0x70] sm:$0xff] %v5035
      %5068 = vst [vmem:[#allocation2 + $0x78] sm:$0xff] %v5036
      %5069 = vst [vmem:[#allocation2 + $0x80] sm:$0xff] %v5037
      %5070 = vst [vmem:[#allocation2 + $0x88] sm:$0xff] %v5038
      %5071 = vst [vmem:[#allocation2 + $0x90] sm:$0xff] %v5039
      %5072 = vst [vmem:[#allocation2 + $0x98] sm:$0xff] %v5040
      %5073 = vst [vmem:[#allocation2 + $0xa0] sm:$0xff] %v5041
      %5074 = vst [vmem:[#allocation2 + $0xa8] sm:$0xff] %v5042
      %5075 = vst [vmem:[#allocation2 + $0xb0] sm:$0xff] %v5043
      %5076 = vst [vmem:[#allocation2 + $0xb8] sm:$0xff] %v5044
      %5077 = vst [vmem:[#allocation2 + $0xc0] sm:$0xff] %v5045
      %5078 = vst [vmem:[#allocation2 + $0xc8] sm:$0xff] %v5046
      %5079 = vst [vmem:[#allocation2 + $0xd0] sm:$0xff] %v5047
      %5080 = vst [vmem:[#allocation2 + $0xd8] sm:$0xff] %v5048
      %5081 = vst [vmem:[#allocation2 + $0xe0] sm:$0xff] %v5049
      %5082 = vst [vmem:[#allocation2 + $0xe8] sm:$0xff] %v5050
      %5083 = vst [vmem:[#allocation2 + $0xf0] sm:$0xff] %v5051
      %5084 = vst [vmem:[#allocation2 + $0xf8] sm:$0xff] %v5052
      %s5085 = scalar_lea.vmem %s4, 384
      %v5086 = vld [vmem:[%s5085] sm:$0xf]
      %v5087 = vld [vmem:[%s5085 + $0x4] sm:$0xf]
      %v5088 = vld [vmem:[%s5085 + $0x8] sm:$0xf]
      %v5089 = vld [vmem:[%s5085 + $0xc] sm:$0xf]
      %v5090 = vld [vmem:[%s5085 + $0x10] sm:$0xf]
      %v5091 = vld [vmem:[%s5085 + $0x14] sm:$0xf]
      %v5092 = vld [vmem:[%s5085 + $0x18] sm:$0xf]
      %v5093 = vld [vmem:[%s5085 + $0x1c] sm:$0xf]
      %v5094 = vld [vmem:[%s5085 + $0x20] sm:$0xf]
      %v5095 = vld [vmem:[%s5085 + $0x24] sm:$0xf]
      %v5096 = vld [vmem:[%s5085 + $0x28] sm:$0xf]
      %v5097 = vld [vmem:[%s5085 + $0x2c] sm:$0xf]
      %v5098 = vld [vmem:[%s5085 + $0x30] sm:$0xf]
      %v5099 = vld [vmem:[%s5085 + $0x34] sm:$0xf]
      %v5100 = vld [vmem:[%s5085 + $0x38] sm:$0xf]
      %v5101 = vld [vmem:[%s5085 + $0x3c] sm:$0xf]
      %v5104 = vunpack.c.l.b16 %v4402
      %v5105 = vunpack.c.l.b16 %v4403
      %v5106 = vpack.c.b16 %v5105, %v5104
      %v5124 = vunpack.c.l.b16 %v5086
      %v5125 = vunpack.c.l.b16 %v5087
      %v5126 = vunpack.c.l.b16 %v5088
      %v5127 = vunpack.c.l.b16 %v5089
      %v5128 = vunpack.c.l.b16 %v5090
      %v5129 = vunpack.c.l.b16 %v5091
      %v5130 = vunpack.c.l.b16 %v5092
      %v5131 = vunpack.c.l.b16 %v5093
      %v5132 = vunpack.c.l.b16 %v5094
      %v5133 = vunpack.c.l.b16 %v5095
      %v5134 = vunpack.c.l.b16 %v5096
      %v5135 = vunpack.c.l.b16 %v5097
      %v5136 = vunpack.c.l.b16 %v5098
      %v5137 = vunpack.c.l.b16 %v5099
      %v5138 = vunpack.c.l.b16 %v5100
      %v5139 = vunpack.c.l.b16 %v5101
      %v5140 = vpack.c.b16 %v5125, %v5124
      %v5141 = vpack.c.b16 %v5127, %v5126
      %v5142 = vpack.c.b16 %v5129, %v5128
      %v5143 = vpack.c.b16 %v5131, %v5130
      %v5144 = vpack.c.b16 %v5133, %v5132
      %v5145 = vpack.c.b16 %v5135, %v5134
      %v5146 = vpack.c.b16 %v5137, %v5136
      %v5147 = vpack.c.b16 %v5139, %v5138
      %5156 = vmatprep.subr.bf16.mxu0 0
      %5157 = vmatpush1.bf16.msra.mxu0 %v5140
      %5158 = vmatprep.subr.bf16.mxu0 0
      %5159 = vmatpush1.bf16.msra.mxu0 %v5141
      %5160 = vmatprep.subr.bf16.mxu0 0
      %5161 = vmatpush1.bf16.msra.mxu0 %v5142
      %5162 = vmatprep.subr.bf16.mxu0 0
      %5163 = vmatpush1.bf16.msra.mxu0 %v5143
      %5164 = vmatprep.subr.bf16.mxu0 0
      %5165 = vmatpush1.bf16.msra.mxu0 %v5144
      %5166 = vmatprep.subr.bf16.mxu0 0
      %5167 = vmatpush1.bf16.msra.mxu0 %v5145
      %5168 = vmatprep.subr.bf16.mxu0 0
      %5169 = vmatpush1.bf16.msra.mxu0 %v5146
      %5170 = vmatprep.subr.bf16.mxu0 0
      %5171 = vmatpush1.bf16.msra.mxu0 %v5147
      %5172 = vmatprep.subr.bf16.mxu0 0
      %5173 = vmatpush1.bf16.msra.mxu0 0
      %5174 = vmatprep.subr.bf16.mxu0 0
      %5175 = vmatpush1.bf16.msra.mxu0 0
      %5176 = vmatprep.subr.bf16.mxu0 0
      %5177 = vmatpush1.bf16.msra.mxu0 0
      %5178 = vmatprep.subr.bf16.mxu0 0
      %5179 = vmatpush1.bf16.msra.mxu0 0
      %5180 = vmatprep.subr.bf16.mxu0 0
      %5181 = vmatpush1.bf16.msra.mxu0 0
      %5182 = vmatprep.subr.bf16.mxu0 0
      %5183 = vmatpush1.bf16.msra.mxu0 0
      %5184 = vmatprep.subr.bf16.mxu0 0
      %5185 = vmatpush1.bf16.msra.mxu0 0
      %5186 = vmatprep.subr.bf16.mxu0 0
      %5187 = vmatpush1.bf16.msra.mxu0 0
      %5188 = vmatprep.mubr.bf16.mxu0 0
      %5189 = vmatmul.mubr.bf16.gmra.mrb[0].mxu0 %v4486
      %v5190 = vpop.f32.mrb[0].mxu0
      %v5191 = vadd.f32 0.0, %v5190
      %v5192 = vpop.f32.mrb[0].mxu0
      %v5193 = vpop.f32.mrb[0].mxu0
      %v5194 = vadd.f32 0.0, %v5193
      %v5195 = vpop.f32.mrb[0].mxu0
      %5196 = vmatprep.mubr.bf16.mxu0 0
      %5197 = vmatmul.mubr.bf16.gmra.mrb[0].mxu0 %v4487
      %v5198 = vpop.f32.mrb[0].mxu0
      %v5199 = vadd.f32 0.0, %v5198
      %v5200 = vpop.f32.mrb[0].mxu0
      %v5201 = vpop.f32.mrb[0].mxu0
      %v5202 = vadd.f32 0.0, %v5201
      %v5203 = vpop.f32.mrb[0].mxu0
      %5204 = vmatprep.mubr.bf16.mxu0 0
      %5205 = vmatmul.mubr.bf16.gmra.mrb[0].mxu0 %v4488
      %v5206 = vpop.f32.mrb[0].mxu0
      %v5207 = vadd.f32 0.0, %v5206
      %v5208 = vpop.f32.mrb[0].mxu0
      %v5209 = vpop.f32.mrb[0].mxu0
      %v5210 = vadd.f32 0.0, %v5209
      %v5211 = vpop.f32.mrb[0].mxu0
      %5212 = vmatprep.mubr.bf16.mxu0 0
      %5213 = vmatmul.mubr.bf16.gmra.mrb[0].mxu0 %v4489
      %v5214 = vpop.f32.mrb[0].mxu0
      %v5215 = vadd.f32 0.0, %v5214
      %v5216 = vpop.f32.mrb[0].mxu0
      %v5217 = vpop.f32.mrb[0].mxu0
      %v5218 = vadd.f32 0.0, %v5217
      %v5219 = vpop.f32.mrb[0].mxu0
      %5220 = vmatprep.mubr.bf16.mxu0 0
      %5221 = vmatmul.mubr.bf16.gmra.mrb[0].mxu0 %v4490
      %v5222 = vpop.f32.mrb[0].mxu0
      %v5223 = vadd.f32 0.0, %v5222
      %v5224 = vpop.f32.mrb[0].mxu0
      %v5225 = vpop.f32.mrb[0].mxu0
      %v5226 = vadd.f32 0.0, %v5225
      %v5227 = vpop.f32.mrb[0].mxu0
      %5228 = vmatprep.mubr.bf16.mxu0 0
      %5229 = vmatmul.mubr.bf16.gmra.mrb[0].mxu0 %v4491
      %v5230 = vpop.f32.mrb[0].mxu0
      %v5231 = vadd.f32 0.0, %v5230
      %v5232 = vpop.f32.mrb[0].mxu0
      %v5233 = vpop.f32.mrb[0].mxu0
      %v5234 = vadd.f32 0.0, %v5233
      %v5235 = vpop.f32.mrb[0].mxu0
      %5236 = vmatprep.mubr.bf16.mxu0 0
      %5237 = vmatmul.mubr.bf16.gmra.mrb[0].mxu0 %v4492
      %v5238 = vpop.f32.mrb[0].mxu0
      %v5239 = vadd.f32 0.0, %v5238
      %v5240 = vpop.f32.mrb[0].mxu0
      %v5241 = vpop.f32.mrb[0].mxu0
      %v5242 = vadd.f32 0.0, %v5241
      %v5243 = vpop.f32.mrb[0].mxu0
      %5244 = vmatprep.mubr.bf16.mxu0 0
      %5245 = vmatmul.mubr.bf16.gmra.mrb[0].mxu0 %v4493
      %v5246 = vpop.f32.mrb[0].mxu0
      %v5247 = vadd.f32 0.0, %v5246
      %v5248 = vpop.f32.mrb[0].mxu0
      %v5249 = vpop.f32.mrb[0].mxu0
      %v5250 = vadd.f32 0.0, %v5249
      %v5251 = vpop.f32.mrb[0].mxu0
      %5252 = vmatprep.mubr.bf16.mxu0 0
      %5253 = vmatmul.mubr.bf16.gmra.mrb[0].mxu0 %v4494
      %v5254 = vpop.f32.mrb[0].mxu0
      %v5255 = vadd.f32 0.0, %v5254
      %v5256 = vpop.f32.mrb[0].mxu0
      %v5257 = vpop.f32.mrb[0].mxu0
      %v5258 = vadd.f32 0.0, %v5257
      %v5259 = vpop.f32.mrb[0].mxu0
      %5260 = vmatprep.mubr.bf16.mxu0 0
      %5261 = vmatmul.mubr.bf16.gmra.mrb[0].mxu0 %v4495
      %v5262 = vpop.f32.mrb[0].mxu0
      %v5263 = vadd.f32 0.0, %v5262
      %v5264 = vpop.f32.mrb[0].mxu0
      %v5265 = vpop.f32.mrb[0].mxu0
      %v5266 = vadd.f32 0.0, %v5265
      %v5267 = vpop.f32.mrb[0].mxu0
      %5268 = vmatprep.mubr.bf16.mxu0 0
      %5269 = vmatmul.mubr.bf16.gmra.mrb[0].mxu0 %v4496
      %v5270 = vpop.f32.mrb[0].mxu0
      %v5271 = vadd.f32 0.0, %v5270
      %v5272 = vpop.f32.mrb[0].mxu0
      %v5273 = vpop.f32.mrb[0].mxu0
      %v5274 = vadd.f32 0.0, %v5273
      %v5275 = vpop.f32.mrb[0].mxu0
      %5276 = vmatprep.mubr.bf16.mxu0 0
      %5277 = vmatmul.mubr.bf16.gmra.mrb[0].mxu0 %v4497
      %v5278 = vpop.f32.mrb[0].mxu0
      %v5279 = vadd.f32 0.0, %v5278
      %v5280 = vpop.f32.mrb[0].mxu0
      %v5281 = vpop.f32.mrb[0].mxu0
      %v5282 = vadd.f32 0.0, %v5281
      %v5283 = vpop.f32.mrb[0].mxu0
      %5284 = vmatprep.mubr.bf16.mxu0 0
      %5285 = vmatmul.mubr.bf16.gmra.mrb[0].mxu0 %v4498
      %v5286 = vpop.f32.mrb[0].mxu0
      %v5287 = vadd.f32 0.0, %v5286
      %v5288 = vpop.f32.mrb[0].mxu0
      %v5289 = vpop.f32.mrb[0].mxu0
      %v5290 = vadd.f32 0.0, %v5289
      %v5291 = vpop.f32.mrb[0].mxu0
      %5292 = vmatprep.mubr.bf16.mxu0 0
      %5293 = vmatmul.mubr.bf16.gmra.mrb[0].mxu0 %v4499
      %v5294 = vpop.f32.mrb[0].mxu0
      %v5295 = vadd.f32 0.0, %v5294
      %v5296 = vpop.f32.mrb[0].mxu0
      %v5297 = vpop.f32.mrb[0].mxu0
      %v5298 = vadd.f32 0.0, %v5297
      %v5299 = vpop.f32.mrb[0].mxu0
      %5300 = vmatprep.mubr.bf16.mxu0 0
      %5301 = vmatmul.mubr.bf16.gmra.mrb[0].mxu0 %v4778
      %v5302 = vpop.f32.mrb[0].mxu0
      %v5303 = vadd.f32 0.0, %v5302
      %v5304 = vpop.f32.mrb[0].mxu0
      %v5305 = vpop.f32.mrb[0].mxu0
      %v5306 = vadd.f32 0.0, %v5305
      %v5307 = vpop.f32.mrb[0].mxu0
      %5308 = vmatprep.mubr.bf16.mxu0 0
      %5309 = vmatmul.mubr.bf16.gmra.mrb[0].mxu0 %v5106
      %v5310 = vpop.f32.mrb[0].mxu0
      %v5311 = vadd.f32 0.0, %v5310
      %v5312 = vpop.f32.mrb[0].mxu0
      %v5313 = vpop.f32.mrb[0].mxu0
      %v5314 = vadd.f32 0.0, %v5313
      %v5315 = vpop.f32.mrb[0].mxu0
      %5316 = vdwg.mxu0
      %v5317 = vld [vmem:[#allocation2] sm:$0xff]
      %v5318 = vld [vmem:[#allocation2 + $0x8] sm:$0xff]
      %v5319 = vld [vmem:[#allocation2 + $0x10] sm:$0xff]
      %v5320 = vld [vmem:[#allocation2 + $0x18] sm:$0xff]
      %v5321 = vld [vmem:[#allocation2 + $0x20] sm:$0xff]
      %v5322 = vld [vmem:[#allocation2 + $0x28] sm:$0xff]
      %v5323 = vld [vmem:[#allocation2 + $0x30] sm:$0xff]
      %v5324 = vld [vmem:[#allocation2 + $0x38] sm:$0xff]
      %v5325 = vld [vmem:[#allocation2 + $0x40] sm:$0xff]
      %v5326 = vld [vmem:[#allocation2 + $0x48] sm:$0xff]
      %v5327 = vld [vmem:[#allocation2 + $0x50] sm:$0xff]
      %v5328 = vld [vmem:[#allocation2 + $0x58] sm:$0xff]
      %v5329 = vld [vmem:[#allocation2 + $0x60] sm:$0xff]
      %v5330 = vld [vmem:[#allocation2 + $0x68] sm:$0xff]
      %v5331 = vld [vmem:[#allocation2 + $0x70] sm:$0xff]
      %v5332 = vld [vmem:[#allocation2 + $0x78] sm:$0xff]
      %v5333 = vld [vmem:[#allocation2 + $0x80] sm:$0xff]
      %v5334 = vld [vmem:[#allocation2 + $0x88] sm:$0xff]
      %v5335 = vld [vmem:[#allocation2 + $0x90] sm:$0xff]
      %v5336 = vld [vmem:[#allocation2 + $0x98] sm:$0xff]
      %v5337 = vld [vmem:[#allocation2 + $0xa0] sm:$0xff]
      %v5338 = vld [vmem:[#allocation2 + $0xa8] sm:$0xff]
      %v5339 = vld [vmem:[#allocation2 + $0xb0] sm:$0xff]
      %v5340 = vld [vmem:[#allocation2 + $0xb8] sm:$0xff]
      %v5341 = vld [vmem:[#allocation2 + $0xc0] sm:$0xff]
      %v5342 = vld [vmem:[#allocation2 + $0xc8] sm:$0xff]
      %v5343 = vld [vmem:[#allocation2 + $0xd0] sm:$0xff]
      %v5344 = vld [vmem:[#allocation2 + $0xd8] sm:$0xff]
      %v5345 = vld [vmem:[#allocation2 + $0xe0] sm:$0xff]
      %v5346 = vld [vmem:[#allocation2 + $0xe8] sm:$0xff]
      %v5347 = vld [vmem:[#allocation2 + $0xf0] sm:$0xff]
      %v5348 = vld [vmem:[#allocation2 + $0xf8] sm:$0xff]
      %v5349 = vadd.f32 %v5317, %v5191
      %v5350 = vadd.f32 %v5318, %v5194
      %v5351 = vadd.f32 %v5319, %v5199
      %v5352 = vadd.f32 %v5320, %v5202
      %v5353 = vadd.f32 %v5321, %v5207
      %v5354 = vadd.f32 %v5322, %v5210
      %v5355 = vadd.f32 %v5323, %v5215
      %v5356 = vadd.f32 %v5324, %v5218
      %v5357 = vadd.f32 %v5325, %v5223
      %v5358 = vadd.f32 %v5326, %v5226
      %v5359 = vadd.f32 %v5327, %v5231
      %v5360 = vadd.f32 %v5328, %v5234
      %v5361 = vadd.f32 %v5329, %v5239
      %v5362 = vadd.f32 %v5330, %v5242
      %v5363 = vadd.f32 %v5331, %v5247
      %v5364 = vadd.f32 %v5332, %v5250
      %v5365 = vadd.f32 %v5333, %v5255
      %v5366 = vadd.f32 %v5334, %v5258
      %v5367 = vadd.f32 %v5335, %v5263
      %v5368 = vadd.f32 %v5336, %v5266
      %v5369 = vadd.f32 %v5337, %v5271
      %v5370 = vadd.f32 %v5338, %v5274
      %v5371 = vadd.f32 %v5339, %v5279
      %v5372 = vadd.f32 %v5340, %v5282
      %v5373 = vadd.f32 %v5341, %v5287
      %v5374 = vadd.f32 %v5342, %v5290
      %v5375 = vadd.f32 %v5343, %v5295
      %v5376 = vadd.f32 %v5344, %v5298
      %v5377 = vadd.f32 %v5345, %v5303
      %v5378 = vadd.f32 %v5346, %v5306
      %v5379 = vadd.f32 %v5347, %v5311
      %v5380 = vadd.f32 %v5348, %v5314
      %5381 = vst [vmem:[#allocation2] sm:$0xff] %v5349
      %5382 = vst [vmem:[#allocation2 + $0x8] sm:$0xff] %v5350
      %5383 = vst [vmem:[#allocation2 + $0x10] sm:$0xff] %v5351
      %5384 = vst [vmem:[#allocation2 + $0x18] sm:$0xff] %v5352
      %5385 = vst [vmem:[#allocation2 + $0x20] sm:$0xff] %v5353
      %5386 = vst [vmem:[#allocation2 + $0x28] sm:$0xff] %v5354
      %5387 = vst [vmem:[#allocation2 + $0x30] sm:$0xff] %v5355
      %5388 = vst [vmem:[#allocation2 + $0x38] sm:$0xff] %v5356
      %5389 = vst [vmem:[#allocation2 + $0x40] sm:$0xff] %v5357
      %5390 = vst [vmem:[#allocation2 + $0x48] sm:$0xff] %v5358
      %5391 = vst [vmem:[#allocation2 + $0x50] sm:$0xff] %v5359
      %5392 = vst [vmem:[#allocation2 + $0x58] sm:$0xff] %v5360
      %5393 = vst [vmem:[#allocation2 + $0x60] sm:$0xff] %v5361
      %5394 = vst [vmem:[#allocation2 + $0x68] sm:$0xff] %v5362
      %5395 = vst [vmem:[#allocation2 + $0x70] sm:$0xff] %v5363
      %5396 = vst [vmem:[#allocation2 + $0x78] sm:$0xff] %v5364
      %5397 = vst [vmem:[#allocation2 + $0x80] sm:$0xff] %v5365
      %5398 = vst [vmem:[#allocation2 + $0x88] sm:$0xff] %v5366
      %5399 = vst [vmem:[#allocation2 + $0x90] sm:$0xff] %v5367
      %5400 = vst [vmem:[#allocation2 + $0x98] sm:$0xff] %v5368
      %5401 = vst [vmem:[#allocation2 + $0xa0] sm:$0xff] %v5369
      %5402 = vst [vmem:[#allocation2 + $0xa8] sm:$0xff] %v5370
      %5403 = vst [vmem:[#allocation2 + $0xb0] sm:$0xff] %v5371
      %5404 = vst [vmem:[#allocation2 + $0xb8] sm:$0xff] %v5372
      %5405 = vst [vmem:[#allocation2 + $0xc0] sm:$0xff] %v5373
      %5406 = vst [vmem:[#allocation2 + $0xc8] sm:$0xff] %v5374
      %5407 = vst [vmem:[#allocation2 + $0xd0] sm:$0xff] %v5375
      %5408 = vst [vmem:[#allocation2 + $0xd8] sm:$0xff] %v5376
      %5409 = vst [vmem:[#allocation2 + $0xe0] sm:$0xff] %v5377
      %5410 = vst [vmem:[#allocation2 + $0xe8] sm:$0xff] %v5378
      %5411 = vst [vmem:[#allocation2 + $0xf0] sm:$0xff] %v5379
      %5412 = vst [vmem:[#allocation2 + $0xf8] sm:$0xff] %v5380
      %v5413 = vld [vmem:[#allocation3] sm:$0xf]
      %v5414 = vld [vmem:[#allocation3 + $0x4] sm:$0xf]
      %v5415 = vld [vmem:[#allocation3 + $0x8] sm:$0x1]
      %v5416 = vld [vmem:[#allocation3 + $0xc] sm:$0xf]
      %v5417 = vld [vmem:[#allocation3 + $0x10] sm:$0xf]
      %v5418 = vld [vmem:[#allocation3 + $0x14] sm:$0x1]
      %v5419 = vld [vmem:[#allocation3 + $0x18] sm:$0xf]
      %v5420 = vld [vmem:[#allocation3 + $0x1c] sm:$0xf]
      %v5421 = vld [vmem:[#allocation3 + $0x20] sm:$0x1]
      %v5422 = vld [vmem:[#allocation3 + $0x24] sm:$0xf]
      %v5423 = vld [vmem:[#allocation3 + $0x28] sm:$0xf]
      %v5424 = vld [vmem:[#allocation3 + $0x2c] sm:$0x1]
      %v5425 = vld [vmem:[#allocation3 + $0x30] sm:$0xf]
      %v5426 = vld [vmem:[#allocation3 + $0x34] sm:$0xf]
      %v5427 = vld [vmem:[#allocation3 + $0x38] sm:$0x1]
      %v5428 = vld [vmem:[#allocation3 + $0x3c] sm:$0xf]
      %v5429 = vld [vmem:[#allocation3 + $0x40] sm:$0xf]
      %v5430 = vld [vmem:[#allocation3 + $0x44] sm:$0x1]
      %v5431 = vld [vmem:[#allocation3 + $0x48] sm:$0xf]
      %v5432 = vld [vmem:[#allocation3 + $0x4c] sm:$0xf]
      %v5433 = vld [vmem:[#allocation3 + $0x50] sm:$0x1]
      %v5434 = vld [vmem:[#allocation3 + $0x54] sm:$0xf]
      %v5435 = vld [vmem:[#allocation3 + $0x58] sm:$0xf]
      %v5436 = vld [vmem:[#allocation3 + $0x5c] sm:$0x1]
      %v5437 = vld [vmem:[#allocation3 + $0x60] sm:$0xf]
      %v5438 = vld [vmem:[#allocation3 + $0x64] sm:$0xf]
      %v5439 = vld [vmem:[#allocation3 + $0x68] sm:$0x1]
      %v5440 = vld [vmem:[#allocation3 + $0x6c] sm:$0xf]
      %v5441 = vld [vmem:[#allocation3 + $0x70] sm:$0xf]
      %v5442 = vld [vmem:[#allocation3 + $0x74] sm:$0x1]
      %v5443 = vld [vmem:[#allocation3 + $0x78] sm:$0xf]
      %v5444 = vld [vmem:[#allocation3 + $0x7c] sm:$0xf]
      %v5445 = vld [vmem:[#allocation3 + $0x80] sm:$0x1]
      %v5446 = vld [vmem:[#allocation3 + $0x84] sm:$0xf]
      %v5447 = vld [vmem:[#allocation3 + $0x88] sm:$0xf]
      %v5448 = vld [vmem:[#allocation3 + $0x8c] sm:$0x1]
      %v5449 = vld [vmem:[#allocation3 + $0x90] sm:$0xf]
      %v5450 = vld [vmem:[#allocation3 + $0x94] sm:$0xf]
      %v5451 = vld [vmem:[#allocation3 + $0x98] sm:$0x1]
      %v5452 = vld [vmem:[#allocation3 + $0x9c] sm:$0xf]
      %v5453 = vld [vmem:[#allocation3 + $0xa0] sm:$0xf]
      %v5454 = vld [vmem:[#allocation3 + $0xa4] sm:$0x1]
      %v5455 = vld [vmem:[#allocation3 + $0xa8] sm:$0xf]
      %v5456 = vld [vmem:[#allocation3 + $0xac] sm:$0xf]
      %v5457 = vld [vmem:[#allocation3 + $0xb0] sm:$0x1]
      %v5458 = vld [vmem:[#allocation3 + $0xb4] sm:$0xf]
      %v5459 = vld [vmem:[#allocation3 + $0xb8] sm:$0xf]
      %v5460 = vld [vmem:[#allocation3 + $0xbc] sm:$0x1]
      %v5461 = vld [vmem:[#allocation3 + $0xc0] sm:$0xf]
      %v5462 = vld [vmem:[#allocation3 + $0xc4] sm:$0xf]
      %v5463 = vld [vmem:[#allocation3 + $0xc8] sm:$0x1]
      %v5464 = vld [vmem:[#allocation3 + $0xcc] sm:$0xf]
      %v5465 = vld [vmem:[#allocation3 + $0xd0] sm:$0xf]
      %v5466 = vld [vmem:[#allocation3 + $0xd4] sm:$0x1]
      %v5468 = vshrl.u32 %v5413, 16
      %v5470 = vrot.slane %v5468, 4
      %v5471 = vshll.u32 %v5413, 16
      %v5473 = vrot.slane %v5471, 5
      %v5474 = vor.u32 %v5470, %v5473
      %v5475 = vrot.slane %v5474, 4
      %v5477 = vshll.u32 %v5414, 16
      %v5479 = vrot.slane %v5477, 5
      %v5480 = vsel %vm1257, %v5475, %v5479
      %v5481 = vshrl.u32 %v5414, 16
      %v5483 = vrot.slane %v5481, 4
      %v5484 = vor.u32 %v5483, %v5479
      %v5485 = vrot.slane %v5484, 4
      %v5487 = vshll.u32 %v5415, 16
      %v5489 = vrot.slane %v5487, 5
      %v5490 = vsel %vm1257, %v5485, %v5489
      %v5492 = vshrl.u32 %v5416, 16
      %v5494 = vrot.slane %v5492, 4
      %v5495 = vshll.u32 %v5416, 16
      %v5497 = vrot.slane %v5495, 5
      %v5498 = vor.u32 %v5494, %v5497
      %v5499 = vrot.slane %v5498, 4
      %v5501 = vshll.u32 %v5417, 16
      %v5503 = vrot.slane %v5501, 5
      %v5504 = vsel %vm1257, %v5499, %v5503
      %v5505 = vshrl.u32 %v5417, 16
      %v5507 = vrot.slane %v5505, 4
      %v5508 = vor.u32 %v5507, %v5503
      %v5509 = vrot.slane %v5508, 4
      %v5511 = vshll.u32 %v5418, 16
      %v5513 = vrot.slane %v5511, 5
      %v5514 = vsel %vm1257, %v5509, %v5513
      %v5516 = vshrl.u32 %v5419, 16
      %v5518 = vrot.slane %v5516, 4
      %v5519 = vshll.u32 %v5419, 16
      %v5521 = vrot.slane %v5519, 5
      %v5522 = vor.u32 %v5518, %v5521
      %v5523 = vrot.slane %v5522, 4
      %v5525 = vshll.u32 %v5420, 16
      %v5527 = vrot.slane %v5525, 5
      %v5528 = vsel %vm1257, %v5523, %v5527
      %v5529 = vshrl.u32 %v5420, 16
      %v5531 = vrot.slane %v5529, 4
      %v5532 = vor.u32 %v5531, %v5527
      %v5533 = vrot.slane %v5532, 4
      %v5535 = vshll.u32 %v5421, 16
      %v5537 = vrot.slane %v5535, 5
      %v5538 = vsel %vm1257, %v5533, %v5537
      %v5540 = vshrl.u32 %v5422, 16
      %v5542 = vrot.slane %v5540, 4
      %v5543 = vshll.u32 %v5422, 16
      %v5545 = vrot.slane %v5543, 5
      %v5546 = vor.u32 %v5542, %v5545
      %v5547 = vrot.slane %v5546, 4
      %v5549 = vshll.u32 %v5423, 16
      %v5551 = vrot.slane %v5549, 5
      %v5552 = vsel %vm1257, %v5547, %v5551
      %v5553 = vshrl.u32 %v5423, 16
      %v5555 = vrot.slane %v5553, 4
      %v5556 = vor.u32 %v5555, %v5551
      %v5557 = vrot.slane %v5556, 4
      %v5559 = vshll.u32 %v5424, 16
      %v5561 = vrot.slane %v5559, 5
      %v5562 = vsel %vm1257, %v5557, %v5561
      %v5564 = vshrl.u32 %v5425, 16
      %v5566 = vrot.slane %v5564, 4
      %v5567 = vshll.u32 %v5425, 16
      %v5569 = vrot.slane %v5567, 5
      %v5570 = vor.u32 %v5566, %v5569
      %v5571 = vrot.slane %v5570, 4
      %v5573 = vshll.u32 %v5426, 16
      %v5575 = vrot.slane %v5573, 5
      %v5576 = vsel %vm1257, %v5571, %v5575
      %v5577 = vshrl.u32 %v5426, 16
      %v5579 = vrot.slane %v5577, 4
      %v5580 = vor.u32 %v5579, %v5575
      %v5581 = vrot.slane %v5580, 4
      %v5583 = vshll.u32 %v5427, 16
      %v5585 = vrot.slane %v5583, 5
      %v5586 = vsel %vm1257, %v5581, %v5585
      %v5588 = vshrl.u32 %v5428, 16
      %v5590 = vrot.slane %v5588, 4
      %v5591 = vshll.u32 %v5428, 16
      %v5593 = vrot.slane %v5591, 5
      %v5594 = vor.u32 %v5590, %v5593
      %v5595 = vrot.slane %v5594, 4
      %v5597 = vshll.u32 %v5429, 16
      %v5599 = vrot.slane %v5597, 5
      %v5600 = vsel %vm1257, %v5595, %v5599
      %v5601 = vshrl.u32 %v5429, 16
      %v5603 = vrot.slane %v5601, 4
      %v5604 = vor.u32 %v5603, %v5599
      %v5605 = vrot.slane %v5604, 4
      %v5607 = vshll.u32 %v5430, 16
      %v5609 = vrot.slane %v5607, 5
      %v5610 = vsel %vm1257, %v5605, %v5609
      %v5612 = vshrl.u32 %v5431, 16
      %v5614 = vrot.slane %v5612, 4
      %v5615 = vshll.u32 %v5431, 16
      %v5617 = vrot.slane %v5615, 5
      %v5618 = vor.u32 %v5614, %v5617
      %v5619 = vrot.slane %v5618, 4
      %v5621 = vshll.u32 %v5432, 16
      %v5623 = vrot.slane %v5621, 5
      %v5624 = vsel %vm1257, %v5619, %v5623
      %v5625 = vshrl.u32 %v5432, 16
      %v5627 = vrot.slane %v5625, 4
      %v5628 = vor.u32 %v5627, %v5623
      %v5629 = vrot.slane %v5628, 4
      %v5631 = vshll.u32 %v5433, 16
      %v5633 = vrot.slane %v5631, 5
      %v5634 = vsel %vm1257, %v5629, %v5633
      %v5636 = vshrl.u32 %v5434, 16
      %v5638 = vrot.slane %v5636, 4
      %v5639 = vshll.u32 %v5434, 16
      %v5641 = vrot.slane %v5639, 5
      %v5642 = vor.u32 %v5638, %v5641
      %v5643 = vrot.slane %v5642, 4
      %v5645 = vshll.u32 %v5435, 16
      %v5647 = vrot.slane %v5645, 5
      %v5648 = vsel %vm1257, %v5643, %v5647
      %v5649 = vshrl.u32 %v5435, 16
      %v5651 = vrot.slane %v5649, 4
      %v5652 = vor.u32 %v5651, %v5647
      %v5653 = vrot.slane %v5652, 4
      %v5655 = vshll.u32 %v5436, 16
      %v5657 = vrot.slane %v5655, 5
      %v5658 = vsel %vm1257, %v5653, %v5657
      %v5660 = vshrl.u32 %v5437, 16
      %v5662 = vrot.slane %v5660, 4
      %v5663 = vshll.u32 %v5437, 16
      %v5665 = vrot.slane %v5663, 5
      %v5666 = vor.u32 %v5662, %v5665
      %v5667 = vrot.slane %v5666, 4
      %v5669 = vshll.u32 %v5438, 16
      %v5671 = vrot.slane %v5669, 5
      %v5672 = vsel %vm1257, %v5667, %v5671
      %v5673 = vshrl.u32 %v5438, 16
      %v5675 = vrot.slane %v5673, 4
      %v5676 = vor.u32 %v5675, %v5671
      %v5677 = vrot.slane %v5676, 4
      %v5679 = vshll.u32 %v5439, 16
      %v5681 = vrot.slane %v5679, 5
      %v5682 = vsel %vm1257, %v5677, %v5681
      %v5684 = vshrl.u32 %v5440, 16
      %v5686 = vrot.slane %v5684, 4
      %v5687 = vshll.u32 %v5440, 16
      %v5689 = vrot.slane %v5687, 5
      %v5690 = vor.u32 %v5686, %v5689
      %v5691 = vrot.slane %v5690, 4
      %v5693 = vshll.u32 %v5441, 16
      %v5695 = vrot.slane %v5693, 5
      %v5696 = vsel %vm1257, %v5691, %v5695
      %v5697 = vshrl.u32 %v5441, 16
      %v5699 = vrot.slane %v5697, 4
      %v5700 = vor.u32 %v5699, %v5695
      %v5701 = vrot.slane %v5700, 4
      %v5703 = vshll.u32 %v5442, 16
      %v5705 = vrot.slane %v5703, 5
      %v5706 = vsel %vm1257, %v5701, %v5705
      %v5708 = vshrl.u32 %v5443, 16
      %v5710 = vrot.slane %v5708, 4
      %v5711 = vshll.u32 %v5443, 16
      %v5713 = vrot.slane %v5711, 5
      %v5714 = vor.u32 %v5710, %v5713
      %v5715 = vrot.slane %v5714, 4
      %v5717 = vshll.u32 %v5444, 16
      %v5719 = vrot.slane %v5717, 5
      %v5720 = vsel %vm1257, %v5715, %v5719
      %v5721 = vshrl.u32 %v5444, 16
      %v5723 = vrot.slane %v5721, 4
      %v5724 = vor.u32 %v5723, %v5719
      %v5725 = vrot.slane %v5724, 4
      %v5727 = vshll.u32 %v5445, 16
      %v5729 = vrot.slane %v5727, 5
      %v5730 = vsel %vm1257, %v5725, %v5729
      %v5732 = vshrl.u32 %v5446, 16
      %v5734 = vrot.slane %v5732, 4
      %v5735 = vshll.u32 %v5446, 16
      %v5737 = vrot.slane %v5735, 5
      %v5738 = vor.u32 %v5734, %v5737
      %v5739 = vrot.slane %v5738, 4
      %v5741 = vshll.u32 %v5447, 16
      %v5743 = vrot.slane %v5741, 5
      %v5744 = vsel %vm1257, %v5739, %v5743
      %v5745 = vshrl.u32 %v5447, 16
      %v5747 = vrot.slane %v5745, 4
      %v5748 = vor.u32 %v5747, %v5743
      %v5749 = vrot.slane %v5748, 4
      %v5751 = vshll.u32 %v5448, 16
      %v5753 = vrot.slane %v5751, 5
      %v5754 = vsel %vm1257, %v5749, %v5753
      %v5756 = vshrl.u32 %v5449, 16
      %v5758 = vrot.slane %v5756, 4
      %v5759 = vshll.u32 %v5449, 16
      %v5761 = vrot.slane %v5759, 5
      %v5762 = vor.u32 %v5758, %v5761
      %v5763 = vrot.slane %v5762, 4
      %v5765 = vshll.u32 %v5450, 16
      %v5767 = vrot.slane %v5765, 5
      %v5768 = vsel %vm1257, %v5763, %v5767
      %v5769 = vshrl.u32 %v5450, 16
      %v5771 = vrot.slane %v5769, 4
      %v5772 = vor.u32 %v5771, %v5767
      %v5773 = vrot.slane %v5772, 4
      %v5775 = vshll.u32 %v5451, 16
      %v5777 = vrot.slane %v5775, 5
      %v5778 = vsel %vm1257, %v5773, %v5777
      %v5780 = vshrl.u32 %v5452, 16
      %v5782 = vrot.slane %v5780, 4
      %v5783 = vshll.u32 %v5452, 16
      %v5785 = vrot.slane %v5783, 5
      %v5786 = vor.u32 %v5782, %v5785
      %v5787 = vrot.slane %v5786, 4
      %v5789 = vshll.u32 %v5453, 16
      %v5791 = vrot.slane %v5789, 5
      %v5792 = vsel %vm1257, %v5787, %v5791
      %v5793 = vshrl.u32 %v5453, 16
      %v5795 = vrot.slane %v5793, 4
      %v5796 = vor.u32 %v5795, %v5791
      %v5797 = vrot.slane %v5796, 4
      %v5799 = vshll.u32 %v5454, 16
      %v5801 = vrot.slane %v5799, 5
      %v5802 = vsel %vm1257, %v5797, %v5801
      %v5804 = vshrl.u32 %v5455, 16
      %v5806 = vrot.slane %v5804, 4
      %v5807 = vshll.u32 %v5455, 16
      %v5809 = vrot.slane %v5807, 5
      %v5810 = vor.u32 %v5806, %v5809
      %v5811 = vrot.slane %v5810, 4
      %v5813 = vshll.u32 %v5456, 16
      %v5815 = vrot.slane %v5813, 5
      %v5816 = vsel %vm1257, %v5811, %v5815
      %v5817 = vshrl.u32 %v5456, 16
      %v5819 = vrot.slane %v5817, 4
      %v5820 = vor.u32 %v5819, %v5815
      %v5821 = vrot.slane %v5820, 4
      %v5823 = vshll.u32 %v5457, 16
      %v5825 = vrot.slane %v5823, 5
      %v5826 = vsel %vm1257, %v5821, %v5825
      %v5828 = vshrl.u32 %v5458, 16
      %v5830 = vrot.slane %v5828, 4
      %v5831 = vshll.u32 %v5458, 16
      %v5833 = vrot.slane %v5831, 5
      %v5834 = vor.u32 %v5830, %v5833
      %v5835 = vrot.slane %v5834, 4
      %v5837 = vshll.u32 %v5459, 16
      %v5839 = vrot.slane %v5837, 5
      %v5840 = vsel %vm1257, %v5835, %v5839
      %v5841 = vshrl.u32 %v5459, 16
      %v5843 = vrot.slane %v5841, 4
      %v5844 = vor.u32 %v5843, %v5839
      %v5845 = vrot.slane %v5844, 4
      %v5847 = vshll.u32 %v5460, 16
      %v5849 = vrot.slane %v5847, 5
      %v5850 = vsel %vm1257, %v5845, %v5849
      %v5852 = vshrl.u32 %v5461, 16
      %v5854 = vrot.slane %v5852, 4
      %v5855 = vshll.u32 %v5461, 16
      %v5857 = vrot.slane %v5855, 5
      %v5858 = vor.u32 %v5854, %v5857
      %v5859 = vrot.slane %v5858, 4
      %v5861 = vshll.u32 %v5462, 16
      %v5863 = vrot.slane %v5861, 5
      %v5864 = vsel %vm1257, %v5859, %v5863
      %v5865 = vshrl.u32 %v5462, 16
      %v5867 = vrot.slane %v5865, 4
      %v5868 = vor.u32 %v5867, %v5863
      %v5869 = vrot.slane %v5868, 4
      %v5871 = vshll.u32 %v5463, 16
      %v5873 = vrot.slane %v5871, 5
      %v5874 = vsel %vm1257, %v5869, %v5873
      %v5876 = vshrl.u32 %v5464, 16
      %v5878 = vrot.slane %v5876, 4
      %v5879 = vshll.u32 %v5464, 16
      %v5881 = vrot.slane %v5879, 5
      %v5882 = vor.u32 %v5878, %v5881
      %v5883 = vrot.slane %v5882, 4
      %v5885 = vshll.u32 %v5465, 16
      %v5887 = vrot.slane %v5885, 5
      %v5888 = vsel %vm1257, %v5883, %v5887
      %v5889 = vshrl.u32 %v5465, 16
      %v5891 = vrot.slane %v5889, 4
      %v5892 = vor.u32 %v5891, %v5887
      %v5893 = vrot.slane %v5892, 4
      %v5895 = vshll.u32 %v5466, 16
      %v5897 = vrot.slane %v5895, 5
      %v5898 = vsel %vm1257, %v5893, %v5897
      %s5899 = scalar_lea.vmem %s4, 64
      %v5900 = vld [vmem:[%s5899] sm:$0xf]
      %v5901 = vld [vmem:[%s5899 + $0x4] sm:$0xf]
      %v5902 = vld [vmem:[%s5899 + $0x8] sm:$0xf]
      %v5903 = vld [vmem:[%s5899 + $0xc] sm:$0xf]
      %v5904 = vld [vmem:[%s5899 + $0x10] sm:$0xf]
      %v5905 = vld [vmem:[%s5899 + $0x14] sm:$0xf]
      %v5906 = vld [vmem:[%s5899 + $0x18] sm:$0xf]
      %v5907 = vld [vmem:[%s5899 + $0x1c] sm:$0xf]
      %v5908 = vld [vmem:[%s5899 + $0x20] sm:$0xf]
      %v5909 = vld [vmem:[%s5899 + $0x24] sm:$0xf]
      %v5910 = vld [vmem:[%s5899 + $0x28] sm:$0xf]
      %v5911 = vld [vmem:[%s5899 + $0x2c] sm:$0xf]
      %v5912 = vld [vmem:[%s5899 + $0x30] sm:$0xf]
      %v5913 = vld [vmem:[%s5899 + $0x34] sm:$0xf]
      %v5914 = vld [vmem:[%s5899 + $0x38] sm:$0xf]
      %v5915 = vld [vmem:[%s5899 + $0x3c] sm:$0xf]
      %v5916 = vunpack.c.l.b16 %v5480
      %v5917 = vunpack.c.l.b16 %v5490
      %v5918 = vunpack.c.l.b16 %v5504
      %v5919 = vunpack.c.l.b16 %v5514
      %v5920 = vunpack.c.l.b16 %v5528
      %v5921 = vunpack.c.l.b16 %v5538
      %v5922 = vunpack.c.l.b16 %v5552
      %v5923 = vunpack.c.l.b16 %v5562
      %v5924 = vunpack.c.l.b16 %v5576
      %v5925 = vunpack.c.l.b16 %v5586
      %v5926 = vunpack.c.l.b16 %v5600
      %v5927 = vunpack.c.l.b16 %v5610
      %v5928 = vunpack.c.l.b16 %v5624
      %v5929 = vunpack.c.l.b16 %v5634
      %v5930 = vunpack.c.l.b16 %v5648
      %v5931 = vunpack.c.l.b16 %v5658
      %v5932 = vunpack.c.l.b16 %v5672
      %v5933 = vunpack.c.l.b16 %v5682
      %v5934 = vunpack.c.l.b16 %v5696
      %v5935 = vunpack.c.l.b16 %v5706
      %v5936 = vunpack.c.l.b16 %v5720
      %v5937 = vunpack.c.l.b16 %v5730
      %v5938 = vunpack.c.l.b16 %v5744
      %v5939 = vunpack.c.l.b16 %v5754
      %v5940 = vunpack.c.l.b16 %v5768
      %v5941 = vunpack.c.l.b16 %v5778
      %v5942 = vunpack.c.l.b16 %v5792
      %v5943 = vunpack.c.l.b16 %v5802
      %v5944 = vunpack.c.l.b16 %v5816
      %v5945 = vunpack.c.l.b16 %v5826
      %v5946 = vunpack.c.l.b16 %v5840
      %v5947 = vunpack.c.l.b16 %v5850
      %v5948 = vpack.c.b16 %v5917, %v5916
      %v5949 = vpack.c.b16 %v5919, %v5918
      %v5950 = vpack.c.b16 %v5921, %v5920
      %v5951 = vpack.c.b16 %v5923, %v5922
      %v5952 = vpack.c.b16 %v5925, %v5924
      %v5953 = vpack.c.b16 %v5927, %v5926
      %v5954 = vpack.c.b16 %v5929, %v5928
      %v5955 = vpack.c.b16 %v5931, %v5930
      %v5956 = vpack.c.b16 %v5933, %v5932
      %v5957 = vpack.c.b16 %v5935, %v5934
      %v5958 = vpack.c.b16 %v5937, %v5936
      %v5959 = vpack.c.b16 %v5939, %v5938
      %v5960 = vpack.c.b16 %v5941, %v5940
      %v5961 = vpack.c.b16 %v5943, %v5942
      %v5962 = vpack.c.b16 %v5945, %v5944
      %v5963 = vpack.c.b16 %v5947, %v5946
      %v5996 = vunpack.c.l.b16 %v5900
      %v5997 = vunpack.c.l.b16 %v5901
      %v5998 = vunpack.c.l.b16 %v5902
      %v5999 = vunpack.c.l.b16 %v5903
      %v6000 = vunpack.c.l.b16 %v5904
      %v6001 = vunpack.c.l.b16 %v5905
      %v6002 = vunpack.c.l.b16 %v5906
      %v6003 = vunpack.c.l.b16 %v5907
      %v6004 = vunpack.c.l.b16 %v5908
      %v6005 = vunpack.c.l.b16 %v5909
      %v6006 = vunpack.c.l.b16 %v5910
      %v6007 = vunpack.c.l.b16 %v5911
      %v6008 = vunpack.c.l.b16 %v5912
      %v6009 = vunpack.c.l.b16 %v5913
      %v6010 = vunpack.c.l.b16 %v5914
      %v6011 = vunpack.c.l.b16 %v5915
      %v6012 = vpack.c.b16 %v5997, %v5996
      %v6013 = vpack.c.b16 %v5999, %v5998
      %v6014 = vpack.c.b16 %v6001, %v6000
      %v6015 = vpack.c.b16 %v6003, %v6002
      %v6016 = vpack.c.b16 %v6005, %v6004
      %v6017 = vpack.c.b16 %v6007, %v6006
      %v6018 = vpack.c.b16 %v6009, %v6008
      %v6019 = vpack.c.b16 %v6011, %v6010
      %6028 = vmatprep.subr.bf16.mxu0 0
      %6029 = vmatpush1.bf16.msra.mxu0 %v6012
      %6030 = vmatprep.subr.bf16.mxu0 0
      %6031 = vmatpush1.bf16.msra.mxu0 %v6013
      %6032 = vmatprep.subr.bf16.mxu0 0
      %6033 = vmatpush1.bf16.msra.mxu0 %v6014
      %6034 = vmatprep.subr.bf16.mxu0 0
      %6035 = vmatpush1.bf16.msra.mxu0 %v6015
      %6036 = vmatprep.subr.bf16.mxu0 0
      %6037 = vmatpush1.bf16.msra.mxu0 %v6016
      %6038 = vmatprep.subr.bf16.mxu0 0
      %6039 = vmatpush1.bf16.msra.mxu0 %v6017
      %6040 = vmatprep.subr.bf16.mxu0 0
      %6041 = vmatpush1.bf16.msra.mxu0 %v6018
      %6042 = vmatprep.subr.bf16.mxu0 0
      %6043 = vmatpush1.bf16.msra.mxu0 %v6019
      %6044 = vmatprep.subr.bf16.mxu0 0
      %6045 = vmatpush1.bf16.msra.mxu0 0
      %6046 = vmatprep.subr.bf16.mxu0 0
      %6047 = vmatpush1.bf16.msra.mxu0 0
      %6048 = vmatprep.subr.bf16.mxu0 0
      %6049 = vmatpush1.bf16.msra.mxu0 0
      %6050 = vmatprep.subr.bf16.mxu0 0
      %6051 = vmatpush1.bf16.msra.mxu0 0
      %6052 = vmatprep.subr.bf16.mxu0 0
      %6053 = vmatpush1.bf16.msra.mxu0 0
      %6054 = vmatprep.subr.bf16.mxu0 0
      %6055 = vmatpush1.bf16.msra.mxu0 0
      %6056 = vmatprep.subr.bf16.mxu0 0
      %6057 = vmatpush1.bf16.msra.mxu0 0
      %6058 = vmatprep.subr.bf16.mxu0 0
      %6059 = vmatpush1.bf16.msra.mxu0 0
      %6060 = vmatprep.mubr.bf16.mxu0 0
      %6061 = vmatmul.mubr.bf16.gmra.mrb[0].mxu0 %v5948
      %v6062 = vpop.f32.mrb[0].mxu0
      %v6063 = vadd.f32 0.0, %v6062
      %v6064 = vpop.f32.mrb[0].mxu0
      %v6065 = vpop.f32.mrb[0].mxu0
      %v6066 = vadd.f32 0.0, %v6065
      %v6067 = vpop.f32.mrb[0].mxu0
      %6068 = vmatprep.mubr.bf16.mxu0 0
      %6069 = vmatmul.mubr.bf16.gmra.mrb[0].mxu0 %v5949
      %v6070 = vpop.f32.mrb[0].mxu0
      %v6071 = vadd.f32 0.0, %v6070
      %v6072 = vpop.f32.mrb[0].mxu0
      %v6073 = vpop.f32.mrb[0].mxu0
      %v6074 = vadd.f32 0.0, %v6073
      %v6075 = vpop.f32.mrb[0].mxu0
      %6076 = vmatprep.mubr.bf16.mxu0 0
      %6077 = vmatmul.mubr.bf16.gmra.mrb[0].mxu0 %v5950
      %v6078 = vpop.f32.mrb[0].mxu0
      %v6079 = vadd.f32 0.0, %v6078
      %v6080 = vpop.f32.mrb[0].mxu0
      %v6081 = vpop.f32.mrb[0].mxu0
      %v6082 = vadd.f32 0.0, %v6081
      %v6083 = vpop.f32.mrb[0].mxu0
      %6084 = vmatprep.mubr.bf16.mxu0 0
      %6085 = vmatmul.mubr.bf16.gmra.mrb[0].mxu0 %v5951
      %v6086 = vpop.f32.mrb[0].mxu0
      %v6087 = vadd.f32 0.0, %v6086
      %v6088 = vpop.f32.mrb[0].mxu0
      %v6089 = vpop.f32.mrb[0].mxu0
      %v6090 = vadd.f32 0.0, %v6089
      %v6091 = vpop.f32.mrb[0].mxu0
      %6092 = vmatprep.mubr.bf16.mxu0 0
      %6093 = vmatmul.mubr.bf16.gmra.mrb[0].mxu0 %v5952
      %v6094 = vpop.f32.mrb[0].mxu0
      %v6095 = vadd.f32 0.0, %v6094
      %v6096 = vpop.f32.mrb[0].mxu0
      %v6097 = vpop.f32.mrb[0].mxu0
      %v6098 = vadd.f32 0.0, %v6097
      %v6099 = vpop.f32.mrb[0].mxu0
      %6100 = vmatprep.mubr.bf16.mxu0 0
      %6101 = vmatmul.mubr.bf16.gmra.mrb[0].mxu0 %v5953
      %v6102 = vpop.f32.mrb[0].mxu0
      %v6103 = vadd.f32 0.0, %v6102
      %v6104 = vpop.f32.mrb[0].mxu0
      %v6105 = vpop.f32.mrb[0].mxu0
      %v6106 = vadd.f32 0.0, %v6105
      %v6107 = vpop.f32.mrb[0].mxu0
      %6108 = vmatprep.mubr.bf16.mxu0 0
      %6109 = vmatmul.mubr.bf16.gmra.mrb[0].mxu0 %v5954
      %v6110 = vpop.f32.mrb[0].mxu0
      %v6111 = vadd.f32 0.0, %v6110
      %v6112 = vpop.f32.mrb[0].mxu0
      %v6113 = vpop.f32.mrb[0].mxu0
      %v6114 = vadd.f32 0.0, %v6113
      %v6115 = vpop.f32.mrb[0].mxu0
      %6116 = vmatprep.mubr.bf16.mxu0 0
      %6117 = vmatmul.mubr.bf16.gmra.mrb[0].mxu0 %v5955
      %v6118 = vpop.f32.mrb[0].mxu0
      %v6119 = vadd.f32 0.0, %v6118
      %v6120 = vpop.f32.mrb[0].mxu0
      %v6121 = vpop.f32.mrb[0].mxu0
      %v6122 = vadd.f32 0.0, %v6121
      %v6123 = vpop.f32.mrb[0].mxu0
      %6124 = vmatprep.mubr.bf16.mxu0 0
      %6125 = vmatmul.mubr.bf16.gmra.mrb[0].mxu0 %v5956
      %v6126 = vpop.f32.mrb[0].mxu0
      %v6127 = vadd.f32 0.0, %v6126
      %v6128 = vpop.f32.mrb[0].mxu0
      %v6129 = vpop.f32.mrb[0].mxu0
      %v6130 = vadd.f32 0.0, %v6129
      %v6131 = vpop.f32.mrb[0].mxu0
      %6132 = vmatprep.mubr.bf16.mxu0 0
      %6133 = vmatmul.mubr.bf16.gmra.mrb[0].mxu0 %v5957
      %v6134 = vpop.f32.mrb[0].mxu0
      %v6135 = vadd.f32 0.0, %v6134
      %v6136 = vpop.f32.mrb[0].mxu0
      %v6137 = vpop.f32.mrb[0].mxu0
      %v6138 = vadd.f32 0.0, %v6137
      %v6139 = vpop.f32.mrb[0].mxu0
      %6140 = vmatprep.mubr.bf16.mxu0 0
      %6141 = vmatmul.mubr.bf16.gmra.mrb[0].mxu0 %v5958
      %v6142 = vpop.f32.mrb[0].mxu0
      %v6143 = vadd.f32 0.0, %v6142
      %v6144 = vpop.f32.mrb[0].mxu0
      %v6145 = vpop.f32.mrb[0].mxu0
      %v6146 = vadd.f32 0.0, %v6145
      %v6147 = vpop.f32.mrb[0].mxu0
      %6148 = vmatprep.mubr.bf16.mxu0 0
      %6149 = vmatmul.mubr.bf16.gmra.mrb[0].mxu0 %v5959
      %v6150 = vpop.f32.mrb[0].mxu0
      %v6151 = vadd.f32 0.0, %v6150
      %v6152 = vpop.f32.mrb[0].mxu0
      %v6153 = vpop.f32.mrb[0].mxu0
      %v6154 = vadd.f32 0.0, %v6153
      %v6155 = vpop.f32.mrb[0].mxu0
      %6156 = vmatprep.mubr.bf16.mxu0 0
      %6157 = vmatmul.mubr.bf16.gmra.mrb[0].mxu0 %v5960
      %v6158 = vpop.f32.mrb[0].mxu0
      %v6159 = vadd.f32 0.0, %v6158
      %v6160 = vpop.f32.mrb[0].mxu0
      %v6161 = vpop.f32.mrb[0].mxu0
      %v6162 = vadd.f32 0.0, %v6161
      %v6163 = vpop.f32.mrb[0].mxu0
      %6164 = vmatprep.mubr.bf16.mxu0 0
      %6165 = vmatmul.mubr.bf16.gmra.mrb[0].mxu0 %v5961
      %v6166 = vpop.f32.mrb[0].mxu0
      %v6167 = vadd.f32 0.0, %v6166
      %v6168 = vpop.f32.mrb[0].mxu0
      %v6169 = vpop.f32.mrb[0].mxu0
      %v6170 = vadd.f32 0.0, %v6169
      %v6171 = vpop.f32.mrb[0].mxu0
      %6172 = vmatprep.mubr.bf16.mxu0 0
      %6173 = vmatmul.mubr.bf16.gmra.mrb[0].mxu0 %v5962
      %v6174 = vpop.f32.mrb[0].mxu0
      %v6175 = vadd.f32 0.0, %v6174
      %v6176 = vpop.f32.mrb[0].mxu0
      %v6177 = vpop.f32.mrb[0].mxu0
      %v6178 = vadd.f32 0.0, %v6177
      %v6179 = vpop.f32.mrb[0].mxu0
      %6180 = vmatprep.mubr.bf16.mxu0 0
      %6181 = vmatmul.mubr.bf16.gmra.mrb[0].mxu0 %v5963
      %v6182 = vpop.f32.mrb[0].mxu0
      %v6183 = vadd.f32 0.0, %v6182
      %v6184 = vpop.f32.mrb[0].mxu0
      %v6185 = vpop.f32.mrb[0].mxu0
      %v6186 = vadd.f32 0.0, %v6185
      %v6187 = vpop.f32.mrb[0].mxu0
      %6188 = vdwg.mxu0
      %v6189 = vld [vmem:[#allocation2] sm:$0xff]
      %v6190 = vld [vmem:[#allocation2 + $0x8] sm:$0xff]
      %v6191 = vld [vmem:[#allocation2 + $0x10] sm:$0xff]
      %v6192 = vld [vmem:[#allocation2 + $0x18] sm:$0xff]
      %v6193 = vld [vmem:[#allocation2 + $0x20] sm:$0xff]
      %v6194 = vld [vmem:[#allocation2 + $0x28] sm:$0xff]
      %v6195 = vld [vmem:[#allocation2 + $0x30] sm:$0xff]
      %v6196 = vld [vmem:[#allocation2 + $0x38] sm:$0xff]
      %v6197 = vld [vmem:[#allocation2 + $0x40] sm:$0xff]
      %v6198 = vld [vmem:[#allocation2 + $0x48] sm:$0xff]
      %v6199 = vld [vmem:[#allocation2 + $0x50] sm:$0xff]
      %v6200 = vld [vmem:[#allocation2 + $0x58] sm:$0xff]
      %v6201 = vld [vmem:[#allocation2 + $0x60] sm:$0xff]
      %v6202 = vld [vmem:[#allocation2 + $0x68] sm:$0xff]
      %v6203 = vld [vmem:[#allocation2 + $0x70] sm:$0xff]
      %v6204 = vld [vmem:[#allocation2 + $0x78] sm:$0xff]
      %v6205 = vld [vmem:[#allocation2 + $0x80] sm:$0xff]
      %v6206 = vld [vmem:[#allocation2 + $0x88] sm:$0xff]
      %v6207 = vld [vmem:[#allocation2 + $0x90] sm:$0xff]
      %v6208 = vld [vmem:[#allocation2 + $0x98] sm:$0xff]
      %v6209 = vld [vmem:[#allocation2 + $0xa0] sm:$0xff]
      %v6210 = vld [vmem:[#allocation2 + $0xa8] sm:$0xff]
      %v6211 = vld [vmem:[#allocation2 + $0xb0] sm:$0xff]
      %v6212 = vld [vmem:[#allocation2 + $0xb8] sm:$0xff]
      %v6213 = vld [vmem:[#allocation2 + $0xc0] sm:$0xff]
      %v6214 = vld [vmem:[#allocation2 + $0xc8] sm:$0xff]
      %v6215 = vld [vmem:[#allocation2 + $0xd0] sm:$0xff]
      %v6216 = vld [vmem:[#allocation2 + $0xd8] sm:$0xff]
      %v6217 = vld [vmem:[#allocation2 + $0xe0] sm:$0xff]
      %v6218 = vld [vmem:[#allocation2 + $0xe8] sm:$0xff]
      %v6219 = vld [vmem:[#allocation2 + $0xf0] sm:$0xff]
      %v6220 = vld [vmem:[#allocation2 + $0xf8] sm:$0xff]
      %v6221 = vadd.f32 %v6189, %v6063
      %v6222 = vadd.f32 %v6190, %v6066
      %v6223 = vadd.f32 %v6191, %v6071
      %v6224 = vadd.f32 %v6192, %v6074
      %v6225 = vadd.f32 %v6193, %v6079
      %v6226 = vadd.f32 %v6194, %v6082
      %v6227 = vadd.f32 %v6195, %v6087
      %v6228 = vadd.f32 %v6196, %v6090
      %v6229 = vadd.f32 %v6197, %v6095
      %v6230 = vadd.f32 %v6198, %v6098
      %v6231 = vadd.f32 %v6199, %v6103
      %v6232 = vadd.f32 %v6200, %v6106
      %v6233 = vadd.f32 %v6201, %v6111
      %v6234 = vadd.f32 %v6202, %v6114
      %v6235 = vadd.f32 %v6203, %v6119
      %v6236 = vadd.f32 %v6204, %v6122
      %v6237 = vadd.f32 %v6205, %v6127
      %v6238 = vadd.f32 %v6206, %v6130
      %v6239 = vadd.f32 %v6207, %v6135
      %v6240 = vadd.f32 %v6208, %v6138
      %v6241 = vadd.f32 %v6209, %v6143
      %v6242 = vadd.f32 %v6210, %v6146
      %v6243 = vadd.f32 %v6211, %v6151
      %v6244 = vadd.f32 %v6212, %v6154
      %v6245 = vadd.f32 %v6213, %v6159
      %v6246 = vadd.f32 %v6214, %v6162
      %v6247 = vadd.f32 %v6215, %v6167
      %v6248 = vadd.f32 %v6216, %v6170
      %v6249 = vadd.f32 %v6217, %v6175
      %v6250 = vadd.f32 %v6218, %v6178
      %v6251 = vadd.f32 %v6219, %v6183
      %v6252 = vadd.f32 %v6220, %v6186
      %6253 = vst [vmem:[#allocation2] sm:$0xff] %v6221
      %6254 = vst [vmem:[#allocation2 + $0x8] sm:$0xff] %v6222
      %6255 = vst [vmem:[#allocation2 + $0x10] sm:$0xff] %v6223
      %6256 = vst [vmem:[#allocation2 + $0x18] sm:$0xff] %v6224
      %6257 = vst [vmem:[#allocation2 + $0x20] sm:$0xff] %v6225
      %6258 = vst [vmem:[#allocation2 + $0x28] sm:$0xff] %v6226
      %6259 = vst [vmem:[#allocation2 + $0x30] sm:$0xff] %v6227
      %6260 = vst [vmem:[#allocation2 + $0x38] sm:$0xff] %v6228
      %6261 = vst [vmem:[#allocation2 + $0x40] sm:$0xff] %v6229
      %6262 = vst [vmem:[#allocation2 + $0x48] sm:$0xff] %v6230
      %6263 = vst [vmem:[#allocation2 + $0x50] sm:$0xff] %v6231
      %6264 = vst [vmem:[#allocation2 + $0x58] sm:$0xff] %v6232
      %6265 = vst [vmem:[#allocation2 + $0x60] sm:$0xff] %v6233
      %6266 = vst [vmem:[#allocation2 + $0x68] sm:$0xff] %v6234
      %6267 = vst [vmem:[#allocation2 + $0x70] sm:$0xff] %v6235
      %6268 = vst [vmem:[#allocation2 + $0x78] sm:$0xff] %v6236
      %6269 = vst [vmem:[#allocation2 + $0x80] sm:$0xff] %v6237
      %6270 = vst [vmem:[#allocation2 + $0x88] sm:$0xff] %v6238
      %6271 = vst [vmem:[#allocation2 + $0x90] sm:$0xff] %v6239
      %6272 = vst [vmem:[#allocation2 + $0x98] sm:$0xff] %v6240
      %6273 = vst [vmem:[#allocation2 + $0xa0] sm:$0xff] %v6241
      %6274 = vst [vmem:[#allocation2 + $0xa8] sm:$0xff] %v6242
      %6275 = vst [vmem:[#allocation2 + $0xb0] sm:$0xff] %v6243
      %6276 = vst [vmem:[#allocation2 + $0xb8] sm:$0xff] %v6244
      %6277 = vst [vmem:[#allocation2 + $0xc0] sm:$0xff] %v6245
      %6278 = vst [vmem:[#allocation2 + $0xc8] sm:$0xff] %v6246
      %6279 = vst [vmem:[#allocation2 + $0xd0] sm:$0xff] %v6247
      %6280 = vst [vmem:[#allocation2 + $0xd8] sm:$0xff] %v6248
      %6281 = vst [vmem:[#allocation2 + $0xe0] sm:$0xff] %v6249
      %6282 = vst [vmem:[#allocation2 + $0xe8] sm:$0xff] %v6250
      %6283 = vst [vmem:[#allocation2 + $0xf0] sm:$0xff] %v6251
      %6284 = vst [vmem:[#allocation2 + $0xf8] sm:$0xff] %v6252
      %s6285 = scalar_lea.vmem %s4, 256
      %v6286 = vld [vmem:[%s6285] sm:$0xf]
      %v6287 = vld [vmem:[%s6285 + $0x4] sm:$0xf]
      %v6288 = vld [vmem:[%s6285 + $0x8] sm:$0xf]
      %v6289 = vld [vmem:[%s6285 + $0xc] sm:$0xf]
      %v6290 = vld [vmem:[%s6285 + $0x10] sm:$0xf]
      %v6291 = vld [vmem:[%s6285 + $0x14] sm:$0xf]
      %v6292 = vld [vmem:[%s6285 + $0x18] sm:$0xf]
      %v6293 = vld [vmem:[%s6285 + $0x1c] sm:$0xf]
      %v6294 = vld [vmem:[%s6285 + $0x20] sm:$0xf]
      %v6295 = vld [vmem:[%s6285 + $0x24] sm:$0xf]
      %v6296 = vld [vmem:[%s6285 + $0x28] sm:$0xf]
      %v6297 = vld [vmem:[%s6285 + $0x2c] sm:$0xf]
      %v6298 = vld [vmem:[%s6285 + $0x30] sm:$0xf]
      %v6299 = vld [vmem:[%s6285 + $0x34] sm:$0xf]
      %v6300 = vld [vmem:[%s6285 + $0x38] sm:$0xf]
      %v6301 = vld [vmem:[%s6285 + $0x3c] sm:$0xf]
      %v6302 = vunpack.c.l.b16 %v5864
      %v6303 = vunpack.c.l.b16 %v5874
      %v6304 = vpack.c.b16 %v6303, %v6302
      %v6322 = vunpack.c.l.b16 %v6286
      %v6323 = vunpack.c.l.b16 %v6287
      %v6324 = vunpack.c.l.b16 %v6288
      %v6325 = vunpack.c.l.b16 %v6289
      %v6326 = vunpack.c.l.b16 %v6290
      %v6327 = vunpack.c.l.b16 %v6291
      %v6328 = vunpack.c.l.b16 %v6292
      %v6329 = vunpack.c.l.b16 %v6293
      %v6330 = vunpack.c.l.b16 %v6294
      %v6331 = vunpack.c.l.b16 %v6295
      %v6332 = vunpack.c.l.b16 %v6296
      %v6333 = vunpack.c.l.b16 %v6297
      %v6334 = vunpack.c.l.b16 %v6298
      %v6335 = vunpack.c.l.b16 %v6299
      %v6336 = vunpack.c.l.b16 %v6300
      %v6337 = vunpack.c.l.b16 %v6301
      %v6338 = vpack.c.b16 %v6323, %v6322
      %v6339 = vpack.c.b16 %v6325, %v6324
      %v6340 = vpack.c.b16 %v6327, %v6326
      %v6341 = vpack.c.b16 %v6329, %v6328
      %v6342 = vpack.c.b16 %v6331, %v6330
      %v6343 = vpack.c.b16 %v6333, %v6332
      %v6344 = vpack.c.b16 %v6335, %v6334
      %v6345 = vpack.c.b16 %v6337, %v6336
      %6354 = vmatprep.subr.bf16.mxu0 0
      %6355 = vmatpush1.bf16.msra.mxu0 %v6338
      %6356 = vmatprep.subr.bf16.mxu0 0
      %6357 = vmatpush1.bf16.msra.mxu0 %v6339
      %6358 = vmatprep.subr.bf16.mxu0 0
      %6359 = vmatpush1.bf16.msra.mxu0 %v6340
      %6360 = vmatprep.subr.bf16.mxu0 0
      %6361 = vmatpush1.bf16.msra.mxu0 %v6341
      %6362 = vmatprep.subr.bf16.mxu0 0
      %6363 = vmatpush1.bf16.msra.mxu0 %v6342
      %6364 = vmatprep.subr.bf16.mxu0 0
      %6365 = vmatpush1.bf16.msra.mxu0 %v6343
      %6366 = vmatprep.subr.bf16.mxu0 0
      %6367 = vmatpush1.bf16.msra.mxu0 %v6344
      %6368 = vmatprep.subr.bf16.mxu0 0
      %6369 = vmatpush1.bf16.msra.mxu0 %v6345
      %6370 = vmatprep.subr.bf16.mxu0 0
      %6371 = vmatpush1.bf16.msra.mxu0 0
      %6372 = vmatprep.subr.bf16.mxu0 0
      %6373 = vmatpush1.bf16.msra.mxu0 0
      %6374 = vmatprep.subr.bf16.mxu0 0
      %6375 = vmatpush1.bf16.msra.mxu0 0
      %6376 = vmatprep.subr.bf16.mxu0 0
      %6377 = vmatpush1.bf16.msra.mxu0 0
      %6378 = vmatprep.subr.bf16.mxu0 0
      %6379 = vmatpush1.bf16.msra.mxu0 0
      %6380 = vmatprep.subr.bf16.mxu0 0
      %6381 = vmatpush1.bf16.msra.mxu0 0
      %6382 = vmatprep.subr.bf16.mxu0 0
      %6383 = vmatpush1.bf16.msra.mxu0 0
      %6384 = vmatprep.subr.bf16.mxu0 0
      %6385 = vmatpush1.bf16.msra.mxu0 0
      %6386 = vmatprep.mubr.bf16.mxu0 0
      %6387 = vmatmul.mubr.bf16.gmra.mrb[0].mxu0 %v5949
      %v6388 = vpop.f32.mrb[0].mxu0
      %v6389 = vadd.f32 0.0, %v6388
      %v6390 = vpop.f32.mrb[0].mxu0
      %v6391 = vpop.f32.mrb[0].mxu0
      %v6392 = vadd.f32 0.0, %v6391
      %v6393 = vpop.f32.mrb[0].mxu0
      %6394 = vmatprep.mubr.bf16.mxu0 0
      %6395 = vmatmul.mubr.bf16.gmra.mrb[0].mxu0 %v5950
      %v6396 = vpop.f32.mrb[0].mxu0
      %v6397 = vadd.f32 0.0, %v6396
      %v6398 = vpop.f32.mrb[0].mxu0
      %v6399 = vpop.f32.mrb[0].mxu0
      %v6400 = vadd.f32 0.0, %v6399
      %v6401 = vpop.f32.mrb[0].mxu0
      %6402 = vmatprep.mubr.bf16.mxu0 0
      %6403 = vmatmul.mubr.bf16.gmra.mrb[0].mxu0 %v5951
      %v6404 = vpop.f32.mrb[0].mxu0
      %v6405 = vadd.f32 0.0, %v6404
      %v6406 = vpop.f32.mrb[0].mxu0
      %v6407 = vpop.f32.mrb[0].mxu0
      %v6408 = vadd.f32 0.0, %v6407
      %v6409 = vpop.f32.mrb[0].mxu0
      %6410 = vmatprep.mubr.bf16.mxu0 0
      %6411 = vmatmul.mubr.bf16.gmra.mrb[0].mxu0 %v5952
      %v6412 = vpop.f32.mrb[0].mxu0
      %v6413 = vadd.f32 0.0, %v6412
      %v6414 = vpop.f32.mrb[0].mxu0
      %v6415 = vpop.f32.mrb[0].mxu0
      %v6416 = vadd.f32 0.0, %v6415
      %v6417 = vpop.f32.mrb[0].mxu0
      %6418 = vmatprep.mubr.bf16.mxu0 0
      %6419 = vmatmul.mubr.bf16.gmra.mrb[0].mxu0 %v5953
      %v6420 = vpop.f32.mrb[0].mxu0
      %v6421 = vadd.f32 0.0, %v6420
      %v6422 = vpop.f32.mrb[0].mxu0
      %v6423 = vpop.f32.mrb[0].mxu0
      %v6424 = vadd.f32 0.0, %v6423
      %v6425 = vpop.f32.mrb[0].mxu0
      %6426 = vmatprep.mubr.bf16.mxu0 0
      %6427 = vmatmul.mubr.bf16.gmra.mrb[0].mxu0 %v5954
      %v6428 = vpop.f32.mrb[0].mxu0
      %v6429 = vadd.f32 0.0, %v6428
      %v6430 = vpop.f32.mrb[0].mxu0
      %v6431 = vpop.f32.mrb[0].mxu0
      %v6432 = vadd.f32 0.0, %v6431
      %v6433 = vpop.f32.mrb[0].mxu0
      %6434 = vmatprep.mubr.bf16.mxu0 0
      %6435 = vmatmul.mubr.bf16.gmra.mrb[0].mxu0 %v5955
      %v6436 = vpop.f32.mrb[0].mxu0
      %v6437 = vadd.f32 0.0, %v6436
      %v6438 = vpop.f32.mrb[0].mxu0
      %v6439 = vpop.f32.mrb[0].mxu0
      %v6440 = vadd.f32 0.0, %v6439
      %v6441 = vpop.f32.mrb[0].mxu0
      %6442 = vmatprep.mubr.bf16.mxu0 0
      %6443 = vmatmul.mubr.bf16.gmra.mrb[0].mxu0 %v5956
      %v6444 = vpop.f32.mrb[0].mxu0
      %v6445 = vadd.f32 0.0, %v6444
      %v6446 = vpop.f32.mrb[0].mxu0
      %v6447 = vpop.f32.mrb[0].mxu0
      %v6448 = vadd.f32 0.0, %v6447
      %v6449 = vpop.f32.mrb[0].mxu0
      %6450 = vmatprep.mubr.bf16.mxu0 0
      %6451 = vmatmul.mubr.bf16.gmra.mrb[0].mxu0 %v5957
      %v6452 = vpop.f32.mrb[0].mxu0
      %v6453 = vadd.f32 0.0, %v6452
      %v6454 = vpop.f32.mrb[0].mxu0
      %v6455 = vpop.f32.mrb[0].mxu0
      %v6456 = vadd.f32 0.0, %v6455
      %v6457 = vpop.f32.mrb[0].mxu0
      %6458 = vmatprep.mubr.bf16.mxu0 0
      %6459 = vmatmul.mubr.bf16.gmra.mrb[0].mxu0 %v5958
      %v6460 = vpop.f32.mrb[0].mxu0
      %v6461 = vadd.f32 0.0, %v6460
      %v6462 = vpop.f32.mrb[0].mxu0
      %v6463 = vpop.f32.mrb[0].mxu0
      %v6464 = vadd.f32 0.0, %v6463
      %v6465 = vpop.f32.mrb[0].mxu0
      %6466 = vmatprep.mubr.bf16.mxu0 0
      %6467 = vmatmul.mubr.bf16.gmra.mrb[0].mxu0 %v5959
      %v6468 = vpop.f32.mrb[0].mxu0
      %v6469 = vadd.f32 0.0, %v6468
      %v6470 = vpop.f32.mrb[0].mxu0
      %v6471 = vpop.f32.mrb[0].mxu0
      %v6472 = vadd.f32 0.0, %v6471
      %v6473 = vpop.f32.mrb[0].mxu0
      %6474 = vmatprep.mubr.bf16.mxu0 0
      %6475 = vmatmul.mubr.bf16.gmra.mrb[0].mxu0 %v5960
      %v6476 = vpop.f32.mrb[0].mxu0
      %v6477 = vadd.f32 0.0, %v6476
      %v6478 = vpop.f32.mrb[0].mxu0
      %v6479 = vpop.f32.mrb[0].mxu0
      %v6480 = vadd.f32 0.0, %v6479
      %v6481 = vpop.f32.mrb[0].mxu0
      %6482 = vmatprep.mubr.bf16.mxu0 0
      %6483 = vmatmul.mubr.bf16.gmra.mrb[0].mxu0 %v5961
      %v6484 = vpop.f32.mrb[0].mxu0
      %v6485 = vadd.f32 0.0, %v6484
      %v6486 = vpop.f32.mrb[0].mxu0
      %v6487 = vpop.f32.mrb[0].mxu0
      %v6488 = vadd.f32 0.0, %v6487
      %v6489 = vpop.f32.mrb[0].mxu0
      %6490 = vmatprep.mubr.bf16.mxu0 0
      %6491 = vmatmul.mubr.bf16.gmra.mrb[0].mxu0 %v5962
      %v6492 = vpop.f32.mrb[0].mxu0
      %v6493 = vadd.f32 0.0, %v6492
      %v6494 = vpop.f32.mrb[0].mxu0
      %v6495 = vpop.f32.mrb[0].mxu0
      %v6496 = vadd.f32 0.0, %v6495
      %v6497 = vpop.f32.mrb[0].mxu0
      %6498 = vmatprep.mubr.bf16.mxu0 0
      %6499 = vmatmul.mubr.bf16.gmra.mrb[0].mxu0 %v5963
      %v6500 = vpop.f32.mrb[0].mxu0
      %v6501 = vadd.f32 0.0, %v6500
      %v6502 = vpop.f32.mrb[0].mxu0
      %v6503 = vpop.f32.mrb[0].mxu0
      %v6504 = vadd.f32 0.0, %v6503
      %v6505 = vpop.f32.mrb[0].mxu0
      %6506 = vmatprep.mubr.bf16.mxu0 0
      %6507 = vmatmul.mubr.bf16.gmra.mrb[0].mxu0 %v6304
      %v6508 = vpop.f32.mrb[0].mxu0
      %v6509 = vadd.f32 0.0, %v6508
      %v6510 = vpop.f32.mrb[0].mxu0
      %v6511 = vpop.f32.mrb[0].mxu0
      %v6512 = vadd.f32 0.0, %v6511
      %v6513 = vpop.f32.mrb[0].mxu0
      %6514 = vdwg.mxu0
      %v6515 = vld [vmem:[#allocation2] sm:$0xff]
      %v6516 = vld [vmem:[#allocation2 + $0x8] sm:$0xff]
      %v6517 = vld [vmem:[#allocation2 + $0x10] sm:$0xff]
      %v6518 = vld [vmem:[#allocation2 + $0x18] sm:$0xff]
      %v6519 = vld [vmem:[#allocation2 + $0x20] sm:$0xff]
      %v6520 = vld [vmem:[#allocation2 + $0x28] sm:$0xff]
      %v6521 = vld [vmem:[#allocation2 + $0x30] sm:$0xff]
      %v6522 = vld [vmem:[#allocation2 + $0x38] sm:$0xff]
      %v6523 = vld [vmem:[#allocation2 + $0x40] sm:$0xff]
      %v6524 = vld [vmem:[#allocation2 + $0x48] sm:$0xff]
      %v6525 = vld [vmem:[#allocation2 + $0x50] sm:$0xff]
      %v6526 = vld [vmem:[#allocation2 + $0x58] sm:$0xff]
      %v6527 = vld [vmem:[#allocation2 + $0x60] sm:$0xff]
      %v6528 = vld [vmem:[#allocation2 + $0x68] sm:$0xff]
      %v6529 = vld [vmem:[#allocation2 + $0x70] sm:$0xff]
      %v6530 = vld [vmem:[#allocation2 + $0x78] sm:$0xff]
      %v6531 = vld [vmem:[#allocation2 + $0x80] sm:$0xff]
      %v6532 = vld [vmem:[#allocation2 + $0x88] sm:$0xff]
      %v6533 = vld [vmem:[#allocation2 + $0x90] sm:$0xff]
      %v6534 = vld [vmem:[#allocation2 + $0x98] sm:$0xff]
      %v6535 = vld [vmem:[#allocation2 + $0xa0] sm:$0xff]
      %v6536 = vld [vmem:[#allocation2 + $0xa8] sm:$0xff]
      %v6537 = vld [vmem:[#allocation2 + $0xb0] sm:$0xff]
      %v6538 = vld [vmem:[#allocation2 + $0xb8] sm:$0xff]
      %v6539 = vld [vmem:[#allocation2 + $0xc0] sm:$0xff]
      %v6540 = vld [vmem:[#allocation2 + $0xc8] sm:$0xff]
      %v6541 = vld [vmem:[#allocation2 + $0xd0] sm:$0xff]
      %v6542 = vld [vmem:[#allocation2 + $0xd8] sm:$0xff]
      %v6543 = vld [vmem:[#allocation2 + $0xe0] sm:$0xff]
      %v6544 = vld [vmem:[#allocation2 + $0xe8] sm:$0xff]
      %v6545 = vld [vmem:[#allocation2 + $0xf0] sm:$0xff]
      %v6546 = vld [vmem:[#allocation2 + $0xf8] sm:$0xff]
      %v6547 = vadd.f32 %v6515, %v6389
      %v6548 = vadd.f32 %v6516, %v6392
      %v6549 = vadd.f32 %v6517, %v6397
      %v6550 = vadd.f32 %v6518, %v6400
      %v6551 = vadd.f32 %v6519, %v6405
      %v6552 = vadd.f32 %v6520, %v6408
      %v6553 = vadd.f32 %v6521, %v6413
      %v6554 = vadd.f32 %v6522, %v6416
      %v6555 = vadd.f32 %v6523, %v6421
      %v6556 = vadd.f32 %v6524, %v6424
      %v6557 = vadd.f32 %v6525, %v6429
      %v6558 = vadd.f32 %v6526, %v6432
      %v6559 = vadd.f32 %v6527, %v6437
      %v6560 = vadd.f32 %v6528, %v6440
      %v6561 = vadd.f32 %v6529, %v6445
      %v6562 = vadd.f32 %v6530, %v6448
      %v6563 = vadd.f32 %v6531, %v6453
      %v6564 = vadd.f32 %v6532, %v6456
      %v6565 = vadd.f32 %v6533, %v6461
      %v6566 = vadd.f32 %v6534, %v6464
      %v6567 = vadd.f32 %v6535, %v6469
      %v6568 = vadd.f32 %v6536, %v6472
      %v6569 = vadd.f32 %v6537, %v6477
      %v6570 = vadd.f32 %v6538, %v6480
      %v6571 = vadd.f32 %v6539, %v6485
      %v6572 = vadd.f32 %v6540, %v6488
      %v6573 = vadd.f32 %v6541, %v6493
      %v6574 = vadd.f32 %v6542, %v6496
      %v6575 = vadd.f32 %v6543, %v6501
      %v6576 = vadd.f32 %v6544, %v6504
      %v6577 = vadd.f32 %v6545, %v6509
      %v6578 = vadd.f32 %v6546, %v6512
      %6579 = vst [vmem:[#allocation2] sm:$0xff] %v6547
      %6580 = vst [vmem:[#allocation2 + $0x8] sm:$0xff] %v6548
      %6581 = vst [vmem:[#allocation2 + $0x10] sm:$0xff] %v6549
      %6582 = vst [vmem:[#allocation2 + $0x18] sm:$0xff] %v6550
      %6583 = vst [vmem:[#allocation2 + $0x20] sm:$0xff] %v6551
      %6584 = vst [vmem:[#allocation2 + $0x28] sm:$0xff] %v6552
      %6585 = vst [vmem:[#allocation2 + $0x30] sm:$0xff] %v6553
      %6586 = vst [vmem:[#allocation2 + $0x38] sm:$0xff] %v6554
      %6587 = vst [vmem:[#allocation2 + $0x40] sm:$0xff] %v6555
      %6588 = vst [vmem:[#allocation2 + $0x48] sm:$0xff] %v6556
      %6589 = vst [vmem:[#allocation2 + $0x50] sm:$0xff] %v6557
      %6590 = vst [vmem:[#allocation2 + $0x58] sm:$0xff] %v6558
      %6591 = vst [vmem:[#allocation2 + $0x60] sm:$0xff] %v6559
      %6592 = vst [vmem:[#allocation2 + $0x68] sm:$0xff] %v6560
      %6593 = vst [vmem:[#allocation2 + $0x70] sm:$0xff] %v6561
      %6594 = vst [vmem:[#allocation2 + $0x78] sm:$0xff] %v6562
      %6595 = vst [vmem:[#allocation2 + $0x80] sm:$0xff] %v6563
      %6596 = vst [vmem:[#allocation2 + $0x88] sm:$0xff] %v6564
      %6597 = vst [vmem:[#allocation2 + $0x90] sm:$0xff] %v6565
      %6598 = vst [vmem:[#allocation2 + $0x98] sm:$0xff] %v6566
      %6599 = vst [vmem:[#allocation2 + $0xa0] sm:$0xff] %v6567
      %6600 = vst [vmem:[#allocation2 + $0xa8] sm:$0xff] %v6568
      %6601 = vst [vmem:[#allocation2 + $0xb0] sm:$0xff] %v6569
      %6602 = vst [vmem:[#allocation2 + $0xb8] sm:$0xff] %v6570
      %6603 = vst [vmem:[#allocation2 + $0xc0] sm:$0xff] %v6571
      %6604 = vst [vmem:[#allocation2 + $0xc8] sm:$0xff] %v6572
      %6605 = vst [vmem:[#allocation2 + $0xd0] sm:$0xff] %v6573
      %6606 = vst [vmem:[#allocation2 + $0xd8] sm:$0xff] %v6574
      %6607 = vst [vmem:[#allocation2 + $0xe0] sm:$0xff] %v6575
      %6608 = vst [vmem:[#allocation2 + $0xe8] sm:$0xff] %v6576
      %6609 = vst [vmem:[#allocation2 + $0xf0] sm:$0xff] %v6577
      %6610 = vst [vmem:[#allocation2 + $0xf8] sm:$0xff] %v6578
      %s6611 = scalar_lea.vmem %s4, 448
      %v6612 = vld [vmem:[%s6611] sm:$0xf]
      %v6613 = vld [vmem:[%s6611 + $0x4] sm:$0xf]
      %v6614 = vld [vmem:[%s6611 + $0x8] sm:$0xf]
      %v6615 = vld [vmem:[%s6611 + $0xc] sm:$0xf]
      %v6616 = vld [vmem:[%s6611 + $0x10] sm:$0xf]
      %v6617 = vld [vmem:[%s6611 + $0x14] sm:$0xf]
      %v6618 = vld [vmem:[%s6611 + $0x18] sm:$0xf]
      %v6619 = vld [vmem:[%s6611 + $0x1c] sm:$0xf]
      %v6620 = vld [vmem:[%s6611 + $0x20] sm:$0xf]
      %v6621 = vld [vmem:[%s6611 + $0x24] sm:$0xf]
      %v6622 = vld [vmem:[%s6611 + $0x28] sm:$0xf]
      %v6623 = vld [vmem:[%s6611 + $0x2c] sm:$0xf]
      %v6624 = vld [vmem:[%s6611 + $0x30] sm:$0xf]
      %v6625 = vld [vmem:[%s6611 + $0x34] sm:$0xf]
      %v6626 = vld [vmem:[%s6611 + $0x38] sm:$0xf]
      %v6627 = vld [vmem:[%s6611 + $0x3c] sm:$0xf]
      %v6628 = vunpack.c.l.b16 %v5888
      %v6629 = vunpack.c.l.b16 %v5898
      %v6630 = vpack.c.b16 %v6629, %v6628
      %v6648 = vunpack.c.l.b16 %v6612
      %v6649 = vunpack.c.l.b16 %v6613
      %v6650 = vunpack.c.l.b16 %v6614
      %v6651 = vunpack.c.l.b16 %v6615
      %v6652 = vunpack.c.l.b16 %v6616
      %v6653 = vunpack.c.l.b16 %v6617
      %v6654 = vunpack.c.l.b16 %v6618
      %v6655 = vunpack.c.l.b16 %v6619
      %v6656 = vunpack.c.l.b16 %v6620
      %v6657 = vunpack.c.l.b16 %v6621
      %v6658 = vunpack.c.l.b16 %v6622
      %v6659 = vunpack.c.l.b16 %v6623
      %v6660 = vunpack.c.l.b16 %v6624
      %v6661 = vunpack.c.l.b16 %v6625
      %v6662 = vunpack.c.l.b16 %v6626
      %v6663 = vunpack.c.l.b16 %v6627
      %v6664 = vpack.c.b16 %v6649, %v6648
      %v6665 = vpack.c.b16 %v6651, %v6650
      %v6666 = vpack.c.b16 %v6653, %v6652
      %v6667 = vpack.c.b16 %v6655, %v6654
      %v6668 = vpack.c.b16 %v6657, %v6656
      %v6669 = vpack.c.b16 %v6659, %v6658
      %v6670 = vpack.c.b16 %v6661, %v6660
      %v6671 = vpack.c.b16 %v6663, %v6662
      %6680 = vmatprep.subr.bf16.mxu0 0
      %6681 = vmatpush1.bf16.msra.mxu0 %v6664
      %6682 = vmatprep.subr.bf16.mxu0 0
      %6683 = vmatpush1.bf16.msra.mxu0 %v6665
      %6684 = vmatprep.subr.bf16.mxu0 0
      %6685 = vmatpush1.bf16.msra.mxu0 %v6666
      %6686 = vmatprep.subr.bf16.mxu0 0
      %6687 = vmatpush1.bf16.msra.mxu0 %v6667
      %6688 = vmatprep.subr.bf16.mxu0 0
      %6689 = vmatpush1.bf16.msra.mxu0 %v6668
      %6690 = vmatprep.subr.bf16.mxu0 0
      %6691 = vmatpush1.bf16.msra.mxu0 %v6669
      %6692 = vmatprep.subr.bf16.mxu0 0
      %6693 = vmatpush1.bf16.msra.mxu0 %v6670
      %6694 = vmatprep.subr.bf16.mxu0 0
      %6695 = vmatpush1.bf16.msra.mxu0 %v6671
      %6696 = vmatprep.subr.bf16.mxu0 0
      %6697 = vmatpush1.bf16.msra.mxu0 0
      %6698 = vmatprep.subr.bf16.mxu0 0
      %6699 = vmatpush1.bf16.msra.mxu0 0
      %6700 = vmatprep.subr.bf16.mxu0 0
      %6701 = vmatpush1.bf16.msra.mxu0 0
      %6702 = vmatprep.subr.bf16.mxu0 0
      %6703 = vmatpush1.bf16.msra.mxu0 0
      %6704 = vmatprep.subr.bf16.mxu0 0
      %6705 = vmatpush1.bf16.msra.mxu0 0
      %6706 = vmatprep.subr.bf16.mxu0 0
      %6707 = vmatpush1.bf16.msra.mxu0 0
      %6708 = vmatprep.subr.bf16.mxu0 0
      %6709 = vmatpush1.bf16.msra.mxu0 0
      %6710 = vmatprep.subr.bf16.mxu0 0
      %6711 = vmatpush1.bf16.msra.mxu0 0
      %6712 = vmatprep.mubr.bf16.mxu0 0
      %6713 = vmatmul.mubr.bf16.gmra.mrb[0].mxu0 %v5950
      %v6714 = vpop.f32.mrb[0].mxu0
      %v6715 = vadd.f32 0.0, %v6714
      %v6716 = vpop.f32.mrb[0].mxu0
      %v6717 = vpop.f32.mrb[0].mxu0
      %v6718 = vadd.f32 0.0, %v6717
      %v6719 = vpop.f32.mrb[0].mxu0
      %6720 = vmatprep.mubr.bf16.mxu0 0
      %6721 = vmatmul.mubr.bf16.gmra.mrb[0].mxu0 %v5951
      %v6722 = vpop.f32.mrb[0].mxu0
      %v6723 = vadd.f32 0.0, %v6722
      %v6724 = vpop.f32.mrb[0].mxu0
      %v6725 = vpop.f32.mrb[0].mxu0
      %v6726 = vadd.f32 0.0, %v6725
      %v6727 = vpop.f32.mrb[0].mxu0
      %6728 = vmatprep.mubr.bf16.mxu0 0
      %6729 = vmatmul.mubr.bf16.gmra.mrb[0].mxu0 %v5952
      %v6730 = vpop.f32.mrb[0].mxu0
      %v6731 = vadd.f32 0.0, %v6730
      %v6732 = vpop.f32.mrb[0].mxu0
      %v6733 = vpop.f32.mrb[0].mxu0
      %v6734 = vadd.f32 0.0, %v6733
      %v6735 = vpop.f32.mrb[0].mxu0
      %6736 = vmatprep.mubr.bf16.mxu0 0
      %6737 = vmatmul.mubr.bf16.gmra.mrb[0].mxu0 %v5953
      %v6738 = vpop.f32.mrb[0].mxu0
      %v6739 = vadd.f32 0.0, %v6738
      %v6740 = vpop.f32.mrb[0].mxu0
      %v6741 = vpop.f32.mrb[0].mxu0
      %v6742 = vadd.f32 0.0, %v6741
      %v6743 = vpop.f32.mrb[0].mxu0
      %6744 = vmatprep.mubr.bf16.mxu0 0
      %6745 = vmatmul.mubr.bf16.gmra.mrb[0].mxu0 %v5954
      %v6746 = vpop.f32.mrb[0].mxu0
      %v6747 = vadd.f32 0.0, %v6746
      %v6748 = vpop.f32.mrb[0].mxu0
      %v6749 = vpop.f32.mrb[0].mxu0
      %v6750 = vadd.f32 0.0, %v6749
      %v6751 = vpop.f32.mrb[0].mxu0
      %6752 = vmatprep.mubr.bf16.mxu0 0
      %6753 = vmatmul.mubr.bf16.gmra.mrb[0].mxu0 %v5955
      %v6754 = vpop.f32.mrb[0].mxu0
      %v6755 = vadd.f32 0.0, %v6754
      %v6756 = vpop.f32.mrb[0].mxu0
      %v6757 = vpop.f32.mrb[0].mxu0
      %v6758 = vadd.f32 0.0, %v6757
      %v6759 = vpop.f32.mrb[0].mxu0
      %6760 = vmatprep.mubr.bf16.mxu0 0
      %6761 = vmatmul.mubr.bf16.gmra.mrb[0].mxu0 %v5956
      %v6762 = vpop.f32.mrb[0].mxu0
      %v6763 = vadd.f32 0.0, %v6762
      %v6764 = vpop.f32.mrb[0].mxu0
      %v6765 = vpop.f32.mrb[0].mxu0
      %v6766 = vadd.f32 0.0, %v6765
      %v6767 = vpop.f32.mrb[0].mxu0
      %6768 = vmatprep.mubr.bf16.mxu0 0
      %6769 = vmatmul.mubr.bf16.gmra.mrb[0].mxu0 %v5957
      %v6770 = vpop.f32.mrb[0].mxu0
      %v6771 = vadd.f32 0.0, %v6770
      %v6772 = vpop.f32.mrb[0].mxu0
      %v6773 = vpop.f32.mrb[0].mxu0
      %v6774 = vadd.f32 0.0, %v6773
      %v6775 = vpop.f32.mrb[0].mxu0
      %6776 = vmatprep.mubr.bf16.mxu0 0
      %6777 = vmatmul.mubr.bf16.gmra.mrb[0].mxu0 %v5958
      %v6778 = vpop.f32.mrb[0].mxu0
      %v6779 = vadd.f32 0.0, %v6778
      %v6780 = vpop.f32.mrb[0].mxu0
      %v6781 = vpop.f32.mrb[0].mxu0
      %v6782 = vadd.f32 0.0, %v6781
      %v6783 = vpop.f32.mrb[0].mxu0
      %6784 = vmatprep.mubr.bf16.mxu0 0
      %6785 = vmatmul.mubr.bf16.gmra.mrb[0].mxu0 %v5959
      %v6786 = vpop.f32.mrb[0].mxu0
      %v6787 = vadd.f32 0.0, %v6786
      %v6788 = vpop.f32.mrb[0].mxu0
      %v6789 = vpop.f32.mrb[0].mxu0
      %v6790 = vadd.f32 0.0, %v6789
      %v6791 = vpop.f32.mrb[0].mxu0
      %6792 = vmatprep.mubr.bf16.mxu0 0
      %6793 = vmatmul.mubr.bf16.gmra.mrb[0].mxu0 %v5960
      %v6794 = vpop.f32.mrb[0].mxu0
      %v6795 = vadd.f32 0.0, %v6794
      %v6796 = vpop.f32.mrb[0].mxu0
      %v6797 = vpop.f32.mrb[0].mxu0
      %v6798 = vadd.f32 0.0, %v6797
      %v6799 = vpop.f32.mrb[0].mxu0
      %6800 = vmatprep.mubr.bf16.mxu0 0
      %6801 = vmatmul.mubr.bf16.gmra.mrb[0].mxu0 %v5961
      %v6802 = vpop.f32.mrb[0].mxu0
      %v6803 = vadd.f32 0.0, %v6802
      %v6804 = vpop.f32.mrb[0].mxu0
      %v6805 = vpop.f32.mrb[0].mxu0
      %v6806 = vadd.f32 0.0, %v6805
      %v6807 = vpop.f32.mrb[0].mxu0
      %6808 = vmatprep.mubr.bf16.mxu0 0
      %6809 = vmatmul.mubr.bf16.gmra.mrb[0].mxu0 %v5962
      %v6810 = vpop.f32.mrb[0].mxu0
      %v6811 = vadd.f32 0.0, %v6810
      %v6812 = vpop.f32.mrb[0].mxu0
      %v6813 = vpop.f32.mrb[0].mxu0
      %v6814 = vadd.f32 0.0, %v6813
      %v6815 = vpop.f32.mrb[0].mxu0
      %6816 = vmatprep.mubr.bf16.mxu0 0
      %6817 = vmatmul.mubr.bf16.gmra.mrb[0].mxu0 %v5963
      %v6818 = vpop.f32.mrb[0].mxu0
      %v6819 = vadd.f32 0.0, %v6818
      %v6820 = vpop.f32.mrb[0].mxu0
      %v6821 = vpop.f32.mrb[0].mxu0
      %v6822 = vadd.f32 0.0, %v6821
      %v6823 = vpop.f32.mrb[0].mxu0
      %6824 = vmatprep.mubr.bf16.mxu0 0
      %6825 = vmatmul.mubr.bf16.gmra.mrb[0].mxu0 %v6304
      %v6826 = vpop.f32.mrb[0].mxu0
      %v6827 = vadd.f32 0.0, %v6826
      %v6828 = vpop.f32.mrb[0].mxu0
      %v6829 = vpop.f32.mrb[0].mxu0
      %v6830 = vadd.f32 0.0, %v6829
      %v6831 = vpop.f32.mrb[0].mxu0
      %6832 = vmatprep.mubr.bf16.mxu0 0
      %6833 = vmatmul.mubr.bf16.gmra.mrb[0].mxu0 %v6630
      %v6834 = vpop.f32.mrb[0].mxu0
      %v6835 = vadd.f32 0.0, %v6834
      %v6836 = vpop.f32.mrb[0].mxu0
      %v6837 = vpop.f32.mrb[0].mxu0
      %v6838 = vadd.f32 0.0, %v6837
      %v6839 = vpop.f32.mrb[0].mxu0
      %6840 = vdwg.mxu0
      %v6841 = vld [vmem:[#allocation2] sm:$0xff]
      %v6842 = vld [vmem:[#allocation2 + $0x8] sm:$0xff]
      %v6843 = vld [vmem:[#allocation2 + $0x10] sm:$0xff]
      %v6844 = vld [vmem:[#allocation2 + $0x18] sm:$0xff]
      %v6845 = vld [vmem:[#allocation2 + $0x20] sm:$0xff]
      %v6846 = vld [vmem:[#allocation2 + $0x28] sm:$0xff]
      %v6847 = vld [vmem:[#allocation2 + $0x30] sm:$0xff]
      %v6848 = vld [vmem:[#allocation2 + $0x38] sm:$0xff]
      %v6849 = vld [vmem:[#allocation2 + $0x40] sm:$0xff]
      %v6850 = vld [vmem:[#allocation2 + $0x48] sm:$0xff]
      %v6851 = vld [vmem:[#allocation2 + $0x50] sm:$0xff]
      %v6852 = vld [vmem:[#allocation2 + $0x58] sm:$0xff]
      %v6853 = vld [vmem:[#allocation2 + $0x60] sm:$0xff]
      %v6854 = vld [vmem:[#allocation2 + $0x68] sm:$0xff]
      %v6855 = vld [vmem:[#allocation2 + $0x70] sm:$0xff]
      %v6856 = vld [vmem:[#allocation2 + $0x78] sm:$0xff]
      %v6857 = vld [vmem:[#allocation2 + $0x80] sm:$0xff]
      %v6858 = vld [vmem:[#allocation2 + $0x88] sm:$0xff]
      %v6859 = vld [vmem:[#allocation2 + $0x90] sm:$0xff]
      %v6860 = vld [vmem:[#allocation2 + $0x98] sm:$0xff]
      %v6861 = vld [vmem:[#allocation2 + $0xa0] sm:$0xff]
      %v6862 = vld [vmem:[#allocation2 + $0xa8] sm:$0xff]
      %v6863 = vld [vmem:[#allocation2 + $0xb0] sm:$0xff]
      %v6864 = vld [vmem:[#allocation2 + $0xb8] sm:$0xff]
      %v6865 = vld [vmem:[#allocation2 + $0xc0] sm:$0xff]
      %v6866 = vld [vmem:[#allocation2 + $0xc8] sm:$0xff]
      %v6867 = vld [vmem:[#allocation2 + $0xd0] sm:$0xff]
      %v6868 = vld [vmem:[#allocation2 + $0xd8] sm:$0xff]
      %v6869 = vld [vmem:[#allocation2 + $0xe0] sm:$0xff]
      %v6870 = vld [vmem:[#allocation2 + $0xe8] sm:$0xff]
      %v6871 = vld [vmem:[#allocation2 + $0xf0] sm:$0xff]
      %v6872 = vld [vmem:[#allocation2 + $0xf8] sm:$0xff]
      %v6873 = vadd.f32 %v6841, %v6715
      %v6874 = vadd.f32 %v6842, %v6718
      %v6875 = vadd.f32 %v6843, %v6723
      %v6876 = vadd.f32 %v6844, %v6726
      %v6877 = vadd.f32 %v6845, %v6731
      %v6878 = vadd.f32 %v6846, %v6734
      %v6879 = vadd.f32 %v6847, %v6739
      %v6880 = vadd.f32 %v6848, %v6742
      %v6881 = vadd.f32 %v6849, %v6747
      %v6882 = vadd.f32 %v6850, %v6750
      %v6883 = vadd.f32 %v6851, %v6755
      %v6884 = vadd.f32 %v6852, %v6758
      %v6885 = vadd.f32 %v6853, %v6763
      %v6886 = vadd.f32 %v6854, %v6766
      %v6887 = vadd.f32 %v6855, %v6771
      %v6888 = vadd.f32 %v6856, %v6774
      %v6889 = vadd.f32 %v6857, %v6779
      %v6890 = vadd.f32 %v6858, %v6782
      %v6891 = vadd.f32 %v6859, %v6787
      %v6892 = vadd.f32 %v6860, %v6790
      %v6893 = vadd.f32 %v6861, %v6795
      %v6894 = vadd.f32 %v6862, %v6798
      %v6895 = vadd.f32 %v6863, %v6803
      %v6896 = vadd.f32 %v6864, %v6806
      %v6897 = vadd.f32 %v6865, %v6811
      %v6898 = vadd.f32 %v6866, %v6814
      %v6899 = vadd.f32 %v6867, %v6819
      %v6900 = vadd.f32 %v6868, %v6822
      %v6901 = vadd.f32 %v6869, %v6827
      %v6902 = vadd.f32 %v6870, %v6830
      %v6903 = vadd.f32 %v6871, %v6835
      %v6904 = vadd.f32 %v6872, %v6838
      %6905 = vst [vmem:[#allocation2] sm:$0xff] %v6873
      %6906 = vst [vmem:[#allocation2 + $0x8] sm:$0xff] %v6874
      %6907 = vst [vmem:[#allocation2 + $0x10] sm:$0xff] %v6875
      %6908 = vst [vmem:[#allocation2 + $0x18] sm:$0xff] %v6876
      %6909 = vst [vmem:[#allocation2 + $0x20] sm:$0xff] %v6877
      %6910 = vst [vmem:[#allocation2 + $0x28] sm:$0xff] %v6878
      %6911 = vst [vmem:[#allocation2 + $0x30] sm:$0xff] %v6879
      %6912 = vst [vmem:[#allocation2 + $0x38] sm:$0xff] %v6880
      %6913 = vst [vmem:[#allocation2 + $0x40] sm:$0xff] %v6881
      %6914 = vst [vmem:[#allocation2 + $0x48] sm:$0xff] %v6882
      %6915 = vst [vmem:[#allocation2 + $0x50] sm:$0xff] %v6883
      %6916 = vst [vmem:[#allocation2 + $0x58] sm:$0xff] %v6884
      %6917 = vst [vmem:[#allocation2 + $0x60] sm:$0xff] %v6885
      %6918 = vst [vmem:[#allocation2 + $0x68] sm:$0xff] %v6886
      %6919 = vst [vmem:[#allocation2 + $0x70] sm:$0xff] %v6887
      %6920 = vst [vmem:[#allocation2 + $0x78] sm:$0xff] %v6888
      %6921 = vst [vmem:[#allocation2 + $0x80] sm:$0xff] %v6889
      %6922 = vst [vmem:[#allocation2 + $0x88] sm:$0xff] %v6890
      %6923 = vst [vmem:[#allocation2 + $0x90] sm:$0xff] %v6891
      %6924 = vst [vmem:[#allocation2 + $0x98] sm:$0xff] %v6892
      %6925 = vst [vmem:[#allocation2 + $0xa0] sm:$0xff] %v6893
      %6926 = vst [vmem:[#allocation2 + $0xa8] sm:$0xff] %v6894
      %6927 = vst [vmem:[#allocation2 + $0xb0] sm:$0xff] %v6895
      %6928 = vst [vmem:[#allocation2 + $0xb8] sm:$0xff] %v6896
      %6929 = vst [vmem:[#allocation2 + $0xc0] sm:$0xff] %v6897
      %6930 = vst [vmem:[#allocation2 + $0xc8] sm:$0xff] %v6898
      %6931 = vst [vmem:[#allocation2 + $0xd0] sm:$0xff] %v6899
      %6932 = vst [vmem:[#allocation2 + $0xd8] sm:$0xff] %v6900
      %6933 = vst [vmem:[#allocation2 + $0xe0] sm:$0xff] %v6901
      %6934 = vst [vmem:[#allocation2 + $0xe8] sm:$0xff] %v6902
      %6935 = vst [vmem:[#allocation2 + $0xf0] sm:$0xff] %v6903
      %6936 = vst [vmem:[#allocation2 + $0xf8] sm:$0xff] %v6904
      %v6937 = vld [vmem:[#allocation3] sm:$0xe]
      %v6938 = vld [vmem:[#allocation3 + $0x4] sm:$0xf]
      %v6939 = vld [vmem:[#allocation3 + $0x8] sm:$0x1]
      %v6940 = vld [vmem:[#allocation3 + $0xc] sm:$0xe]
      %v6941 = vld [vmem:[#allocation3 + $0x10] sm:$0xf]
      %v6942 = vld [vmem:[#allocation3 + $0x14] sm:$0x1]
      %v6943 = vld [vmem:[#allocation3 + $0x18] sm:$0xe]
      %v6944 = vld [vmem:[#allocation3 + $0x1c] sm:$0xf]
      %v6945 = vld [vmem:[#allocation3 + $0x20] sm:$0x1]
      %v6946 = vld [vmem:[#allocation3 + $0x24] sm:$0xe]
      %v6947 = vld [vmem:[#allocation3 + $0x28] sm:$0xf]
      %v6948 = vld [vmem:[#allocation3 + $0x2c] sm:$0x1]
      %v6949 = vld [vmem:[#allocation3 + $0x30] sm:$0xe]
      %v6950 = vld [vmem:[#allocation3 + $0x34] sm:$0xf]
      %v6951 = vld [vmem:[#allocation3 + $0x38] sm:$0x1]
      %v6952 = vld [vmem:[#allocation3 + $0x3c] sm:$0xe]
      %v6953 = vld [vmem:[#allocation3 + $0x40] sm:$0xf]
      %v6954 = vld [vmem:[#allocation3 + $0x44] sm:$0x1]
      %v6955 = vld [vmem:[#allocation3 + $0x48] sm:$0xe]
      %v6956 = vld [vmem:[#allocation3 + $0x4c] sm:$0xf]
      %v6957 = vld [vmem:[#allocation3 + $0x50] sm:$0x1]
      %v6958 = vld [vmem:[#allocation3 + $0x54] sm:$0xe]
      %v6959 = vld [vmem:[#allocation3 + $0x58] sm:$0xf]
      %v6960 = vld [vmem:[#allocation3 + $0x5c] sm:$0x1]
      %v6961 = vld [vmem:[#allocation3 + $0x60] sm:$0xe]
      %v6962 = vld [vmem:[#allocation3 + $0x64] sm:$0xf]
      %v6963 = vld [vmem:[#allocation3 + $0x68] sm:$0x1]
      %v6964 = vld [vmem:[#allocation3 + $0x6c] sm:$0xe]
      %v6965 = vld [vmem:[#allocation3 + $0x70] sm:$0xf]
      %v6966 = vld [vmem:[#allocation3 + $0x74] sm:$0x1]
      %v6967 = vld [vmem:[#allocation3 + $0x78] sm:$0xe]
      %v6968 = vld [vmem:[#allocation3 + $0x7c] sm:$0xf]
      %v6969 = vld [vmem:[#allocation3 + $0x80] sm:$0x1]
      %v6970 = vld [vmem:[#allocation3 + $0x84] sm:$0xe]
      %v6971 = vld [vmem:[#allocation3 + $0x88] sm:$0xf]
      %v6972 = vld [vmem:[#allocation3 + $0x8c] sm:$0x1]
      %v6973 = vld [vmem:[#allocation3 + $0x90] sm:$0xe]
      %v6974 = vld [vmem:[#allocation3 + $0x94] sm:$0xf]
      %v6975 = vld [vmem:[#allocation3 + $0x98] sm:$0x1]
      %v6976 = vld [vmem:[#allocation3 + $0x9c] sm:$0xe]
      %v6977 = vld [vmem:[#allocation3 + $0xa0] sm:$0xf]
      %v6978 = vld [vmem:[#allocation3 + $0xa4] sm:$0x1]
      %v6979 = vld [vmem:[#allocation3 + $0xa8] sm:$0xe]
      %v6980 = vld [vmem:[#allocation3 + $0xac] sm:$0xf]
      %v6981 = vld [vmem:[#allocation3 + $0xb0] sm:$0x1]
      %v6982 = vld [vmem:[#allocation3 + $0xb4] sm:$0xe]
      %v6983 = vld [vmem:[#allocation3 + $0xb8] sm:$0xf]
      %v6984 = vld [vmem:[#allocation3 + $0xbc] sm:$0x1]
      %v6985 = vld [vmem:[#allocation3 + $0xc0] sm:$0xe]
      %v6986 = vld [vmem:[#allocation3 + $0xc4] sm:$0xf]
      %v6987 = vld [vmem:[#allocation3 + $0xc8] sm:$0x1]
      %v6988 = vld [vmem:[#allocation3 + $0xcc] sm:$0xe]
      %v6989 = vld [vmem:[#allocation3 + $0xd0] sm:$0xf]
      %v6990 = vld [vmem:[#allocation3 + $0xd4] sm:$0x1]
      %v7045 = vrot.slane %v6937, 5
      %v7046 = vrot.slane %v7045, 4
      %v7047 = vrot.slane %v6938, 5
      %v7048 = vsel %vm2604, %v7046, %v7047
      %v7049 = vrot.slane %v7047, 4
      %v7050 = vrot.slane %v6939, 5
      %v7051 = vsel %vm2604, %v7049, %v7050
      %v7052 = vrot.slane %v6940, 5
      %v7053 = vrot.slane %v7052, 4
      %v7054 = vrot.slane %v6941, 5
      %v7055 = vsel %vm2604, %v7053, %v7054
      %v7056 = vrot.slane %v7054, 4
      %v7057 = vrot.slane %v6942, 5
      %v7058 = vsel %vm2604, %v7056, %v7057
      %v7059 = vrot.slane %v6943, 5
      %v7060 = vrot.slane %v7059, 4
      %v7061 = vrot.slane %v6944, 5
      %v7062 = vsel %vm2604, %v7060, %v7061
      %v7063 = vrot.slane %v7061, 4
      %v7064 = vrot.slane %v6945, 5
      %v7065 = vsel %vm2604, %v7063, %v7064
      %v7066 = vrot.slane %v6946, 5
      %v7067 = vrot.slane %v7066, 4
      %v7068 = vrot.slane %v6947, 5
      %v7069 = vsel %vm2604, %v7067, %v7068
      %v7070 = vrot.slane %v7068, 4
      %v7071 = vrot.slane %v6948, 5
      %v7072 = vsel %vm2604, %v7070, %v7071
      %v7073 = vrot.slane %v6949, 5
      %v7074 = vrot.slane %v7073, 4
      %v7075 = vrot.slane %v6950, 5
      %v7076 = vsel %vm2604, %v7074, %v7075
      %v7077 = vrot.slane %v7075, 4
      %v7078 = vrot.slane %v6951, 5
      %v7079 = vsel %vm2604, %v7077, %v7078
      %v7080 = vrot.slane %v6952, 5
      %v7081 = vrot.slane %v7080, 4
      %v7082 = vrot.slane %v6953, 5
      %v7083 = vsel %vm2604, %v7081, %v7082
      %v7084 = vrot.slane %v7082, 4
      %v7085 = vrot.slane %v6954, 5
      %v7086 = vsel %vm2604, %v7084, %v7085
      %v7087 = vrot.slane %v6955, 5
      %v7088 = vrot.slane %v7087, 4
      %v7089 = vrot.slane %v6956, 5
      %v7090 = vsel %vm2604, %v7088, %v7089
      %v7091 = vrot.slane %v7089, 4
      %v7092 = vrot.slane %v6957, 5
      %v7093 = vsel %vm2604, %v7091, %v7092
      %v7094 = vrot.slane %v6958, 5
      %v7095 = vrot.slane %v7094, 4
      %v7096 = vrot.slane %v6959, 5
      %v7097 = vsel %vm2604, %v7095, %v7096
      %v7098 = vrot.slane %v7096, 4
      %v7099 = vrot.slane %v6960, 5
      %v7100 = vsel %vm2604, %v7098, %v7099
      %v7101 = vrot.slane %v6961, 5
      %v7102 = vrot.slane %v7101, 4
      %v7103 = vrot.slane %v6962, 5
      %v7104 = vsel %vm2604, %v7102, %v7103
      %v7105 = vrot.slane %v7103, 4
      %v7106 = vrot.slane %v6963, 5
      %v7107 = vsel %vm2604, %v7105, %v7106
      %v7108 = vrot.slane %v6964, 5
      %v7109 = vrot.slane %v7108, 4
      %v7110 = vrot.slane %v6965, 5
      %v7111 = vsel %vm2604, %v7109, %v7110
      %v7112 = vrot.slane %v7110, 4
      %v7113 = vrot.slane %v6966, 5
      %v7114 = vsel %vm2604, %v7112, %v7113
      %v7115 = vrot.slane %v6967, 5
      %v7116 = vrot.slane %v7115, 4
      %v7117 = vrot.slane %v6968, 5
      %v7118 = vsel %vm2604, %v7116, %v7117
      %v7119 = vrot.slane %v7117, 4
      %v7120 = vrot.slane %v6969, 5
      %v7121 = vsel %vm2604, %v7119, %v7120
      %v7122 = vrot.slane %v6970, 5
      %v7123 = vrot.slane %v7122, 4
      %v7124 = vrot.slane %v6971, 5
      %v7125 = vsel %vm2604, %v7123, %v7124
      %v7126 = vrot.slane %v7124, 4
      %v7127 = vrot.slane %v6972, 5
      %v7128 = vsel %vm2604, %v7126, %v7127
      %v7129 = vrot.slane %v6973, 5
      %v7130 = vrot.slane %v7129, 4
      %v7131 = vrot.slane %v6974, 5
      %v7132 = vsel %vm2604, %v7130, %v7131
      %v7133 = vrot.slane %v7131, 4
      %v7134 = vrot.slane %v6975, 5
      %v7135 = vsel %vm2604, %v7133, %v7134
      %v7136 = vrot.slane %v6976, 5
      %v7137 = vrot.slane %v7136, 4
      %v7138 = vrot.slane %v6977, 5
      %v7139 = vsel %vm2604, %v7137, %v7138
      %v7140 = vrot.slane %v7138, 4
      %v7141 = vrot.slane %v6978, 5
      %v7142 = vsel %vm2604, %v7140, %v7141
      %v7143 = vrot.slane %v6979, 5
      %v7144 = vrot.slane %v7143, 4
      %v7145 = vrot.slane %v6980, 5
      %v7146 = vsel %vm2604, %v7144, %v7145
      %v7147 = vrot.slane %v7145, 4
      %v7148 = vrot.slane %v6981, 5
      %v7149 = vsel %vm2604, %v7147, %v7148
      %v7150 = vrot.slane %v6982, 5
      %v7151 = vrot.slane %v7150, 4
      %v7152 = vrot.slane %v6983, 5
      %v7153 = vsel %vm2604, %v7151, %v7152
      %v7154 = vrot.slane %v7152, 4
      %v7155 = vrot.slane %v6984, 5
      %v7156 = vsel %vm2604, %v7154, %v7155
      %v7157 = vrot.slane %v6985, 5
      %v7158 = vrot.slane %v7157, 4
      %v7159 = vrot.slane %v6986, 5
      %v7160 = vsel %vm2604, %v7158, %v7159
      %v7161 = vrot.slane %v7159, 4
      %v7162 = vrot.slane %v6987, 5
      %v7163 = vsel %vm2604, %v7161, %v7162
      %v7164 = vrot.slane %v6988, 5
      %v7165 = vrot.slane %v7164, 4
      %v7166 = vrot.slane %v6989, 5
      %v7167 = vsel %vm2604, %v7165, %v7166
      %v7168 = vrot.slane %v7166, 4
      %v7169 = vrot.slane %v6990, 5
      %v7170 = vsel %vm2604, %v7168, %v7169
      %s7171 = scalar_lea.vmem %s4, 128
      %v7172 = vld [vmem:[%s7171] sm:$0xf]
      %v7173 = vld [vmem:[%s7171 + $0x4] sm:$0xf]
      %v7174 = vld [vmem:[%s7171 + $0x8] sm:$0xf]
      %v7175 = vld [vmem:[%s7171 + $0xc] sm:$0xf]
      %v7176 = vld [vmem:[%s7171 + $0x10] sm:$0xf]
      %v7177 = vld [vmem:[%s7171 + $0x14] sm:$0xf]
      %v7178 = vld [vmem:[%s7171 + $0x18] sm:$0xf]
      %v7179 = vld [vmem:[%s7171 + $0x1c] sm:$0xf]
      %v7180 = vld [vmem:[%s7171 + $0x20] sm:$0xf]
      %v7181 = vld [vmem:[%s7171 + $0x24] sm:$0xf]
      %v7182 = vld [vmem:[%s7171 + $0x28] sm:$0xf]
      %v7183 = vld [vmem:[%s7171 + $0x2c] sm:$0xf]
      %v7184 = vld [vmem:[%s7171 + $0x30] sm:$0xf]
      %v7185 = vld [vmem:[%s7171 + $0x34] sm:$0xf]
      %v7186 = vld [vmem:[%s7171 + $0x38] sm:$0xf]
      %v7187 = vld [vmem:[%s7171 + $0x3c] sm:$0xf]
      %v7188 = vunpack.c.l.b16 %v7048
      %v7189 = vunpack.c.l.b16 %v7051
      %v7190 = vunpack.c.l.b16 %v7055
      %v7191 = vunpack.c.l.b16 %v7058
      %v7192 = vunpack.c.l.b16 %v7062
      %v7193 = vunpack.c.l.b16 %v7065
      %v7194 = vunpack.c.l.b16 %v7069
      %v7195 = vunpack.c.l.b16 %v7072
      %v7196 = vunpack.c.l.b16 %v7076
      %v7197 = vunpack.c.l.b16 %v7079
      %v7198 = vunpack.c.l.b16 %v7083
      %v7199 = vunpack.c.l.b16 %v7086
      %v7200 = vunpack.c.l.b16 %v7090
      %v7201 = vunpack.c.l.b16 %v7093
      %v7202 = vunpack.c.l.b16 %v7097
      %v7203 = vunpack.c.l.b16 %v7100
      %v7204 = vunpack.c.l.b16 %v7104
      %v7205 = vunpack.c.l.b16 %v7107
      %v7206 = vunpack.c.l.b16 %v7111
      %v7207 = vunpack.c.l.b16 %v7114
      %v7208 = vunpack.c.l.b16 %v7118
      %v7209 = vunpack.c.l.b16 %v7121
      %v7210 = vunpack.c.l.b16 %v7125
      %v7211 = vunpack.c.l.b16 %v7128
      %v7212 = vunpack.c.l.b16 %v7132
      %v7213 = vunpack.c.l.b16 %v7135
      %v7214 = vunpack.c.l.b16 %v7139
      %v7215 = vunpack.c.l.b16 %v7142
      %v7216 = vunpack.c.l.b16 %v7146
      %v7217 = vunpack.c.l.b16 %v7149
      %v7218 = vunpack.c.l.b16 %v7153
      %v7219 = vunpack.c.l.b16 %v7156
      %v7220 = vpack.c.b16 %v7189, %v7188
      %v7221 = vpack.c.b16 %v7191, %v7190
      %v7222 = vpack.c.b16 %v7193, %v7192
      %v7223 = vpack.c.b16 %v7195, %v7194
      %v7224 = vpack.c.b16 %v7197, %v7196
      %v7225 = vpack.c.b16 %v7199, %v7198
      %v7226 = vpack.c.b16 %v7201, %v7200
      %v7227 = vpack.c.b16 %v7203, %v7202
      %v7228 = vpack.c.b16 %v7205, %v7204
      %v7229 = vpack.c.b16 %v7207, %v7206
      %v7230 = vpack.c.b16 %v7209, %v7208
      %v7231 = vpack.c.b16 %v7211, %v7210
      %v7232 = vpack.c.b16 %v7213, %v7212
      %v7233 = vpack.c.b16 %v7215, %v7214
      %v7234 = vpack.c.b16 %v7217, %v7216
      %v7235 = vpack.c.b16 %v7219, %v7218
      %v7268 = vunpack.c.l.b16 %v7172
      %v7269 = vunpack.c.l.b16 %v7173
      %v7270 = vunpack.c.l.b16 %v7174
      %v7271 = vunpack.c.l.b16 %v7175
      %v7272 = vunpack.c.l.b16 %v7176
      %v7273 = vunpack.c.l.b16 %v7177
      %v7274 = vunpack.c.l.b16 %v7178
      %v7275 = vunpack.c.l.b16 %v7179
      %v7276 = vunpack.c.l.b16 %v7180
      %v7277 = vunpack.c.l.b16 %v7181
      %v7278 = vunpack.c.l.b16 %v7182
      %v7279 = vunpack.c.l.b16 %v7183
      %v7280 = vunpack.c.l.b16 %v7184
      %v7281 = vunpack.c.l.b16 %v7185
      %v7282 = vunpack.c.l.b16 %v7186
      %v7283 = vunpack.c.l.b16 %v7187
      %v7284 = vpack.c.b16 %v7269, %v7268
      %v7285 = vpack.c.b16 %v7271, %v7270
      %v7286 = vpack.c.b16 %v7273, %v7272
      %v7287 = vpack.c.b16 %v7275, %v7274
      %v7288 = vpack.c.b16 %v7277, %v7276
      %v7289 = vpack.c.b16 %v7279, %v7278
      %v7290 = vpack.c.b16 %v7281, %v7280
      %v7291 = vpack.c.b16 %v7283, %v7282
      %7300 = vmatprep.subr.bf16.mxu0 0
      %7301 = vmatpush1.bf16.msra.mxu0 %v7284
      %7302 = vmatprep.subr.bf16.mxu0 0
      %7303 = vmatpush1.bf16.msra.mxu0 %v7285
      %7304 = vmatprep.subr.bf16.mxu0 0
      %7305 = vmatpush1.bf16.msra.mxu0 %v7286
      %7306 = vmatprep.subr.bf16.mxu0 0
      %7307 = vmatpush1.bf16.msra.mxu0 %v7287
      %7308 = vmatprep.subr.bf16.mxu0 0
      %7309 = vmatpush1.bf16.msra.mxu0 %v7288
      %7310 = vmatprep.subr.bf16.mxu0 0
      %7311 = vmatpush1.bf16.msra.mxu0 %v7289
      %7312 = vmatprep.subr.bf16.mxu0 0
      %7313 = vmatpush1.bf16.msra.mxu0 %v7290
      %7314 = vmatprep.subr.bf16.mxu0 0
      %7315 = vmatpush1.bf16.msra.mxu0 %v7291
      %7316 = vmatprep.subr.bf16.mxu0 0
      %7317 = vmatpush1.bf16.msra.mxu0 0
      %7318 = vmatprep.subr.bf16.mxu0 0
      %7319 = vmatpush1.bf16.msra.mxu0 0
      %7320 = vmatprep.subr.bf16.mxu0 0
      %7321 = vmatpush1.bf16.msra.mxu0 0
      %7322 = vmatprep.subr.bf16.mxu0 0
      %7323 = vmatpush1.bf16.msra.mxu0 0
      %7324 = vmatprep.subr.bf16.mxu0 0
      %7325 = vmatpush1.bf16.msra.mxu0 0
      %7326 = vmatprep.subr.bf16.mxu0 0
      %7327 = vmatpush1.bf16.msra.mxu0 0
      %7328 = vmatprep.subr.bf16.mxu0 0
      %7329 = vmatpush1.bf16.msra.mxu0 0
      %7330 = vmatprep.subr.bf16.mxu0 0
      %7331 = vmatpush1.bf16.msra.mxu0 0
      %7332 = vmatprep.mubr.bf16.mxu0 0
      %7333 = vmatmul.mubr.bf16.gmra.mrb[0].mxu0 %v7220
      %v7334 = vpop.f32.mrb[0].mxu0
      %v7335 = vadd.f32 0.0, %v7334
      %v7336 = vpop.f32.mrb[0].mxu0
      %v7337 = vpop.f32.mrb[0].mxu0
      %v7338 = vadd.f32 0.0, %v7337
      %v7339 = vpop.f32.mrb[0].mxu0
      %7340 = vmatprep.mubr.bf16.mxu0 0
      %7341 = vmatmul.mubr.bf16.gmra.mrb[0].mxu0 %v7221
      %v7342 = vpop.f32.mrb[0].mxu0
      %v7343 = vadd.f32 0.0, %v7342
      %v7344 = vpop.f32.mrb[0].mxu0
      %v7345 = vpop.f32.mrb[0].mxu0
      %v7346 = vadd.f32 0.0, %v7345
      %v7347 = vpop.f32.mrb[0].mxu0
      %7348 = vmatprep.mubr.bf16.mxu0 0
      %7349 = vmatmul.mubr.bf16.gmra.mrb[0].mxu0 %v7222
      %v7350 = vpop.f32.mrb[0].mxu0
      %v7351 = vadd.f32 0.0, %v7350
      %v7352 = vpop.f32.mrb[0].mxu0
      %v7353 = vpop.f32.mrb[0].mxu0
      %v7354 = vadd.f32 0.0, %v7353
      %v7355 = vpop.f32.mrb[0].mxu0
      %7356 = vmatprep.mubr.bf16.mxu0 0
      %7357 = vmatmul.mubr.bf16.gmra.mrb[0].mxu0 %v7223
      %v7358 = vpop.f32.mrb[0].mxu0
      %v7359 = vadd.f32 0.0, %v7358
      %v7360 = vpop.f32.mrb[0].mxu0
      %v7361 = vpop.f32.mrb[0].mxu0
      %v7362 = vadd.f32 0.0, %v7361
      %v7363 = vpop.f32.mrb[0].mxu0
      %7364 = vmatprep.mubr.bf16.mxu0 0
      %7365 = vmatmul.mubr.bf16.gmra.mrb[0].mxu0 %v7224
      %v7366 = vpop.f32.mrb[0].mxu0
      %v7367 = vadd.f32 0.0, %v7366
      %v7368 = vpop.f32.mrb[0].mxu0
      %v7369 = vpop.f32.mrb[0].mxu0
      %v7370 = vadd.f32 0.0, %v7369
      %v7371 = vpop.f32.mrb[0].mxu0
      %7372 = vmatprep.mubr.bf16.mxu0 0
      %7373 = vmatmul.mubr.bf16.gmra.mrb[0].mxu0 %v7225
      %v7374 = vpop.f32.mrb[0].mxu0
      %v7375 = vadd.f32 0.0, %v7374
      %v7376 = vpop.f32.mrb[0].mxu0
      %v7377 = vpop.f32.mrb[0].mxu0
      %v7378 = vadd.f32 0.0, %v7377
      %v7379 = vpop.f32.mrb[0].mxu0
      %7380 = vmatprep.mubr.bf16.mxu0 0
      %7381 = vmatmul.mubr.bf16.gmra.mrb[0].mxu0 %v7226
      %v7382 = vpop.f32.mrb[0].mxu0
      %v7383 = vadd.f32 0.0, %v7382
      %v7384 = vpop.f32.mrb[0].mxu0
      %v7385 = vpop.f32.mrb[0].mxu0
      %v7386 = vadd.f32 0.0, %v7385
      %v7387 = vpop.f32.mrb[0].mxu0
      %7388 = vmatprep.mubr.bf16.mxu0 0
      %7389 = vmatmul.mubr.bf16.gmra.mrb[0].mxu0 %v7227
      %v7390 = vpop.f32.mrb[0].mxu0
      %v7391 = vadd.f32 0.0, %v7390
      %v7392 = vpop.f32.mrb[0].mxu0
      %v7393 = vpop.f32.mrb[0].mxu0
      %v7394 = vadd.f32 0.0, %v7393
      %v7395 = vpop.f32.mrb[0].mxu0
      %7396 = vmatprep.mubr.bf16.mxu0 0
      %7397 = vmatmul.mubr.bf16.gmra.mrb[0].mxu0 %v7228
      %v7398 = vpop.f32.mrb[0].mxu0
      %v7399 = vadd.f32 0.0, %v7398
      %v7400 = vpop.f32.mrb[0].mxu0
      %v7401 = vpop.f32.mrb[0].mxu0
      %v7402 = vadd.f32 0.0, %v7401
      %v7403 = vpop.f32.mrb[0].mxu0
      %7404 = vmatprep.mubr.bf16.mxu0 0
      %7405 = vmatmul.mubr.bf16.gmra.mrb[0].mxu0 %v7229
      %v7406 = vpop.f32.mrb[0].mxu0
      %v7407 = vadd.f32 0.0, %v7406
      %v7408 = vpop.f32.mrb[0].mxu0
      %v7409 = vpop.f32.mrb[0].mxu0
      %v7410 = vadd.f32 0.0, %v7409
      %v7411 = vpop.f32.mrb[0].mxu0
      %7412 = vmatprep.mubr.bf16.mxu0 0
      %7413 = vmatmul.mubr.bf16.gmra.mrb[0].mxu0 %v7230
      %v7414 = vpop.f32.mrb[0].mxu0
      %v7415 = vadd.f32 0.0, %v7414
      %v7416 = vpop.f32.mrb[0].mxu0
      %v7417 = vpop.f32.mrb[0].mxu0
      %v7418 = vadd.f32 0.0, %v7417
      %v7419 = vpop.f32.mrb[0].mxu0
      %7420 = vmatprep.mubr.bf16.mxu0 0
      %7421 = vmatmul.mubr.bf16.gmra.mrb[0].mxu0 %v7231
      %v7422 = vpop.f32.mrb[0].mxu0
      %v7423 = vadd.f32 0.0, %v7422
      %v7424 = vpop.f32.mrb[0].mxu0
      %v7425 = vpop.f32.mrb[0].mxu0
      %v7426 = vadd.f32 0.0, %v7425
      %v7427 = vpop.f32.mrb[0].mxu0
      %7428 = vmatprep.mubr.bf16.mxu0 0
      %7429 = vmatmul.mubr.bf16.gmra.mrb[0].mxu0 %v7232
      %v7430 = vpop.f32.mrb[0].mxu0
      %v7431 = vadd.f32 0.0, %v7430
      %v7432 = vpop.f32.mrb[0].mxu0
      %v7433 = vpop.f32.mrb[0].mxu0
      %v7434 = vadd.f32 0.0, %v7433
      %v7435 = vpop.f32.mrb[0].mxu0
      %7436 = vmatprep.mubr.bf16.mxu0 0
      %7437 = vmatmul.mubr.bf16.gmra.mrb[0].mxu0 %v7233
      %v7438 = vpop.f32.mrb[0].mxu0
      %v7439 = vadd.f32 0.0, %v7438
      %v7440 = vpop.f32.mrb[0].mxu0
      %v7441 = vpop.f32.mrb[0].mxu0
      %v7442 = vadd.f32 0.0, %v7441
      %v7443 = vpop.f32.mrb[0].mxu0
      %7444 = vmatprep.mubr.bf16.mxu0 0
      %7445 = vmatmul.mubr.bf16.gmra.mrb[0].mxu0 %v7234
      %v7446 = vpop.f32.mrb[0].mxu0
      %v7447 = vadd.f32 0.0, %v7446
      %v7448 = vpop.f32.mrb[0].mxu0
      %v7449 = vpop.f32.mrb[0].mxu0
      %v7450 = vadd.f32 0.0, %v7449
      %v7451 = vpop.f32.mrb[0].mxu0
      %7452 = vmatprep.mubr.bf16.mxu0 0
      %7453 = vmatmul.mubr.bf16.gmra.mrb[0].mxu0 %v7235
      %v7454 = vpop.f32.mrb[0].mxu0
      %v7455 = vadd.f32 0.0, %v7454
      %v7456 = vpop.f32.mrb[0].mxu0
      %v7457 = vpop.f32.mrb[0].mxu0
      %v7458 = vadd.f32 0.0, %v7457
      %v7459 = vpop.f32.mrb[0].mxu0
      %7460 = vdwg.mxu0
      %v7461 = vld [vmem:[#allocation2] sm:$0xff]
      %v7462 = vld [vmem:[#allocation2 + $0x8] sm:$0xff]
      %v7463 = vld [vmem:[#allocation2 + $0x10] sm:$0xff]
      %v7464 = vld [vmem:[#allocation2 + $0x18] sm:$0xff]
      %v7465 = vld [vmem:[#allocation2 + $0x20] sm:$0xff]
      %v7466 = vld [vmem:[#allocation2 + $0x28] sm:$0xff]
      %v7467 = vld [vmem:[#allocation2 + $0x30] sm:$0xff]
      %v7468 = vld [vmem:[#allocation2 + $0x38] sm:$0xff]
      %v7469 = vld [vmem:[#allocation2 + $0x40] sm:$0xff]
      %v7470 = vld [vmem:[#allocation2 + $0x48] sm:$0xff]
      %v7471 = vld [vmem:[#allocation2 + $0x50] sm:$0xff]
      %v7472 = vld [vmem:[#allocation2 + $0x58] sm:$0xff]
      %v7473 = vld [vmem:[#allocation2 + $0x60] sm:$0xff]
      %v7474 = vld [vmem:[#allocation2 + $0x68] sm:$0xff]
      %v7475 = vld [vmem:[#allocation2 + $0x70] sm:$0xff]
      %v7476 = vld [vmem:[#allocation2 + $0x78] sm:$0xff]
      %v7477 = vld [vmem:[#allocation2 + $0x80] sm:$0xff]
      %v7478 = vld [vmem:[#allocation2 + $0x88] sm:$0xff]
      %v7479 = vld [vmem:[#allocation2 + $0x90] sm:$0xff]
      %v7480 = vld [vmem:[#allocation2 + $0x98] sm:$0xff]
      %v7481 = vld [vmem:[#allocation2 + $0xa0] sm:$0xff]
      %v7482 = vld [vmem:[#allocation2 + $0xa8] sm:$0xff]
      %v7483 = vld [vmem:[#allocation2 + $0xb0] sm:$0xff]
      %v7484 = vld [vmem:[#allocation2 + $0xb8] sm:$0xff]
      %v7485 = vld [vmem:[#allocation2 + $0xc0] sm:$0xff]
      %v7486 = vld [vmem:[#allocation2 + $0xc8] sm:$0xff]
      %v7487 = vld [vmem:[#allocation2 + $0xd0] sm:$0xff]
      %v7488 = vld [vmem:[#allocation2 + $0xd8] sm:$0xff]
      %v7489 = vld [vmem:[#allocation2 + $0xe0] sm:$0xff]
      %v7490 = vld [vmem:[#allocation2 + $0xe8] sm:$0xff]
      %v7491 = vld [vmem:[#allocation2 + $0xf0] sm:$0xff]
      %v7492 = vld [vmem:[#allocation2 + $0xf8] sm:$0xff]
      %v7493 = vadd.f32 %v7461, %v7335
      %v7494 = vadd.f32 %v7462, %v7338
      %v7495 = vadd.f32 %v7463, %v7343
      %v7496 = vadd.f32 %v7464, %v7346
      %v7497 = vadd.f32 %v7465, %v7351
      %v7498 = vadd.f32 %v7466, %v7354
      %v7499 = vadd.f32 %v7467, %v7359
      %v7500 = vadd.f32 %v7468, %v7362
      %v7501 = vadd.f32 %v7469, %v7367
      %v7502 = vadd.f32 %v7470, %v7370
      %v7503 = vadd.f32 %v7471, %v7375
      %v7504 = vadd.f32 %v7472, %v7378
      %v7505 = vadd.f32 %v7473, %v7383
      %v7506 = vadd.f32 %v7474, %v7386
      %v7507 = vadd.f32 %v7475, %v7391
      %v7508 = vadd.f32 %v7476, %v7394
      %v7509 = vadd.f32 %v7477, %v7399
      %v7510 = vadd.f32 %v7478, %v7402
      %v7511 = vadd.f32 %v7479, %v7407
      %v7512 = vadd.f32 %v7480, %v7410
      %v7513 = vadd.f32 %v7481, %v7415
      %v7514 = vadd.f32 %v7482, %v7418
      %v7515 = vadd.f32 %v7483, %v7423
      %v7516 = vadd.f32 %v7484, %v7426
      %v7517 = vadd.f32 %v7485, %v7431
      %v7518 = vadd.f32 %v7486, %v7434
      %v7519 = vadd.f32 %v7487, %v7439
      %v7520 = vadd.f32 %v7488, %v7442
      %v7521 = vadd.f32 %v7489, %v7447
      %v7522 = vadd.f32 %v7490, %v7450
      %v7523 = vadd.f32 %v7491, %v7455
      %v7524 = vadd.f32 %v7492, %v7458
      %7525 = vst [vmem:[#allocation2] sm:$0xff] %v7493
      %7526 = vst [vmem:[#allocation2 + $0x8] sm:$0xff] %v7494
      %7527 = vst [vmem:[#allocation2 + $0x10] sm:$0xff] %v7495
      %7528 = vst [vmem:[#allocation2 + $0x18] sm:$0xff] %v7496
      %7529 = vst [vmem:[#allocation2 + $0x20] sm:$0xff] %v7497
      %7530 = vst [vmem:[#allocation2 + $0x28] sm:$0xff] %v7498
      %7531 = vst [vmem:[#allocation2 + $0x30] sm:$0xff] %v7499
      %7532 = vst [vmem:[#allocation2 + $0x38] sm:$0xff] %v7500
      %7533 = vst [vmem:[#allocation2 + $0x40] sm:$0xff] %v7501
      %7534 = vst [vmem:[#allocation2 + $0x48] sm:$0xff] %v7502
      %7535 = vst [vmem:[#allocation2 + $0x50] sm:$0xff] %v7503
      %7536 = vst [vmem:[#allocation2 + $0x58] sm:$0xff] %v7504
      %7537 = vst [vmem:[#allocation2 + $0x60] sm:$0xff] %v7505
      %7538 = vst [vmem:[#allocation2 + $0x68] sm:$0xff] %v7506
      %7539 = vst [vmem:[#allocation2 + $0x70] sm:$0xff] %v7507
      %7540 = vst [vmem:[#allocation2 + $0x78] sm:$0xff] %v7508
      %7541 = vst [vmem:[#allocation2 + $0x80] sm:$0xff] %v7509
      %7542 = vst [vmem:[#allocation2 + $0x88] sm:$0xff] %v7510
      %7543 = vst [vmem:[#allocation2 + $0x90] sm:$0xff] %v7511
      %7544 = vst [vmem:[#allocation2 + $0x98] sm:$0xff] %v7512
      %7545 = vst [vmem:[#allocation2 + $0xa0] sm:$0xff] %v7513
      %7546 = vst [vmem:[#allocation2 + $0xa8] sm:$0xff] %v7514
      %7547 = vst [vmem:[#allocation2 + $0xb0] sm:$0xff] %v7515
      %7548 = vst [vmem:[#allocation2 + $0xb8] sm:$0xff] %v7516
      %7549 = vst [vmem:[#allocation2 + $0xc0] sm:$0xff] %v7517
      %7550 = vst [vmem:[#allocation2 + $0xc8] sm:$0xff] %v7518
      %7551 = vst [vmem:[#allocation2 + $0xd0] sm:$0xff] %v7519
      %7552 = vst [vmem:[#allocation2 + $0xd8] sm:$0xff] %v7520
      %7553 = vst [vmem:[#allocation2 + $0xe0] sm:$0xff] %v7521
      %7554 = vst [vmem:[#allocation2 + $0xe8] sm:$0xff] %v7522
      %7555 = vst [vmem:[#allocation2 + $0xf0] sm:$0xff] %v7523
      %7556 = vst [vmem:[#allocation2 + $0xf8] sm:$0xff] %v7524
      %s7557 = scalar_lea.vmem %s4, 320
      %v7558 = vld [vmem:[%s7557] sm:$0xf]
      %v7559 = vld [vmem:[%s7557 + $0x4] sm:$0xf]
      %v7560 = vld [vmem:[%s7557 + $0x8] sm:$0xf]
      %v7561 = vld [vmem:[%s7557 + $0xc] sm:$0xf]
      %v7562 = vld [vmem:[%s7557 + $0x10] sm:$0xf]
      %v7563 = vld [vmem:[%s7557 + $0x14] sm:$0xf]
      %v7564 = vld [vmem:[%s7557 + $0x18] sm:$0xf]
      %v7565 = vld [vmem:[%s7557 + $0x1c] sm:$0xf]
      %v7566 = vld [vmem:[%s7557 + $0x20] sm:$0xf]
      %v7567 = vld [vmem:[%s7557 + $0x24] sm:$0xf]
      %v7568 = vld [vmem:[%s7557 + $0x28] sm:$0xf]
      %v7569 = vld [vmem:[%s7557 + $0x2c] sm:$0xf]
      %v7570 = vld [vmem:[%s7557 + $0x30] sm:$0xf]
      %v7571 = vld [vmem:[%s7557 + $0x34] sm:$0xf]
      %v7572 = vld [vmem:[%s7557 + $0x38] sm:$0xf]
      %v7573 = vld [vmem:[%s7557 + $0x3c] sm:$0xf]
      %v7574 = vunpack.c.l.b16 %v7160
      %v7575 = vunpack.c.l.b16 %v7163
      %v7576 = vpack.c.b16 %v7575, %v7574
      %v7594 = vunpack.c.l.b16 %v7558
      %v7595 = vunpack.c.l.b16 %v7559
      %v7596 = vunpack.c.l.b16 %v7560
      %v7597 = vunpack.c.l.b16 %v7561
      %v7598 = vunpack.c.l.b16 %v7562
      %v7599 = vunpack.c.l.b16 %v7563
      %v7600 = vunpack.c.l.b16 %v7564
      %v7601 = vunpack.c.l.b16 %v7565
      %v7602 = vunpack.c.l.b16 %v7566
      %v7603 = vunpack.c.l.b16 %v7567
      %v7604 = vunpack.c.l.b16 %v7568
      %v7605 = vunpack.c.l.b16 %v7569
      %v7606 = vunpack.c.l.b16 %v7570
      %v7607 = vunpack.c.l.b16 %v7571
      %v7608 = vunpack.c.l.b16 %v7572
      %v7609 = vunpack.c.l.b16 %v7573
      %v7610 = vpack.c.b16 %v7595, %v7594
      %v7611 = vpack.c.b16 %v7597, %v7596
      %v7612 = vpack.c.b16 %v7599, %v7598
      %v7613 = vpack.c.b16 %v7601, %v7600
      %v7614 = vpack.c.b16 %v7603, %v7602
      %v7615 = vpack.c.b16 %v7605, %v7604
      %v7616 = vpack.c.b16 %v7607, %v7606
      %v7617 = vpack.c.b16 %v7609, %v7608
      %7626 = vmatprep.subr.bf16.mxu0 0
      %7627 = vmatpush1.bf16.msra.mxu0 %v7610
      %7628 = vmatprep.subr.bf16.mxu0 0
      %7629 = vmatpush1.bf16.msra.mxu0 %v7611
      %7630 = vmatprep.subr.bf16.mxu0 0
      %7631 = vmatpush1.bf16.msra.mxu0 %v7612
      %7632 = vmatprep.subr.bf16.mxu0 0
      %7633 = vmatpush1.bf16.msra.mxu0 %v7613
      %7634 = vmatprep.subr.bf16.mxu0 0
      %7635 = vmatpush1.bf16.msra.mxu0 %v7614
      %7636 = vmatprep.subr.bf16.mxu0 0
      %7637 = vmatpush1.bf16.msra.mxu0 %v7615
      %7638 = vmatprep.subr.bf16.mxu0 0
      %7639 = vmatpush1.bf16.msra.mxu0 %v7616
      %7640 = vmatprep.subr.bf16.mxu0 0
      %7641 = vmatpush1.bf16.msra.mxu0 %v7617
      %7642 = vmatprep.subr.bf16.mxu0 0
      %7643 = vmatpush1.bf16.msra.mxu0 0
      %7644 = vmatprep.subr.bf16.mxu0 0
      %7645 = vmatpush1.bf16.msra.mxu0 0
      %7646 = vmatprep.subr.bf16.mxu0 0
      %7647 = vmatpush1.bf16.msra.mxu0 0
      %7648 = vmatprep.subr.bf16.mxu0 0
      %7649 = vmatpush1.bf16.msra.mxu0 0
      %7650 = vmatprep.subr.bf16.mxu0 0
      %7651 = vmatpush1.bf16.msra.mxu0 0
      %7652 = vmatprep.subr.bf16.mxu0 0
      %7653 = vmatpush1.bf16.msra.mxu0 0
      %7654 = vmatprep.subr.bf16.mxu0 0
      %7655 = vmatpush1.bf16.msra.mxu0 0
      %7656 = vmatprep.subr.bf16.mxu0 0
      %7657 = vmatpush1.bf16.msra.mxu0 0
      %7658 = vmatprep.mubr.bf16.mxu0 0
      %7659 = vmatmul.mubr.bf16.gmra.mrb[0].mxu0 %v7221
      %v7660 = vpop.f32.mrb[0].mxu0
      %v7661 = vadd.f32 0.0, %v7660
      %v7662 = vpop.f32.mrb[0].mxu0
      %v7663 = vpop.f32.mrb[0].mxu0
      %v7664 = vadd.f32 0.0, %v7663
      %v7665 = vpop.f32.mrb[0].mxu0
      %7666 = vmatprep.mubr.bf16.mxu0 0
      %7667 = vmatmul.mubr.bf16.gmra.mrb[0].mxu0 %v7222
      %v7668 = vpop.f32.mrb[0].mxu0
      %v7669 = vadd.f32 0.0, %v7668
      %v7670 = vpop.f32.mrb[0].mxu0
      %v7671 = vpop.f32.mrb[0].mxu0
      %v7672 = vadd.f32 0.0, %v7671
      %v7673 = vpop.f32.mrb[0].mxu0
      %7674 = vmatprep.mubr.bf16.mxu0 0
      %7675 = vmatmul.mubr.bf16.gmra.mrb[0].mxu0 %v7223
      %v7676 = vpop.f32.mrb[0].mxu0
      %v7677 = vadd.f32 0.0, %v7676
      %v7678 = vpop.f32.mrb[0].mxu0
      %v7679 = vpop.f32.mrb[0].mxu0
      %v7680 = vadd.f32 0.0, %v7679
      %v7681 = vpop.f32.mrb[0].mxu0
      %7682 = vmatprep.mubr.bf16.mxu0 0
      %7683 = vmatmul.mubr.bf16.gmra.mrb[0].mxu0 %v7224
      %v7684 = vpop.f32.mrb[0].mxu0
      %v7685 = vadd.f32 0.0, %v7684
      %v7686 = vpop.f32.mrb[0].mxu0
      %v7687 = vpop.f32.mrb[0].mxu0
      %v7688 = vadd.f32 0.0, %v7687
      %v7689 = vpop.f32.mrb[0].mxu0
      %7690 = vmatprep.mubr.bf16.mxu0 0
      %7691 = vmatmul.mubr.bf16.gmra.mrb[0].mxu0 %v7225
      %v7692 = vpop.f32.mrb[0].mxu0
      %v7693 = vadd.f32 0.0, %v7692
      %v7694 = vpop.f32.mrb[0].mxu0
      %v7695 = vpop.f32.mrb[0].mxu0
      %v7696 = vadd.f32 0.0, %v7695
      %v7697 = vpop.f32.mrb[0].mxu0
      %7698 = vmatprep.mubr.bf16.mxu0 0
      %7699 = vmatmul.mubr.bf16.gmra.mrb[0].mxu0 %v7226
      %v7700 = vpop.f32.mrb[0].mxu0
      %v7701 = vadd.f32 0.0, %v7700
      %v7702 = vpop.f32.mrb[0].mxu0
      %v7703 = vpop.f32.mrb[0].mxu0
      %v7704 = vadd.f32 0.0, %v7703
      %v7705 = vpop.f32.mrb[0].mxu0
      %7706 = vmatprep.mubr.bf16.mxu0 0
      %7707 = vmatmul.mubr.bf16.gmra.mrb[0].mxu0 %v7227
      %v7708 = vpop.f32.mrb[0].mxu0
      %v7709 = vadd.f32 0.0, %v7708
      %v7710 = vpop.f32.mrb[0].mxu0
      %v7711 = vpop.f32.mrb[0].mxu0
      %v7712 = vadd.f32 0.0, %v7711
      %v7713 = vpop.f32.mrb[0].mxu0
      %7714 = vmatprep.mubr.bf16.mxu0 0
      %7715 = vmatmul.mubr.bf16.gmra.mrb[0].mxu0 %v7228
      %v7716 = vpop.f32.mrb[0].mxu0
      %v7717 = vadd.f32 0.0, %v7716
      %v7718 = vpop.f32.mrb[0].mxu0
      %v7719 = vpop.f32.mrb[0].mxu0
      %v7720 = vadd.f32 0.0, %v7719
      %v7721 = vpop.f32.mrb[0].mxu0
      %7722 = vmatprep.mubr.bf16.mxu0 0
      %7723 = vmatmul.mubr.bf16.gmra.mrb[0].mxu0 %v7229
      %v7724 = vpop.f32.mrb[0].mxu0
      %v7725 = vadd.f32 0.0, %v7724
      %v7726 = vpop.f32.mrb[0].mxu0
      %v7727 = vpop.f32.mrb[0].mxu0
      %v7728 = vadd.f32 0.0, %v7727
      %v7729 = vpop.f32.mrb[0].mxu0
      %7730 = vmatprep.mubr.bf16.mxu0 0
      %7731 = vmatmul.mubr.bf16.gmra.mrb[0].mxu0 %v7230
      %v7732 = vpop.f32.mrb[0].mxu0
      %v7733 = vadd.f32 0.0, %v7732
      %v7734 = vpop.f32.mrb[0].mxu0
      %v7735 = vpop.f32.mrb[0].mxu0
      %v7736 = vadd.f32 0.0, %v7735
      %v7737 = vpop.f32.mrb[0].mxu0
      %7738 = vmatprep.mubr.bf16.mxu0 0
      %7739 = vmatmul.mubr.bf16.gmra.mrb[0].mxu0 %v7231
      %v7740 = vpop.f32.mrb[0].mxu0
      %v7741 = vadd.f32 0.0, %v7740
      %v7742 = vpop.f32.mrb[0].mxu0
      %v7743 = vpop.f32.mrb[0].mxu0
      %v7744 = vadd.f32 0.0, %v7743
      %v7745 = vpop.f32.mrb[0].mxu0
      %7746 = vmatprep.mubr.bf16.mxu0 0
      %7747 = vmatmul.mubr.bf16.gmra.mrb[0].mxu0 %v7232
      %v7748 = vpop.f32.mrb[0].mxu0
      %v7749 = vadd.f32 0.0, %v7748
      %v7750 = vpop.f32.mrb[0].mxu0
      %v7751 = vpop.f32.mrb[0].mxu0
      %v7752 = vadd.f32 0.0, %v7751
      %v7753 = vpop.f32.mrb[0].mxu0
      %7754 = vmatprep.mubr.bf16.mxu0 0
      %7755 = vmatmul.mubr.bf16.gmra.mrb[0].mxu0 %v7233
      %v7756 = vpop.f32.mrb[0].mxu0
      %v7757 = vadd.f32 0.0, %v7756
      %v7758 = vpop.f32.mrb[0].mxu0
      %v7759 = vpop.f32.mrb[0].mxu0
      %v7760 = vadd.f32 0.0, %v7759
      %v7761 = vpop.f32.mrb[0].mxu0
      %7762 = vmatprep.mubr.bf16.mxu0 0
      %7763 = vmatmul.mubr.bf16.gmra.mrb[0].mxu0 %v7234
      %v7764 = vpop.f32.mrb[0].mxu0
      %v7765 = vadd.f32 0.0, %v7764
      %v7766 = vpop.f32.mrb[0].mxu0
      %v7767 = vpop.f32.mrb[0].mxu0
      %v7768 = vadd.f32 0.0, %v7767
      %v7769 = vpop.f32.mrb[0].mxu0
      %7770 = vmatprep.mubr.bf16.mxu0 0
      %7771 = vmatmul.mubr.bf16.gmra.mrb[0].mxu0 %v7235
      %v7772 = vpop.f32.mrb[0].mxu0
      %v7773 = vadd.f32 0.0, %v7772
      %v7774 = vpop.f32.mrb[0].mxu0
      %v7775 = vpop.f32.mrb[0].mxu0
      %v7776 = vadd.f32 0.0, %v7775
      %v7777 = vpop.f32.mrb[0].mxu0
      %7778 = vmatprep.mubr.bf16.mxu0 0
      %7779 = vmatmul.mubr.bf16.gmra.mrb[0].mxu0 %v7576
      %v7780 = vpop.f32.mrb[0].mxu0
      %v7781 = vadd.f32 0.0, %v7780
      %v7782 = vpop.f32.mrb[0].mxu0
      %v7783 = vpop.f32.mrb[0].mxu0
      %v7784 = vadd.f32 0.0, %v7783
      %v7785 = vpop.f32.mrb[0].mxu0
      %7786 = vdwg.mxu0
      %v7787 = vld [vmem:[#allocation2] sm:$0xff]
      %v7788 = vld [vmem:[#allocation2 + $0x8] sm:$0xff]
      %v7789 = vld [vmem:[#allocation2 + $0x10] sm:$0xff]
      %v7790 = vld [vmem:[#allocation2 + $0x18] sm:$0xff]
      %v7791 = vld [vmem:[#allocation2 + $0x20] sm:$0xff]
      %v7792 = vld [vmem:[#allocation2 + $0x28] sm:$0xff]
      %v7793 = vld [vmem:[#allocation2 + $0x30] sm:$0xff]
      %v7794 = vld [vmem:[#allocation2 + $0x38] sm:$0xff]
      %v7795 = vld [vmem:[#allocation2 + $0x40] sm:$0xff]
      %v7796 = vld [vmem:[#allocation2 + $0x48] sm:$0xff]
      %v7797 = vld [vmem:[#allocation2 + $0x50] sm:$0xff]
      %v7798 = vld [vmem:[#allocation2 + $0x58] sm:$0xff]
      %v7799 = vld [vmem:[#allocation2 + $0x60] sm:$0xff]
      %v7800 = vld [vmem:[#allocation2 + $0x68] sm:$0xff]
      %v7801 = vld [vmem:[#allocation2 + $0x70] sm:$0xff]
      %v7802 = vld [vmem:[#allocation2 + $0x78] sm:$0xff]
      %v7803 = vld [vmem:[#allocation2 + $0x80] sm:$0xff]
      %v7804 = vld [vmem:[#allocation2 + $0x88] sm:$0xff]
      %v7805 = vld [vmem:[#allocation2 + $0x90] sm:$0xff]
      %v7806 = vld [vmem:[#allocation2 + $0x98] sm:$0xff]
      %v7807 = vld [vmem:[#allocation2 + $0xa0] sm:$0xff]
      %v7808 = vld [vmem:[#allocation2 + $0xa8] sm:$0xff]
      %v7809 = vld [vmem:[#allocation2 + $0xb0] sm:$0xff]
      %v7810 = vld [vmem:[#allocation2 + $0xb8] sm:$0xff]
      %v7811 = vld [vmem:[#allocation2 + $0xc0] sm:$0xff]
      %v7812 = vld [vmem:[#allocation2 + $0xc8] sm:$0xff]
      %v7813 = vld [vmem:[#allocation2 + $0xd0] sm:$0xff]
      %v7814 = vld [vmem:[#allocation2 + $0xd8] sm:$0xff]
      %v7815 = vld [vmem:[#allocation2 + $0xe0] sm:$0xff]
      %v7816 = vld [vmem:[#allocation2 + $0xe8] sm:$0xff]
      %v7817 = vld [vmem:[#allocation2 + $0xf0] sm:$0xff]
      %v7818 = vld [vmem:[#allocation2 + $0xf8] sm:$0xff]
      %v7819 = vadd.f32 %v7787, %v7661
      %v7820 = vadd.f32 %v7788, %v7664
      %v7821 = vadd.f32 %v7789, %v7669
      %v7822 = vadd.f32 %v7790, %v7672
      %v7823 = vadd.f32 %v7791, %v7677
      %v7824 = vadd.f32 %v7792, %v7680
      %v7825 = vadd.f32 %v7793, %v7685
      %v7826 = vadd.f32 %v7794, %v7688
      %v7827 = vadd.f32 %v7795, %v7693
      %v7828 = vadd.f32 %v7796, %v7696
      %v7829 = vadd.f32 %v7797, %v7701
      %v7830 = vadd.f32 %v7798, %v7704
      %v7831 = vadd.f32 %v7799, %v7709
      %v7832 = vadd.f32 %v7800, %v7712
      %v7833 = vadd.f32 %v7801, %v7717
      %v7834 = vadd.f32 %v7802, %v7720
      %v7835 = vadd.f32 %v7803, %v7725
      %v7836 = vadd.f32 %v7804, %v7728
      %v7837 = vadd.f32 %v7805, %v7733
      %v7838 = vadd.f32 %v7806, %v7736
      %v7839 = vadd.f32 %v7807, %v7741
      %v7840 = vadd.f32 %v7808, %v7744
      %v7841 = vadd.f32 %v7809, %v7749
      %v7842 = vadd.f32 %v7810, %v7752
      %v7843 = vadd.f32 %v7811, %v7757
      %v7844 = vadd.f32 %v7812, %v7760
      %v7845 = vadd.f32 %v7813, %v7765
      %v7846 = vadd.f32 %v7814, %v7768
      %v7847 = vadd.f32 %v7815, %v7773
      %v7848 = vadd.f32 %v7816, %v7776
      %v7849 = vadd.f32 %v7817, %v7781
      %v7850 = vadd.f32 %v7818, %v7784
      %7851 = vst [vmem:[#allocation2] sm:$0xff] %v7819
      %7852 = vst [vmem:[#allocation2 + $0x8] sm:$0xff] %v7820
      %7853 = vst [vmem:[#allocation2 + $0x10] sm:$0xff] %v7821
      %7854 = vst [vmem:[#allocation2 + $0x18] sm:$0xff] %v7822
      %7855 = vst [vmem:[#allocation2 + $0x20] sm:$0xff] %v7823
      %7856 = vst [vmem:[#allocation2 + $0x28] sm:$0xff] %v7824
      %7857 = vst [vmem:[#allocation2 + $0x30] sm:$0xff] %v7825
      %7858 = vst [vmem:[#allocation2 + $0x38] sm:$0xff] %v7826
      %7859 = vst [vmem:[#allocation2 + $0x40] sm:$0xff] %v7827
      %7860 = vst [vmem:[#allocation2 + $0x48] sm:$0xff] %v7828
      %7861 = vst [vmem:[#allocation2 + $0x50] sm:$0xff] %v7829
      %7862 = vst [vmem:[#allocation2 + $0x58] sm:$0xff] %v7830
      %7863 = vst [vmem:[#allocation2 + $0x60] sm:$0xff] %v7831
      %7864 = vst [vmem:[#allocation2 + $0x68] sm:$0xff] %v7832
      %7865 = vst [vmem:[#allocation2 + $0x70] sm:$0xff] %v7833
      %7866 = vst [vmem:[#allocation2 + $0x78] sm:$0xff] %v7834
      %7867 = vst [vmem:[#allocation2 + $0x80] sm:$0xff] %v7835
      %7868 = vst [vmem:[#allocation2 + $0x88] sm:$0xff] %v7836
      %7869 = vst [vmem:[#allocation2 + $0x90] sm:$0xff] %v7837
      %7870 = vst [vmem:[#allocation2 + $0x98] sm:$0xff] %v7838
      %7871 = vst [vmem:[#allocation2 + $0xa0] sm:$0xff] %v7839
      %7872 = vst [vmem:[#allocation2 + $0xa8] sm:$0xff] %v7840
      %7873 = vst [vmem:[#allocation2 + $0xb0] sm:$0xff] %v7841
      %7874 = vst [vmem:[#allocation2 + $0xb8] sm:$0xff] %v7842
      %7875 = vst [vmem:[#allocation2 + $0xc0] sm:$0xff] %v7843
      %7876 = vst [vmem:[#allocation2 + $0xc8] sm:$0xff] %v7844
      %7877 = vst [vmem:[#allocation2 + $0xd0] sm:$0xff] %v7845
      %7878 = vst [vmem:[#allocation2 + $0xd8] sm:$0xff] %v7846
      %7879 = vst [vmem:[#allocation2 + $0xe0] sm:$0xff] %v7847
      %7880 = vst [vmem:[#allocation2 + $0xe8] sm:$0xff] %v7848
      %7881 = vst [vmem:[#allocation2 + $0xf0] sm:$0xff] %v7849
      %7882 = vst [vmem:[#allocation2 + $0xf8] sm:$0xff] %v7850
      %s7883 = scalar_lea.vmem %s4, 512
      %v7884 = vld [vmem:[%s7883] sm:$0xf]
      %v7885 = vld [vmem:[%s7883 + $0x4] sm:$0xf]
      %v7886 = vld [vmem:[%s7883 + $0x8] sm:$0xf]
      %v7887 = vld [vmem:[%s7883 + $0xc] sm:$0xf]
      %v7888 = vld [vmem:[%s7883 + $0x10] sm:$0xf]
      %v7889 = vld [vmem:[%s7883 + $0x14] sm:$0xf]
      %v7890 = vld [vmem:[%s7883 + $0x18] sm:$0xf]
      %v7891 = vld [vmem:[%s7883 + $0x1c] sm:$0xf]
      %v7892 = vld [vmem:[%s7883 + $0x20] sm:$0xf]
      %v7893 = vld [vmem:[%s7883 + $0x24] sm:$0xf]
      %v7894 = vld [vmem:[%s7883 + $0x28] sm:$0xf]
      %v7895 = vld [vmem:[%s7883 + $0x2c] sm:$0xf]
      %v7896 = vld [vmem:[%s7883 + $0x30] sm:$0xf]
      %v7897 = vld [vmem:[%s7883 + $0x34] sm:$0xf]
      %v7898 = vld [vmem:[%s7883 + $0x38] sm:$0xf]
      %v7899 = vld [vmem:[%s7883 + $0x3c] sm:$0xf]
      %v7900 = vunpack.c.l.b16 %v7167
      %v7901 = vunpack.c.l.b16 %v7170
      %v7902 = vpack.c.b16 %v7901, %v7900
      %v7920 = vunpack.c.l.b16 %v7884
      %v7921 = vunpack.c.l.b16 %v7885
      %v7922 = vunpack.c.l.b16 %v7886
      %v7923 = vunpack.c.l.b16 %v7887
      %v7924 = vunpack.c.l.b16 %v7888
      %v7925 = vunpack.c.l.b16 %v7889
      %v7926 = vunpack.c.l.b16 %v7890
      %v7927 = vunpack.c.l.b16 %v7891
      %v7928 = vunpack.c.l.b16 %v7892
      %v7929 = vunpack.c.l.b16 %v7893
      %v7930 = vunpack.c.l.b16 %v7894
      %v7931 = vunpack.c.l.b16 %v7895
      %v7932 = vunpack.c.l.b16 %v7896
      %v7933 = vunpack.c.l.b16 %v7897
      %v7934 = vunpack.c.l.b16 %v7898
      %v7935 = vunpack.c.l.b16 %v7899
      %v7936 = vpack.c.b16 %v7921, %v7920
      %v7937 = vpack.c.b16 %v7923, %v7922
      %v7938 = vpack.c.b16 %v7925, %v7924
      %v7939 = vpack.c.b16 %v7927, %v7926
      %v7940 = vpack.c.b16 %v7929, %v7928
      %v7941 = vpack.c.b16 %v7931, %v7930
      %v7942 = vpack.c.b16 %v7933, %v7932
      %v7943 = vpack.c.b16 %v7935, %v7934
      %7952 = vmatprep.subr.bf16.mxu0 0
      %7953 = vmatpush1.bf16.msra.mxu0 %v7936
      %7954 = vmatprep.subr.bf16.mxu0 0
      %7955 = vmatpush1.bf16.msra.mxu0 %v7937
      %7956 = vmatprep.subr.bf16.mxu0 0
      %7957 = vmatpush1.bf16.msra.mxu0 %v7938
      %7958 = vmatprep.subr.bf16.mxu0 0
      %7959 = vmatpush1.bf16.msra.mxu0 %v7939
      %7960 = vmatprep.subr.bf16.mxu0 0
      %7961 = vmatpush1.bf16.msra.mxu0 %v7940
      %7962 = vmatprep.subr.bf16.mxu0 0
      %7963 = vmatpush1.bf16.msra.mxu0 %v7941
      %7964 = vmatprep.subr.bf16.mxu0 0
      %7965 = vmatpush1.bf16.msra.mxu0 %v7942
      %7966 = vmatprep.subr.bf16.mxu0 0
      %7967 = vmatpush1.bf16.msra.mxu0 %v7943
      %7968 = vmatprep.subr.bf16.mxu0 0
      %7969 = vmatpush1.bf16.msra.mxu0 0
      %7970 = vmatprep.subr.bf16.mxu0 0
      %7971 = vmatpush1.bf16.msra.mxu0 0
      %7972 = vmatprep.subr.bf16.mxu0 0
      %7973 = vmatpush1.bf16.msra.mxu0 0
      %7974 = vmatprep.subr.bf16.mxu0 0
      %7975 = vmatpush1.bf16.msra.mxu0 0
      %7976 = vmatprep.subr.bf16.mxu0 0
      %7977 = vmatpush1.bf16.msra.mxu0 0
      %7978 = vmatprep.subr.bf16.mxu0 0
      %7979 = vmatpush1.bf16.msra.mxu0 0
      %7980 = vmatprep.subr.bf16.mxu0 0
      %7981 = vmatpush1.bf16.msra.mxu0 0
      %7982 = vmatprep.subr.bf16.mxu0 0
      %7983 = vmatpush1.bf16.msra.mxu0 0
      %7984 = vmatprep.mubr.bf16.mxu0 0
      %7985 = vmatmul.mubr.bf16.gmra.mrb[0].mxu0 %v7222
      %v7986 = vpop.f32.mrb[0].mxu0
      %v7987 = vadd.f32 0.0, %v7986
      %v7988 = vpop.f32.mrb[0].mxu0
      %v7989 = vpop.f32.mrb[0].mxu0
      %v7990 = vadd.f32 0.0, %v7989
      %v7991 = vpop.f32.mrb[0].mxu0
      %7992 = vmatprep.mubr.bf16.mxu0 0
      %7993 = vmatmul.mubr.bf16.gmra.mrb[0].mxu0 %v7223
      %v7994 = vpop.f32.mrb[0].mxu0
      %v7995 = vadd.f32 0.0, %v7994
      %v7996 = vpop.f32.mrb[0].mxu0
      %v7997 = vpop.f32.mrb[0].mxu0
      %v7998 = vadd.f32 0.0, %v7997
      %v7999 = vpop.f32.mrb[0].mxu0
      %8000 = vmatprep.mubr.bf16.mxu0 0
      %8001 = vmatmul.mubr.bf16.gmra.mrb[0].mxu0 %v7224
      %v8002 = vpop.f32.mrb[0].mxu0
      %v8003 = vadd.f32 0.0, %v8002
      %v8004 = vpop.f32.mrb[0].mxu0
      %v8005 = vpop.f32.mrb[0].mxu0
      %v8006 = vadd.f32 0.0, %v8005
      %v8007 = vpop.f32.mrb[0].mxu0
      %8008 = vmatprep.mubr.bf16.mxu0 0
      %8009 = vmatmul.mubr.bf16.gmra.mrb[0].mxu0 %v7225
      %v8010 = vpop.f32.mrb[0].mxu0
      %v8011 = vadd.f32 0.0, %v8010
      %v8012 = vpop.f32.mrb[0].mxu0
      %v8013 = vpop.f32.mrb[0].mxu0
      %v8014 = vadd.f32 0.0, %v8013
      %v8015 = vpop.f32.mrb[0].mxu0
      %8016 = vmatprep.mubr.bf16.mxu0 0
      %8017 = vmatmul.mubr.bf16.gmra.mrb[0].mxu0 %v7226
      %v8018 = vpop.f32.mrb[0].mxu0
      %v8019 = vadd.f32 0.0, %v8018
      %v8020 = vpop.f32.mrb[0].mxu0
      %v8021 = vpop.f32.mrb[0].mxu0
      %v8022 = vadd.f32 0.0, %v8021
      %v8023 = vpop.f32.mrb[0].mxu0
      %8024 = vmatprep.mubr.bf16.mxu0 0
      %8025 = vmatmul.mubr.bf16.gmra.mrb[0].mxu0 %v7227
      %v8026 = vpop.f32.mrb[0].mxu0
      %v8027 = vadd.f32 0.0, %v8026
      %v8028 = vpop.f32.mrb[0].mxu0
      %v8029 = vpop.f32.mrb[0].mxu0
      %v8030 = vadd.f32 0.0, %v8029
      %v8031 = vpop.f32.mrb[0].mxu0
      %8032 = vmatprep.mubr.bf16.mxu0 0
      %8033 = vmatmul.mubr.bf16.gmra.mrb[0].mxu0 %v7228
      %v8034 = vpop.f32.mrb[0].mxu0
      %v8035 = vadd.f32 0.0, %v8034
      %v8036 = vpop.f32.mrb[0].mxu0
      %v8037 = vpop.f32.mrb[0].mxu0
      %v8038 = vadd.f32 0.0, %v8037
      %v8039 = vpop.f32.mrb[0].mxu0
      %8040 = vmatprep.mubr.bf16.mxu0 0
      %8041 = vmatmul.mubr.bf16.gmra.mrb[0].mxu0 %v7229
      %v8042 = vpop.f32.mrb[0].mxu0
      %v8043 = vadd.f32 0.0, %v8042
      %v8044 = vpop.f32.mrb[0].mxu0
      %v8045 = vpop.f32.mrb[0].mxu0
      %v8046 = vadd.f32 0.0, %v8045
      %v8047 = vpop.f32.mrb[0].mxu0
      %8048 = vmatprep.mubr.bf16.mxu0 0
      %8049 = vmatmul.mubr.bf16.gmra.mrb[0].mxu0 %v7230
      %v8050 = vpop.f32.mrb[0].mxu0
      %v8051 = vadd.f32 0.0, %v8050
      %v8052 = vpop.f32.mrb[0].mxu0
      %v8053 = vpop.f32.mrb[0].mxu0
      %v8054 = vadd.f32 0.0, %v8053
      %v8055 = vpop.f32.mrb[0].mxu0
      %8056 = vmatprep.mubr.bf16.mxu0 0
      %8057 = vmatmul.mubr.bf16.gmra.mrb[0].mxu0 %v7231
      %v8058 = vpop.f32.mrb[0].mxu0
      %v8059 = vadd.f32 0.0, %v8058
      %v8060 = vpop.f32.mrb[0].mxu0
      %v8061 = vpop.f32.mrb[0].mxu0
      %v8062 = vadd.f32 0.0, %v8061
      %v8063 = vpop.f32.mrb[0].mxu0
      %8064 = vmatprep.mubr.bf16.mxu0 0
      %8065 = vmatmul.mubr.bf16.gmra.mrb[0].mxu0 %v7232
      %v8066 = vpop.f32.mrb[0].mxu0
      %v8067 = vadd.f32 0.0, %v8066
      %v8068 = vpop.f32.mrb[0].mxu0
      %v8069 = vpop.f32.mrb[0].mxu0
      %v8070 = vadd.f32 0.0, %v8069
      %v8071 = vpop.f32.mrb[0].mxu0
      %8072 = vmatprep.mubr.bf16.mxu0 0
      %8073 = vmatmul.mubr.bf16.gmra.mrb[0].mxu0 %v7233
      %v8074 = vpop.f32.mrb[0].mxu0
      %v8075 = vadd.f32 0.0, %v8074
      %v8076 = vpop.f32.mrb[0].mxu0
      %v8077 = vpop.f32.mrb[0].mxu0
      %v8078 = vadd.f32 0.0, %v8077
      %v8079 = vpop.f32.mrb[0].mxu0
      %8080 = vmatprep.mubr.bf16.mxu0 0
      %8081 = vmatmul.mubr.bf16.gmra.mrb[0].mxu0 %v7234
      %v8082 = vpop.f32.mrb[0].mxu0
      %v8083 = vadd.f32 0.0, %v8082
      %v8084 = vpop.f32.mrb[0].mxu0
      %v8085 = vpop.f32.mrb[0].mxu0
      %v8086 = vadd.f32 0.0, %v8085
      %v8087 = vpop.f32.mrb[0].mxu0
      %8088 = vmatprep.mubr.bf16.mxu0 0
      %8089 = vmatmul.mubr.bf16.gmra.mrb[0].mxu0 %v7235
      %v8090 = vpop.f32.mrb[0].mxu0
      %v8091 = vadd.f32 0.0, %v8090
      %v8092 = vpop.f32.mrb[0].mxu0
      %v8093 = vpop.f32.mrb[0].mxu0
      %v8094 = vadd.f32 0.0, %v8093
      %v8095 = vpop.f32.mrb[0].mxu0
      %8096 = vmatprep.mubr.bf16.mxu0 0
      %8097 = vmatmul.mubr.bf16.gmra.mrb[0].mxu0 %v7576
      %v8098 = vpop.f32.mrb[0].mxu0
      %v8099 = vadd.f32 0.0, %v8098
      %v8100 = vpop.f32.mrb[0].mxu0
      %v8101 = vpop.f32.mrb[0].mxu0
      %v8102 = vadd.f32 0.0, %v8101
      %v8103 = vpop.f32.mrb[0].mxu0
      %8104 = vmatprep.mubr.bf16.mxu0 0
      %8105 = vmatmul.mubr.bf16.gmra.mrb[0].mxu0 %v7902
      %v8106 = vpop.f32.mrb[0].mxu0
      %v8107 = vadd.f32 0.0, %v8106
      %v8108 = vpop.f32.mrb[0].mxu0
      %v8109 = vpop.f32.mrb[0].mxu0
      %v8110 = vadd.f32 0.0, %v8109
      %v8111 = vpop.f32.mrb[0].mxu0
      %8112 = vdwg.mxu0
      %v8113 = vld [vmem:[#allocation2] sm:$0xff]
      %v8114 = vld [vmem:[#allocation2 + $0x8] sm:$0xff]
      %v8115 = vld [vmem:[#allocation2 + $0x10] sm:$0xff]
      %v8116 = vld [vmem:[#allocation2 + $0x18] sm:$0xff]
      %v8117 = vld [vmem:[#allocation2 + $0x20] sm:$0xff]
      %v8118 = vld [vmem:[#allocation2 + $0x28] sm:$0xff]
      %v8119 = vld [vmem:[#allocation2 + $0x30] sm:$0xff]
      %v8120 = vld [vmem:[#allocation2 + $0x38] sm:$0xff]
      %v8121 = vld [vmem:[#allocation2 + $0x40] sm:$0xff]
      %v8122 = vld [vmem:[#allocation2 + $0x48] sm:$0xff]
      %v8123 = vld [vmem:[#allocation2 + $0x50] sm:$0xff]
      %v8124 = vld [vmem:[#allocation2 + $0x58] sm:$0xff]
      %v8125 = vld [vmem:[#allocation2 + $0x60] sm:$0xff]
      %v8126 = vld [vmem:[#allocation2 + $0x68] sm:$0xff]
      %v8127 = vld [vmem:[#allocation2 + $0x70] sm:$0xff]
      %v8128 = vld [vmem:[#allocation2 + $0x78] sm:$0xff]
      %v8129 = vld [vmem:[#allocation2 + $0x80] sm:$0xff]
      %v8130 = vld [vmem:[#allocation2 + $0x88] sm:$0xff]
      %v8131 = vld [vmem:[#allocation2 + $0x90] sm:$0xff]
      %v8132 = vld [vmem:[#allocation2 + $0x98] sm:$0xff]
      %v8133 = vld [vmem:[#allocation2 + $0xa0] sm:$0xff]
      %v8134 = vld [vmem:[#allocation2 + $0xa8] sm:$0xff]
      %v8135 = vld [vmem:[#allocation2 + $0xb0] sm:$0xff]
      %v8136 = vld [vmem:[#allocation2 + $0xb8] sm:$0xff]
      %v8137 = vld [vmem:[#allocation2 + $0xc0] sm:$0xff]
      %v8138 = vld [vmem:[#allocation2 + $0xc8] sm:$0xff]
      %v8139 = vld [vmem:[#allocation2 + $0xd0] sm:$0xff]
      %v8140 = vld [vmem:[#allocation2 + $0xd8] sm:$0xff]
      %v8141 = vld [vmem:[#allocation2 + $0xe0] sm:$0xff]
      %v8142 = vld [vmem:[#allocation2 + $0xe8] sm:$0xff]
      %v8143 = vld [vmem:[#allocation2 + $0xf0] sm:$0xff]
      %v8144 = vld [vmem:[#allocation2 + $0xf8] sm:$0xff]
      %v8145 = vadd.f32 %v8113, %v7987
      %v8146 = vadd.f32 %v8114, %v7990
      %v8147 = vadd.f32 %v8115, %v7995
      %v8148 = vadd.f32 %v8116, %v7998
      %v8149 = vadd.f32 %v8117, %v8003
      %v8150 = vadd.f32 %v8118, %v8006
      %v8151 = vadd.f32 %v8119, %v8011
      %v8152 = vadd.f32 %v8120, %v8014
      %v8153 = vadd.f32 %v8121, %v8019
      %v8154 = vadd.f32 %v8122, %v8022
      %v8155 = vadd.f32 %v8123, %v8027
      %v8156 = vadd.f32 %v8124, %v8030
      %v8157 = vadd.f32 %v8125, %v8035
      %v8158 = vadd.f32 %v8126, %v8038
      %v8159 = vadd.f32 %v8127, %v8043
      %v8160 = vadd.f32 %v8128, %v8046
      %v8161 = vadd.f32 %v8129, %v8051
      %v8162 = vadd.f32 %v8130, %v8054
      %v8163 = vadd.f32 %v8131, %v8059
      %v8164 = vadd.f32 %v8132, %v8062
      %v8165 = vadd.f32 %v8133, %v8067
      %v8166 = vadd.f32 %v8134, %v8070
      %v8167 = vadd.f32 %v8135, %v8075
      %v8168 = vadd.f32 %v8136, %v8078
      %v8169 = vadd.f32 %v8137, %v8083
      %v8170 = vadd.f32 %v8138, %v8086
      %v8171 = vadd.f32 %v8139, %v8091
      %v8172 = vadd.f32 %v8140, %v8094
      %v8173 = vadd.f32 %v8141, %v8099
      %v8174 = vadd.f32 %v8142, %v8102
      %v8175 = vadd.f32 %v8143, %v8107
      %v8176 = vadd.f32 %v8144, %v8110
      %8177 = vst [vmem:[#allocation2] sm:$0xff] %v8145
      %8178 = vst [vmem:[#allocation2 + $0x8] sm:$0xff] %v8146
      %8179 = vst [vmem:[#allocation2 + $0x10] sm:$0xff] %v8147
      %8180 = vst [vmem:[#allocation2 + $0x18] sm:$0xff] %v8148
      %8181 = vst [vmem:[#allocation2 + $0x20] sm:$0xff] %v8149
      %8182 = vst [vmem:[#allocation2 + $0x28] sm:$0xff] %v8150
      %8183 = vst [vmem:[#allocation2 + $0x30] sm:$0xff] %v8151
      %8184 = vst [vmem:[#allocation2 + $0x38] sm:$0xff] %v8152
      %8185 = vst [vmem:[#allocation2 + $0x40] sm:$0xff] %v8153
      %8186 = vst [vmem:[#allocation2 + $0x48] sm:$0xff] %v8154
      %8187 = vst [vmem:[#allocation2 + $0x50] sm:$0xff] %v8155
      %8188 = vst [vmem:[#allocation2 + $0x58] sm:$0xff] %v8156
      %8189 = vst [vmem:[#allocation2 + $0x60] sm:$0xff] %v8157
      %8190 = vst [vmem:[#allocation2 + $0x68] sm:$0xff] %v8158
      %8191 = vst [vmem:[#allocation2 + $0x70] sm:$0xff] %v8159
      %8192 = vst [vmem:[#allocation2 + $0x78] sm:$0xff] %v8160
      %8193 = vst [vmem:[#allocation2 + $0x80] sm:$0xff] %v8161
      %8194 = vst [vmem:[#allocation2 + $0x88] sm:$0xff] %v8162
      %8195 = vst [vmem:[#allocation2 + $0x90] sm:$0xff] %v8163
      %8196 = vst [vmem:[#allocation2 + $0x98] sm:$0xff] %v8164
      %8197 = vst [vmem:[#allocation2 + $0xa0] sm:$0xff] %v8165
      %8198 = vst [vmem:[#allocation2 + $0xa8] sm:$0xff] %v8166
      %8199 = vst [vmem:[#allocation2 + $0xb0] sm:$0xff] %v8167
      %8200 = vst [vmem:[#allocation2 + $0xb8] sm:$0xff] %v8168
      %8201 = vst [vmem:[#allocation2 + $0xc0] sm:$0xff] %v8169
      %8202 = vst [vmem:[#allocation2 + $0xc8] sm:$0xff] %v8170
      %8203 = vst [vmem:[#allocation2 + $0xd0] sm:$0xff] %v8171
      %8204 = vst [vmem:[#allocation2 + $0xd8] sm:$0xff] %v8172
      %8205 = vst [vmem:[#allocation2 + $0xe0] sm:$0xff] %v8173
      %8206 = vst [vmem:[#allocation2 + $0xe8] sm:$0xff] %v8174
      %8207 = vst [vmem:[#allocation2 + $0xf0] sm:$0xff] %v8175
      %8208 = vst [vmem:[#allocation2 + $0xf8] sm:$0xff] %v8176
      %v8209 = vld [vmem:[#allocation2] sm:$0xff]
      %v8210 = vld [vmem:[#allocation2 + $0x8] sm:$0xff]
      %v8211 = vld [vmem:[#allocation2 + $0x10] sm:$0xff]
      %v8212 = vld [vmem:[#allocation2 + $0x18] sm:$0xff]
      %v8213 = vld [vmem:[#allocation2 + $0x20] sm:$0xff]
      %v8214 = vld [vmem:[#allocation2 + $0x28] sm:$0xff]
      %v8215 = vld [vmem:[#allocation2 + $0x30] sm:$0xff]
      %v8216 = vld [vmem:[#allocation2 + $0x38] sm:$0xff]
      %v8217 = vld [vmem:[#allocation2 + $0x40] sm:$0xff]
      %v8218 = vld [vmem:[#allocation2 + $0x48] sm:$0xff]
      %v8219 = vld [vmem:[#allocation2 + $0x50] sm:$0xff]
      %v8220 = vld [vmem:[#allocation2 + $0x58] sm:$0xff]
      %v8221 = vld [vmem:[#allocation2 + $0x60] sm:$0xff]
      %v8222 = vld [vmem:[#allocation2 + $0x68] sm:$0xff]
      %v8223 = vld [vmem:[#allocation2 + $0x70] sm:$0xff]
      %v8224 = vld [vmem:[#allocation2 + $0x78] sm:$0xff]
      %v8225 = vld [vmem:[#allocation2 + $0x80] sm:$0xff]
      %v8226 = vld [vmem:[#allocation2 + $0x88] sm:$0xff]
      %v8227 = vld [vmem:[#allocation2 + $0x90] sm:$0xff]
      %v8228 = vld [vmem:[#allocation2 + $0x98] sm:$0xff]
      %v8229 = vld [vmem:[#allocation2 + $0xa0] sm:$0xff]
      %v8230 = vld [vmem:[#allocation2 + $0xa8] sm:$0xff]
      %v8231 = vld [vmem:[#allocation2 + $0xb0] sm:$0xff]
      %v8232 = vld [vmem:[#allocation2 + $0xb8] sm:$0xff]
      %v8233 = vld [vmem:[#allocation2 + $0xc0] sm:$0xff]
      %v8234 = vld [vmem:[#allocation2 + $0xc8] sm:$0xff]
      %v8235 = vld [vmem:[#allocation2 + $0xd0] sm:$0xff]
      %v8236 = vld [vmem:[#allocation2 + $0xd8] sm:$0xff]
      %v8237 = vld [vmem:[#allocation2 + $0xe0] sm:$0xff]
      %v8238 = vld [vmem:[#allocation2 + $0xe8] sm:$0xff]
      %v8239 = vld [vmem:[#allocation2 + $0xf0] sm:$0xff]
      %v8240 = vld [vmem:[#allocation2 + $0xf8] sm:$0xff]
      %v8241 = vld [vmem:[%s5] sm:$0x1]
      %v8243 = vlaneseq
      %v8244 = vshrl.u32 %v8243, 7
      %v8245 = vsub.s32 0, %v8244
      %v8246 = vrot.slane %v8241, %v8245
      %v8248 = vmul.f32 %v8209, %v8246
      %v8249 = vmul.f32 %v8210, %v8246
      %v8250 = vmul.f32 %v8211, %v8246
      %v8251 = vmul.f32 %v8212, %v8246
      %v8252 = vmul.f32 %v8213, %v8246
      %v8253 = vmul.f32 %v8214, %v8246
      %v8254 = vmul.f32 %v8215, %v8246
      %v8255 = vmul.f32 %v8216, %v8246
      %v8256 = vmul.f32 %v8217, %v8246
      %v8257 = vmul.f32 %v8218, %v8246
      %v8258 = vmul.f32 %v8219, %v8246
      %v8259 = vmul.f32 %v8220, %v8246
      %v8260 = vmul.f32 %v8221, %v8246
      %v8261 = vmul.f32 %v8222, %v8246
      %v8262 = vmul.f32 %v8223, %v8246
      %v8263 = vmul.f32 %v8224, %v8246
      %v8264 = vmul.f32 %v8225, %v8246
      %v8265 = vmul.f32 %v8226, %v8246
      %v8266 = vmul.f32 %v8227, %v8246
      %v8267 = vmul.f32 %v8228, %v8246
      %v8268 = vmul.f32 %v8229, %v8246
      %v8269 = vmul.f32 %v8230, %v8246
      %v8270 = vmul.f32 %v8231, %v8246
      %v8271 = vmul.f32 %v8232, %v8246
      %v8272 = vmul.f32 %v8233, %v8246
      %v8273 = vmul.f32 %v8234, %v8246
      %v8274 = vmul.f32 %v8235, %v8246
      %v8275 = vmul.f32 %v8236, %v8246
      %v8276 = vmul.f32 %v8237, %v8246
      %v8277 = vmul.f32 %v8238, %v8246
      %v8278 = vmul.f32 %v8239, %v8246
      %v8279 = vmul.f32 %v8240, %v8246
      %v8280 = vld [vmem:[%s6] sm:$0x1]
      %v8282 = vlaneseq
      %v8283 = vshrl.u32 %v8282, 7
      %v8284 = vsub.s32 0, %v8283
      %v8285 = vrot.slane %v8280, %v8284
      %v8287 = vadd.f32 %v8248, %v8285
      %v8288 = vadd.f32 %v8249, %v8285
      %v8289 = vadd.f32 %v8250, %v8285
      %v8290 = vadd.f32 %v8251, %v8285
      %v8291 = vadd.f32 %v8252, %v8285
      %v8292 = vadd.f32 %v8253, %v8285
      %v8293 = vadd.f32 %v8254, %v8285
      %v8294 = vadd.f32 %v8255, %v8285
      %v8295 = vadd.f32 %v8256, %v8285
      %v8296 = vadd.f32 %v8257, %v8285
      %v8297 = vadd.f32 %v8258, %v8285
      %v8298 = vadd.f32 %v8259, %v8285
      %v8299 = vadd.f32 %v8260, %v8285
      %v8300 = vadd.f32 %v8261, %v8285
      %v8301 = vadd.f32 %v8262, %v8285
      %v8302 = vadd.f32 %v8263, %v8285
      %v8303 = vadd.f32 %v8264, %v8285
      %v8304 = vadd.f32 %v8265, %v8285
      %v8305 = vadd.f32 %v8266, %v8285
      %v8306 = vadd.f32 %v8267, %v8285
      %v8307 = vadd.f32 %v8268, %v8285
      %v8308 = vadd.f32 %v8269, %v8285
      %v8309 = vadd.f32 %v8270, %v8285
      %v8310 = vadd.f32 %v8271, %v8285
      %v8311 = vadd.f32 %v8272, %v8285
      %v8312 = vadd.f32 %v8273, %v8285
      %v8313 = vadd.f32 %v8274, %v8285
      %v8314 = vadd.f32 %v8275, %v8285
      %v8315 = vadd.f32 %v8276, %v8285
      %v8316 = vadd.f32 %v8277, %v8285
      %v8317 = vadd.f32 %v8278, %v8285
      %v8318 = vadd.f32 %v8279, %v8285
      %vm8319 = vcmp.ge.f32.partialorder %v8287, 0.0
      %vm8320 = vcmp.ge.f32.partialorder %v8288, 0.0
      %vm8321 = vcmp.ge.f32.partialorder %v8289, 0.0
      %vm8322 = vcmp.ge.f32.partialorder %v8290, 0.0
      %vm8323 = vcmp.ge.f32.partialorder %v8291, 0.0
      %vm8324 = vcmp.ge.f32.partialorder %v8292, 0.0
      %vm8325 = vcmp.ge.f32.partialorder %v8293, 0.0
      %vm8326 = vcmp.ge.f32.partialorder %v8294, 0.0
      %vm8327 = vcmp.ge.f32.partialorder %v8295, 0.0
      %vm8328 = vcmp.ge.f32.partialorder %v8296, 0.0
      %vm8329 = vcmp.ge.f32.partialorder %v8297, 0.0
      %vm8330 = vcmp.ge.f32.partialorder %v8298, 0.0
      %vm8331 = vcmp.ge.f32.partialorder %v8299, 0.0
      %vm8332 = vcmp.ge.f32.partialorder %v8300, 0.0
      %vm8333 = vcmp.ge.f32.partialorder %v8301, 0.0
      %vm8334 = vcmp.ge.f32.partialorder %v8302, 0.0
      %vm8335 = vcmp.ge.f32.partialorder %v8303, 0.0
      %vm8336 = vcmp.ge.f32.partialorder %v8304, 0.0
      %vm8337 = vcmp.ge.f32.partialorder %v8305, 0.0
      %vm8338 = vcmp.ge.f32.partialorder %v8306, 0.0
      %vm8339 = vcmp.ge.f32.partialorder %v8307, 0.0
      %vm8340 = vcmp.ge.f32.partialorder %v8308, 0.0
      %vm8341 = vcmp.ge.f32.partialorder %v8309, 0.0
      %vm8342 = vcmp.ge.f32.partialorder %v8310, 0.0
      %vm8343 = vcmp.ge.f32.partialorder %v8311, 0.0
      %vm8344 = vcmp.ge.f32.partialorder %v8312, 0.0
      %vm8345 = vcmp.ge.f32.partialorder %v8313, 0.0
      %vm8346 = vcmp.ge.f32.partialorder %v8314, 0.0
      %vm8347 = vcmp.ge.f32.partialorder %v8315, 0.0
      %vm8348 = vcmp.ge.f32.partialorder %v8316, 0.0
      %vm8349 = vcmp.ge.f32.partialorder %v8317, 0.0
      %vm8350 = vcmp.ge.f32.partialorder %v8318, 0.0
      %v8351 = vmul.f32 %v8287, 0.01
      %v8352 = vmul.f32 %v8288, 0.01
      %v8353 = vmul.f32 %v8289, 0.01
      %v8354 = vmul.f32 %v8290, 0.01
      %v8355 = vmul.f32 %v8291, 0.01
      %v8356 = vmul.f32 %v8292, 0.01
      %v8357 = vmul.f32 %v8293, 0.01
      %v8358 = vmul.f32 %v8294, 0.01
      %v8359 = vmul.f32 %v8295, 0.01
      %v8360 = vmul.f32 %v8296, 0.01
      %v8361 = vmul.f32 %v8297, 0.01
      %v8362 = vmul.f32 %v8298, 0.01
      %v8363 = vmul.f32 %v8299, 0.01
      %v8364 = vmul.f32 %v8300, 0.01
      %v8365 = vmul.f32 %v8301, 0.01
      %v8366 = vmul.f32 %v8302, 0.01
      %v8367 = vmul.f32 %v8303, 0.01
      %v8368 = vmul.f32 %v8304, 0.01
      %v8369 = vmul.f32 %v8305, 0.01
      %v8370 = vmul.f32 %v8306, 0.01
      %v8371 = vmul.f32 %v8307, 0.01
      %v8372 = vmul.f32 %v8308, 0.01
      %v8373 = vmul.f32 %v8309, 0.01
      %v8374 = vmul.f32 %v8310, 0.01
      %v8375 = vmul.f32 %v8311, 0.01
      %v8376 = vmul.f32 %v8312, 0.01
      %v8377 = vmul.f32 %v8313, 0.01
      %v8378 = vmul.f32 %v8314, 0.01
      %v8379 = vmul.f32 %v8315, 0.01
      %v8380 = vmul.f32 %v8316, 0.01
      %v8381 = vmul.f32 %v8317, 0.01
      %v8382 = vmul.f32 %v8318, 0.01
      %v8383 = vsel %vm8319, %v8287, %v8351
      %v8384 = vsel %vm8320, %v8288, %v8352
      %v8385 = vsel %vm8321, %v8289, %v8353
      %v8386 = vsel %vm8322, %v8290, %v8354
      %v8387 = vsel %vm8323, %v8291, %v8355
      %v8388 = vsel %vm8324, %v8292, %v8356
      %v8389 = vsel %vm8325, %v8293, %v8357
      %v8390 = vsel %vm8326, %v8294, %v8358
      %v8391 = vsel %vm8327, %v8295, %v8359
      %v8392 = vsel %vm8328, %v8296, %v8360
      %v8393 = vsel %vm8329, %v8297, %v8361
      %v8394 = vsel %vm8330, %v8298, %v8362
      %v8395 = vsel %vm8331, %v8299, %v8363
      %v8396 = vsel %vm8332, %v8300, %v8364
      %v8397 = vsel %vm8333, %v8301, %v8365
      %v8398 = vsel %vm8334, %v8302, %v8366
      %v8399 = vsel %vm8335, %v8303, %v8367
      %v8400 = vsel %vm8336, %v8304, %v8368
      %v8401 = vsel %vm8337, %v8305, %v8369
      %v8402 = vsel %vm8338, %v8306, %v8370
      %v8403 = vsel %vm8339, %v8307, %v8371
      %v8404 = vsel %vm8340, %v8308, %v8372
      %v8405 = vsel %vm8341, %v8309, %v8373
      %v8406 = vsel %vm8342, %v8310, %v8374
      %v8407 = vsel %vm8343, %v8311, %v8375
      %v8408 = vsel %vm8344, %v8312, %v8376
      %v8409 = vsel %vm8345, %v8313, %v8377
      %v8410 = vsel %vm8346, %v8314, %v8378
      %v8411 = vsel %vm8347, %v8315, %v8379
      %v8412 = vsel %vm8348, %v8316, %v8380
      %v8413 = vsel %vm8349, %v8317, %v8381
      %v8414 = vsel %vm8350, %v8318, %v8382
      %8415 = vst [vmem:[%s278] sm:$0xff] %v8383
      %8416 = vst [vmem:[%s278 + $0x8] sm:$0xff] %v8384
      %8417 = vst [vmem:[%s278 + $0x10] sm:$0xff] %v8385
      %8418 = vst [vmem:[%s278 + $0x18] sm:$0xff] %v8386
      %8419 = vst [vmem:[%s278 + $0x20] sm:$0xff] %v8387
      %8420 = vst [vmem:[%s278 + $0x28] sm:$0xff] %v8388
      %8421 = vst [vmem:[%s278 + $0x30] sm:$0xff] %v8389
      %8422 = vst [vmem:[%s278 + $0x38] sm:$0xff] %v8390
      %8423 = vst [vmem:[%s278 + $0x40] sm:$0xff] %v8391
      %8424 = vst [vmem:[%s278 + $0x48] sm:$0xff] %v8392
      %8425 = vst [vmem:[%s278 + $0x50] sm:$0xff] %v8393
      %8426 = vst [vmem:[%s278 + $0x58] sm:$0xff] %v8394
      %8427 = vst [vmem:[%s278 + $0x60] sm:$0xff] %v8395
      %8428 = vst [vmem:[%s278 + $0x68] sm:$0xff] %v8396
      %8429 = vst [vmem:[%s278 + $0x70] sm:$0xff] %v8397
      %8430 = vst [vmem:[%s278 + $0x78] sm:$0xff] %v8398
      %8431 = vst [vmem:[%s278 + $0x80] sm:$0xff] %v8399
      %8432 = vst [vmem:[%s278 + $0x88] sm:$0xff] %v8400
      %8433 = vst [vmem:[%s278 + $0x90] sm:$0xff] %v8401
      %8434 = vst [vmem:[%s278 + $0x98] sm:$0xff] %v8402
      %8435 = vst [vmem:[%s278 + $0xa0] sm:$0xff] %v8403
      %8436 = vst [vmem:[%s278 + $0xa8] sm:$0xff] %v8404
      %8437 = vst [vmem:[%s278 + $0xb0] sm:$0xff] %v8405
      %8438 = vst [vmem:[%s278 + $0xb8] sm:$0xff] %v8406
      %8439 = vst [vmem:[%s278 + $0xc0] sm:$0xff] %v8407
      %8440 = vst [vmem:[%s278 + $0xc8] sm:$0xff] %v8408
      %8441 = vst [vmem:[%s278 + $0xd0] sm:$0xff] %v8409
      %8442 = vst [vmem:[%s278 + $0xd8] sm:$0xff] %v8410
      %8443 = vst [vmem:[%s278 + $0xe0] sm:$0xff] %v8411
      %8444 = vst [vmem:[%s278 + $0xe8] sm:$0xff] %v8412
      %8445 = vst [vmem:[%s278 + $0xf0] sm:$0xff] %v8413
      %8446 = vst [vmem:[%s278 + $0xf8] sm:$0xff] %v8414
      %p8447 = scmp.lt.s32.totalorder %s18, 1
      %s8448 = scalar_select %p8447, %s18, 1
      %s8449 = smul.addr %s8448, 32
      %s8450 = smul.addr %s8449, 8
      %s8451 = scalar_lea.vmem %s7, %s8450
      // Predicated region
      $region49: #{double_conv.1} parent=47 // pred_check
        %p8452 = pneg %p188
      $region50: #{double_conv.1} parent=47 // pred_check_branch
        %8454 = sbr.rel (%p8452) target = $region52
      $region51: #{double_conv.1} parent=47 // pred_region
        _
      $region52: #{double_conv.1} parent=47 // pred_fallthru
        _
    $region48: #{double_conv.1} parent=5 // pred_fallthru
      _
    %p8455 = scmp.le.s32.totalorder 2, %s13
    // Predicated region
    $region53: #{double_conv.1} parent=5 // pred_check
      %p8456 = pneg %p8455
    $region54: #{double_conv.1} parent=5 // pred_check_branch
      %8458 = sbr.rel (%p8456) target = $region56
    $region55: #{double_conv.1} parent=5 // pred_region
      %s8459 = ssub.s32 %s13, 2
      // Predicated region
      $region57: #{double_conv.1} parent=55 // pred_check
        %p8460 = pneg %p194
      $region58: #{double_conv.1} parent=55 // pred_check_branch
        %8462 = sbr.rel (%p8460) target = $region60
      $region59: #{double_conv.1} parent=55 // pred_region
        %p8463 = scmp.lt.s32.totalorder %s19, 1
        %s8464 = scalar_select %p8463, %s19, 1
        %s8465 = smul.addr %s8464, 32
        %s8466 = smul.addr %s8465, 8
        %s8467 = scalar_lea.vmem %s7, %s8466
      $region60: #{double_conv.1} parent=55 // pred_fallthru
        _
    $region56: #{double_conv.1} parent=5 // pred_fallthru
      _
  $region6: #{double_conv.1} parent=0 // loop_footer
    %s17 = sadd.s32 1, %s13
  $region7: #{double_conv.1} parent=0 // loop_footer_branch
    %12 = sbr.rel target = $region3
  $region8: #{double_conv.1} parent=0 // loop_exit
    _

</llo_original>
